<compile_context>
chip_gen: v5e
topology: v5e:2x2
jax: 0.10.0
libtpu: 0.0.40
codegen_flags: <defaults>
</compile_context>

<pallas_src>
import jax
import jax.numpy as jnp
from jax.experimental import pallas as pl
from jax.experimental.pallas import tpu as pltpu

F_IN = 6            # real feature count: [t, sin t, cos t, t^2, t^3, t^4]
F_PAD = 8           # padded to a sublane-friendly 8 (zeros, does not change the math)
H1, H2, H3 = 128, 256, 128
OUT = 2
TN = 256            # rows per grid step (multiple of 128)


def extrapolation_kernel(t_ref, w1_ref, b1_ref, w2_ref, b2_ref,
                         w3_ref, b3_ref, w4_ref, b4_ref, o_ref):
    # t_ref: (TN, 1) f32 ; o_ref: (TN, OUT) f32 ; weights bf16, biases f32.
    t = t_ref[...]                                   # (TN, 1)
    n = t.shape[0]

    # Features [t, sin t, cos t, t^2, t^3, t^4, 0, 0] -> (TN, F_PAD), all f32 (VPU).
    tb = jnp.broadcast_to(t, (n, F_PAD))
    p2 = tb * tb
    p3 = p2 * tb
    p4 = p2 * p2
    col = jax.lax.broadcasted_iota(jnp.int32, (n, F_PAD), 1)
    feat = jnp.where(col == 0, tb,
           jnp.where(col == 1, jnp.sin(tb),
           jnp.where(col == 2, jnp.cos(tb),
           jnp.where(col == 3, p2,
           jnp.where(col == 4, p3,
           jnp.where(col == 5, p4,
                     jnp.zeros_like(tb)))))))

    bf16 = jnp.bfloat16
    # bf16 MXU inputs, f32 accumulation; bias add / ReLU in f32.
    x = jnp.dot(feat.astype(bf16), w1_ref[...],
                preferred_element_type=jnp.float32) + b1_ref[...]
    x = jnp.maximum(x, 0.0)
    x = jnp.dot(x.astype(bf16), w2_ref[...],
                preferred_element_type=jnp.float32) + b2_ref[...]
    x = jnp.maximum(x, 0.0)
    x = jnp.dot(x.astype(bf16), w3_ref[...],
                preferred_element_type=jnp.float32) + b3_ref[...]
    x = jnp.maximum(x, 0.0)
    x = jnp.dot(x.astype(bf16), w4_ref[...],
                preferred_element_type=jnp.float32) + b4_ref[...]
    o_ref[...] = x.astype(o_ref.dtype)


def init_params(key):
    """PyTorch-like uniform +/- 1/sqrt(fan_in) init (nn.Linear default), f32."""
    ks = jax.random.split(key, 8)

    def linear(kw, kb, fan_in, fan_out):
        bound = 1.0 / jnp.sqrt(fan_in)
        w = jax.random.uniform(kw, (fan_in, fan_out), jnp.float32, -bound, bound)
        b = jax.random.uniform(kb, (fan_out,), jnp.float32, -bound, bound)
        return w, b

    w1, b1 = linear(ks[0], ks[1], F_IN, H1)
    w2, b2 = linear(ks[2], ks[3], H1, H2)
    w3, b3 = linear(ks[4], ks[5], H2, H3)
    w4, b4 = linear(ks[6], ks[7], H3, OUT)
    return (w1, b1, w2, b2, w3, b3, w4, b4)


def prepare_params(params):
    """One-time weight prep, hoisted out of the per-call path:
    pad fc1 input 6->8, cast weights to bf16 (MXU inputs), reshape biases to (1, D) f32."""
    w1, b1, w2, b2, w3, b3, w4, b4 = params
    w1p = jnp.zeros((F_PAD, H1), jnp.bfloat16).at[:F_IN, :].set(w1.astype(jnp.bfloat16))
    w2p = w2.astype(jnp.bfloat16)
    w3p = w3.astype(jnp.bfloat16)
    w4p = w4.astype(jnp.bfloat16)
    b1p = b1.reshape(1, H1).astype(jnp.float32)
    b2p = b2.reshape(1, H2).astype(jnp.float32)
    b3p = b3.reshape(1, H3).astype(jnp.float32)
    b4p = b4.reshape(1, OUT).astype(jnp.float32)
    return (w1p, b1p, w2p, b2p, w3p, b3p, w4p, b4p)


@jax.jit
def extrapolation_net(t, prepared):
    w1p, b1p, w2p, b2p, w3p, b3p, w4p, b4p = prepared
    t2 = t.reshape(-1, 1).astype(jnp.float32)        # t.view(-1, 1)
    n = t2.shape[0]
    n_blocks = pl.cdiv(n, TN)
    n_pad = n_blocks * TN
    if n_pad != n:                                    # pad tail rows; sliced off below
        t2 = jnp.pad(t2, ((0, n_pad - n), (0, 0)))

    const = lambda shape: pl.BlockSpec(shape, lambda i: (0, 0))

    flops = 2 * n_pad * (F_PAD * H1 + H1 * H2 + H2 * H3 + H3 * OUT)
    transcendentals = 2 * n_pad * F_PAD               # sin + cos
    bytes_accessed = (
        2 * (F_PAD * H1 + H1 * H2 + H2 * H3 + H3 * OUT)   # bf16 weights
        + 4 * (H1 + H2 + H3 + OUT)                        # f32 biases
        + 4 * n_pad * (1 + OUT))                          # t in, (N, 2) out

    out = pl.pallas_call(
        extrapolation_kernel,
        out_shape=jax.ShapeDtypeStruct((n_pad, OUT), jnp.float32),
        grid=(n_blocks,),
        in_specs=[
            pl.BlockSpec((TN, 1), lambda i: (i, 0)),      # t row tile
            const((F_PAD, H1)), const((1, H1)),           # weights/biases: VMEM-resident
            const((H1, H2)),    const((1, H2)),
            const((H2, H3)),    const((1, H3)),
            const((H3, OUT)),   const((1, OUT)),
        ],
        out_specs=pl.BlockSpec((TN, OUT), lambda i: (i, 0)),
        compiler_params=pltpu.CompilerParams(
            dimension_semantics=("parallel",)),
        cost_estimate=pl.CostEstimate(
            flops=flops, transcendentals=transcendentals,
            bytes_accessed=bytes_accessed),
    )(t2, w1p, b1p, w2p, b2p, w3p, b3p, w4p, b4p)
    return out[:n]


def extrapolation_net_ref(t, params):
    """Pure-JAX f32 reference of the PyTorch forward pass."""
    w1, b1, w2, b2, w3, b3, w4, b4 = params
    t2 = t.reshape(-1, 1).astype(jnp.float32)
    feat = jnp.concatenate(
        [t2, jnp.sin(t2), jnp.cos(t2), t2**2, t2**3, t2**4], axis=1)
    x = jax.nn.relu(feat @ w1 + b1)
    x = jax.nn.relu(x @ w2 + b2)
    x = jax.nn.relu(x @ w3 + b3)
    return x @ w4 + b4


def extrapolation_net_ref_mixed(t, params):
    """Pure-JAX reference mirroring the kernel's bf16-MXU / f32-accumulate precision."""
    w1, b1, w2, b2, w3, b3, w4, b4 = params
    bf16 = jnp.bfloat16

    def mm(a, w):
        return jnp.dot(a.astype(bf16), w.astype(bf16),
                       preferred_element_type=jnp.float32)

    t2 = t.reshape(-1, 1).astype(jnp.float32)
    feat = jnp.concatenate(
        [t2, jnp.sin(t2), jnp.cos(t2), t2**2, t2**3, t2**4], axis=1)
    x = jax.nn.relu(mm(feat, w1) + b1)
    x = jax.nn.relu(mm(x, w2) + b2)
    x = jax.nn.relu(mm(x, w3) + b3)
    return mm(x, w4) + b4


if __name__ == "__main__":
    key = jax.random.PRNGKey(0)
    k_param, k_data = jax.random.split(key)
    params = init_params(k_param)
    prepared = prepare_params(params)     # pad/cast once, not per forward call

    # Small deterministic input: 16 time points (module accepts any shape, view(-1,1)).
    t = jax.random.uniform(k_data, (16,), jnp.float32, 0.0, 2.0)

    y = jax.block_until_ready(extrapolation_net(t, prepared))
    assert y.shape == (16, 2)

    # Tight check vs a reference with the same bf16-MXU / f32-accumulate precision.
    y_mixed = jax.block_until_ready(extrapolation_net_ref_mixed(t, params))
    assert jnp.allclose(y, y_mixed, rtol=5e-3, atol=5e-3), "mismatch vs mixed-precision ref"

    # Sanity check vs the full-f32 PyTorch-equivalent forward (looser: bf16 MXU inputs).
    y_ref = jax.block_until_ready(extrapolation_net_ref(t, params))
    assert jnp.allclose(y, y_ref, rtol=2e-2, atol=2e-2), "mismatch vs f32 reference"

    print("KERNEL_OK")
</pallas_src>

<mosaic_0001>
module attributes {stable_mosaic.version = 11 : i64} {
  func.func @extrapolation_kernel(%arg0: i32, %arg1: memref<256x1xf32, #tpu.memory_space<vmem>>, %arg2: memref<8x128xbf16, #tpu.memory_space<vmem>>, %arg3: memref<1x128xf32, #tpu.memory_space<vmem>>, %arg4: memref<128x256xbf16, #tpu.memory_space<vmem>>, %arg5: memref<1x256xf32, #tpu.memory_space<vmem>>, %arg6: memref<256x128xbf16, #tpu.memory_space<vmem>>, %arg7: memref<1x128xf32, #tpu.memory_space<vmem>>, %arg8: memref<128x2xbf16, #tpu.memory_space<vmem>>, %arg9: memref<1x2xf32, #tpu.memory_space<vmem>>, %arg10: memref<256x2xf32, #tpu.memory_space<vmem>>) attributes {dimension_semantics = [#tpu.dimension_semantics<parallel>], iteration_bounds = array<i64: 1>, scalar_prefetch = 0 : i64, scratch_operands = 0 : i64, tpu.core_type = #tpu.core_type<tc>, window_params = [{transform_indices = @transform_0, window_bounds = array<i64: 256, 1>}, {pipeline_mode = #tpu.pipeline_mode<synchronous>, transform_indices = @transform_1, window_bounds = array<i64: 8, 128>}, {pipeline_mode = #tpu.pipeline_mode<synchronous>, transform_indices = @transform_2, window_bounds = array<i64: 1, 128>}, {pipeline_mode = #tpu.pipeline_mode<synchronous>, transform_indices = @transform_3, window_bounds = array<i64: 128, 256>}, {pipeline_mode = #tpu.pipeline_mode<synchronous>, transform_indices = @transform_4, window_bounds = array<i64: 1, 256>}, {pipeline_mode = #tpu.pipeline_mode<synchronous>, transform_indices = @transform_5, window_bounds = array<i64: 256, 128>}, {pipeline_mode = #tpu.pipeline_mode<synchronous>, transform_indices = @transform_6, window_bounds = array<i64: 1, 128>}, {pipeline_mode = #tpu.pipeline_mode<synchronous>, transform_indices = @transform_7, window_bounds = array<i64: 128, 2>}, {pipeline_mode = #tpu.pipeline_mode<synchronous>, transform_indices = @transform_8, window_bounds = array<i64: 1, 2>}, {transform_indices = @transform_9, window_bounds = array<i64: 256, 2>}]} {
    %c0 = arith.constant 0 : index
    %c0_0 = arith.constant 0 : index
    %0 = vector.load %arg1[%c0, %c0_0] : memref<256x1xf32, #tpu.memory_space<vmem>>, vector<256x1xf32>
    %1 = vector.shape_cast %0 : vector<256x1xf32> to vector<256x1xf32>
    %2 = vector.broadcast %1 : vector<256x1xf32> to vector<256x8xf32>
    %3 = arith.mulf %2, %2 : vector<256x8xf32>
    %4 = arith.mulf %3, %2 : vector<256x8xf32>
    %5 = arith.mulf %3, %3 : vector<256x8xf32>
    %6 = tpu.iota {dimensions = array<i32: 1>} : vector<256x8xi32>
    %c0_i32 = arith.constant 0 : i32
    %7 = vector.broadcast %c0_i32 : i32 to vector<256x8xi32>
    %8 = arith.cmpi eq, %6, %7 : vector<256x8xi32>
    %c1_i32 = arith.constant 1 : i32
    %9 = vector.broadcast %c1_i32 : i32 to vector<256x8xi32>
    %10 = arith.cmpi eq, %6, %9 : vector<256x8xi32>
    %11 = math.sin %2 : vector<256x8xf32>
    %c2_i32 = arith.constant 2 : i32
    %12 = vector.broadcast %c2_i32 : i32 to vector<256x8xi32>
    %13 = arith.cmpi eq, %6, %12 : vector<256x8xi32>
    %14 = math.cos %2 : vector<256x8xf32>
    %c3_i32 = arith.constant 3 : i32
    %15 = vector.broadcast %c3_i32 : i32 to vector<256x8xi32>
    %16 = arith.cmpi eq, %6, %15 : vector<256x8xi32>
    %c4_i32 = arith.constant 4 : i32
    %17 = vector.broadcast %c4_i32 : i32 to vector<256x8xi32>
    %18 = arith.cmpi eq, %6, %17 : vector<256x8xi32>
    %c5_i32 = arith.constant 5 : i32
    %19 = vector.broadcast %c5_i32 : i32 to vector<256x8xi32>
    %20 = arith.cmpi eq, %6, %19 : vector<256x8xi32>
    %cst = arith.constant 0.000000e+00 : f32
    %21 = vector.broadcast %cst : f32 to vector<256x8xf32>
    %22 = arith.select %20, %5, %21 : vector<256x8xi1>, vector<256x8xf32>
    %23 = arith.select %18, %4, %22 : vector<256x8xi1>, vector<256x8xf32>
    %24 = arith.select %16, %3, %23 : vector<256x8xi1>, vector<256x8xf32>
    %25 = arith.select %13, %14, %24 : vector<256x8xi1>, vector<256x8xf32>
    %26 = arith.select %10, %11, %25 : vector<256x8xi1>, vector<256x8xf32>
    %27 = arith.select %8, %2, %26 : vector<256x8xi1>, vector<256x8xf32>
    %28 = arith.truncf %27 : vector<256x8xf32> to vector<256x8xbf16>
    %c0_1 = arith.constant 0 : index
    %c0_2 = arith.constant 0 : index
    %29 = vector.load %arg2[%c0_1, %c0_2] : memref<8x128xbf16, #tpu.memory_space<vmem>>, vector<8x128xbf16>
    %cst_3 = arith.constant dense<0.000000e+00> : vector<256x128xf32>
    %30 = tpu.matmul %28, %29, %cst_3 {dimension_numbers = #tpu.dot_dimension_numbers<[1], [0], [0], [1], [0, 0, 1, 1], [], []>} : vector<256x8xbf16>, vector<8x128xbf16>, vector<256x128xf32> -> vector<256x128xf32>
    %c0_4 = arith.constant 0 : index
    %c0_5 = arith.constant 0 : index
    %31 = vector.load %arg3[%c0_4, %c0_5] : memref<1x128xf32, #tpu.memory_space<vmem>>, vector<1x128xf32>
    %32 = vector.broadcast %31 : vector<1x128xf32> to vector<256x128xf32>
    %33 = arith.addf %30, %32 : vector<256x128xf32>
    %cst_6 = arith.constant 0.000000e+00 : f32
    %34 = vector.broadcast %cst_6 : f32 to vector<256x128xf32>
    %35 = arith.maximumf %33, %34 : vector<256x128xf32>
    %36 = arith.truncf %35 : vector<256x128xf32> to vector<256x128xbf16>
    %c0_7 = arith.constant 0 : index
    %c0_8 = arith.constant 0 : index
    %37 = vector.load %arg4[%c0_7, %c0_8] : memref<128x256xbf16, #tpu.memory_space<vmem>>, vector<128x256xbf16>
    %cst_9 = arith.constant dense<0.000000e+00> : vector<256x256xf32>
    %38 = tpu.matmul %36, %37, %cst_9 {dimension_numbers = #tpu.dot_dimension_numbers<[1], [0], [0], [1], [0, 0, 1, 1], [], []>} : vector<256x128xbf16>, vector<128x256xbf16>, vector<256x256xf32> -> vector<256x256xf32>
    %c0_10 = arith.constant 0 : index
    %c0_11 = arith.constant 0 : index
    %39 = vector.load %arg5[%c0_10, %c0_11] : memref<1x256xf32, #tpu.memory_space<vmem>>, vector<1x256xf32>
    %40 = vector.broadcast %39 : vector<1x256xf32> to vector<256x256xf32>
    %41 = arith.addf %38, %40 : vector<256x256xf32>
    %cst_12 = arith.constant 0.000000e+00 : f32
    %42 = vector.broadcast %cst_12 : f32 to vector<256x256xf32>
    %43 = arith.maximumf %41, %42 : vector<256x256xf32>
    %44 = arith.truncf %43 : vector<256x256xf32> to vector<256x256xbf16>
    %c0_13 = arith.constant 0 : index
    %c0_14 = arith.constant 0 : index
    %45 = vector.load %arg6[%c0_13, %c0_14] : memref<256x128xbf16, #tpu.memory_space<vmem>>, vector<256x128xbf16>
    %cst_15 = arith.constant dense<0.000000e+00> : vector<256x128xf32>
    %46 = tpu.matmul %44, %45, %cst_15 {dimension_numbers = #tpu.dot_dimension_numbers<[1], [0], [0], [1], [0, 0, 1, 1], [], []>} : vector<256x256xbf16>, vector<256x128xbf16>, vector<256x128xf32> -> vector<256x128xf32>
    %c0_16 = arith.constant 0 : index
    %c0_17 = arith.constant 0 : index
    %47 = vector.load %arg7[%c0_16, %c0_17] : memref<1x128xf32, #tpu.memory_space<vmem>>, vector<1x128xf32>
    %48 = vector.broadcast %47 : vector<1x128xf32> to vector<256x128xf32>
    %49 = arith.addf %46, %48 : vector<256x128xf32>
    %cst_18 = arith.constant 0.000000e+00 : f32
    %50 = vector.broadcast %cst_18 : f32 to vector<256x128xf32>
    %51 = arith.maximumf %49, %50 : vector<256x128xf32>
    %52 = arith.truncf %51 : vector<256x128xf32> to vector<256x128xbf16>
    %c0_19 = arith.constant 0 : index
    %c0_20 = arith.constant 0 : index
    %53 = vector.load %arg8[%c0_19, %c0_20] : memref<128x2xbf16, #tpu.memory_space<vmem>>, vector<128x2xbf16>
    %cst_21 = arith.constant dense<0.000000e+00> : vector<256x2xf32>
    %54 = tpu.matmul %52, %53, %cst_21 {dimension_numbers = #tpu.dot_dimension_numbers<[1], [0], [0], [1], [0, 0, 1, 1], [], []>} : vector<256x128xbf16>, vector<128x2xbf16>, vector<256x2xf32> -> vector<256x2xf32>
    %c0_22 = arith.constant 0 : index
    %c0_23 = arith.constant 0 : index
    %55 = vector.load %arg9[%c0_22, %c0_23] : memref<1x2xf32, #tpu.memory_space<vmem>>, vector<1x2xf32>
    %56 = vector.broadcast %55 : vector<1x2xf32> to vector<256x2xf32>
    %57 = arith.addf %54, %56 : vector<256x2xf32>
    %c0_24 = arith.constant 0 : index
    %c0_25 = arith.constant 0 : index
    %58 = vector.load %arg10[%c0_24, %c0_25] : memref<256x2xf32, #tpu.memory_space<vmem>>, vector<256x2xf32>
    tpu.vector_store %arg10[%c0_24, %c0_25], %57 {strides = array<i32>} : memref<256x2xf32, #tpu.memory_space<vmem>>, vector<256x2xf32>,
    return
  }
  func.func @transform_0(%arg0: i32) -> (i32, i32) {
    %c0_i32 = arith.constant 0 : i32
    %c0_i32_0 = arith.constant 0 : i32
    return %arg0, %c0_i32 : i32, i32
  }
  func.func @transform_1(%arg0: i32) -> (i32, i32) {
    %c0_i32 = arith.constant 0 : i32
    %c0_i32_0 = arith.constant 0 : i32
    %c0_i32_1 = arith.constant 0 : i32
    return %c0_i32, %c0_i32_0 : i32, i32
  }
  func.func @transform_2(%arg0: i32) -> (i32, i32) {
    %c0_i32 = arith.constant 0 : i32
    %c0_i32_0 = arith.constant 0 : i32
    %c0_i32_1 = arith.constant 0 : i32
    return %c0_i32, %c0_i32_0 : i32, i32
  }
  func.func @transform_3(%arg0: i32) -> (i32, i32) {
    %c0_i32 = arith.constant 0 : i32
    %c0_i32_0 = arith.constant 0 : i32
    %c0_i32_1 = arith.constant 0 : i32
    return %c0_i32, %c0_i32_0 : i32, i32
  }
  func.func @transform_4(%arg0: i32) -> (i32, i32) {
    %c0_i32 = arith.constant 0 : i32
    %c0_i32_0 = arith.constant 0 : i32
    %c0_i32_1 = arith.constant 0 : i32
    return %c0_i32, %c0_i32_0 : i32, i32
  }
  func.func @transform_5(%arg0: i32) -> (i32, i32) {
    %c0_i32 = arith.constant 0 : i32
    %c0_i32_0 = arith.constant 0 : i32
    %c0_i32_1 = arith.constant 0 : i32
    return %c0_i32, %c0_i32_0 : i32, i32
  }
  func.func @transform_6(%arg0: i32) -> (i32, i32) {
    %c0_i32 = arith.constant 0 : i32
    %c0_i32_0 = arith.constant 0 : i32
    %c0_i32_1 = arith.constant 0 : i32
    return %c0_i32, %c0_i32_0 : i32, i32
  }
  func.func @transform_7(%arg0: i32) -> (i32, i32) {
    %c0_i32 = arith.constant 0 : i32
    %c0_i32_0 = arith.constant 0 : i32
    %c0_i32_1 = arith.constant 0 : i32
    return %c0_i32, %c0_i32_0 : i32, i32
  }
  func.func @transform_8(%arg0: i32) -> (i32, i32) {
    %c0_i32 = arith.constant 0 : i32
    %c0_i32_0 = arith.constant 0 : i32
    %c0_i32_1 = arith.constant 0 : i32
    return %c0_i32, %c0_i32_0 : i32, i32
  }
  func.func @transform_9(%arg0: i32) -> (i32, i32) {
    %c0_i32 = arith.constant 0 : i32
    %c0_i32_0 = arith.constant 0 : i32
    return %arg0, %c0_i32 : i32, i32
  }
}

</mosaic_0001>

<llo_original>
// kernel: extrapolation_net.1
$region0: #{extrapolation_net.1}
  #allocation0 [shape = 'u32[]', space=smem, size = 0x4, offset = 0x4, fixed_abs, tag = 'smem constant byte address 0x4 - core index']
  #allocation1 [shape = 'u32[72,128]{1,0:T(1,128)}', space=vmem, size = 0x9000, scoped, tag = 'internal scratch']
  %s0 = inlined_call_operand.vmem [shape: f32[256,1], index: 0, kind: input, shape index: {}]
  %s1 = inlined_call_operand.vmem [shape: bf16[8,128], index: 1, kind: input, shape index: {}]
  %s2 = inlined_call_operand.vmem [shape: f32[1,128], index: 2, kind: input, shape index: {}]
  %s3 = inlined_call_operand.vmem [shape: bf16[128,256], index: 3, kind: input, shape index: {}]
  %s4 = inlined_call_operand.vmem [shape: f32[1,256], index: 4, kind: input, shape index: {}]
  %s5 = inlined_call_operand.vmem [shape: bf16[256,128], index: 5, kind: input, shape index: {}]
  %s6 = inlined_call_operand.vmem [shape: f32[1,128], index: 6, kind: input, shape index: {}]
  %s7 = inlined_call_operand.vmem [shape: bf16[128,2], index: 7, kind: input, shape index: {}]
  %s8 = inlined_call_operand.vmem [shape: f32[1,2], index: 8, kind: input, shape index: {}]
  %s9 = inlined_call_operand.vmem [shape: f32[256,2], index: 9, kind: output, shape index: {}]
  %s10 = sld [smem:[#allocation0]]
  $region46: #{extrapolation_net.1} parent=0
    _
  %s12 = ssub.s32 1, %s10
  %s13 = scalar_select 0, %s12, %s10
  // Predicated region
  $region2: #{extrapolation_net.1} parent=0 // pred_check
    _
  $region3: #{extrapolation_net.1} parent=0 // pred_check_branch
    %15 = sbr.rel (0) target = $region5
  $region4: #{extrapolation_net.1} parent=0 // pred_region
    _
  $region5: #{extrapolation_net.1} parent=0 // pred_fallthru
    _
  // Predicated region
  $region6: #{extrapolation_net.1} parent=0 // pred_check
    _
  $region7: #{extrapolation_net.1} parent=0 // pred_check_branch
    %17 = sbr.rel (0) target = $region9
  $region8: #{extrapolation_net.1} parent=0 // pred_region
    _
  $region9: #{extrapolation_net.1} parent=0 // pred_fallthru
    _
  // Predicated region
  $region10: #{extrapolation_net.1} parent=0 // pred_check
    _
  $region11: #{extrapolation_net.1} parent=0 // pred_check_branch
    %19 = sbr.rel (0) target = $region13
  $region12: #{extrapolation_net.1} parent=0 // pred_region
    _
  $region13: #{extrapolation_net.1} parent=0 // pred_fallthru
    _
  // Predicated region
  $region14: #{extrapolation_net.1} parent=0 // pred_check
    _
  $region15: #{extrapolation_net.1} parent=0 // pred_check_branch
    %21 = sbr.rel (0) target = $region17
  $region16: #{extrapolation_net.1} parent=0 // pred_region
    _
  $region17: #{extrapolation_net.1} parent=0 // pred_fallthru
    _
  // Predicated region
  $region18: #{extrapolation_net.1} parent=0 // pred_check
    _
  $region19: #{extrapolation_net.1} parent=0 // pred_check_branch
    %23 = sbr.rel (0) target = $region21
  $region20: #{extrapolation_net.1} parent=0 // pred_region
    _
  $region21: #{extrapolation_net.1} parent=0 // pred_fallthru
    _
  // Predicated region
  $region22: #{extrapolation_net.1} parent=0 // pred_check
    _
  $region23: #{extrapolation_net.1} parent=0 // pred_check_branch
    %25 = sbr.rel (0) target = $region25
  $region24: #{extrapolation_net.1} parent=0 // pred_region
    _
  $region25: #{extrapolation_net.1} parent=0 // pred_fallthru
    _
  // Predicated region
  $region26: #{extrapolation_net.1} parent=0 // pred_check
    _
  $region27: #{extrapolation_net.1} parent=0 // pred_check_branch
    %27 = sbr.rel (0) target = $region29
  $region28: #{extrapolation_net.1} parent=0 // pred_region
    _
  $region29: #{extrapolation_net.1} parent=0 // pred_fallthru
    _
  // Predicated region
  $region30: #{extrapolation_net.1} parent=0 // pred_check
    _
  $region31: #{extrapolation_net.1} parent=0 // pred_check_branch
    %29 = sbr.rel (0) target = $region33
  $region32: #{extrapolation_net.1} parent=0 // pred_region
    _
  $region33: #{extrapolation_net.1} parent=0 // pred_fallthru
    _
  // Predicated region
  $region34: #{extrapolation_net.1} parent=0 // pred_check
    _
  $region35: #{extrapolation_net.1} parent=0 // pred_check_branch
    %31 = sbr.rel (0) target = $region37
  $region36: #{extrapolation_net.1} parent=0 // pred_region
    _
  $region37: #{extrapolation_net.1} parent=0 // pred_fallthru
    _
  %v33 = vld [vmem:[%s0] sm:$0xff]
  %v34 = vld [vmem:[%s0 + $0x8] sm:$0xff]
  %v35 = vld [vmem:[%s0 + $0x10] sm:$0xff]
  %v36 = vld [vmem:[%s0 + $0x18] sm:$0xff]
  %v37 = vld [vmem:[%s0 + $0x20] sm:$0xff]
  %v38 = vld [vmem:[%s0 + $0x28] sm:$0xff]
  %v39 = vld [vmem:[%s0 + $0x30] sm:$0xff]
  %v40 = vld [vmem:[%s0 + $0x38] sm:$0xff]
  %v41 = vld [vmem:[%s0 + $0x40] sm:$0xff]
  %v42 = vld [vmem:[%s0 + $0x48] sm:$0xff]
  %v43 = vld [vmem:[%s0 + $0x50] sm:$0xff]
  %v44 = vld [vmem:[%s0 + $0x58] sm:$0xff]
  %v45 = vld [vmem:[%s0 + $0x60] sm:$0xff]
  %v46 = vld [vmem:[%s0 + $0x68] sm:$0xff]
  %v47 = vld [vmem:[%s0 + $0x70] sm:$0xff]
  %v48 = vld [vmem:[%s0 + $0x78] sm:$0xff]
  %v49 = vld [vmem:[%s0 + $0x80] sm:$0xff]
  %v50 = vld [vmem:[%s0 + $0x88] sm:$0xff]
  %v51 = vld [vmem:[%s0 + $0x90] sm:$0xff]
  %v52 = vld [vmem:[%s0 + $0x98] sm:$0xff]
  %v53 = vld [vmem:[%s0 + $0xa0] sm:$0xff]
  %v54 = vld [vmem:[%s0 + $0xa8] sm:$0xff]
  %v55 = vld [vmem:[%s0 + $0xb0] sm:$0xff]
  %v56 = vld [vmem:[%s0 + $0xb8] sm:$0xff]
  %v57 = vld [vmem:[%s0 + $0xc0] sm:$0xff]
  %v58 = vld [vmem:[%s0 + $0xc8] sm:$0xff]
  %v59 = vld [vmem:[%s0 + $0xd0] sm:$0xff]
  %v60 = vld [vmem:[%s0 + $0xd8] sm:$0xff]
  %v61 = vld [vmem:[%s0 + $0xe0] sm:$0xff]
  %v62 = vld [vmem:[%s0 + $0xe8] sm:$0xff]
  %v63 = vld [vmem:[%s0 + $0xf0] sm:$0xff]
  %v64 = vld [vmem:[%s0 + $0xf8] sm:$0xff]
  %66 = vset.pattern.permute.xlu0 0
  %67 = vperm.xlu0 %66, %v33
  %v68 = vpop.permute.xlu0 %67
  %71 = vset.pattern.permute.xlu0 0
  %72 = vperm.xlu0 %71, %v34
  %v73 = vpop.permute.xlu0 %72
  %76 = vset.pattern.permute.xlu0 0
  %77 = vperm.xlu0 %76, %v35
  %v78 = vpop.permute.xlu0 %77
  %81 = vset.pattern.permute.xlu0 0
  %82 = vperm.xlu0 %81, %v36
  %v83 = vpop.permute.xlu0 %82
  %86 = vset.pattern.permute.xlu0 0
  %87 = vperm.xlu0 %86, %v37
  %v88 = vpop.permute.xlu0 %87
  %91 = vset.pattern.permute.xlu0 0
  %92 = vperm.xlu0 %91, %v38
  %v93 = vpop.permute.xlu0 %92
  %96 = vset.pattern.permute.xlu0 0
  %97 = vperm.xlu0 %96, %v39
  %v98 = vpop.permute.xlu0 %97
  %101 = vset.pattern.permute.xlu0 0
  %102 = vperm.xlu0 %101, %v40
  %v103 = vpop.permute.xlu0 %102
  %106 = vset.pattern.permute.xlu0 0
  %107 = vperm.xlu0 %106, %v41
  %v108 = vpop.permute.xlu0 %107
  %111 = vset.pattern.permute.xlu0 0
  %112 = vperm.xlu0 %111, %v42
  %v113 = vpop.permute.xlu0 %112
  %116 = vset.pattern.permute.xlu0 0
  %117 = vperm.xlu0 %116, %v43
  %v118 = vpop.permute.xlu0 %117
  %121 = vset.pattern.permute.xlu0 0
  %122 = vperm.xlu0 %121, %v44
  %v123 = vpop.permute.xlu0 %122
  %126 = vset.pattern.permute.xlu0 0
  %127 = vperm.xlu0 %126, %v45
  %v128 = vpop.permute.xlu0 %127
  %131 = vset.pattern.permute.xlu0 0
  %132 = vperm.xlu0 %131, %v46
  %v133 = vpop.permute.xlu0 %132
  %136 = vset.pattern.permute.xlu0 0
  %137 = vperm.xlu0 %136, %v47
  %v138 = vpop.permute.xlu0 %137
  %141 = vset.pattern.permute.xlu0 0
  %142 = vperm.xlu0 %141, %v48
  %v143 = vpop.permute.xlu0 %142
  %146 = vset.pattern.permute.xlu0 0
  %147 = vperm.xlu0 %146, %v49
  %v148 = vpop.permute.xlu0 %147
  %151 = vset.pattern.permute.xlu0 0
  %152 = vperm.xlu0 %151, %v50
  %v153 = vpop.permute.xlu0 %152
  %156 = vset.pattern.permute.xlu0 0
  %157 = vperm.xlu0 %156, %v51
  %v158 = vpop.permute.xlu0 %157
  %161 = vset.pattern.permute.xlu0 0
  %162 = vperm.xlu0 %161, %v52
  %v163 = vpop.permute.xlu0 %162
  %166 = vset.pattern.permute.xlu0 0
  %167 = vperm.xlu0 %166, %v53
  %v168 = vpop.permute.xlu0 %167
  %171 = vset.pattern.permute.xlu0 0
  %172 = vperm.xlu0 %171, %v54
  %v173 = vpop.permute.xlu0 %172
  %176 = vset.pattern.permute.xlu0 0
  %177 = vperm.xlu0 %176, %v55
  %v178 = vpop.permute.xlu0 %177
  %181 = vset.pattern.permute.xlu0 0
  %182 = vperm.xlu0 %181, %v56
  %v183 = vpop.permute.xlu0 %182
  %186 = vset.pattern.permute.xlu0 0
  %187 = vperm.xlu0 %186, %v57
  %v188 = vpop.permute.xlu0 %187
  %191 = vset.pattern.permute.xlu0 0
  %192 = vperm.xlu0 %191, %v58
  %v193 = vpop.permute.xlu0 %192
  %196 = vset.pattern.permute.xlu0 0
  %197 = vperm.xlu0 %196, %v59
  %v198 = vpop.permute.xlu0 %197
  %201 = vset.pattern.permute.xlu0 0
  %202 = vperm.xlu0 %201, %v60
  %v203 = vpop.permute.xlu0 %202
  %206 = vset.pattern.permute.xlu0 0
  %207 = vperm.xlu0 %206, %v61
  %v208 = vpop.permute.xlu0 %207
  %211 = vset.pattern.permute.xlu0 0
  %212 = vperm.xlu0 %211, %v62
  %v213 = vpop.permute.xlu0 %212
  %216 = vset.pattern.permute.xlu0 0
  %217 = vperm.xlu0 %216, %v63
  %v218 = vpop.permute.xlu0 %217
  %221 = vset.pattern.permute.xlu0 0
  %222 = vperm.xlu0 %221, %v64
  %v223 = vpop.permute.xlu0 %222
  %v225 = vmul.f32 %v68, %v68
  %v226 = vmul.f32 %v73, %v73
  %v227 = vmul.f32 %v78, %v78
  %v228 = vmul.f32 %v83, %v83
  %v229 = vmul.f32 %v88, %v88
  %v230 = vmul.f32 %v93, %v93
  %v231 = vmul.f32 %v98, %v98
  %v232 = vmul.f32 %v103, %v103
  %v233 = vmul.f32 %v108, %v108
  %v234 = vmul.f32 %v113, %v113
  %v235 = vmul.f32 %v118, %v118
  %v236 = vmul.f32 %v123, %v123
  %v237 = vmul.f32 %v128, %v128
  %v238 = vmul.f32 %v133, %v133
  %v239 = vmul.f32 %v138, %v138
  %v240 = vmul.f32 %v143, %v143
  %v241 = vmul.f32 %v148, %v148
  %v242 = vmul.f32 %v153, %v153
  %v243 = vmul.f32 %v158, %v158
  %v244 = vmul.f32 %v163, %v163
  %v245 = vmul.f32 %v168, %v168
  %v246 = vmul.f32 %v173, %v173
  %v247 = vmul.f32 %v178, %v178
  %v248 = vmul.f32 %v183, %v183
  %v249 = vmul.f32 %v188, %v188
  %v250 = vmul.f32 %v193, %v193
  %v251 = vmul.f32 %v198, %v198
  %v252 = vmul.f32 %v203, %v203
  %v253 = vmul.f32 %v208, %v208
  %v254 = vmul.f32 %v213, %v213
  %v255 = vmul.f32 %v218, %v218
  %v256 = vmul.f32 %v223, %v223
  %v257 = vmul.f32 %v225, %v68
  %v258 = vmul.f32 %v226, %v73
  %v259 = vmul.f32 %v227, %v78
  %v260 = vmul.f32 %v228, %v83
  %v261 = vmul.f32 %v229, %v88
  %v262 = vmul.f32 %v230, %v93
  %v263 = vmul.f32 %v231, %v98
  %v264 = vmul.f32 %v232, %v103
  %v265 = vmul.f32 %v233, %v108
  %v266 = vmul.f32 %v234, %v113
  %v267 = vmul.f32 %v235, %v118
  %v268 = vmul.f32 %v236, %v123
  %v269 = vmul.f32 %v237, %v128
  %v270 = vmul.f32 %v238, %v133
  %v271 = vmul.f32 %v239, %v138
  %v272 = vmul.f32 %v240, %v143
  %v273 = vmul.f32 %v241, %v148
  %v274 = vmul.f32 %v242, %v153
  %v275 = vmul.f32 %v243, %v158
  %v276 = vmul.f32 %v244, %v163
  %v277 = vmul.f32 %v245, %v168
  %v278 = vmul.f32 %v246, %v173
  %v279 = vmul.f32 %v247, %v178
  %v280 = vmul.f32 %v248, %v183
  %v281 = vmul.f32 %v249, %v188
  %v282 = vmul.f32 %v250, %v193
  %v283 = vmul.f32 %v251, %v198
  %v284 = vmul.f32 %v252, %v203
  %v285 = vmul.f32 %v253, %v208
  %v286 = vmul.f32 %v254, %v213
  %v287 = vmul.f32 %v255, %v218
  %v288 = vmul.f32 %v256, %v223
  %v289 = vmul.f32 %v225, %v225
  %v290 = vmul.f32 %v226, %v226
  %v291 = vmul.f32 %v227, %v227
  %v292 = vmul.f32 %v228, %v228
  %v293 = vmul.f32 %v229, %v229
  %v294 = vmul.f32 %v230, %v230
  %v295 = vmul.f32 %v231, %v231
  %v296 = vmul.f32 %v232, %v232
  %v297 = vmul.f32 %v233, %v233
  %v298 = vmul.f32 %v234, %v234
  %v299 = vmul.f32 %v235, %v235
  %v300 = vmul.f32 %v236, %v236
  %v301 = vmul.f32 %v237, %v237
  %v302 = vmul.f32 %v238, %v238
  %v303 = vmul.f32 %v239, %v239
  %v304 = vmul.f32 %v240, %v240
  %v305 = vmul.f32 %v241, %v241
  %v306 = vmul.f32 %v242, %v242
  %v307 = vmul.f32 %v243, %v243
  %v308 = vmul.f32 %v244, %v244
  %v309 = vmul.f32 %v245, %v245
  %v310 = vmul.f32 %v246, %v246
  %v311 = vmul.f32 %v247, %v247
  %v312 = vmul.f32 %v248, %v248
  %v313 = vmul.f32 %v249, %v249
  %v314 = vmul.f32 %v250, %v250
  %v315 = vmul.f32 %v251, %v251
  %v316 = vmul.f32 %v252, %v252
  %v317 = vmul.f32 %v253, %v253
  %v318 = vmul.f32 %v254, %v254
  %v319 = vmul.f32 %v255, %v255
  %v320 = vmul.f32 %v256, %v256
  %v321 = vlaneseq
  %v322 = vand.u32 %v321, 127
  %vm323 = vcmp.eq.s32.totalorder %v322, 0
  %vm324 = vcmp.eq.s32.totalorder %v322, 1
  %v325 = vand.u32 2147483647, %v68
  %vm326 = vcmp.le.f32.partialorder %v325, 0.7853982
  %vm327 = vcmp.lt.s32.totalorder %v68, 0
  %v328 = vand.u32 %v68, 2139095040
  %v329 = vshrl.u32 %v328, 23
  %v330 = vsub.s32 %v329, 127
  %v331 = vand.u32 2147483647, %v68
  %v332 = vand.u32 %v331, 8388607
  %v333 = vor.u32 %v332, 8388608
  %v334 = vsub.s32 0, %v333
  %v335 = vadd.s32 %v330, 1
  %vm336 = vcmp.gt.s32.totalorder %v335, 0
  %v337 = vsel %vm336, %v335, 0
  %v338 = vshrl.u32 %v337, 5
  %v339 = vand.u32 %v337, 31
  %v340 = vsub.s32 32, %v339
  %v341 = vshrl.u32 683565275, %v340
  %v342 = vshll.u32 683565275, %v339
  %v343 = vshrl.u32 2475754826, %v340
  %v344 = vor.u32 %v342, %v343
  %v345 = vshll.u32 2475754826, %v339
  %v346 = vshrl.u32 2131351028, %v340
  %v347 = vor.u32 %v345, %v346
  %v348 = vshll.u32 2131351028, %v339
  %v349 = vshrl.u32 2102212464, %v340
  %v350 = vor.u32 %v348, %v349
  %v351 = vshll.u32 2102212464, %v339
  %v352 = vshrl.u32 920167782, %v340
  %v353 = vor.u32 %v351, %v352
  %v354 = vshll.u32 920167782, %v339
  %v355 = vshrl.u32 1326507024, %v340
  %v356 = vor.u32 %v354, %v355
  %vm357 = vcmp.lt.s32.totalorder %v338, 1
  %vm358 = vcmp.lt.s32.totalorder %v338, 2
  %vm359 = vcmp.lt.s32.totalorder %v338, 3
  %vm360 = vcmp.lt.s32.totalorder %v338, 4
  %v361 = vsel %vm357, %v341, %v344
  %v362 = vsel %vm360, %v350, 2102212464
  %v363 = vsel %vm359, %v347, %v362
  %v364 = vsel %vm358, %v361, %v363
  %v365 = vsel %vm357, %v344, %v347
  %v366 = vsel %vm360, %v353, 920167782
  %v367 = vsel %vm359, %v350, %v366
  %v368 = vsel %vm358, %v365, %v367
  %v369 = vsel %vm357, %v347, %v350
  %v370 = vsel %vm360, %v356, 1326507024
  %v371 = vsel %vm359, %v353, %v370
  %v372 = vsel %vm358, %v369, %v371
  %v373 = vshll.u32 %v333, 8
  %v374 = vand.u32 %v373, 65535
  %v375 = vshrl.u32 %v373, 16
  %v376 = vand.u32 %v372, 65535
  %v377 = vshrl.u32 %v372, 16
  %v378 = vmul.u32 %v374, %v376
  %v379 = vmul.u32 %v374, %v377
  %v380 = vmul.u32 %v375, %v376
  %v381 = vmul.u32 %v375, %v377
  %v382 = vshll.u32 %v379, 16
  %v383 = vshrl.u32 %v379, 16
  %v384 = vshll.u32 %v380, 16
  %v385 = vshrl.u32 %v380, 16
  %vm386 = vc.u32 %v378, %v382
  %v387 = vsel %vm386, 1, 0
  %v388 = vadd.s32 %v378, %v382
  %v389 = vadd.s32 %v381, %v387
  %vm390 = vc.u32 %v388, %v384
  %v391 = vsel %vm390, 1, 0
  %v392 = vadd.s32 %v388, %v384
  %v393 = vadd.s32 %v389, %v391
  %v394 = vadd.s32 %v393, %v383
  %v395 = vadd.s32 %v394, %v385
  %v396 = vand.u32 %v373, 65535
  %v397 = vshrl.u32 %v373, 16
  %v398 = vand.u32 %v368, 65535
  %v399 = vshrl.u32 %v368, 16
  %v400 = vmul.u32 %v396, %v398
  %v401 = vmul.u32 %v396, %v399
  %v402 = vmul.u32 %v397, %v398
  %v403 = vmul.u32 %v397, %v399
  %v404 = vshll.u32 %v401, 16
  %v405 = vshrl.u32 %v401, 16
  %v406 = vshll.u32 %v402, 16
  %v407 = vshrl.u32 %v402, 16
  %vm408 = vc.u32 %v400, %v404
  %v409 = vsel %vm408, 1, 0
  %v410 = vadd.s32 %v400, %v404
  %v411 = vadd.s32 %v403, %v409
  %vm412 = vc.u32 %v410, %v406
  %v413 = vsel %vm412, 1, 0
  %v414 = vadd.s32 %v410, %v406
  %v415 = vadd.s32 %v411, %v413
  %v416 = vadd.s32 %v415, %v405
  %v417 = vadd.s32 %v416, %v407
  %v418 = vmul.u32 %v373, %v364
  %v419 = vadd.s32 %v395, %v414
  %vm420 = vc.u32 %v395, %v414
  %v421 = vadd.s32 %v417, 1
  %v422 = vsel %vm420, %v421, %v417
  %v423 = vadd.s32 %v418, %v422
  %v424 = vadd.s32 %v423, 536870912
  %v425 = vshrl.u32 %v424, 30
  %v426 = vshll.u32 %v425, 30
  %v427 = vsub.s32 %v423, %v426
  %vm428 = vcmp.lt.s32.totalorder %v427, 0
  %v429 = vsub.s32 0, %v427
  %v430 = vsel %vm428, %v429, %v427
  %v431 = vclz %v430
  %v432 = vsub.s32 %v431, 2
  %vm433 = vcmp.gt.s32.totalorder 0, %v432
  %v434 = vsel %vm433, 0, %v432
  %v435 = vsub.s32 32, %v434
  %v436 = vshll.u32 %v427, %v434
  %v437 = vshrl.u32 %v419, %v435
  %v438 = vor.u32 %v436, %v437
  %v439 = vsub.s32 4294967266, %v434
  %v440 = vadd.s32 %v439, 127
  %v441 = vshll.u32 %v440, 23
  %v442 = vor.u32 4788187, %v441
  %v443 = vand.u32 2147483647, %v442
  %v445 = vcvt.s32.f32 %v438
  %v446 = vmul.f32 %v445, %v443
  %v447 = vxor.u32 %v446, 2147483648
  %v448 = vsel %vm327, %v447, %v446
  %v449 = vsub.s32 4, %v425
  %v450 = vsel %vm327, %v449, %v425
  %v451 = vsel %vm326, %v68, %v448
  %v452 = vsel %vm326, 0, %v450
  %v453 = vmul.f32 %v451, %v451
  %v454 = vmul.f32 %v453, -0.001358992
  %v455 = vadd.f32 %v454, 0.041655596
  %v456 = vmul.f32 %v453, %v455
  %v457 = vadd.f32 %v456, -0.4999988
  %v458 = vmul.f32 %v453, %v457
  %v459 = vadd.f32 1.0, %v458
  %v460 = vmul.f32 %v451, %v451
  %v461 = vmul.f32 %v460, -0.00019511016
  %v462 = vadd.f32 %v461, 0.008332121
  %v463 = vmul.f32 %v460, %v462
  %v464 = vadd.f32 %v463, -0.16666654
  %v465 = vmul.f32 %v460, %v464
  %v466 = vadd.f32 %v465, 1.0
  %v467 = vmul.f32 %v466, %v451
  %vm468 = vweird.f32 %v68
  %v469 = vadd.s32 %v452, 3
  %v470 = vand.u32 %v469, 3
  %vm471 = vcmp.lt.s32.totalorder %v470, 2
  %vm472 = vcmp.eq.s32.totalorder %v470, 0
  %v473 = vxor.u32 %v467, 2147483648
  %v474 = vsel %vm472, %v459, %v473
  %vm475 = vcmp.eq.s32.totalorder %v470, 2
  %v476 = vxor.u32 %v459, 2147483648
  %v477 = vsel %vm475, %v476, %v467
  %v478 = vsel %vm471, %v474, %v477
  %v479 = vsel %vm468, nan, %v478
  %v480 = vand.u32 2147483647, %v73
  %vm481 = vcmp.le.f32.partialorder %v480, 0.7853982
  %vm482 = vcmp.lt.s32.totalorder %v73, 0
  %v483 = vand.u32 %v73, 2139095040
  %v484 = vshrl.u32 %v483, 23
  %v485 = vsub.s32 %v484, 127
  %v486 = vand.u32 2147483647, %v73
  %v487 = vand.u32 %v486, 8388607
  %v488 = vor.u32 %v487, 8388608
  %v489 = vsub.s32 0, %v488
  %v490 = vadd.s32 %v485, 1
  %vm491 = vcmp.gt.s32.totalorder %v490, 0
  %v492 = vsel %vm491, %v490, 0
  %v493 = vshrl.u32 %v492, 5
  %v494 = vand.u32 %v492, 31
  %v495 = vsub.s32 32, %v494
  %v496 = vshrl.u32 683565275, %v495
  %v497 = vshll.u32 683565275, %v494
  %v498 = vshrl.u32 2475754826, %v495
  %v499 = vor.u32 %v497, %v498
  %v500 = vshll.u32 2475754826, %v494
  %v501 = vshrl.u32 2131351028, %v495
  %v502 = vor.u32 %v500, %v501
  %v503 = vshll.u32 2131351028, %v494
  %v504 = vshrl.u32 2102212464, %v495
  %v505 = vor.u32 %v503, %v504
  %v506 = vshll.u32 2102212464, %v494
  %v507 = vshrl.u32 920167782, %v495
  %v508 = vor.u32 %v506, %v507
  %v509 = vshll.u32 920167782, %v494
  %v510 = vshrl.u32 1326507024, %v495
  %v511 = vor.u32 %v509, %v510
  %vm512 = vcmp.lt.s32.totalorder %v493, 1
  %vm513 = vcmp.lt.s32.totalorder %v493, 2
  %vm514 = vcmp.lt.s32.totalorder %v493, 3
  %vm515 = vcmp.lt.s32.totalorder %v493, 4
  %v516 = vsel %vm512, %v496, %v499
  %v517 = vsel %vm515, %v505, 2102212464
  %v518 = vsel %vm514, %v502, %v517
  %v519 = vsel %vm513, %v516, %v518
  %v520 = vsel %vm512, %v499, %v502
  %v521 = vsel %vm515, %v508, 920167782
  %v522 = vsel %vm514, %v505, %v521
  %v523 = vsel %vm513, %v520, %v522
  %v524 = vsel %vm512, %v502, %v505
  %v525 = vsel %vm515, %v511, 1326507024
  %v526 = vsel %vm514, %v508, %v525
  %v527 = vsel %vm513, %v524, %v526
  %v528 = vshll.u32 %v488, 8
  %v529 = vand.u32 %v528, 65535
  %v530 = vshrl.u32 %v528, 16
  %v531 = vand.u32 %v527, 65535
  %v532 = vshrl.u32 %v527, 16
  %v533 = vmul.u32 %v529, %v531
  %v534 = vmul.u32 %v529, %v532
  %v535 = vmul.u32 %v530, %v531
  %v536 = vmul.u32 %v530, %v532
  %v537 = vshll.u32 %v534, 16
  %v538 = vshrl.u32 %v534, 16
  %v539 = vshll.u32 %v535, 16
  %v540 = vshrl.u32 %v535, 16
  %vm541 = vc.u32 %v533, %v537
  %v542 = vsel %vm541, 1, 0
  %v543 = vadd.s32 %v533, %v537
  %v544 = vadd.s32 %v536, %v542
  %vm545 = vc.u32 %v543, %v539
  %v546 = vsel %vm545, 1, 0
  %v547 = vadd.s32 %v543, %v539
  %v548 = vadd.s32 %v544, %v546
  %v549 = vadd.s32 %v548, %v538
  %v550 = vadd.s32 %v549, %v540
  %v551 = vand.u32 %v528, 65535
  %v552 = vshrl.u32 %v528, 16
  %v553 = vand.u32 %v523, 65535
  %v554 = vshrl.u32 %v523, 16
  %v555 = vmul.u32 %v551, %v553
  %v556 = vmul.u32 %v551, %v554
  %v557 = vmul.u32 %v552, %v553
  %v558 = vmul.u32 %v552, %v554
  %v559 = vshll.u32 %v556, 16
  %v560 = vshrl.u32 %v556, 16
  %v561 = vshll.u32 %v557, 16
  %v562 = vshrl.u32 %v557, 16
  %vm563 = vc.u32 %v555, %v559
  %v564 = vsel %vm563, 1, 0
  %v565 = vadd.s32 %v555, %v559
  %v566 = vadd.s32 %v558, %v564
  %vm567 = vc.u32 %v565, %v561
  %v568 = vsel %vm567, 1, 0
  %v569 = vadd.s32 %v565, %v561
  %v570 = vadd.s32 %v566, %v568
  %v571 = vadd.s32 %v570, %v560
  %v572 = vadd.s32 %v571, %v562
  %v573 = vmul.u32 %v528, %v519
  %v574 = vadd.s32 %v550, %v569
  %vm575 = vc.u32 %v550, %v569
  %v576 = vadd.s32 %v572, 1
  %v577 = vsel %vm575, %v576, %v572
  %v578 = vadd.s32 %v573, %v577
  %v579 = vadd.s32 %v578, 536870912
  %v580 = vshrl.u32 %v579, 30
  %v581 = vshll.u32 %v580, 30
  %v582 = vsub.s32 %v578, %v581
  %vm583 = vcmp.lt.s32.totalorder %v582, 0
  %v584 = vsub.s32 0, %v582
  %v585 = vsel %vm583, %v584, %v582
  %v586 = vclz %v585
  %v587 = vsub.s32 %v586, 2
  %vm588 = vcmp.gt.s32.totalorder 0, %v587
  %v589 = vsel %vm588, 0, %v587
  %v590 = vsub.s32 32, %v589
  %v591 = vshll.u32 %v582, %v589
  %v592 = vshrl.u32 %v574, %v590
  %v593 = vor.u32 %v591, %v592
  %v594 = vsub.s32 4294967266, %v589
  %v595 = vadd.s32 %v594, 127
  %v596 = vshll.u32 %v595, 23
  %v597 = vor.u32 4788187, %v596
  %v598 = vand.u32 2147483647, %v597
  %v600 = vcvt.s32.f32 %v593
  %v601 = vmul.f32 %v600, %v598
  %v602 = vxor.u32 %v601, 2147483648
  %v603 = vsel %vm482, %v602, %v601
  %v604 = vsub.s32 4, %v580
  %v605 = vsel %vm482, %v604, %v580
  %v606 = vsel %vm481, %v73, %v603
  %v607 = vsel %vm481, 0, %v605
  %v608 = vmul.f32 %v606, %v606
  %v609 = vmul.f32 %v608, -0.001358992
  %v610 = vadd.f32 %v609, 0.041655596
  %v611 = vmul.f32 %v608, %v610
  %v612 = vadd.f32 %v611, -0.4999988
  %v613 = vmul.f32 %v608, %v612
  %v614 = vadd.f32 1.0, %v613
  %v615 = vmul.f32 %v606, %v606
  %v616 = vmul.f32 %v615, -0.00019511016
  %v617 = vadd.f32 %v616, 0.008332121
  %v618 = vmul.f32 %v615, %v617
  %v619 = vadd.f32 %v618, -0.16666654
  %v620 = vmul.f32 %v615, %v619
  %v621 = vadd.f32 %v620, 1.0
  %v622 = vmul.f32 %v621, %v606
  %vm623 = vweird.f32 %v73
  %v624 = vadd.s32 %v607, 3
  %v625 = vand.u32 %v624, 3
  %vm626 = vcmp.lt.s32.totalorder %v625, 2
  %vm627 = vcmp.eq.s32.totalorder %v625, 0
  %v628 = vxor.u32 %v622, 2147483648
  %v629 = vsel %vm627, %v614, %v628
  %vm630 = vcmp.eq.s32.totalorder %v625, 2
  %v631 = vxor.u32 %v614, 2147483648
  %v632 = vsel %vm630, %v631, %v622
  %v633 = vsel %vm626, %v629, %v632
  %v634 = vsel %vm623, nan, %v633
  %v635 = vand.u32 2147483647, %v78
  %vm636 = vcmp.le.f32.partialorder %v635, 0.7853982
  %vm637 = vcmp.lt.s32.totalorder %v78, 0
  %v638 = vand.u32 %v78, 2139095040
  %v639 = vshrl.u32 %v638, 23
  %v640 = vsub.s32 %v639, 127
  %v641 = vand.u32 2147483647, %v78
  %v642 = vand.u32 %v641, 8388607
  %v643 = vor.u32 %v642, 8388608
  %v644 = vsub.s32 0, %v643
  %v645 = vadd.s32 %v640, 1
  %vm646 = vcmp.gt.s32.totalorder %v645, 0
  %v647 = vsel %vm646, %v645, 0
  %v648 = vshrl.u32 %v647, 5
  %v649 = vand.u32 %v647, 31
  %v650 = vsub.s32 32, %v649
  %v651 = vshrl.u32 683565275, %v650
  %v652 = vshll.u32 683565275, %v649
  %v653 = vshrl.u32 2475754826, %v650
  %v654 = vor.u32 %v652, %v653
  %v655 = vshll.u32 2475754826, %v649
  %v656 = vshrl.u32 2131351028, %v650
  %v657 = vor.u32 %v655, %v656
  %v658 = vshll.u32 2131351028, %v649
  %v659 = vshrl.u32 2102212464, %v650
  %v660 = vor.u32 %v658, %v659
  %v661 = vshll.u32 2102212464, %v649
  %v662 = vshrl.u32 920167782, %v650
  %v663 = vor.u32 %v661, %v662
  %v664 = vshll.u32 920167782, %v649
  %v665 = vshrl.u32 1326507024, %v650
  %v666 = vor.u32 %v664, %v665
  %vm667 = vcmp.lt.s32.totalorder %v648, 1
  %vm668 = vcmp.lt.s32.totalorder %v648, 2
  %vm669 = vcmp.lt.s32.totalorder %v648, 3
  %vm670 = vcmp.lt.s32.totalorder %v648, 4
  %v671 = vsel %vm667, %v651, %v654
  %v672 = vsel %vm670, %v660, 2102212464
  %v673 = vsel %vm669, %v657, %v672
  %v674 = vsel %vm668, %v671, %v673
  %v675 = vsel %vm667, %v654, %v657
  %v676 = vsel %vm670, %v663, 920167782
  %v677 = vsel %vm669, %v660, %v676
  %v678 = vsel %vm668, %v675, %v677
  %v679 = vsel %vm667, %v657, %v660
  %v680 = vsel %vm670, %v666, 1326507024
  %v681 = vsel %vm669, %v663, %v680
  %v682 = vsel %vm668, %v679, %v681
  %v683 = vshll.u32 %v643, 8
  %v684 = vand.u32 %v683, 65535
  %v685 = vshrl.u32 %v683, 16
  %v686 = vand.u32 %v682, 65535
  %v687 = vshrl.u32 %v682, 16
  %v688 = vmul.u32 %v684, %v686
  %v689 = vmul.u32 %v684, %v687
  %v690 = vmul.u32 %v685, %v686
  %v691 = vmul.u32 %v685, %v687
  %v692 = vshll.u32 %v689, 16
  %v693 = vshrl.u32 %v689, 16
  %v694 = vshll.u32 %v690, 16
  %v695 = vshrl.u32 %v690, 16
  %vm696 = vc.u32 %v688, %v692
  %v697 = vsel %vm696, 1, 0
  %v698 = vadd.s32 %v688, %v692
  %v699 = vadd.s32 %v691, %v697
  %vm700 = vc.u32 %v698, %v694
  %v701 = vsel %vm700, 1, 0
  %v702 = vadd.s32 %v698, %v694
  %v703 = vadd.s32 %v699, %v701
  %v704 = vadd.s32 %v703, %v693
  %v705 = vadd.s32 %v704, %v695
  %v706 = vand.u32 %v683, 65535
  %v707 = vshrl.u32 %v683, 16
  %v708 = vand.u32 %v678, 65535
  %v709 = vshrl.u32 %v678, 16
  %v710 = vmul.u32 %v706, %v708
  %v711 = vmul.u32 %v706, %v709
  %v712 = vmul.u32 %v707, %v708
  %v713 = vmul.u32 %v707, %v709
  %v714 = vshll.u32 %v711, 16
  %v715 = vshrl.u32 %v711, 16
  %v716 = vshll.u32 %v712, 16
  %v717 = vshrl.u32 %v712, 16
  %vm718 = vc.u32 %v710, %v714
  %v719 = vsel %vm718, 1, 0
  %v720 = vadd.s32 %v710, %v714
  %v721 = vadd.s32 %v713, %v719
  %vm722 = vc.u32 %v720, %v716
  %v723 = vsel %vm722, 1, 0
  %v724 = vadd.s32 %v720, %v716
  %v725 = vadd.s32 %v721, %v723
  %v726 = vadd.s32 %v725, %v715
  %v727 = vadd.s32 %v726, %v717
  %v728 = vmul.u32 %v683, %v674
  %v729 = vadd.s32 %v705, %v724
  %vm730 = vc.u32 %v705, %v724
  %v731 = vadd.s32 %v727, 1
  %v732 = vsel %vm730, %v731, %v727
  %v733 = vadd.s32 %v728, %v732
  %v734 = vadd.s32 %v733, 536870912
  %v735 = vshrl.u32 %v734, 30
  %v736 = vshll.u32 %v735, 30
  %v737 = vsub.s32 %v733, %v736
  %vm738 = vcmp.lt.s32.totalorder %v737, 0
  %v739 = vsub.s32 0, %v737
  %v740 = vsel %vm738, %v739, %v737
  %v741 = vclz %v740
  %v742 = vsub.s32 %v741, 2
  %vm743 = vcmp.gt.s32.totalorder 0, %v742
  %v744 = vsel %vm743, 0, %v742
  %v745 = vsub.s32 32, %v744
  %v746 = vshll.u32 %v737, %v744
  %v747 = vshrl.u32 %v729, %v745
  %v748 = vor.u32 %v746, %v747
  %v749 = vsub.s32 4294967266, %v744
  %v750 = vadd.s32 %v749, 127
  %v751 = vshll.u32 %v750, 23
  %v752 = vor.u32 4788187, %v751
  %v753 = vand.u32 2147483647, %v752
  %v755 = vcvt.s32.f32 %v748
  %v756 = vmul.f32 %v755, %v753
  %v757 = vxor.u32 %v756, 2147483648
  %v758 = vsel %vm637, %v757, %v756
  %v759 = vsub.s32 4, %v735
  %v760 = vsel %vm637, %v759, %v735
  %v761 = vsel %vm636, %v78, %v758
  %v762 = vsel %vm636, 0, %v760
  %v763 = vmul.f32 %v761, %v761
  %v764 = vmul.f32 %v763, -0.001358992
  %v765 = vadd.f32 %v764, 0.041655596
  %v766 = vmul.f32 %v763, %v765
  %v767 = vadd.f32 %v766, -0.4999988
  %v768 = vmul.f32 %v763, %v767
  %v769 = vadd.f32 1.0, %v768
  %v770 = vmul.f32 %v761, %v761
  %v771 = vmul.f32 %v770, -0.00019511016
  %v772 = vadd.f32 %v771, 0.008332121
  %v773 = vmul.f32 %v770, %v772
  %v774 = vadd.f32 %v773, -0.16666654
  %v775 = vmul.f32 %v770, %v774
  %v776 = vadd.f32 %v775, 1.0
  %v777 = vmul.f32 %v776, %v761
  %vm778 = vweird.f32 %v78
  %v779 = vadd.s32 %v762, 3
  %v780 = vand.u32 %v779, 3
  %vm781 = vcmp.lt.s32.totalorder %v780, 2
  %vm782 = vcmp.eq.s32.totalorder %v780, 0
  %v783 = vxor.u32 %v777, 2147483648
  %v784 = vsel %vm782, %v769, %v783
  %vm785 = vcmp.eq.s32.totalorder %v780, 2
  %v786 = vxor.u32 %v769, 2147483648
  %v787 = vsel %vm785, %v786, %v777
  %v788 = vsel %vm781, %v784, %v787
  %v789 = vsel %vm778, nan, %v788
  %v790 = vand.u32 2147483647, %v83
  %vm791 = vcmp.le.f32.partialorder %v790, 0.7853982
  %vm792 = vcmp.lt.s32.totalorder %v83, 0
  %v793 = vand.u32 %v83, 2139095040
  %v794 = vshrl.u32 %v793, 23
  %v795 = vsub.s32 %v794, 127
  %v796 = vand.u32 2147483647, %v83
  %v797 = vand.u32 %v796, 8388607
  %v798 = vor.u32 %v797, 8388608
  %v799 = vsub.s32 0, %v798
  %v800 = vadd.s32 %v795, 1
  %vm801 = vcmp.gt.s32.totalorder %v800, 0
  %v802 = vsel %vm801, %v800, 0
  %v803 = vshrl.u32 %v802, 5
  %v804 = vand.u32 %v802, 31
  %v805 = vsub.s32 32, %v804
  %v806 = vshrl.u32 683565275, %v805
  %v807 = vshll.u32 683565275, %v804
  %v808 = vshrl.u32 2475754826, %v805
  %v809 = vor.u32 %v807, %v808
  %v810 = vshll.u32 2475754826, %v804
  %v811 = vshrl.u32 2131351028, %v805
  %v812 = vor.u32 %v810, %v811
  %v813 = vshll.u32 2131351028, %v804
  %v814 = vshrl.u32 2102212464, %v805
  %v815 = vor.u32 %v813, %v814
  %v816 = vshll.u32 2102212464, %v804
  %v817 = vshrl.u32 920167782, %v805
  %v818 = vor.u32 %v816, %v817
  %v819 = vshll.u32 920167782, %v804
  %v820 = vshrl.u32 1326507024, %v805
  %v821 = vor.u32 %v819, %v820
  %vm822 = vcmp.lt.s32.totalorder %v803, 1
  %vm823 = vcmp.lt.s32.totalorder %v803, 2
  %vm824 = vcmp.lt.s32.totalorder %v803, 3
  %vm825 = vcmp.lt.s32.totalorder %v803, 4
  %v826 = vsel %vm822, %v806, %v809
  %v827 = vsel %vm825, %v815, 2102212464
  %v828 = vsel %vm824, %v812, %v827
  %v829 = vsel %vm823, %v826, %v828
  %v830 = vsel %vm822, %v809, %v812
  %v831 = vsel %vm825, %v818, 920167782
  %v832 = vsel %vm824, %v815, %v831
  %v833 = vsel %vm823, %v830, %v832
  %v834 = vsel %vm822, %v812, %v815
  %v835 = vsel %vm825, %v821, 1326507024
  %v836 = vsel %vm824, %v818, %v835
  %v837 = vsel %vm823, %v834, %v836
  %v838 = vshll.u32 %v798, 8
  %v839 = vand.u32 %v838, 65535
  %v840 = vshrl.u32 %v838, 16
  %v841 = vand.u32 %v837, 65535
  %v842 = vshrl.u32 %v837, 16
  %v843 = vmul.u32 %v839, %v841
  %v844 = vmul.u32 %v839, %v842
  %v845 = vmul.u32 %v840, %v841
  %v846 = vmul.u32 %v840, %v842
  %v847 = vshll.u32 %v844, 16
  %v848 = vshrl.u32 %v844, 16
  %v849 = vshll.u32 %v845, 16
  %v850 = vshrl.u32 %v845, 16
  %vm851 = vc.u32 %v843, %v847
  %v852 = vsel %vm851, 1, 0
  %v853 = vadd.s32 %v843, %v847
  %v854 = vadd.s32 %v846, %v852
  %vm855 = vc.u32 %v853, %v849
  %v856 = vsel %vm855, 1, 0
  %v857 = vadd.s32 %v853, %v849
  %v858 = vadd.s32 %v854, %v856
  %v859 = vadd.s32 %v858, %v848
  %v860 = vadd.s32 %v859, %v850
  %v861 = vand.u32 %v838, 65535
  %v862 = vshrl.u32 %v838, 16
  %v863 = vand.u32 %v833, 65535
  %v864 = vshrl.u32 %v833, 16
  %v865 = vmul.u32 %v861, %v863
  %v866 = vmul.u32 %v861, %v864
  %v867 = vmul.u32 %v862, %v863
  %v868 = vmul.u32 %v862, %v864
  %v869 = vshll.u32 %v866, 16
  %v870 = vshrl.u32 %v866, 16
  %v871 = vshll.u32 %v867, 16
  %v872 = vshrl.u32 %v867, 16
  %vm873 = vc.u32 %v865, %v869
  %v874 = vsel %vm873, 1, 0
  %v875 = vadd.s32 %v865, %v869
  %v876 = vadd.s32 %v868, %v874
  %vm877 = vc.u32 %v875, %v871
  %v878 = vsel %vm877, 1, 0
  %v879 = vadd.s32 %v875, %v871
  %v880 = vadd.s32 %v876, %v878
  %v881 = vadd.s32 %v880, %v870
  %v882 = vadd.s32 %v881, %v872
  %v883 = vmul.u32 %v838, %v829
  %v884 = vadd.s32 %v860, %v879
  %vm885 = vc.u32 %v860, %v879
  %v886 = vadd.s32 %v882, 1
  %v887 = vsel %vm885, %v886, %v882
  %v888 = vadd.s32 %v883, %v887
  %v889 = vadd.s32 %v888, 536870912
  %v890 = vshrl.u32 %v889, 30
  %v891 = vshll.u32 %v890, 30
  %v892 = vsub.s32 %v888, %v891
  %vm893 = vcmp.lt.s32.totalorder %v892, 0
  %v894 = vsub.s32 0, %v892
  %v895 = vsel %vm893, %v894, %v892
  %v896 = vclz %v895
  %v897 = vsub.s32 %v896, 2
  %vm898 = vcmp.gt.s32.totalorder 0, %v897
  %v899 = vsel %vm898, 0, %v897
  %v900 = vsub.s32 32, %v899
  %v901 = vshll.u32 %v892, %v899
  %v902 = vshrl.u32 %v884, %v900
  %v903 = vor.u32 %v901, %v902
  %v904 = vsub.s32 4294967266, %v899
  %v905 = vadd.s32 %v904, 127
  %v906 = vshll.u32 %v905, 23
  %v907 = vor.u32 4788187, %v906
  %v908 = vand.u32 2147483647, %v907
  %v910 = vcvt.s32.f32 %v903
  %v911 = vmul.f32 %v910, %v908
  %v912 = vxor.u32 %v911, 2147483648
  %v913 = vsel %vm792, %v912, %v911
  %v914 = vsub.s32 4, %v890
  %v915 = vsel %vm792, %v914, %v890
  %v916 = vsel %vm791, %v83, %v913
  %v917 = vsel %vm791, 0, %v915
  %v918 = vmul.f32 %v916, %v916
  %v919 = vmul.f32 %v918, -0.001358992
  %v920 = vadd.f32 %v919, 0.041655596
  %v921 = vmul.f32 %v918, %v920
  %v922 = vadd.f32 %v921, -0.4999988
  %v923 = vmul.f32 %v918, %v922
  %v924 = vadd.f32 1.0, %v923
  %v925 = vmul.f32 %v916, %v916
  %v926 = vmul.f32 %v925, -0.00019511016
  %v927 = vadd.f32 %v926, 0.008332121
  %v928 = vmul.f32 %v925, %v927
  %v929 = vadd.f32 %v928, -0.16666654
  %v930 = vmul.f32 %v925, %v929
  %v931 = vadd.f32 %v930, 1.0
  %v932 = vmul.f32 %v931, %v916
  %vm933 = vweird.f32 %v83
  %v934 = vadd.s32 %v917, 3
  %v935 = vand.u32 %v934, 3
  %vm936 = vcmp.lt.s32.totalorder %v935, 2
  %vm937 = vcmp.eq.s32.totalorder %v935, 0
  %v938 = vxor.u32 %v932, 2147483648
  %v939 = vsel %vm937, %v924, %v938
  %vm940 = vcmp.eq.s32.totalorder %v935, 2
  %v941 = vxor.u32 %v924, 2147483648
  %v942 = vsel %vm940, %v941, %v932
  %v943 = vsel %vm936, %v939, %v942
  %v944 = vsel %vm933, nan, %v943
  %v945 = vand.u32 2147483647, %v88
  %vm946 = vcmp.le.f32.partialorder %v945, 0.7853982
  %vm947 = vcmp.lt.s32.totalorder %v88, 0
  %v948 = vand.u32 %v88, 2139095040
  %v949 = vshrl.u32 %v948, 23
  %v950 = vsub.s32 %v949, 127
  %v951 = vand.u32 2147483647, %v88
  %v952 = vand.u32 %v951, 8388607
  %v953 = vor.u32 %v952, 8388608
  %v954 = vsub.s32 0, %v953
  %v955 = vadd.s32 %v950, 1
  %vm956 = vcmp.gt.s32.totalorder %v955, 0
  %v957 = vsel %vm956, %v955, 0
  %v958 = vshrl.u32 %v957, 5
  %v959 = vand.u32 %v957, 31
  %v960 = vsub.s32 32, %v959
  %v961 = vshrl.u32 683565275, %v960
  %v962 = vshll.u32 683565275, %v959
  %v963 = vshrl.u32 2475754826, %v960
  %v964 = vor.u32 %v962, %v963
  %v965 = vshll.u32 2475754826, %v959
  %v966 = vshrl.u32 2131351028, %v960
  %v967 = vor.u32 %v965, %v966
  %v968 = vshll.u32 2131351028, %v959
  %v969 = vshrl.u32 2102212464, %v960
  %v970 = vor.u32 %v968, %v969
  %v971 = vshll.u32 2102212464, %v959
  %v972 = vshrl.u32 920167782, %v960
  %v973 = vor.u32 %v971, %v972
  %v974 = vshll.u32 920167782, %v959
  %v975 = vshrl.u32 1326507024, %v960
  %v976 = vor.u32 %v974, %v975
  %vm977 = vcmp.lt.s32.totalorder %v958, 1
  %vm978 = vcmp.lt.s32.totalorder %v958, 2
  %vm979 = vcmp.lt.s32.totalorder %v958, 3
  %vm980 = vcmp.lt.s32.totalorder %v958, 4
  %v981 = vsel %vm977, %v961, %v964
  %v982 = vsel %vm980, %v970, 2102212464
  %v983 = vsel %vm979, %v967, %v982
  %v984 = vsel %vm978, %v981, %v983
  %v985 = vsel %vm977, %v964, %v967
  %v986 = vsel %vm980, %v973, 920167782
  %v987 = vsel %vm979, %v970, %v986
  %v988 = vsel %vm978, %v985, %v987
  %v989 = vsel %vm977, %v967, %v970
  %v990 = vsel %vm980, %v976, 1326507024
  %v991 = vsel %vm979, %v973, %v990
  %v992 = vsel %vm978, %v989, %v991
  %v993 = vshll.u32 %v953, 8
  %v994 = vand.u32 %v993, 65535
  %v995 = vshrl.u32 %v993, 16
  %v996 = vand.u32 %v992, 65535
  %v997 = vshrl.u32 %v992, 16
  %v998 = vmul.u32 %v994, %v996
  %v999 = vmul.u32 %v994, %v997
  %v1000 = vmul.u32 %v995, %v996
  %v1001 = vmul.u32 %v995, %v997
  %v1002 = vshll.u32 %v999, 16
  %v1003 = vshrl.u32 %v999, 16
  %v1004 = vshll.u32 %v1000, 16
  %v1005 = vshrl.u32 %v1000, 16
  %vm1006 = vc.u32 %v998, %v1002
  %v1007 = vsel %vm1006, 1, 0
  %v1008 = vadd.s32 %v998, %v1002
  %v1009 = vadd.s32 %v1001, %v1007
  %vm1010 = vc.u32 %v1008, %v1004
  %v1011 = vsel %vm1010, 1, 0
  %v1012 = vadd.s32 %v1008, %v1004
  %v1013 = vadd.s32 %v1009, %v1011
  %v1014 = vadd.s32 %v1013, %v1003
  %v1015 = vadd.s32 %v1014, %v1005
  %v1016 = vand.u32 %v993, 65535
  %v1017 = vshrl.u32 %v993, 16
  %v1018 = vand.u32 %v988, 65535
  %v1019 = vshrl.u32 %v988, 16
  %v1020 = vmul.u32 %v1016, %v1018
  %v1021 = vmul.u32 %v1016, %v1019
  %v1022 = vmul.u32 %v1017, %v1018
  %v1023 = vmul.u32 %v1017, %v1019
  %v1024 = vshll.u32 %v1021, 16
  %v1025 = vshrl.u32 %v1021, 16
  %v1026 = vshll.u32 %v1022, 16
  %v1027 = vshrl.u32 %v1022, 16
  %vm1028 = vc.u32 %v1020, %v1024
  %v1029 = vsel %vm1028, 1, 0
  %v1030 = vadd.s32 %v1020, %v1024
  %v1031 = vadd.s32 %v1023, %v1029
  %vm1032 = vc.u32 %v1030, %v1026
  %v1033 = vsel %vm1032, 1, 0
  %v1034 = vadd.s32 %v1030, %v1026
  %v1035 = vadd.s32 %v1031, %v1033
  %v1036 = vadd.s32 %v1035, %v1025
  %v1037 = vadd.s32 %v1036, %v1027
  %v1038 = vmul.u32 %v993, %v984
  %v1039 = vadd.s32 %v1015, %v1034
  %vm1040 = vc.u32 %v1015, %v1034
  %v1041 = vadd.s32 %v1037, 1
  %v1042 = vsel %vm1040, %v1041, %v1037
  %v1043 = vadd.s32 %v1038, %v1042
  %v1044 = vadd.s32 %v1043, 536870912
  %v1045 = vshrl.u32 %v1044, 30
  %v1046 = vshll.u32 %v1045, 30
  %v1047 = vsub.s32 %v1043, %v1046
  %vm1048 = vcmp.lt.s32.totalorder %v1047, 0
  %v1049 = vsub.s32 0, %v1047
  %v1050 = vsel %vm1048, %v1049, %v1047
  %v1051 = vclz %v1050
  %v1052 = vsub.s32 %v1051, 2
  %vm1053 = vcmp.gt.s32.totalorder 0, %v1052
  %v1054 = vsel %vm1053, 0, %v1052
  %v1055 = vsub.s32 32, %v1054
  %v1056 = vshll.u32 %v1047, %v1054
  %v1057 = vshrl.u32 %v1039, %v1055
  %v1058 = vor.u32 %v1056, %v1057
  %v1059 = vsub.s32 4294967266, %v1054
  %v1060 = vadd.s32 %v1059, 127
  %v1061 = vshll.u32 %v1060, 23
  %v1062 = vor.u32 4788187, %v1061
  %v1063 = vand.u32 2147483647, %v1062
  %v1065 = vcvt.s32.f32 %v1058
  %v1066 = vmul.f32 %v1065, %v1063
  %v1067 = vxor.u32 %v1066, 2147483648
  %v1068 = vsel %vm947, %v1067, %v1066
  %v1069 = vsub.s32 4, %v1045
  %v1070 = vsel %vm947, %v1069, %v1045
  %v1071 = vsel %vm946, %v88, %v1068
  %v1072 = vsel %vm946, 0, %v1070
  %v1073 = vmul.f32 %v1071, %v1071
  %v1074 = vmul.f32 %v1073, -0.001358992
  %v1075 = vadd.f32 %v1074, 0.041655596
  %v1076 = vmul.f32 %v1073, %v1075
  %v1077 = vadd.f32 %v1076, -0.4999988
  %v1078 = vmul.f32 %v1073, %v1077
  %v1079 = vadd.f32 1.0, %v1078
  %v1080 = vmul.f32 %v1071, %v1071
  %v1081 = vmul.f32 %v1080, -0.00019511016
  %v1082 = vadd.f32 %v1081, 0.008332121
  %v1083 = vmul.f32 %v1080, %v1082
  %v1084 = vadd.f32 %v1083, -0.16666654
  %v1085 = vmul.f32 %v1080, %v1084
  %v1086 = vadd.f32 %v1085, 1.0
  %v1087 = vmul.f32 %v1086, %v1071
  %vm1088 = vweird.f32 %v88
  %v1089 = vadd.s32 %v1072, 3
  %v1090 = vand.u32 %v1089, 3
  %vm1091 = vcmp.lt.s32.totalorder %v1090, 2
  %vm1092 = vcmp.eq.s32.totalorder %v1090, 0
  %v1093 = vxor.u32 %v1087, 2147483648
  %v1094 = vsel %vm1092, %v1079, %v1093
  %vm1095 = vcmp.eq.s32.totalorder %v1090, 2
  %v1096 = vxor.u32 %v1079, 2147483648
  %v1097 = vsel %vm1095, %v1096, %v1087
  %v1098 = vsel %vm1091, %v1094, %v1097
  %v1099 = vsel %vm1088, nan, %v1098
  %v1100 = vand.u32 2147483647, %v93
  %vm1101 = vcmp.le.f32.partialorder %v1100, 0.7853982
  %vm1102 = vcmp.lt.s32.totalorder %v93, 0
  %v1103 = vand.u32 %v93, 2139095040
  %v1104 = vshrl.u32 %v1103, 23
  %v1105 = vsub.s32 %v1104, 127
  %v1106 = vand.u32 2147483647, %v93
  %v1107 = vand.u32 %v1106, 8388607
  %v1108 = vor.u32 %v1107, 8388608
  %v1109 = vsub.s32 0, %v1108
  %v1110 = vadd.s32 %v1105, 1
  %vm1111 = vcmp.gt.s32.totalorder %v1110, 0
  %v1112 = vsel %vm1111, %v1110, 0
  %v1113 = vshrl.u32 %v1112, 5
  %v1114 = vand.u32 %v1112, 31
  %v1115 = vsub.s32 32, %v1114
  %v1116 = vshrl.u32 683565275, %v1115
  %v1117 = vshll.u32 683565275, %v1114
  %v1118 = vshrl.u32 2475754826, %v1115
  %v1119 = vor.u32 %v1117, %v1118
  %v1120 = vshll.u32 2475754826, %v1114
  %v1121 = vshrl.u32 2131351028, %v1115
  %v1122 = vor.u32 %v1120, %v1121
  %v1123 = vshll.u32 2131351028, %v1114
  %v1124 = vshrl.u32 2102212464, %v1115
  %v1125 = vor.u32 %v1123, %v1124
  %v1126 = vshll.u32 2102212464, %v1114
  %v1127 = vshrl.u32 920167782, %v1115
  %v1128 = vor.u32 %v1126, %v1127
  %v1129 = vshll.u32 920167782, %v1114
  %v1130 = vshrl.u32 1326507024, %v1115
  %v1131 = vor.u32 %v1129, %v1130
  %vm1132 = vcmp.lt.s32.totalorder %v1113, 1
  %vm1133 = vcmp.lt.s32.totalorder %v1113, 2
  %vm1134 = vcmp.lt.s32.totalorder %v1113, 3
  %vm1135 = vcmp.lt.s32.totalorder %v1113, 4
  %v1136 = vsel %vm1132, %v1116, %v1119
  %v1137 = vsel %vm1135, %v1125, 2102212464
  %v1138 = vsel %vm1134, %v1122, %v1137
  %v1139 = vsel %vm1133, %v1136, %v1138
  %v1140 = vsel %vm1132, %v1119, %v1122
  %v1141 = vsel %vm1135, %v1128, 920167782
  %v1142 = vsel %vm1134, %v1125, %v1141
  %v1143 = vsel %vm1133, %v1140, %v1142
  %v1144 = vsel %vm1132, %v1122, %v1125
  %v1145 = vsel %vm1135, %v1131, 1326507024
  %v1146 = vsel %vm1134, %v1128, %v1145
  %v1147 = vsel %vm1133, %v1144, %v1146
  %v1148 = vshll.u32 %v1108, 8
  %v1149 = vand.u32 %v1148, 65535
  %v1150 = vshrl.u32 %v1148, 16
  %v1151 = vand.u32 %v1147, 65535
  %v1152 = vshrl.u32 %v1147, 16
  %v1153 = vmul.u32 %v1149, %v1151
  %v1154 = vmul.u32 %v1149, %v1152
  %v1155 = vmul.u32 %v1150, %v1151
  %v1156 = vmul.u32 %v1150, %v1152
  %v1157 = vshll.u32 %v1154, 16
  %v1158 = vshrl.u32 %v1154, 16
  %v1159 = vshll.u32 %v1155, 16
  %v1160 = vshrl.u32 %v1155, 16
  %vm1161 = vc.u32 %v1153, %v1157
  %v1162 = vsel %vm1161, 1, 0
  %v1163 = vadd.s32 %v1153, %v1157
  %v1164 = vadd.s32 %v1156, %v1162
  %vm1165 = vc.u32 %v1163, %v1159
  %v1166 = vsel %vm1165, 1, 0
  %v1167 = vadd.s32 %v1163, %v1159
  %v1168 = vadd.s32 %v1164, %v1166
  %v1169 = vadd.s32 %v1168, %v1158
  %v1170 = vadd.s32 %v1169, %v1160
  %v1171 = vand.u32 %v1148, 65535
  %v1172 = vshrl.u32 %v1148, 16
  %v1173 = vand.u32 %v1143, 65535
  %v1174 = vshrl.u32 %v1143, 16
  %v1175 = vmul.u32 %v1171, %v1173
  %v1176 = vmul.u32 %v1171, %v1174
  %v1177 = vmul.u32 %v1172, %v1173
  %v1178 = vmul.u32 %v1172, %v1174
  %v1179 = vshll.u32 %v1176, 16
  %v1180 = vshrl.u32 %v1176, 16
  %v1181 = vshll.u32 %v1177, 16
  %v1182 = vshrl.u32 %v1177, 16
  %vm1183 = vc.u32 %v1175, %v1179
  %v1184 = vsel %vm1183, 1, 0
  %v1185 = vadd.s32 %v1175, %v1179
  %v1186 = vadd.s32 %v1178, %v1184
  %vm1187 = vc.u32 %v1185, %v1181
  %v1188 = vsel %vm1187, 1, 0
  %v1189 = vadd.s32 %v1185, %v1181
  %v1190 = vadd.s32 %v1186, %v1188
  %v1191 = vadd.s32 %v1190, %v1180
  %v1192 = vadd.s32 %v1191, %v1182
  %v1193 = vmul.u32 %v1148, %v1139
  %v1194 = vadd.s32 %v1170, %v1189
  %vm1195 = vc.u32 %v1170, %v1189
  %v1196 = vadd.s32 %v1192, 1
  %v1197 = vsel %vm1195, %v1196, %v1192
  %v1198 = vadd.s32 %v1193, %v1197
  %v1199 = vadd.s32 %v1198, 536870912
  %v1200 = vshrl.u32 %v1199, 30
  %v1201 = vshll.u32 %v1200, 30
  %v1202 = vsub.s32 %v1198, %v1201
  %vm1203 = vcmp.lt.s32.totalorder %v1202, 0
  %v1204 = vsub.s32 0, %v1202
  %v1205 = vsel %vm1203, %v1204, %v1202
  %v1206 = vclz %v1205
  %v1207 = vsub.s32 %v1206, 2
  %vm1208 = vcmp.gt.s32.totalorder 0, %v1207
  %v1209 = vsel %vm1208, 0, %v1207
  %v1210 = vsub.s32 32, %v1209
  %v1211 = vshll.u32 %v1202, %v1209
  %v1212 = vshrl.u32 %v1194, %v1210
  %v1213 = vor.u32 %v1211, %v1212
  %v1214 = vsub.s32 4294967266, %v1209
  %v1215 = vadd.s32 %v1214, 127
  %v1216 = vshll.u32 %v1215, 23
  %v1217 = vor.u32 4788187, %v1216
  %v1218 = vand.u32 2147483647, %v1217
  %v1220 = vcvt.s32.f32 %v1213
  %v1221 = vmul.f32 %v1220, %v1218
  %v1222 = vxor.u32 %v1221, 2147483648
  %v1223 = vsel %vm1102, %v1222, %v1221
  %v1224 = vsub.s32 4, %v1200
  %v1225 = vsel %vm1102, %v1224, %v1200
  %v1226 = vsel %vm1101, %v93, %v1223
  %v1227 = vsel %vm1101, 0, %v1225
  %v1228 = vmul.f32 %v1226, %v1226
  %v1229 = vmul.f32 %v1228, -0.001358992
  %v1230 = vadd.f32 %v1229, 0.041655596
  %v1231 = vmul.f32 %v1228, %v1230
  %v1232 = vadd.f32 %v1231, -0.4999988
  %v1233 = vmul.f32 %v1228, %v1232
  %v1234 = vadd.f32 1.0, %v1233
  %v1235 = vmul.f32 %v1226, %v1226
  %v1236 = vmul.f32 %v1235, -0.00019511016
  %v1237 = vadd.f32 %v1236, 0.008332121
  %v1238 = vmul.f32 %v1235, %v1237
  %v1239 = vadd.f32 %v1238, -0.16666654
  %v1240 = vmul.f32 %v1235, %v1239
  %v1241 = vadd.f32 %v1240, 1.0
  %v1242 = vmul.f32 %v1241, %v1226
  %vm1243 = vweird.f32 %v93
  %v1244 = vadd.s32 %v1227, 3
  %v1245 = vand.u32 %v1244, 3
  %vm1246 = vcmp.lt.s32.totalorder %v1245, 2
  %vm1247 = vcmp.eq.s32.totalorder %v1245, 0
  %v1248 = vxor.u32 %v1242, 2147483648
  %v1249 = vsel %vm1247, %v1234, %v1248
  %vm1250 = vcmp.eq.s32.totalorder %v1245, 2
  %v1251 = vxor.u32 %v1234, 2147483648
  %v1252 = vsel %vm1250, %v1251, %v1242
  %v1253 = vsel %vm1246, %v1249, %v1252
  %v1254 = vsel %vm1243, nan, %v1253
  %v1255 = vand.u32 2147483647, %v98
  %vm1256 = vcmp.le.f32.partialorder %v1255, 0.7853982
  %vm1257 = vcmp.lt.s32.totalorder %v98, 0
  %v1258 = vand.u32 %v98, 2139095040
  %v1259 = vshrl.u32 %v1258, 23
  %v1260 = vsub.s32 %v1259, 127
  %v1261 = vand.u32 2147483647, %v98
  %v1262 = vand.u32 %v1261, 8388607
  %v1263 = vor.u32 %v1262, 8388608
  %v1264 = vsub.s32 0, %v1263
  %v1265 = vadd.s32 %v1260, 1
  %vm1266 = vcmp.gt.s32.totalorder %v1265, 0
  %v1267 = vsel %vm1266, %v1265, 0
  %v1268 = vshrl.u32 %v1267, 5
  %v1269 = vand.u32 %v1267, 31
  %v1270 = vsub.s32 32, %v1269
  %v1271 = vshrl.u32 683565275, %v1270
  %v1272 = vshll.u32 683565275, %v1269
  %v1273 = vshrl.u32 2475754826, %v1270
  %v1274 = vor.u32 %v1272, %v1273
  %v1275 = vshll.u32 2475754826, %v1269
  %v1276 = vshrl.u32 2131351028, %v1270
  %v1277 = vor.u32 %v1275, %v1276
  %v1278 = vshll.u32 2131351028, %v1269
  %v1279 = vshrl.u32 2102212464, %v1270
  %v1280 = vor.u32 %v1278, %v1279
  %v1281 = vshll.u32 2102212464, %v1269
  %v1282 = vshrl.u32 920167782, %v1270
  %v1283 = vor.u32 %v1281, %v1282
  %v1284 = vshll.u32 920167782, %v1269
  %v1285 = vshrl.u32 1326507024, %v1270
  %v1286 = vor.u32 %v1284, %v1285
  %vm1287 = vcmp.lt.s32.totalorder %v1268, 1
  %vm1288 = vcmp.lt.s32.totalorder %v1268, 2
  %vm1289 = vcmp.lt.s32.totalorder %v1268, 3
  %vm1290 = vcmp.lt.s32.totalorder %v1268, 4
  %v1291 = vsel %vm1287, %v1271, %v1274
  %v1292 = vsel %vm1290, %v1280, 2102212464
  %v1293 = vsel %vm1289, %v1277, %v1292
  %v1294 = vsel %vm1288, %v1291, %v1293
  %v1295 = vsel %vm1287, %v1274, %v1277
  %v1296 = vsel %vm1290, %v1283, 920167782
  %v1297 = vsel %vm1289, %v1280, %v1296
  %v1298 = vsel %vm1288, %v1295, %v1297
  %v1299 = vsel %vm1287, %v1277, %v1280
  %v1300 = vsel %vm1290, %v1286, 1326507024
  %v1301 = vsel %vm1289, %v1283, %v1300
  %v1302 = vsel %vm1288, %v1299, %v1301
  %v1303 = vshll.u32 %v1263, 8
  %v1304 = vand.u32 %v1303, 65535
  %v1305 = vshrl.u32 %v1303, 16
  %v1306 = vand.u32 %v1302, 65535
  %v1307 = vshrl.u32 %v1302, 16
  %v1308 = vmul.u32 %v1304, %v1306
  %v1309 = vmul.u32 %v1304, %v1307
  %v1310 = vmul.u32 %v1305, %v1306
  %v1311 = vmul.u32 %v1305, %v1307
  %v1312 = vshll.u32 %v1309, 16
  %v1313 = vshrl.u32 %v1309, 16
  %v1314 = vshll.u32 %v1310, 16
  %v1315 = vshrl.u32 %v1310, 16
  %vm1316 = vc.u32 %v1308, %v1312
  %v1317 = vsel %vm1316, 1, 0
  %v1318 = vadd.s32 %v1308, %v1312
  %v1319 = vadd.s32 %v1311, %v1317
  %vm1320 = vc.u32 %v1318, %v1314
  %v1321 = vsel %vm1320, 1, 0
  %v1322 = vadd.s32 %v1318, %v1314
  %v1323 = vadd.s32 %v1319, %v1321
  %v1324 = vadd.s32 %v1323, %v1313
  %v1325 = vadd.s32 %v1324, %v1315
  %v1326 = vand.u32 %v1303, 65535
  %v1327 = vshrl.u32 %v1303, 16
  %v1328 = vand.u32 %v1298, 65535
  %v1329 = vshrl.u32 %v1298, 16
  %v1330 = vmul.u32 %v1326, %v1328
  %v1331 = vmul.u32 %v1326, %v1329
  %v1332 = vmul.u32 %v1327, %v1328
  %v1333 = vmul.u32 %v1327, %v1329
  %v1334 = vshll.u32 %v1331, 16
  %v1335 = vshrl.u32 %v1331, 16
  %v1336 = vshll.u32 %v1332, 16
  %v1337 = vshrl.u32 %v1332, 16
  %vm1338 = vc.u32 %v1330, %v1334
  %v1339 = vsel %vm1338, 1, 0
  %v1340 = vadd.s32 %v1330, %v1334
  %v1341 = vadd.s32 %v1333, %v1339
  %vm1342 = vc.u32 %v1340, %v1336
  %v1343 = vsel %vm1342, 1, 0
  %v1344 = vadd.s32 %v1340, %v1336
  %v1345 = vadd.s32 %v1341, %v1343
  %v1346 = vadd.s32 %v1345, %v1335
  %v1347 = vadd.s32 %v1346, %v1337
  %v1348 = vmul.u32 %v1303, %v1294
  %v1349 = vadd.s32 %v1325, %v1344
  %vm1350 = vc.u32 %v1325, %v1344
  %v1351 = vadd.s32 %v1347, 1
  %v1352 = vsel %vm1350, %v1351, %v1347
  %v1353 = vadd.s32 %v1348, %v1352
  %v1354 = vadd.s32 %v1353, 536870912
  %v1355 = vshrl.u32 %v1354, 30
  %v1356 = vshll.u32 %v1355, 30
  %v1357 = vsub.s32 %v1353, %v1356
  %vm1358 = vcmp.lt.s32.totalorder %v1357, 0
  %v1359 = vsub.s32 0, %v1357
  %v1360 = vsel %vm1358, %v1359, %v1357
  %v1361 = vclz %v1360
  %v1362 = vsub.s32 %v1361, 2
  %vm1363 = vcmp.gt.s32.totalorder 0, %v1362
  %v1364 = vsel %vm1363, 0, %v1362
  %v1365 = vsub.s32 32, %v1364
  %v1366 = vshll.u32 %v1357, %v1364
  %v1367 = vshrl.u32 %v1349, %v1365
  %v1368 = vor.u32 %v1366, %v1367
  %v1369 = vsub.s32 4294967266, %v1364
  %v1370 = vadd.s32 %v1369, 127
  %v1371 = vshll.u32 %v1370, 23
  %v1372 = vor.u32 4788187, %v1371
  %v1373 = vand.u32 2147483647, %v1372
  %v1375 = vcvt.s32.f32 %v1368
  %v1376 = vmul.f32 %v1375, %v1373
  %v1377 = vxor.u32 %v1376, 2147483648
  %v1378 = vsel %vm1257, %v1377, %v1376
  %v1379 = vsub.s32 4, %v1355
  %v1380 = vsel %vm1257, %v1379, %v1355
  %v1381 = vsel %vm1256, %v98, %v1378
  %v1382 = vsel %vm1256, 0, %v1380
  %v1383 = vmul.f32 %v1381, %v1381
  %v1384 = vmul.f32 %v1383, -0.001358992
  %v1385 = vadd.f32 %v1384, 0.041655596
  %v1386 = vmul.f32 %v1383, %v1385
  %v1387 = vadd.f32 %v1386, -0.4999988
  %v1388 = vmul.f32 %v1383, %v1387
  %v1389 = vadd.f32 1.0, %v1388
  %v1390 = vmul.f32 %v1381, %v1381
  %v1391 = vmul.f32 %v1390, -0.00019511016
  %v1392 = vadd.f32 %v1391, 0.008332121
  %v1393 = vmul.f32 %v1390, %v1392
  %v1394 = vadd.f32 %v1393, -0.16666654
  %v1395 = vmul.f32 %v1390, %v1394
  %v1396 = vadd.f32 %v1395, 1.0
  %v1397 = vmul.f32 %v1396, %v1381
  %vm1398 = vweird.f32 %v98
  %v1399 = vadd.s32 %v1382, 3
  %v1400 = vand.u32 %v1399, 3
  %vm1401 = vcmp.lt.s32.totalorder %v1400, 2
  %vm1402 = vcmp.eq.s32.totalorder %v1400, 0
  %v1403 = vxor.u32 %v1397, 2147483648
  %v1404 = vsel %vm1402, %v1389, %v1403
  %vm1405 = vcmp.eq.s32.totalorder %v1400, 2
  %v1406 = vxor.u32 %v1389, 2147483648
  %v1407 = vsel %vm1405, %v1406, %v1397
  %v1408 = vsel %vm1401, %v1404, %v1407
  %v1409 = vsel %vm1398, nan, %v1408
  %v1410 = vand.u32 2147483647, %v103
  %vm1411 = vcmp.le.f32.partialorder %v1410, 0.7853982
  %vm1412 = vcmp.lt.s32.totalorder %v103, 0
  %v1413 = vand.u32 %v103, 2139095040
  %v1414 = vshrl.u32 %v1413, 23
  %v1415 = vsub.s32 %v1414, 127
  %v1416 = vand.u32 2147483647, %v103
  %v1417 = vand.u32 %v1416, 8388607
  %v1418 = vor.u32 %v1417, 8388608
  %v1419 = vsub.s32 0, %v1418
  %v1420 = vadd.s32 %v1415, 1
  %vm1421 = vcmp.gt.s32.totalorder %v1420, 0
  %v1422 = vsel %vm1421, %v1420, 0
  %v1423 = vshrl.u32 %v1422, 5
  %v1424 = vand.u32 %v1422, 31
  %v1425 = vsub.s32 32, %v1424
  %v1426 = vshrl.u32 683565275, %v1425
  %v1427 = vshll.u32 683565275, %v1424
  %v1428 = vshrl.u32 2475754826, %v1425
  %v1429 = vor.u32 %v1427, %v1428
  %v1430 = vshll.u32 2475754826, %v1424
  %v1431 = vshrl.u32 2131351028, %v1425
  %v1432 = vor.u32 %v1430, %v1431
  %v1433 = vshll.u32 2131351028, %v1424
  %v1434 = vshrl.u32 2102212464, %v1425
  %v1435 = vor.u32 %v1433, %v1434
  %v1436 = vshll.u32 2102212464, %v1424
  %v1437 = vshrl.u32 920167782, %v1425
  %v1438 = vor.u32 %v1436, %v1437
  %v1439 = vshll.u32 920167782, %v1424
  %v1440 = vshrl.u32 1326507024, %v1425
  %v1441 = vor.u32 %v1439, %v1440
  %vm1442 = vcmp.lt.s32.totalorder %v1423, 1
  %vm1443 = vcmp.lt.s32.totalorder %v1423, 2
  %vm1444 = vcmp.lt.s32.totalorder %v1423, 3
  %vm1445 = vcmp.lt.s32.totalorder %v1423, 4
  %v1446 = vsel %vm1442, %v1426, %v1429
  %v1447 = vsel %vm1445, %v1435, 2102212464
  %v1448 = vsel %vm1444, %v1432, %v1447
  %v1449 = vsel %vm1443, %v1446, %v1448
  %v1450 = vsel %vm1442, %v1429, %v1432
  %v1451 = vsel %vm1445, %v1438, 920167782
  %v1452 = vsel %vm1444, %v1435, %v1451
  %v1453 = vsel %vm1443, %v1450, %v1452
  %v1454 = vsel %vm1442, %v1432, %v1435
  %v1455 = vsel %vm1445, %v1441, 1326507024
  %v1456 = vsel %vm1444, %v1438, %v1455
  %v1457 = vsel %vm1443, %v1454, %v1456
  %v1458 = vshll.u32 %v1418, 8
  %v1459 = vand.u32 %v1458, 65535
  %v1460 = vshrl.u32 %v1458, 16
  %v1461 = vand.u32 %v1457, 65535
  %v1462 = vshrl.u32 %v1457, 16
  %v1463 = vmul.u32 %v1459, %v1461
  %v1464 = vmul.u32 %v1459, %v1462
  %v1465 = vmul.u32 %v1460, %v1461
  %v1466 = vmul.u32 %v1460, %v1462
  %v1467 = vshll.u32 %v1464, 16
  %v1468 = vshrl.u32 %v1464, 16
  %v1469 = vshll.u32 %v1465, 16
  %v1470 = vshrl.u32 %v1465, 16
  %vm1471 = vc.u32 %v1463, %v1467
  %v1472 = vsel %vm1471, 1, 0
  %v1473 = vadd.s32 %v1463, %v1467
  %v1474 = vadd.s32 %v1466, %v1472
  %vm1475 = vc.u32 %v1473, %v1469
  %v1476 = vsel %vm1475, 1, 0
  %v1477 = vadd.s32 %v1473, %v1469
  %v1478 = vadd.s32 %v1474, %v1476
  %v1479 = vadd.s32 %v1478, %v1468
  %v1480 = vadd.s32 %v1479, %v1470
  %v1481 = vand.u32 %v1458, 65535
  %v1482 = vshrl.u32 %v1458, 16
  %v1483 = vand.u32 %v1453, 65535
  %v1484 = vshrl.u32 %v1453, 16
  %v1485 = vmul.u32 %v1481, %v1483
  %v1486 = vmul.u32 %v1481, %v1484
  %v1487 = vmul.u32 %v1482, %v1483
  %v1488 = vmul.u32 %v1482, %v1484
  %v1489 = vshll.u32 %v1486, 16
  %v1490 = vshrl.u32 %v1486, 16
  %v1491 = vshll.u32 %v1487, 16
  %v1492 = vshrl.u32 %v1487, 16
  %vm1493 = vc.u32 %v1485, %v1489
  %v1494 = vsel %vm1493, 1, 0
  %v1495 = vadd.s32 %v1485, %v1489
  %v1496 = vadd.s32 %v1488, %v1494
  %vm1497 = vc.u32 %v1495, %v1491
  %v1498 = vsel %vm1497, 1, 0
  %v1499 = vadd.s32 %v1495, %v1491
  %v1500 = vadd.s32 %v1496, %v1498
  %v1501 = vadd.s32 %v1500, %v1490
  %v1502 = vadd.s32 %v1501, %v1492
  %v1503 = vmul.u32 %v1458, %v1449
  %v1504 = vadd.s32 %v1480, %v1499
  %vm1505 = vc.u32 %v1480, %v1499
  %v1506 = vadd.s32 %v1502, 1
  %v1507 = vsel %vm1505, %v1506, %v1502
  %v1508 = vadd.s32 %v1503, %v1507
  %v1509 = vadd.s32 %v1508, 536870912
  %v1510 = vshrl.u32 %v1509, 30
  %v1511 = vshll.u32 %v1510, 30
  %v1512 = vsub.s32 %v1508, %v1511
  %vm1513 = vcmp.lt.s32.totalorder %v1512, 0
  %v1514 = vsub.s32 0, %v1512
  %v1515 = vsel %vm1513, %v1514, %v1512
  %v1516 = vclz %v1515
  %v1517 = vsub.s32 %v1516, 2
  %vm1518 = vcmp.gt.s32.totalorder 0, %v1517
  %v1519 = vsel %vm1518, 0, %v1517
  %v1520 = vsub.s32 32, %v1519
  %v1521 = vshll.u32 %v1512, %v1519
  %v1522 = vshrl.u32 %v1504, %v1520
  %v1523 = vor.u32 %v1521, %v1522
  %v1524 = vsub.s32 4294967266, %v1519
  %v1525 = vadd.s32 %v1524, 127
  %v1526 = vshll.u32 %v1525, 23
  %v1527 = vor.u32 4788187, %v1526
  %v1528 = vand.u32 2147483647, %v1527
  %v1530 = vcvt.s32.f32 %v1523
  %v1531 = vmul.f32 %v1530, %v1528
  %v1532 = vxor.u32 %v1531, 2147483648
  %v1533 = vsel %vm1412, %v1532, %v1531
  %v1534 = vsub.s32 4, %v1510
  %v1535 = vsel %vm1412, %v1534, %v1510
  %v1536 = vsel %vm1411, %v103, %v1533
  %v1537 = vsel %vm1411, 0, %v1535
  %v1538 = vmul.f32 %v1536, %v1536
  %v1539 = vmul.f32 %v1538, -0.001358992
  %v1540 = vadd.f32 %v1539, 0.041655596
  %v1541 = vmul.f32 %v1538, %v1540
  %v1542 = vadd.f32 %v1541, -0.4999988
  %v1543 = vmul.f32 %v1538, %v1542
  %v1544 = vadd.f32 1.0, %v1543
  %v1545 = vmul.f32 %v1536, %v1536
  %v1546 = vmul.f32 %v1545, -0.00019511016
  %v1547 = vadd.f32 %v1546, 0.008332121
  %v1548 = vmul.f32 %v1545, %v1547
  %v1549 = vadd.f32 %v1548, -0.16666654
  %v1550 = vmul.f32 %v1545, %v1549
  %v1551 = vadd.f32 %v1550, 1.0
  %v1552 = vmul.f32 %v1551, %v1536
  %vm1553 = vweird.f32 %v103
  %v1554 = vadd.s32 %v1537, 3
  %v1555 = vand.u32 %v1554, 3
  %vm1556 = vcmp.lt.s32.totalorder %v1555, 2
  %vm1557 = vcmp.eq.s32.totalorder %v1555, 0
  %v1558 = vxor.u32 %v1552, 2147483648
  %v1559 = vsel %vm1557, %v1544, %v1558
  %vm1560 = vcmp.eq.s32.totalorder %v1555, 2
  %v1561 = vxor.u32 %v1544, 2147483648
  %v1562 = vsel %vm1560, %v1561, %v1552
  %v1563 = vsel %vm1556, %v1559, %v1562
  %v1564 = vsel %vm1553, nan, %v1563
  %v1565 = vand.u32 2147483647, %v108
  %vm1566 = vcmp.le.f32.partialorder %v1565, 0.7853982
  %vm1567 = vcmp.lt.s32.totalorder %v108, 0
  %v1568 = vand.u32 %v108, 2139095040
  %v1569 = vshrl.u32 %v1568, 23
  %v1570 = vsub.s32 %v1569, 127
  %v1571 = vand.u32 2147483647, %v108
  %v1572 = vand.u32 %v1571, 8388607
  %v1573 = vor.u32 %v1572, 8388608
  %v1574 = vsub.s32 0, %v1573
  %v1575 = vadd.s32 %v1570, 1
  %vm1576 = vcmp.gt.s32.totalorder %v1575, 0
  %v1577 = vsel %vm1576, %v1575, 0
  %v1578 = vshrl.u32 %v1577, 5
  %v1579 = vand.u32 %v1577, 31
  %v1580 = vsub.s32 32, %v1579
  %v1581 = vshrl.u32 683565275, %v1580
  %v1582 = vshll.u32 683565275, %v1579
  %v1583 = vshrl.u32 2475754826, %v1580
  %v1584 = vor.u32 %v1582, %v1583
  %v1585 = vshll.u32 2475754826, %v1579
  %v1586 = vshrl.u32 2131351028, %v1580
  %v1587 = vor.u32 %v1585, %v1586
  %v1588 = vshll.u32 2131351028, %v1579
  %v1589 = vshrl.u32 2102212464, %v1580
  %v1590 = vor.u32 %v1588, %v1589
  %v1591 = vshll.u32 2102212464, %v1579
  %v1592 = vshrl.u32 920167782, %v1580
  %v1593 = vor.u32 %v1591, %v1592
  %v1594 = vshll.u32 920167782, %v1579
  %v1595 = vshrl.u32 1326507024, %v1580
  %v1596 = vor.u32 %v1594, %v1595
  %vm1597 = vcmp.lt.s32.totalorder %v1578, 1
  %vm1598 = vcmp.lt.s32.totalorder %v1578, 2
  %vm1599 = vcmp.lt.s32.totalorder %v1578, 3
  %vm1600 = vcmp.lt.s32.totalorder %v1578, 4
  %v1601 = vsel %vm1597, %v1581, %v1584
  %v1602 = vsel %vm1600, %v1590, 2102212464
  %v1603 = vsel %vm1599, %v1587, %v1602
  %v1604 = vsel %vm1598, %v1601, %v1603
  %v1605 = vsel %vm1597, %v1584, %v1587
  %v1606 = vsel %vm1600, %v1593, 920167782
  %v1607 = vsel %vm1599, %v1590, %v1606
  %v1608 = vsel %vm1598, %v1605, %v1607
  %v1609 = vsel %vm1597, %v1587, %v1590
  %v1610 = vsel %vm1600, %v1596, 1326507024
  %v1611 = vsel %vm1599, %v1593, %v1610
  %v1612 = vsel %vm1598, %v1609, %v1611
  %v1613 = vshll.u32 %v1573, 8
  %v1614 = vand.u32 %v1613, 65535
  %v1615 = vshrl.u32 %v1613, 16
  %v1616 = vand.u32 %v1612, 65535
  %v1617 = vshrl.u32 %v1612, 16
  %v1618 = vmul.u32 %v1614, %v1616
  %v1619 = vmul.u32 %v1614, %v1617
  %v1620 = vmul.u32 %v1615, %v1616
  %v1621 = vmul.u32 %v1615, %v1617
  %v1622 = vshll.u32 %v1619, 16
  %v1623 = vshrl.u32 %v1619, 16
  %v1624 = vshll.u32 %v1620, 16
  %v1625 = vshrl.u32 %v1620, 16
  %vm1626 = vc.u32 %v1618, %v1622
  %v1627 = vsel %vm1626, 1, 0
  %v1628 = vadd.s32 %v1618, %v1622
  %v1629 = vadd.s32 %v1621, %v1627
  %vm1630 = vc.u32 %v1628, %v1624
  %v1631 = vsel %vm1630, 1, 0
  %v1632 = vadd.s32 %v1628, %v1624
  %v1633 = vadd.s32 %v1629, %v1631
  %v1634 = vadd.s32 %v1633, %v1623
  %v1635 = vadd.s32 %v1634, %v1625
  %v1636 = vand.u32 %v1613, 65535
  %v1637 = vshrl.u32 %v1613, 16
  %v1638 = vand.u32 %v1608, 65535
  %v1639 = vshrl.u32 %v1608, 16
  %v1640 = vmul.u32 %v1636, %v1638
  %v1641 = vmul.u32 %v1636, %v1639
  %v1642 = vmul.u32 %v1637, %v1638
  %v1643 = vmul.u32 %v1637, %v1639
  %v1644 = vshll.u32 %v1641, 16
  %v1645 = vshrl.u32 %v1641, 16
  %v1646 = vshll.u32 %v1642, 16
  %v1647 = vshrl.u32 %v1642, 16
  %vm1648 = vc.u32 %v1640, %v1644
  %v1649 = vsel %vm1648, 1, 0
  %v1650 = vadd.s32 %v1640, %v1644
  %v1651 = vadd.s32 %v1643, %v1649
  %vm1652 = vc.u32 %v1650, %v1646
  %v1653 = vsel %vm1652, 1, 0
  %v1654 = vadd.s32 %v1650, %v1646
  %v1655 = vadd.s32 %v1651, %v1653
  %v1656 = vadd.s32 %v1655, %v1645
  %v1657 = vadd.s32 %v1656, %v1647
  %v1658 = vmul.u32 %v1613, %v1604
  %v1659 = vadd.s32 %v1635, %v1654
  %vm1660 = vc.u32 %v1635, %v1654
  %v1661 = vadd.s32 %v1657, 1
  %v1662 = vsel %vm1660, %v1661, %v1657
  %v1663 = vadd.s32 %v1658, %v1662
  %v1664 = vadd.s32 %v1663, 536870912
  %v1665 = vshrl.u32 %v1664, 30
  %v1666 = vshll.u32 %v1665, 30
  %v1667 = vsub.s32 %v1663, %v1666
  %vm1668 = vcmp.lt.s32.totalorder %v1667, 0
  %v1669 = vsub.s32 0, %v1667
  %v1670 = vsel %vm1668, %v1669, %v1667
  %v1671 = vclz %v1670
  %v1672 = vsub.s32 %v1671, 2
  %vm1673 = vcmp.gt.s32.totalorder 0, %v1672
  %v1674 = vsel %vm1673, 0, %v1672
  %v1675 = vsub.s32 32, %v1674
  %v1676 = vshll.u32 %v1667, %v1674
  %v1677 = vshrl.u32 %v1659, %v1675
  %v1678 = vor.u32 %v1676, %v1677
  %v1679 = vsub.s32 4294967266, %v1674
  %v1680 = vadd.s32 %v1679, 127
  %v1681 = vshll.u32 %v1680, 23
  %v1682 = vor.u32 4788187, %v1681
  %v1683 = vand.u32 2147483647, %v1682
  %v1685 = vcvt.s32.f32 %v1678
  %v1686 = vmul.f32 %v1685, %v1683
  %v1687 = vxor.u32 %v1686, 2147483648
  %v1688 = vsel %vm1567, %v1687, %v1686
  %v1689 = vsub.s32 4, %v1665
  %v1690 = vsel %vm1567, %v1689, %v1665
  %v1691 = vsel %vm1566, %v108, %v1688
  %v1692 = vsel %vm1566, 0, %v1690
  %v1693 = vmul.f32 %v1691, %v1691
  %v1694 = vmul.f32 %v1693, -0.001358992
  %v1695 = vadd.f32 %v1694, 0.041655596
  %v1696 = vmul.f32 %v1693, %v1695
  %v1697 = vadd.f32 %v1696, -0.4999988
  %v1698 = vmul.f32 %v1693, %v1697
  %v1699 = vadd.f32 1.0, %v1698
  %v1700 = vmul.f32 %v1691, %v1691
  %v1701 = vmul.f32 %v1700, -0.00019511016
  %v1702 = vadd.f32 %v1701, 0.008332121
  %v1703 = vmul.f32 %v1700, %v1702
  %v1704 = vadd.f32 %v1703, -0.16666654
  %v1705 = vmul.f32 %v1700, %v1704
  %v1706 = vadd.f32 %v1705, 1.0
  %v1707 = vmul.f32 %v1706, %v1691
  %vm1708 = vweird.f32 %v108
  %v1709 = vadd.s32 %v1692, 3
  %v1710 = vand.u32 %v1709, 3
  %vm1711 = vcmp.lt.s32.totalorder %v1710, 2
  %vm1712 = vcmp.eq.s32.totalorder %v1710, 0
  %v1713 = vxor.u32 %v1707, 2147483648
  %v1714 = vsel %vm1712, %v1699, %v1713
  %vm1715 = vcmp.eq.s32.totalorder %v1710, 2
  %v1716 = vxor.u32 %v1699, 2147483648
  %v1717 = vsel %vm1715, %v1716, %v1707
  %v1718 = vsel %vm1711, %v1714, %v1717
  %v1719 = vsel %vm1708, nan, %v1718
  %v1720 = vand.u32 2147483647, %v113
  %vm1721 = vcmp.le.f32.partialorder %v1720, 0.7853982
  %vm1722 = vcmp.lt.s32.totalorder %v113, 0
  %v1723 = vand.u32 %v113, 2139095040
  %v1724 = vshrl.u32 %v1723, 23
  %v1725 = vsub.s32 %v1724, 127
  %v1726 = vand.u32 2147483647, %v113
  %v1727 = vand.u32 %v1726, 8388607
  %v1728 = vor.u32 %v1727, 8388608
  %v1729 = vsub.s32 0, %v1728
  %v1730 = vadd.s32 %v1725, 1
  %vm1731 = vcmp.gt.s32.totalorder %v1730, 0
  %v1732 = vsel %vm1731, %v1730, 0
  %v1733 = vshrl.u32 %v1732, 5
  %v1734 = vand.u32 %v1732, 31
  %v1735 = vsub.s32 32, %v1734
  %v1736 = vshrl.u32 683565275, %v1735
  %v1737 = vshll.u32 683565275, %v1734
  %v1738 = vshrl.u32 2475754826, %v1735
  %v1739 = vor.u32 %v1737, %v1738
  %v1740 = vshll.u32 2475754826, %v1734
  %v1741 = vshrl.u32 2131351028, %v1735
  %v1742 = vor.u32 %v1740, %v1741
  %v1743 = vshll.u32 2131351028, %v1734
  %v1744 = vshrl.u32 2102212464, %v1735
  %v1745 = vor.u32 %v1743, %v1744
  %v1746 = vshll.u32 2102212464, %v1734
  %v1747 = vshrl.u32 920167782, %v1735
  %v1748 = vor.u32 %v1746, %v1747
  %v1749 = vshll.u32 920167782, %v1734
  %v1750 = vshrl.u32 1326507024, %v1735
  %v1751 = vor.u32 %v1749, %v1750
  %vm1752 = vcmp.lt.s32.totalorder %v1733, 1
  %vm1753 = vcmp.lt.s32.totalorder %v1733, 2
  %vm1754 = vcmp.lt.s32.totalorder %v1733, 3
  %vm1755 = vcmp.lt.s32.totalorder %v1733, 4
  %v1756 = vsel %vm1752, %v1736, %v1739
  %v1757 = vsel %vm1755, %v1745, 2102212464
  %v1758 = vsel %vm1754, %v1742, %v1757
  %v1759 = vsel %vm1753, %v1756, %v1758
  %v1760 = vsel %vm1752, %v1739, %v1742
  %v1761 = vsel %vm1755, %v1748, 920167782
  %v1762 = vsel %vm1754, %v1745, %v1761
  %v1763 = vsel %vm1753, %v1760, %v1762
  %v1764 = vsel %vm1752, %v1742, %v1745
  %v1765 = vsel %vm1755, %v1751, 1326507024
  %v1766 = vsel %vm1754, %v1748, %v1765
  %v1767 = vsel %vm1753, %v1764, %v1766
  %v1768 = vshll.u32 %v1728, 8
  %v1769 = vand.u32 %v1768, 65535
  %v1770 = vshrl.u32 %v1768, 16
  %v1771 = vand.u32 %v1767, 65535
  %v1772 = vshrl.u32 %v1767, 16
  %v1773 = vmul.u32 %v1769, %v1771
  %v1774 = vmul.u32 %v1769, %v1772
  %v1775 = vmul.u32 %v1770, %v1771
  %v1776 = vmul.u32 %v1770, %v1772
  %v1777 = vshll.u32 %v1774, 16
  %v1778 = vshrl.u32 %v1774, 16
  %v1779 = vshll.u32 %v1775, 16
  %v1780 = vshrl.u32 %v1775, 16
  %vm1781 = vc.u32 %v1773, %v1777
  %v1782 = vsel %vm1781, 1, 0
  %v1783 = vadd.s32 %v1773, %v1777
  %v1784 = vadd.s32 %v1776, %v1782
  %vm1785 = vc.u32 %v1783, %v1779
  %v1786 = vsel %vm1785, 1, 0
  %v1787 = vadd.s32 %v1783, %v1779
  %v1788 = vadd.s32 %v1784, %v1786
  %v1789 = vadd.s32 %v1788, %v1778
  %v1790 = vadd.s32 %v1789, %v1780
  %v1791 = vand.u32 %v1768, 65535
  %v1792 = vshrl.u32 %v1768, 16
  %v1793 = vand.u32 %v1763, 65535
  %v1794 = vshrl.u32 %v1763, 16
  %v1795 = vmul.u32 %v1791, %v1793
  %v1796 = vmul.u32 %v1791, %v1794
  %v1797 = vmul.u32 %v1792, %v1793
  %v1798 = vmul.u32 %v1792, %v1794
  %v1799 = vshll.u32 %v1796, 16
  %v1800 = vshrl.u32 %v1796, 16
  %v1801 = vshll.u32 %v1797, 16
  %v1802 = vshrl.u32 %v1797, 16
  %vm1803 = vc.u32 %v1795, %v1799
  %v1804 = vsel %vm1803, 1, 0
  %v1805 = vadd.s32 %v1795, %v1799
  %v1806 = vadd.s32 %v1798, %v1804
  %vm1807 = vc.u32 %v1805, %v1801
  %v1808 = vsel %vm1807, 1, 0
  %v1809 = vadd.s32 %v1805, %v1801
  %v1810 = vadd.s32 %v1806, %v1808
  %v1811 = vadd.s32 %v1810, %v1800
  %v1812 = vadd.s32 %v1811, %v1802
  %v1813 = vmul.u32 %v1768, %v1759
  %v1814 = vadd.s32 %v1790, %v1809
  %vm1815 = vc.u32 %v1790, %v1809
  %v1816 = vadd.s32 %v1812, 1
  %v1817 = vsel %vm1815, %v1816, %v1812
  %v1818 = vadd.s32 %v1813, %v1817
  %v1819 = vadd.s32 %v1818, 536870912
  %v1820 = vshrl.u32 %v1819, 30
  %v1821 = vshll.u32 %v1820, 30
  %v1822 = vsub.s32 %v1818, %v1821
  %vm1823 = vcmp.lt.s32.totalorder %v1822, 0
  %v1824 = vsub.s32 0, %v1822
  %v1825 = vsel %vm1823, %v1824, %v1822
  %v1826 = vclz %v1825
  %v1827 = vsub.s32 %v1826, 2
  %vm1828 = vcmp.gt.s32.totalorder 0, %v1827
  %v1829 = vsel %vm1828, 0, %v1827
  %v1830 = vsub.s32 32, %v1829
  %v1831 = vshll.u32 %v1822, %v1829
  %v1832 = vshrl.u32 %v1814, %v1830
  %v1833 = vor.u32 %v1831, %v1832
  %v1834 = vsub.s32 4294967266, %v1829
  %v1835 = vadd.s32 %v1834, 127
  %v1836 = vshll.u32 %v1835, 23
  %v1837 = vor.u32 4788187, %v1836
  %v1838 = vand.u32 2147483647, %v1837
  %v1840 = vcvt.s32.f32 %v1833
  %v1841 = vmul.f32 %v1840, %v1838
  %v1842 = vxor.u32 %v1841, 2147483648
  %v1843 = vsel %vm1722, %v1842, %v1841
  %v1844 = vsub.s32 4, %v1820
  %v1845 = vsel %vm1722, %v1844, %v1820
  %v1846 = vsel %vm1721, %v113, %v1843
  %v1847 = vsel %vm1721, 0, %v1845
  %v1848 = vmul.f32 %v1846, %v1846
  %v1849 = vmul.f32 %v1848, -0.001358992
  %v1850 = vadd.f32 %v1849, 0.041655596
  %v1851 = vmul.f32 %v1848, %v1850
  %v1852 = vadd.f32 %v1851, -0.4999988
  %v1853 = vmul.f32 %v1848, %v1852
  %v1854 = vadd.f32 1.0, %v1853
  %v1855 = vmul.f32 %v1846, %v1846
  %v1856 = vmul.f32 %v1855, -0.00019511016
  %v1857 = vadd.f32 %v1856, 0.008332121
  %v1858 = vmul.f32 %v1855, %v1857
  %v1859 = vadd.f32 %v1858, -0.16666654
  %v1860 = vmul.f32 %v1855, %v1859
  %v1861 = vadd.f32 %v1860, 1.0
  %v1862 = vmul.f32 %v1861, %v1846
  %vm1863 = vweird.f32 %v113
  %v1864 = vadd.s32 %v1847, 3
  %v1865 = vand.u32 %v1864, 3
  %vm1866 = vcmp.lt.s32.totalorder %v1865, 2
  %vm1867 = vcmp.eq.s32.totalorder %v1865, 0
  %v1868 = vxor.u32 %v1862, 2147483648
  %v1869 = vsel %vm1867, %v1854, %v1868
  %vm1870 = vcmp.eq.s32.totalorder %v1865, 2
  %v1871 = vxor.u32 %v1854, 2147483648
  %v1872 = vsel %vm1870, %v1871, %v1862
  %v1873 = vsel %vm1866, %v1869, %v1872
  %v1874 = vsel %vm1863, nan, %v1873
  %v1875 = vand.u32 2147483647, %v118
  %vm1876 = vcmp.le.f32.partialorder %v1875, 0.7853982
  %vm1877 = vcmp.lt.s32.totalorder %v118, 0
  %v1878 = vand.u32 %v118, 2139095040
  %v1879 = vshrl.u32 %v1878, 23
  %v1880 = vsub.s32 %v1879, 127
  %v1881 = vand.u32 2147483647, %v118
  %v1882 = vand.u32 %v1881, 8388607
  %v1883 = vor.u32 %v1882, 8388608
  %v1884 = vsub.s32 0, %v1883
  %v1885 = vadd.s32 %v1880, 1
  %vm1886 = vcmp.gt.s32.totalorder %v1885, 0
  %v1887 = vsel %vm1886, %v1885, 0
  %v1888 = vshrl.u32 %v1887, 5
  %v1889 = vand.u32 %v1887, 31
  %v1890 = vsub.s32 32, %v1889
  %v1891 = vshrl.u32 683565275, %v1890
  %v1892 = vshll.u32 683565275, %v1889
  %v1893 = vshrl.u32 2475754826, %v1890
  %v1894 = vor.u32 %v1892, %v1893
  %v1895 = vshll.u32 2475754826, %v1889
  %v1896 = vshrl.u32 2131351028, %v1890
  %v1897 = vor.u32 %v1895, %v1896
  %v1898 = vshll.u32 2131351028, %v1889
  %v1899 = vshrl.u32 2102212464, %v1890
  %v1900 = vor.u32 %v1898, %v1899
  %v1901 = vshll.u32 2102212464, %v1889
  %v1902 = vshrl.u32 920167782, %v1890
  %v1903 = vor.u32 %v1901, %v1902
  %v1904 = vshll.u32 920167782, %v1889
  %v1905 = vshrl.u32 1326507024, %v1890
  %v1906 = vor.u32 %v1904, %v1905
  %vm1907 = vcmp.lt.s32.totalorder %v1888, 1
  %vm1908 = vcmp.lt.s32.totalorder %v1888, 2
  %vm1909 = vcmp.lt.s32.totalorder %v1888, 3
  %vm1910 = vcmp.lt.s32.totalorder %v1888, 4
  %v1911 = vsel %vm1907, %v1891, %v1894
  %v1912 = vsel %vm1910, %v1900, 2102212464
  %v1913 = vsel %vm1909, %v1897, %v1912
  %v1914 = vsel %vm1908, %v1911, %v1913
  %v1915 = vsel %vm1907, %v1894, %v1897
  %v1916 = vsel %vm1910, %v1903, 920167782
  %v1917 = vsel %vm1909, %v1900, %v1916
  %v1918 = vsel %vm1908, %v1915, %v1917
  %v1919 = vsel %vm1907, %v1897, %v1900
  %v1920 = vsel %vm1910, %v1906, 1326507024
  %v1921 = vsel %vm1909, %v1903, %v1920
  %v1922 = vsel %vm1908, %v1919, %v1921
  %v1923 = vshll.u32 %v1883, 8
  %v1924 = vand.u32 %v1923, 65535
  %v1925 = vshrl.u32 %v1923, 16
  %v1926 = vand.u32 %v1922, 65535
  %v1927 = vshrl.u32 %v1922, 16
  %v1928 = vmul.u32 %v1924, %v1926
  %v1929 = vmul.u32 %v1924, %v1927
  %v1930 = vmul.u32 %v1925, %v1926
  %v1931 = vmul.u32 %v1925, %v1927
  %v1932 = vshll.u32 %v1929, 16
  %v1933 = vshrl.u32 %v1929, 16
  %v1934 = vshll.u32 %v1930, 16
  %v1935 = vshrl.u32 %v1930, 16
  %vm1936 = vc.u32 %v1928, %v1932
  %v1937 = vsel %vm1936, 1, 0
  %v1938 = vadd.s32 %v1928, %v1932
  %v1939 = vadd.s32 %v1931, %v1937
  %vm1940 = vc.u32 %v1938, %v1934
  %v1941 = vsel %vm1940, 1, 0
  %v1942 = vadd.s32 %v1938, %v1934
  %v1943 = vadd.s32 %v1939, %v1941
  %v1944 = vadd.s32 %v1943, %v1933
  %v1945 = vadd.s32 %v1944, %v1935
  %v1946 = vand.u32 %v1923, 65535
  %v1947 = vshrl.u32 %v1923, 16
  %v1948 = vand.u32 %v1918, 65535
  %v1949 = vshrl.u32 %v1918, 16
  %v1950 = vmul.u32 %v1946, %v1948
  %v1951 = vmul.u32 %v1946, %v1949
  %v1952 = vmul.u32 %v1947, %v1948
  %v1953 = vmul.u32 %v1947, %v1949
  %v1954 = vshll.u32 %v1951, 16
  %v1955 = vshrl.u32 %v1951, 16
  %v1956 = vshll.u32 %v1952, 16
  %v1957 = vshrl.u32 %v1952, 16
  %vm1958 = vc.u32 %v1950, %v1954
  %v1959 = vsel %vm1958, 1, 0
  %v1960 = vadd.s32 %v1950, %v1954
  %v1961 = vadd.s32 %v1953, %v1959
  %vm1962 = vc.u32 %v1960, %v1956
  %v1963 = vsel %vm1962, 1, 0
  %v1964 = vadd.s32 %v1960, %v1956
  %v1965 = vadd.s32 %v1961, %v1963
  %v1966 = vadd.s32 %v1965, %v1955
  %v1967 = vadd.s32 %v1966, %v1957
  %v1968 = vmul.u32 %v1923, %v1914
  %v1969 = vadd.s32 %v1945, %v1964
  %vm1970 = vc.u32 %v1945, %v1964
  %v1971 = vadd.s32 %v1967, 1
  %v1972 = vsel %vm1970, %v1971, %v1967
  %v1973 = vadd.s32 %v1968, %v1972
  %v1974 = vadd.s32 %v1973, 536870912
  %v1975 = vshrl.u32 %v1974, 30
  %v1976 = vshll.u32 %v1975, 30
  %v1977 = vsub.s32 %v1973, %v1976
  %vm1978 = vcmp.lt.s32.totalorder %v1977, 0
  %v1979 = vsub.s32 0, %v1977
  %v1980 = vsel %vm1978, %v1979, %v1977
  %v1981 = vclz %v1980
  %v1982 = vsub.s32 %v1981, 2
  %vm1983 = vcmp.gt.s32.totalorder 0, %v1982
  %v1984 = vsel %vm1983, 0, %v1982
  %v1985 = vsub.s32 32, %v1984
  %v1986 = vshll.u32 %v1977, %v1984
  %v1987 = vshrl.u32 %v1969, %v1985
  %v1988 = vor.u32 %v1986, %v1987
  %v1989 = vsub.s32 4294967266, %v1984
  %v1990 = vadd.s32 %v1989, 127
  %v1991 = vshll.u32 %v1990, 23
  %v1992 = vor.u32 4788187, %v1991
  %v1993 = vand.u32 2147483647, %v1992
  %v1995 = vcvt.s32.f32 %v1988
  %v1996 = vmul.f32 %v1995, %v1993
  %v1997 = vxor.u32 %v1996, 2147483648
  %v1998 = vsel %vm1877, %v1997, %v1996
  %v1999 = vsub.s32 4, %v1975
  %v2000 = vsel %vm1877, %v1999, %v1975
  %v2001 = vsel %vm1876, %v118, %v1998
  %v2002 = vsel %vm1876, 0, %v2000
  %v2003 = vmul.f32 %v2001, %v2001
  %v2004 = vmul.f32 %v2003, -0.001358992
  %v2005 = vadd.f32 %v2004, 0.041655596
  %v2006 = vmul.f32 %v2003, %v2005
  %v2007 = vadd.f32 %v2006, -0.4999988
  %v2008 = vmul.f32 %v2003, %v2007
  %v2009 = vadd.f32 1.0, %v2008
  %v2010 = vmul.f32 %v2001, %v2001
  %v2011 = vmul.f32 %v2010, -0.00019511016
  %v2012 = vadd.f32 %v2011, 0.008332121
  %v2013 = vmul.f32 %v2010, %v2012
  %v2014 = vadd.f32 %v2013, -0.16666654
  %v2015 = vmul.f32 %v2010, %v2014
  %v2016 = vadd.f32 %v2015, 1.0
  %v2017 = vmul.f32 %v2016, %v2001
  %vm2018 = vweird.f32 %v118
  %v2019 = vadd.s32 %v2002, 3
  %v2020 = vand.u32 %v2019, 3
  %vm2021 = vcmp.lt.s32.totalorder %v2020, 2
  %vm2022 = vcmp.eq.s32.totalorder %v2020, 0
  %v2023 = vxor.u32 %v2017, 2147483648
  %v2024 = vsel %vm2022, %v2009, %v2023
  %vm2025 = vcmp.eq.s32.totalorder %v2020, 2
  %v2026 = vxor.u32 %v2009, 2147483648
  %v2027 = vsel %vm2025, %v2026, %v2017
  %v2028 = vsel %vm2021, %v2024, %v2027
  %v2029 = vsel %vm2018, nan, %v2028
  %v2030 = vand.u32 2147483647, %v123
  %vm2031 = vcmp.le.f32.partialorder %v2030, 0.7853982
  %vm2032 = vcmp.lt.s32.totalorder %v123, 0
  %v2033 = vand.u32 %v123, 2139095040
  %v2034 = vshrl.u32 %v2033, 23
  %v2035 = vsub.s32 %v2034, 127
  %v2036 = vand.u32 2147483647, %v123
  %v2037 = vand.u32 %v2036, 8388607
  %v2038 = vor.u32 %v2037, 8388608
  %v2039 = vsub.s32 0, %v2038
  %v2040 = vadd.s32 %v2035, 1
  %vm2041 = vcmp.gt.s32.totalorder %v2040, 0
  %v2042 = vsel %vm2041, %v2040, 0
  %v2043 = vshrl.u32 %v2042, 5
  %v2044 = vand.u32 %v2042, 31
  %v2045 = vsub.s32 32, %v2044
  %v2046 = vshrl.u32 683565275, %v2045
  %v2047 = vshll.u32 683565275, %v2044
  %v2048 = vshrl.u32 2475754826, %v2045
  %v2049 = vor.u32 %v2047, %v2048
  %v2050 = vshll.u32 2475754826, %v2044
  %v2051 = vshrl.u32 2131351028, %v2045
  %v2052 = vor.u32 %v2050, %v2051
  %v2053 = vshll.u32 2131351028, %v2044
  %v2054 = vshrl.u32 2102212464, %v2045
  %v2055 = vor.u32 %v2053, %v2054
  %v2056 = vshll.u32 2102212464, %v2044
  %v2057 = vshrl.u32 920167782, %v2045
  %v2058 = vor.u32 %v2056, %v2057
  %v2059 = vshll.u32 920167782, %v2044
  %v2060 = vshrl.u32 1326507024, %v2045
  %v2061 = vor.u32 %v2059, %v2060
  %vm2062 = vcmp.lt.s32.totalorder %v2043, 1
  %vm2063 = vcmp.lt.s32.totalorder %v2043, 2
  %vm2064 = vcmp.lt.s32.totalorder %v2043, 3
  %vm2065 = vcmp.lt.s32.totalorder %v2043, 4
  %v2066 = vsel %vm2062, %v2046, %v2049
  %v2067 = vsel %vm2065, %v2055, 2102212464
  %v2068 = vsel %vm2064, %v2052, %v2067
  %v2069 = vsel %vm2063, %v2066, %v2068
  %v2070 = vsel %vm2062, %v2049, %v2052
  %v2071 = vsel %vm2065, %v2058, 920167782
  %v2072 = vsel %vm2064, %v2055, %v2071
  %v2073 = vsel %vm2063, %v2070, %v2072
  %v2074 = vsel %vm2062, %v2052, %v2055
  %v2075 = vsel %vm2065, %v2061, 1326507024
  %v2076 = vsel %vm2064, %v2058, %v2075
  %v2077 = vsel %vm2063, %v2074, %v2076
  %v2078 = vshll.u32 %v2038, 8
  %v2079 = vand.u32 %v2078, 65535
  %v2080 = vshrl.u32 %v2078, 16
  %v2081 = vand.u32 %v2077, 65535
  %v2082 = vshrl.u32 %v2077, 16
  %v2083 = vmul.u32 %v2079, %v2081
  %v2084 = vmul.u32 %v2079, %v2082
  %v2085 = vmul.u32 %v2080, %v2081
  %v2086 = vmul.u32 %v2080, %v2082
  %v2087 = vshll.u32 %v2084, 16
  %v2088 = vshrl.u32 %v2084, 16
  %v2089 = vshll.u32 %v2085, 16
  %v2090 = vshrl.u32 %v2085, 16
  %vm2091 = vc.u32 %v2083, %v2087
  %v2092 = vsel %vm2091, 1, 0
  %v2093 = vadd.s32 %v2083, %v2087
  %v2094 = vadd.s32 %v2086, %v2092
  %vm2095 = vc.u32 %v2093, %v2089
  %v2096 = vsel %vm2095, 1, 0
  %v2097 = vadd.s32 %v2093, %v2089
  %v2098 = vadd.s32 %v2094, %v2096
  %v2099 = vadd.s32 %v2098, %v2088
  %v2100 = vadd.s32 %v2099, %v2090
  %v2101 = vand.u32 %v2078, 65535
  %v2102 = vshrl.u32 %v2078, 16
  %v2103 = vand.u32 %v2073, 65535
  %v2104 = vshrl.u32 %v2073, 16
  %v2105 = vmul.u32 %v2101, %v2103
  %v2106 = vmul.u32 %v2101, %v2104
  %v2107 = vmul.u32 %v2102, %v2103
  %v2108 = vmul.u32 %v2102, %v2104
  %v2109 = vshll.u32 %v2106, 16
  %v2110 = vshrl.u32 %v2106, 16
  %v2111 = vshll.u32 %v2107, 16
  %v2112 = vshrl.u32 %v2107, 16
  %vm2113 = vc.u32 %v2105, %v2109
  %v2114 = vsel %vm2113, 1, 0
  %v2115 = vadd.s32 %v2105, %v2109
  %v2116 = vadd.s32 %v2108, %v2114
  %vm2117 = vc.u32 %v2115, %v2111
  %v2118 = vsel %vm2117, 1, 0
  %v2119 = vadd.s32 %v2115, %v2111
  %v2120 = vadd.s32 %v2116, %v2118
  %v2121 = vadd.s32 %v2120, %v2110
  %v2122 = vadd.s32 %v2121, %v2112
  %v2123 = vmul.u32 %v2078, %v2069
  %v2124 = vadd.s32 %v2100, %v2119
  %vm2125 = vc.u32 %v2100, %v2119
  %v2126 = vadd.s32 %v2122, 1
  %v2127 = vsel %vm2125, %v2126, %v2122
  %v2128 = vadd.s32 %v2123, %v2127
  %v2129 = vadd.s32 %v2128, 536870912
  %v2130 = vshrl.u32 %v2129, 30
  %v2131 = vshll.u32 %v2130, 30
  %v2132 = vsub.s32 %v2128, %v2131
  %vm2133 = vcmp.lt.s32.totalorder %v2132, 0
  %v2134 = vsub.s32 0, %v2132
  %v2135 = vsel %vm2133, %v2134, %v2132
  %v2136 = vclz %v2135
  %v2137 = vsub.s32 %v2136, 2
  %vm2138 = vcmp.gt.s32.totalorder 0, %v2137
  %v2139 = vsel %vm2138, 0, %v2137
  %v2140 = vsub.s32 32, %v2139
  %v2141 = vshll.u32 %v2132, %v2139
  %v2142 = vshrl.u32 %v2124, %v2140
  %v2143 = vor.u32 %v2141, %v2142
  %v2144 = vsub.s32 4294967266, %v2139
  %v2145 = vadd.s32 %v2144, 127
  %v2146 = vshll.u32 %v2145, 23
  %v2147 = vor.u32 4788187, %v2146
  %v2148 = vand.u32 2147483647, %v2147
  %v2150 = vcvt.s32.f32 %v2143
  %v2151 = vmul.f32 %v2150, %v2148
  %v2152 = vxor.u32 %v2151, 2147483648
  %v2153 = vsel %vm2032, %v2152, %v2151
  %v2154 = vsub.s32 4, %v2130
  %v2155 = vsel %vm2032, %v2154, %v2130
  %v2156 = vsel %vm2031, %v123, %v2153
  %v2157 = vsel %vm2031, 0, %v2155
  %v2158 = vmul.f32 %v2156, %v2156
  %v2159 = vmul.f32 %v2158, -0.001358992
  %v2160 = vadd.f32 %v2159, 0.041655596
  %v2161 = vmul.f32 %v2158, %v2160
  %v2162 = vadd.f32 %v2161, -0.4999988
  %v2163 = vmul.f32 %v2158, %v2162
  %v2164 = vadd.f32 1.0, %v2163
  %v2165 = vmul.f32 %v2156, %v2156
  %v2166 = vmul.f32 %v2165, -0.00019511016
  %v2167 = vadd.f32 %v2166, 0.008332121
  %v2168 = vmul.f32 %v2165, %v2167
  %v2169 = vadd.f32 %v2168, -0.16666654
  %v2170 = vmul.f32 %v2165, %v2169
  %v2171 = vadd.f32 %v2170, 1.0
  %v2172 = vmul.f32 %v2171, %v2156
  %vm2173 = vweird.f32 %v123
  %v2174 = vadd.s32 %v2157, 3
  %v2175 = vand.u32 %v2174, 3
  %vm2176 = vcmp.lt.s32.totalorder %v2175, 2
  %vm2177 = vcmp.eq.s32.totalorder %v2175, 0
  %v2178 = vxor.u32 %v2172, 2147483648
  %v2179 = vsel %vm2177, %v2164, %v2178
  %vm2180 = vcmp.eq.s32.totalorder %v2175, 2
  %v2181 = vxor.u32 %v2164, 2147483648
  %v2182 = vsel %vm2180, %v2181, %v2172
  %v2183 = vsel %vm2176, %v2179, %v2182
  %v2184 = vsel %vm2173, nan, %v2183
  %v2185 = vand.u32 2147483647, %v128
  %vm2186 = vcmp.le.f32.partialorder %v2185, 0.7853982
  %vm2187 = vcmp.lt.s32.totalorder %v128, 0
  %v2188 = vand.u32 %v128, 2139095040
  %v2189 = vshrl.u32 %v2188, 23
  %v2190 = vsub.s32 %v2189, 127
  %v2191 = vand.u32 2147483647, %v128
  %v2192 = vand.u32 %v2191, 8388607
  %v2193 = vor.u32 %v2192, 8388608
  %v2194 = vsub.s32 0, %v2193
  %v2195 = vadd.s32 %v2190, 1
  %vm2196 = vcmp.gt.s32.totalorder %v2195, 0
  %v2197 = vsel %vm2196, %v2195, 0
  %v2198 = vshrl.u32 %v2197, 5
  %v2199 = vand.u32 %v2197, 31
  %v2200 = vsub.s32 32, %v2199
  %v2201 = vshrl.u32 683565275, %v2200
  %v2202 = vshll.u32 683565275, %v2199
  %v2203 = vshrl.u32 2475754826, %v2200
  %v2204 = vor.u32 %v2202, %v2203
  %v2205 = vshll.u32 2475754826, %v2199
  %v2206 = vshrl.u32 2131351028, %v2200
  %v2207 = vor.u32 %v2205, %v2206
  %v2208 = vshll.u32 2131351028, %v2199
  %v2209 = vshrl.u32 2102212464, %v2200
  %v2210 = vor.u32 %v2208, %v2209
  %v2211 = vshll.u32 2102212464, %v2199
  %v2212 = vshrl.u32 920167782, %v2200
  %v2213 = vor.u32 %v2211, %v2212
  %v2214 = vshll.u32 920167782, %v2199
  %v2215 = vshrl.u32 1326507024, %v2200
  %v2216 = vor.u32 %v2214, %v2215
  %vm2217 = vcmp.lt.s32.totalorder %v2198, 1
  %vm2218 = vcmp.lt.s32.totalorder %v2198, 2
  %vm2219 = vcmp.lt.s32.totalorder %v2198, 3
  %vm2220 = vcmp.lt.s32.totalorder %v2198, 4
  %v2221 = vsel %vm2217, %v2201, %v2204
  %v2222 = vsel %vm2220, %v2210, 2102212464
  %v2223 = vsel %vm2219, %v2207, %v2222
  %v2224 = vsel %vm2218, %v2221, %v2223
  %v2225 = vsel %vm2217, %v2204, %v2207
  %v2226 = vsel %vm2220, %v2213, 920167782
  %v2227 = vsel %vm2219, %v2210, %v2226
  %v2228 = vsel %vm2218, %v2225, %v2227
  %v2229 = vsel %vm2217, %v2207, %v2210
  %v2230 = vsel %vm2220, %v2216, 1326507024
  %v2231 = vsel %vm2219, %v2213, %v2230
  %v2232 = vsel %vm2218, %v2229, %v2231
  %v2233 = vshll.u32 %v2193, 8
  %v2234 = vand.u32 %v2233, 65535
  %v2235 = vshrl.u32 %v2233, 16
  %v2236 = vand.u32 %v2232, 65535
  %v2237 = vshrl.u32 %v2232, 16
  %v2238 = vmul.u32 %v2234, %v2236
  %v2239 = vmul.u32 %v2234, %v2237
  %v2240 = vmul.u32 %v2235, %v2236
  %v2241 = vmul.u32 %v2235, %v2237
  %v2242 = vshll.u32 %v2239, 16
  %v2243 = vshrl.u32 %v2239, 16
  %v2244 = vshll.u32 %v2240, 16
  %v2245 = vshrl.u32 %v2240, 16
  %vm2246 = vc.u32 %v2238, %v2242
  %v2247 = vsel %vm2246, 1, 0
  %v2248 = vadd.s32 %v2238, %v2242
  %v2249 = vadd.s32 %v2241, %v2247
  %vm2250 = vc.u32 %v2248, %v2244
  %v2251 = vsel %vm2250, 1, 0
  %v2252 = vadd.s32 %v2248, %v2244
  %v2253 = vadd.s32 %v2249, %v2251
  %v2254 = vadd.s32 %v2253, %v2243
  %v2255 = vadd.s32 %v2254, %v2245
  %v2256 = vand.u32 %v2233, 65535
  %v2257 = vshrl.u32 %v2233, 16
  %v2258 = vand.u32 %v2228, 65535
  %v2259 = vshrl.u32 %v2228, 16
  %v2260 = vmul.u32 %v2256, %v2258
  %v2261 = vmul.u32 %v2256, %v2259
  %v2262 = vmul.u32 %v2257, %v2258
  %v2263 = vmul.u32 %v2257, %v2259
  %v2264 = vshll.u32 %v2261, 16
  %v2265 = vshrl.u32 %v2261, 16
  %v2266 = vshll.u32 %v2262, 16
  %v2267 = vshrl.u32 %v2262, 16
  %vm2268 = vc.u32 %v2260, %v2264
  %v2269 = vsel %vm2268, 1, 0
  %v2270 = vadd.s32 %v2260, %v2264
  %v2271 = vadd.s32 %v2263, %v2269
  %vm2272 = vc.u32 %v2270, %v2266
  %v2273 = vsel %vm2272, 1, 0
  %v2274 = vadd.s32 %v2270, %v2266
  %v2275 = vadd.s32 %v2271, %v2273
  %v2276 = vadd.s32 %v2275, %v2265
  %v2277 = vadd.s32 %v2276, %v2267
  %v2278 = vmul.u32 %v2233, %v2224
  %v2279 = vadd.s32 %v2255, %v2274
  %vm2280 = vc.u32 %v2255, %v2274
  %v2281 = vadd.s32 %v2277, 1
  %v2282 = vsel %vm2280, %v2281, %v2277
  %v2283 = vadd.s32 %v2278, %v2282
  %v2284 = vadd.s32 %v2283, 536870912
  %v2285 = vshrl.u32 %v2284, 30
  %v2286 = vshll.u32 %v2285, 30
  %v2287 = vsub.s32 %v2283, %v2286
  %vm2288 = vcmp.lt.s32.totalorder %v2287, 0
  %v2289 = vsub.s32 0, %v2287
  %v2290 = vsel %vm2288, %v2289, %v2287
  %v2291 = vclz %v2290
  %v2292 = vsub.s32 %v2291, 2
  %vm2293 = vcmp.gt.s32.totalorder 0, %v2292
  %v2294 = vsel %vm2293, 0, %v2292
  %v2295 = vsub.s32 32, %v2294
  %v2296 = vshll.u32 %v2287, %v2294
  %v2297 = vshrl.u32 %v2279, %v2295
  %v2298 = vor.u32 %v2296, %v2297
  %v2299 = vsub.s32 4294967266, %v2294
  %v2300 = vadd.s32 %v2299, 127
  %v2301 = vshll.u32 %v2300, 23
  %v2302 = vor.u32 4788187, %v2301
  %v2303 = vand.u32 2147483647, %v2302
  %v2305 = vcvt.s32.f32 %v2298
  %v2306 = vmul.f32 %v2305, %v2303
  %v2307 = vxor.u32 %v2306, 2147483648
  %v2308 = vsel %vm2187, %v2307, %v2306
  %v2309 = vsub.s32 4, %v2285
  %v2310 = vsel %vm2187, %v2309, %v2285
  %v2311 = vsel %vm2186, %v128, %v2308
  %v2312 = vsel %vm2186, 0, %v2310
  %v2313 = vmul.f32 %v2311, %v2311
  %v2314 = vmul.f32 %v2313, -0.001358992
  %v2315 = vadd.f32 %v2314, 0.041655596
  %v2316 = vmul.f32 %v2313, %v2315
  %v2317 = vadd.f32 %v2316, -0.4999988
  %v2318 = vmul.f32 %v2313, %v2317
  %v2319 = vadd.f32 1.0, %v2318
  %v2320 = vmul.f32 %v2311, %v2311
  %v2321 = vmul.f32 %v2320, -0.00019511016
  %v2322 = vadd.f32 %v2321, 0.008332121
  %v2323 = vmul.f32 %v2320, %v2322
  %v2324 = vadd.f32 %v2323, -0.16666654
  %v2325 = vmul.f32 %v2320, %v2324
  %v2326 = vadd.f32 %v2325, 1.0
  %v2327 = vmul.f32 %v2326, %v2311
  %vm2328 = vweird.f32 %v128
  %v2329 = vadd.s32 %v2312, 3
  %v2330 = vand.u32 %v2329, 3
  %vm2331 = vcmp.lt.s32.totalorder %v2330, 2
  %vm2332 = vcmp.eq.s32.totalorder %v2330, 0
  %v2333 = vxor.u32 %v2327, 2147483648
  %v2334 = vsel %vm2332, %v2319, %v2333
  %vm2335 = vcmp.eq.s32.totalorder %v2330, 2
  %v2336 = vxor.u32 %v2319, 2147483648
  %v2337 = vsel %vm2335, %v2336, %v2327
  %v2338 = vsel %vm2331, %v2334, %v2337
  %v2339 = vsel %vm2328, nan, %v2338
  %v2340 = vand.u32 2147483647, %v133
  %vm2341 = vcmp.le.f32.partialorder %v2340, 0.7853982
  %vm2342 = vcmp.lt.s32.totalorder %v133, 0
  %v2343 = vand.u32 %v133, 2139095040
  %v2344 = vshrl.u32 %v2343, 23
  %v2345 = vsub.s32 %v2344, 127
  %v2346 = vand.u32 2147483647, %v133
  %v2347 = vand.u32 %v2346, 8388607
  %v2348 = vor.u32 %v2347, 8388608
  %v2349 = vsub.s32 0, %v2348
  %v2350 = vadd.s32 %v2345, 1
  %vm2351 = vcmp.gt.s32.totalorder %v2350, 0
  %v2352 = vsel %vm2351, %v2350, 0
  %v2353 = vshrl.u32 %v2352, 5
  %v2354 = vand.u32 %v2352, 31
  %v2355 = vsub.s32 32, %v2354
  %v2356 = vshrl.u32 683565275, %v2355
  %v2357 = vshll.u32 683565275, %v2354
  %v2358 = vshrl.u32 2475754826, %v2355
  %v2359 = vor.u32 %v2357, %v2358
  %v2360 = vshll.u32 2475754826, %v2354
  %v2361 = vshrl.u32 2131351028, %v2355
  %v2362 = vor.u32 %v2360, %v2361
  %v2363 = vshll.u32 2131351028, %v2354
  %v2364 = vshrl.u32 2102212464, %v2355
  %v2365 = vor.u32 %v2363, %v2364
  %v2366 = vshll.u32 2102212464, %v2354
  %v2367 = vshrl.u32 920167782, %v2355
  %v2368 = vor.u32 %v2366, %v2367
  %v2369 = vshll.u32 920167782, %v2354
  %v2370 = vshrl.u32 1326507024, %v2355
  %v2371 = vor.u32 %v2369, %v2370
  %vm2372 = vcmp.lt.s32.totalorder %v2353, 1
  %vm2373 = vcmp.lt.s32.totalorder %v2353, 2
  %vm2374 = vcmp.lt.s32.totalorder %v2353, 3
  %vm2375 = vcmp.lt.s32.totalorder %v2353, 4
  %v2376 = vsel %vm2372, %v2356, %v2359
  %v2377 = vsel %vm2375, %v2365, 2102212464
  %v2378 = vsel %vm2374, %v2362, %v2377
  %v2379 = vsel %vm2373, %v2376, %v2378
  %v2380 = vsel %vm2372, %v2359, %v2362
  %v2381 = vsel %vm2375, %v2368, 920167782
  %v2382 = vsel %vm2374, %v2365, %v2381
  %v2383 = vsel %vm2373, %v2380, %v2382
  %v2384 = vsel %vm2372, %v2362, %v2365
  %v2385 = vsel %vm2375, %v2371, 1326507024
  %v2386 = vsel %vm2374, %v2368, %v2385
  %v2387 = vsel %vm2373, %v2384, %v2386
  %v2388 = vshll.u32 %v2348, 8
  %v2389 = vand.u32 %v2388, 65535
  %v2390 = vshrl.u32 %v2388, 16
  %v2391 = vand.u32 %v2387, 65535
  %v2392 = vshrl.u32 %v2387, 16
  %v2393 = vmul.u32 %v2389, %v2391
  %v2394 = vmul.u32 %v2389, %v2392
  %v2395 = vmul.u32 %v2390, %v2391
  %v2396 = vmul.u32 %v2390, %v2392
  %v2397 = vshll.u32 %v2394, 16
  %v2398 = vshrl.u32 %v2394, 16
  %v2399 = vshll.u32 %v2395, 16
  %v2400 = vshrl.u32 %v2395, 16
  %vm2401 = vc.u32 %v2393, %v2397
  %v2402 = vsel %vm2401, 1, 0
  %v2403 = vadd.s32 %v2393, %v2397
  %v2404 = vadd.s32 %v2396, %v2402
  %vm2405 = vc.u32 %v2403, %v2399
  %v2406 = vsel %vm2405, 1, 0
  %v2407 = vadd.s32 %v2403, %v2399
  %v2408 = vadd.s32 %v2404, %v2406
  %v2409 = vadd.s32 %v2408, %v2398
  %v2410 = vadd.s32 %v2409, %v2400
  %v2411 = vand.u32 %v2388, 65535
  %v2412 = vshrl.u32 %v2388, 16
  %v2413 = vand.u32 %v2383, 65535
  %v2414 = vshrl.u32 %v2383, 16
  %v2415 = vmul.u32 %v2411, %v2413
  %v2416 = vmul.u32 %v2411, %v2414
  %v2417 = vmul.u32 %v2412, %v2413
  %v2418 = vmul.u32 %v2412, %v2414
  %v2419 = vshll.u32 %v2416, 16
  %v2420 = vshrl.u32 %v2416, 16
  %v2421 = vshll.u32 %v2417, 16
  %v2422 = vshrl.u32 %v2417, 16
  %vm2423 = vc.u32 %v2415, %v2419
  %v2424 = vsel %vm2423, 1, 0
  %v2425 = vadd.s32 %v2415, %v2419
  %v2426 = vadd.s32 %v2418, %v2424
  %vm2427 = vc.u32 %v2425, %v2421
  %v2428 = vsel %vm2427, 1, 0
  %v2429 = vadd.s32 %v2425, %v2421
  %v2430 = vadd.s32 %v2426, %v2428
  %v2431 = vadd.s32 %v2430, %v2420
  %v2432 = vadd.s32 %v2431, %v2422
  %v2433 = vmul.u32 %v2388, %v2379
  %v2434 = vadd.s32 %v2410, %v2429
  %vm2435 = vc.u32 %v2410, %v2429
  %v2436 = vadd.s32 %v2432, 1
  %v2437 = vsel %vm2435, %v2436, %v2432
  %v2438 = vadd.s32 %v2433, %v2437
  %v2439 = vadd.s32 %v2438, 536870912
  %v2440 = vshrl.u32 %v2439, 30
  %v2441 = vshll.u32 %v2440, 30
  %v2442 = vsub.s32 %v2438, %v2441
  %vm2443 = vcmp.lt.s32.totalorder %v2442, 0
  %v2444 = vsub.s32 0, %v2442
  %v2445 = vsel %vm2443, %v2444, %v2442
  %v2446 = vclz %v2445
  %v2447 = vsub.s32 %v2446, 2
  %vm2448 = vcmp.gt.s32.totalorder 0, %v2447
  %v2449 = vsel %vm2448, 0, %v2447
  %v2450 = vsub.s32 32, %v2449
  %v2451 = vshll.u32 %v2442, %v2449
  %v2452 = vshrl.u32 %v2434, %v2450
  %v2453 = vor.u32 %v2451, %v2452
  %v2454 = vsub.s32 4294967266, %v2449
  %v2455 = vadd.s32 %v2454, 127
  %v2456 = vshll.u32 %v2455, 23
  %v2457 = vor.u32 4788187, %v2456
  %v2458 = vand.u32 2147483647, %v2457
  %v2460 = vcvt.s32.f32 %v2453
  %v2461 = vmul.f32 %v2460, %v2458
  %v2462 = vxor.u32 %v2461, 2147483648
  %v2463 = vsel %vm2342, %v2462, %v2461
  %v2464 = vsub.s32 4, %v2440
  %v2465 = vsel %vm2342, %v2464, %v2440
  %v2466 = vsel %vm2341, %v133, %v2463
  %v2467 = vsel %vm2341, 0, %v2465
  %v2468 = vmul.f32 %v2466, %v2466
  %v2469 = vmul.f32 %v2468, -0.001358992
  %v2470 = vadd.f32 %v2469, 0.041655596
  %v2471 = vmul.f32 %v2468, %v2470
  %v2472 = vadd.f32 %v2471, -0.4999988
  %v2473 = vmul.f32 %v2468, %v2472
  %v2474 = vadd.f32 1.0, %v2473
  %v2475 = vmul.f32 %v2466, %v2466
  %v2476 = vmul.f32 %v2475, -0.00019511016
  %v2477 = vadd.f32 %v2476, 0.008332121
  %v2478 = vmul.f32 %v2475, %v2477
  %v2479 = vadd.f32 %v2478, -0.16666654
  %v2480 = vmul.f32 %v2475, %v2479
  %v2481 = vadd.f32 %v2480, 1.0
  %v2482 = vmul.f32 %v2481, %v2466
  %vm2483 = vweird.f32 %v133
  %v2484 = vadd.s32 %v2467, 3
  %v2485 = vand.u32 %v2484, 3
  %vm2486 = vcmp.lt.s32.totalorder %v2485, 2
  %vm2487 = vcmp.eq.s32.totalorder %v2485, 0
  %v2488 = vxor.u32 %v2482, 2147483648
  %v2489 = vsel %vm2487, %v2474, %v2488
  %vm2490 = vcmp.eq.s32.totalorder %v2485, 2
  %v2491 = vxor.u32 %v2474, 2147483648
  %v2492 = vsel %vm2490, %v2491, %v2482
  %v2493 = vsel %vm2486, %v2489, %v2492
  %v2494 = vsel %vm2483, nan, %v2493
  %v2495 = vand.u32 2147483647, %v138
  %vm2496 = vcmp.le.f32.partialorder %v2495, 0.7853982
  %vm2497 = vcmp.lt.s32.totalorder %v138, 0
  %v2498 = vand.u32 %v138, 2139095040
  %v2499 = vshrl.u32 %v2498, 23
  %v2500 = vsub.s32 %v2499, 127
  %v2501 = vand.u32 2147483647, %v138
  %v2502 = vand.u32 %v2501, 8388607
  %v2503 = vor.u32 %v2502, 8388608
  %v2504 = vsub.s32 0, %v2503
  %v2505 = vadd.s32 %v2500, 1
  %vm2506 = vcmp.gt.s32.totalorder %v2505, 0
  %v2507 = vsel %vm2506, %v2505, 0
  %v2508 = vshrl.u32 %v2507, 5
  %v2509 = vand.u32 %v2507, 31
  %v2510 = vsub.s32 32, %v2509
  %v2511 = vshrl.u32 683565275, %v2510
  %v2512 = vshll.u32 683565275, %v2509
  %v2513 = vshrl.u32 2475754826, %v2510
  %v2514 = vor.u32 %v2512, %v2513
  %v2515 = vshll.u32 2475754826, %v2509
  %v2516 = vshrl.u32 2131351028, %v2510
  %v2517 = vor.u32 %v2515, %v2516
  %v2518 = vshll.u32 2131351028, %v2509
  %v2519 = vshrl.u32 2102212464, %v2510
  %v2520 = vor.u32 %v2518, %v2519
  %v2521 = vshll.u32 2102212464, %v2509
  %v2522 = vshrl.u32 920167782, %v2510
  %v2523 = vor.u32 %v2521, %v2522
  %v2524 = vshll.u32 920167782, %v2509
  %v2525 = vshrl.u32 1326507024, %v2510
  %v2526 = vor.u32 %v2524, %v2525
  %vm2527 = vcmp.lt.s32.totalorder %v2508, 1
  %vm2528 = vcmp.lt.s32.totalorder %v2508, 2
  %vm2529 = vcmp.lt.s32.totalorder %v2508, 3
  %vm2530 = vcmp.lt.s32.totalorder %v2508, 4
  %v2531 = vsel %vm2527, %v2511, %v2514
  %v2532 = vsel %vm2530, %v2520, 2102212464
  %v2533 = vsel %vm2529, %v2517, %v2532
  %v2534 = vsel %vm2528, %v2531, %v2533
  %v2535 = vsel %vm2527, %v2514, %v2517
  %v2536 = vsel %vm2530, %v2523, 920167782
  %v2537 = vsel %vm2529, %v2520, %v2536
  %v2538 = vsel %vm2528, %v2535, %v2537
  %v2539 = vsel %vm2527, %v2517, %v2520
  %v2540 = vsel %vm2530, %v2526, 1326507024
  %v2541 = vsel %vm2529, %v2523, %v2540
  %v2542 = vsel %vm2528, %v2539, %v2541
  %v2543 = vshll.u32 %v2503, 8
  %v2544 = vand.u32 %v2543, 65535
  %v2545 = vshrl.u32 %v2543, 16
  %v2546 = vand.u32 %v2542, 65535
  %v2547 = vshrl.u32 %v2542, 16
  %v2548 = vmul.u32 %v2544, %v2546
  %v2549 = vmul.u32 %v2544, %v2547
  %v2550 = vmul.u32 %v2545, %v2546
  %v2551 = vmul.u32 %v2545, %v2547
  %v2552 = vshll.u32 %v2549, 16
  %v2553 = vshrl.u32 %v2549, 16
  %v2554 = vshll.u32 %v2550, 16
  %v2555 = vshrl.u32 %v2550, 16
  %vm2556 = vc.u32 %v2548, %v2552
  %v2557 = vsel %vm2556, 1, 0
  %v2558 = vadd.s32 %v2548, %v2552
  %v2559 = vadd.s32 %v2551, %v2557
  %vm2560 = vc.u32 %v2558, %v2554
  %v2561 = vsel %vm2560, 1, 0
  %v2562 = vadd.s32 %v2558, %v2554
  %v2563 = vadd.s32 %v2559, %v2561
  %v2564 = vadd.s32 %v2563, %v2553
  %v2565 = vadd.s32 %v2564, %v2555
  %v2566 = vand.u32 %v2543, 65535
  %v2567 = vshrl.u32 %v2543, 16
  %v2568 = vand.u32 %v2538, 65535
  %v2569 = vshrl.u32 %v2538, 16
  %v2570 = vmul.u32 %v2566, %v2568
  %v2571 = vmul.u32 %v2566, %v2569
  %v2572 = vmul.u32 %v2567, %v2568
  %v2573 = vmul.u32 %v2567, %v2569
  %v2574 = vshll.u32 %v2571, 16
  %v2575 = vshrl.u32 %v2571, 16
  %v2576 = vshll.u32 %v2572, 16
  %v2577 = vshrl.u32 %v2572, 16
  %vm2578 = vc.u32 %v2570, %v2574
  %v2579 = vsel %vm2578, 1, 0
  %v2580 = vadd.s32 %v2570, %v2574
  %v2581 = vadd.s32 %v2573, %v2579
  %vm2582 = vc.u32 %v2580, %v2576
  %v2583 = vsel %vm2582, 1, 0
  %v2584 = vadd.s32 %v2580, %v2576
  %v2585 = vadd.s32 %v2581, %v2583
  %v2586 = vadd.s32 %v2585, %v2575
  %v2587 = vadd.s32 %v2586, %v2577
  %v2588 = vmul.u32 %v2543, %v2534
  %v2589 = vadd.s32 %v2565, %v2584
  %vm2590 = vc.u32 %v2565, %v2584
  %v2591 = vadd.s32 %v2587, 1
  %v2592 = vsel %vm2590, %v2591, %v2587
  %v2593 = vadd.s32 %v2588, %v2592
  %v2594 = vadd.s32 %v2593, 536870912
  %v2595 = vshrl.u32 %v2594, 30
  %v2596 = vshll.u32 %v2595, 30
  %v2597 = vsub.s32 %v2593, %v2596
  %vm2598 = vcmp.lt.s32.totalorder %v2597, 0
  %v2599 = vsub.s32 0, %v2597
  %v2600 = vsel %vm2598, %v2599, %v2597
  %v2601 = vclz %v2600
  %v2602 = vsub.s32 %v2601, 2
  %vm2603 = vcmp.gt.s32.totalorder 0, %v2602
  %v2604 = vsel %vm2603, 0, %v2602
  %v2605 = vsub.s32 32, %v2604
  %v2606 = vshll.u32 %v2597, %v2604
  %v2607 = vshrl.u32 %v2589, %v2605
  %v2608 = vor.u32 %v2606, %v2607
  %v2609 = vsub.s32 4294967266, %v2604
  %v2610 = vadd.s32 %v2609, 127
  %v2611 = vshll.u32 %v2610, 23
  %v2612 = vor.u32 4788187, %v2611
  %v2613 = vand.u32 2147483647, %v2612
  %v2615 = vcvt.s32.f32 %v2608
  %v2616 = vmul.f32 %v2615, %v2613
  %v2617 = vxor.u32 %v2616, 2147483648
  %v2618 = vsel %vm2497, %v2617, %v2616
  %v2619 = vsub.s32 4, %v2595
  %v2620 = vsel %vm2497, %v2619, %v2595
  %v2621 = vsel %vm2496, %v138, %v2618
  %v2622 = vsel %vm2496, 0, %v2620
  %v2623 = vmul.f32 %v2621, %v2621
  %v2624 = vmul.f32 %v2623, -0.001358992
  %v2625 = vadd.f32 %v2624, 0.041655596
  %v2626 = vmul.f32 %v2623, %v2625
  %v2627 = vadd.f32 %v2626, -0.4999988
  %v2628 = vmul.f32 %v2623, %v2627
  %v2629 = vadd.f32 1.0, %v2628
  %v2630 = vmul.f32 %v2621, %v2621
  %v2631 = vmul.f32 %v2630, -0.00019511016
  %v2632 = vadd.f32 %v2631, 0.008332121
  %v2633 = vmul.f32 %v2630, %v2632
  %v2634 = vadd.f32 %v2633, -0.16666654
  %v2635 = vmul.f32 %v2630, %v2634
  %v2636 = vadd.f32 %v2635, 1.0
  %v2637 = vmul.f32 %v2636, %v2621
  %vm2638 = vweird.f32 %v138
  %v2639 = vadd.s32 %v2622, 3
  %v2640 = vand.u32 %v2639, 3
  %vm2641 = vcmp.lt.s32.totalorder %v2640, 2
  %vm2642 = vcmp.eq.s32.totalorder %v2640, 0
  %v2643 = vxor.u32 %v2637, 2147483648
  %v2644 = vsel %vm2642, %v2629, %v2643
  %vm2645 = vcmp.eq.s32.totalorder %v2640, 2
  %v2646 = vxor.u32 %v2629, 2147483648
  %v2647 = vsel %vm2645, %v2646, %v2637
  %v2648 = vsel %vm2641, %v2644, %v2647
  %v2649 = vsel %vm2638, nan, %v2648
  %v2650 = vand.u32 2147483647, %v143
  %vm2651 = vcmp.le.f32.partialorder %v2650, 0.7853982
  %vm2652 = vcmp.lt.s32.totalorder %v143, 0
  %v2653 = vand.u32 %v143, 2139095040
  %v2654 = vshrl.u32 %v2653, 23
  %v2655 = vsub.s32 %v2654, 127
  %v2656 = vand.u32 2147483647, %v143
  %v2657 = vand.u32 %v2656, 8388607
  %v2658 = vor.u32 %v2657, 8388608
  %v2659 = vsub.s32 0, %v2658
  %v2660 = vadd.s32 %v2655, 1
  %vm2661 = vcmp.gt.s32.totalorder %v2660, 0
  %v2662 = vsel %vm2661, %v2660, 0
  %v2663 = vshrl.u32 %v2662, 5
  %v2664 = vand.u32 %v2662, 31
  %v2665 = vsub.s32 32, %v2664
  %v2666 = vshrl.u32 683565275, %v2665
  %v2667 = vshll.u32 683565275, %v2664
  %v2668 = vshrl.u32 2475754826, %v2665
  %v2669 = vor.u32 %v2667, %v2668
  %v2670 = vshll.u32 2475754826, %v2664
  %v2671 = vshrl.u32 2131351028, %v2665
  %v2672 = vor.u32 %v2670, %v2671
  %v2673 = vshll.u32 2131351028, %v2664
  %v2674 = vshrl.u32 2102212464, %v2665
  %v2675 = vor.u32 %v2673, %v2674
  %v2676 = vshll.u32 2102212464, %v2664
  %v2677 = vshrl.u32 920167782, %v2665
  %v2678 = vor.u32 %v2676, %v2677
  %v2679 = vshll.u32 920167782, %v2664
  %v2680 = vshrl.u32 1326507024, %v2665
  %v2681 = vor.u32 %v2679, %v2680
  %vm2682 = vcmp.lt.s32.totalorder %v2663, 1
  %vm2683 = vcmp.lt.s32.totalorder %v2663, 2
  %vm2684 = vcmp.lt.s32.totalorder %v2663, 3
  %vm2685 = vcmp.lt.s32.totalorder %v2663, 4
  %v2686 = vsel %vm2682, %v2666, %v2669
  %v2687 = vsel %vm2685, %v2675, 2102212464
  %v2688 = vsel %vm2684, %v2672, %v2687
  %v2689 = vsel %vm2683, %v2686, %v2688
  %v2690 = vsel %vm2682, %v2669, %v2672
  %v2691 = vsel %vm2685, %v2678, 920167782
  %v2692 = vsel %vm2684, %v2675, %v2691
  %v2693 = vsel %vm2683, %v2690, %v2692
  %v2694 = vsel %vm2682, %v2672, %v2675
  %v2695 = vsel %vm2685, %v2681, 1326507024
  %v2696 = vsel %vm2684, %v2678, %v2695
  %v2697 = vsel %vm2683, %v2694, %v2696
  %v2698 = vshll.u32 %v2658, 8
  %v2699 = vand.u32 %v2698, 65535
  %v2700 = vshrl.u32 %v2698, 16
  %v2701 = vand.u32 %v2697, 65535
  %v2702 = vshrl.u32 %v2697, 16
  %v2703 = vmul.u32 %v2699, %v2701
  %v2704 = vmul.u32 %v2699, %v2702
  %v2705 = vmul.u32 %v2700, %v2701
  %v2706 = vmul.u32 %v2700, %v2702
  %v2707 = vshll.u32 %v2704, 16
  %v2708 = vshrl.u32 %v2704, 16
  %v2709 = vshll.u32 %v2705, 16
  %v2710 = vshrl.u32 %v2705, 16
  %vm2711 = vc.u32 %v2703, %v2707
  %v2712 = vsel %vm2711, 1, 0
  %v2713 = vadd.s32 %v2703, %v2707
  %v2714 = vadd.s32 %v2706, %v2712
  %vm2715 = vc.u32 %v2713, %v2709
  %v2716 = vsel %vm2715, 1, 0
  %v2717 = vadd.s32 %v2713, %v2709
  %v2718 = vadd.s32 %v2714, %v2716
  %v2719 = vadd.s32 %v2718, %v2708
  %v2720 = vadd.s32 %v2719, %v2710
  %v2721 = vand.u32 %v2698, 65535
  %v2722 = vshrl.u32 %v2698, 16
  %v2723 = vand.u32 %v2693, 65535
  %v2724 = vshrl.u32 %v2693, 16
  %v2725 = vmul.u32 %v2721, %v2723
  %v2726 = vmul.u32 %v2721, %v2724
  %v2727 = vmul.u32 %v2722, %v2723
  %v2728 = vmul.u32 %v2722, %v2724
  %v2729 = vshll.u32 %v2726, 16
  %v2730 = vshrl.u32 %v2726, 16
  %v2731 = vshll.u32 %v2727, 16
  %v2732 = vshrl.u32 %v2727, 16
  %vm2733 = vc.u32 %v2725, %v2729
  %v2734 = vsel %vm2733, 1, 0
  %v2735 = vadd.s32 %v2725, %v2729
  %v2736 = vadd.s32 %v2728, %v2734
  %vm2737 = vc.u32 %v2735, %v2731
  %v2738 = vsel %vm2737, 1, 0
  %v2739 = vadd.s32 %v2735, %v2731
  %v2740 = vadd.s32 %v2736, %v2738
  %v2741 = vadd.s32 %v2740, %v2730
  %v2742 = vadd.s32 %v2741, %v2732
  %v2743 = vmul.u32 %v2698, %v2689
  %v2744 = vadd.s32 %v2720, %v2739
  %vm2745 = vc.u32 %v2720, %v2739
  %v2746 = vadd.s32 %v2742, 1
  %v2747 = vsel %vm2745, %v2746, %v2742
  %v2748 = vadd.s32 %v2743, %v2747
  %v2749 = vadd.s32 %v2748, 536870912
  %v2750 = vshrl.u32 %v2749, 30
  %v2751 = vshll.u32 %v2750, 30
  %v2752 = vsub.s32 %v2748, %v2751
  %vm2753 = vcmp.lt.s32.totalorder %v2752, 0
  %v2754 = vsub.s32 0, %v2752
  %v2755 = vsel %vm2753, %v2754, %v2752
  %v2756 = vclz %v2755
  %v2757 = vsub.s32 %v2756, 2
  %vm2758 = vcmp.gt.s32.totalorder 0, %v2757
  %v2759 = vsel %vm2758, 0, %v2757
  %v2760 = vsub.s32 32, %v2759
  %v2761 = vshll.u32 %v2752, %v2759
  %v2762 = vshrl.u32 %v2744, %v2760
  %v2763 = vor.u32 %v2761, %v2762
  %v2764 = vsub.s32 4294967266, %v2759
  %v2765 = vadd.s32 %v2764, 127
  %v2766 = vshll.u32 %v2765, 23
  %v2767 = vor.u32 4788187, %v2766
  %v2768 = vand.u32 2147483647, %v2767
  %v2770 = vcvt.s32.f32 %v2763
  %v2771 = vmul.f32 %v2770, %v2768
  %v2772 = vxor.u32 %v2771, 2147483648
  %v2773 = vsel %vm2652, %v2772, %v2771
  %v2774 = vsub.s32 4, %v2750
  %v2775 = vsel %vm2652, %v2774, %v2750
  %v2776 = vsel %vm2651, %v143, %v2773
  %v2777 = vsel %vm2651, 0, %v2775
  %v2778 = vmul.f32 %v2776, %v2776
  %v2779 = vmul.f32 %v2778, -0.001358992
  %v2780 = vadd.f32 %v2779, 0.041655596
  %v2781 = vmul.f32 %v2778, %v2780
  %v2782 = vadd.f32 %v2781, -0.4999988
  %v2783 = vmul.f32 %v2778, %v2782
  %v2784 = vadd.f32 1.0, %v2783
  %v2785 = vmul.f32 %v2776, %v2776
  %v2786 = vmul.f32 %v2785, -0.00019511016
  %v2787 = vadd.f32 %v2786, 0.008332121
  %v2788 = vmul.f32 %v2785, %v2787
  %v2789 = vadd.f32 %v2788, -0.16666654
  %v2790 = vmul.f32 %v2785, %v2789
  %v2791 = vadd.f32 %v2790, 1.0
  %v2792 = vmul.f32 %v2791, %v2776
  %vm2793 = vweird.f32 %v143
  %v2794 = vadd.s32 %v2777, 3
  %v2795 = vand.u32 %v2794, 3
  %vm2796 = vcmp.lt.s32.totalorder %v2795, 2
  %vm2797 = vcmp.eq.s32.totalorder %v2795, 0
  %v2798 = vxor.u32 %v2792, 2147483648
  %v2799 = vsel %vm2797, %v2784, %v2798
  %vm2800 = vcmp.eq.s32.totalorder %v2795, 2
  %v2801 = vxor.u32 %v2784, 2147483648
  %v2802 = vsel %vm2800, %v2801, %v2792
  %v2803 = vsel %vm2796, %v2799, %v2802
  %v2804 = vsel %vm2793, nan, %v2803
  %v2805 = vand.u32 2147483647, %v148
  %vm2806 = vcmp.le.f32.partialorder %v2805, 0.7853982
  %vm2807 = vcmp.lt.s32.totalorder %v148, 0
  %v2808 = vand.u32 %v148, 2139095040
  %v2809 = vshrl.u32 %v2808, 23
  %v2810 = vsub.s32 %v2809, 127
  %v2811 = vand.u32 2147483647, %v148
  %v2812 = vand.u32 %v2811, 8388607
  %v2813 = vor.u32 %v2812, 8388608
  %v2814 = vsub.s32 0, %v2813
  %v2815 = vadd.s32 %v2810, 1
  %vm2816 = vcmp.gt.s32.totalorder %v2815, 0
  %v2817 = vsel %vm2816, %v2815, 0
  %v2818 = vshrl.u32 %v2817, 5
  %v2819 = vand.u32 %v2817, 31
  %v2820 = vsub.s32 32, %v2819
  %v2821 = vshrl.u32 683565275, %v2820
  %v2822 = vshll.u32 683565275, %v2819
  %v2823 = vshrl.u32 2475754826, %v2820
  %v2824 = vor.u32 %v2822, %v2823
  %v2825 = vshll.u32 2475754826, %v2819
  %v2826 = vshrl.u32 2131351028, %v2820
  %v2827 = vor.u32 %v2825, %v2826
  %v2828 = vshll.u32 2131351028, %v2819
  %v2829 = vshrl.u32 2102212464, %v2820
  %v2830 = vor.u32 %v2828, %v2829
  %v2831 = vshll.u32 2102212464, %v2819
  %v2832 = vshrl.u32 920167782, %v2820
  %v2833 = vor.u32 %v2831, %v2832
  %v2834 = vshll.u32 920167782, %v2819
  %v2835 = vshrl.u32 1326507024, %v2820
  %v2836 = vor.u32 %v2834, %v2835
  %vm2837 = vcmp.lt.s32.totalorder %v2818, 1
  %vm2838 = vcmp.lt.s32.totalorder %v2818, 2
  %vm2839 = vcmp.lt.s32.totalorder %v2818, 3
  %vm2840 = vcmp.lt.s32.totalorder %v2818, 4
  %v2841 = vsel %vm2837, %v2821, %v2824
  %v2842 = vsel %vm2840, %v2830, 2102212464
  %v2843 = vsel %vm2839, %v2827, %v2842
  %v2844 = vsel %vm2838, %v2841, %v2843
  %v2845 = vsel %vm2837, %v2824, %v2827
  %v2846 = vsel %vm2840, %v2833, 920167782
  %v2847 = vsel %vm2839, %v2830, %v2846
  %v2848 = vsel %vm2838, %v2845, %v2847
  %v2849 = vsel %vm2837, %v2827, %v2830
  %v2850 = vsel %vm2840, %v2836, 1326507024
  %v2851 = vsel %vm2839, %v2833, %v2850
  %v2852 = vsel %vm2838, %v2849, %v2851
  %v2853 = vshll.u32 %v2813, 8
  %v2854 = vand.u32 %v2853, 65535
  %v2855 = vshrl.u32 %v2853, 16
  %v2856 = vand.u32 %v2852, 65535
  %v2857 = vshrl.u32 %v2852, 16
  %v2858 = vmul.u32 %v2854, %v2856
  %v2859 = vmul.u32 %v2854, %v2857
  %v2860 = vmul.u32 %v2855, %v2856
  %v2861 = vmul.u32 %v2855, %v2857
  %v2862 = vshll.u32 %v2859, 16
  %v2863 = vshrl.u32 %v2859, 16
  %v2864 = vshll.u32 %v2860, 16
  %v2865 = vshrl.u32 %v2860, 16
  %vm2866 = vc.u32 %v2858, %v2862
  %v2867 = vsel %vm2866, 1, 0
  %v2868 = vadd.s32 %v2858, %v2862
  %v2869 = vadd.s32 %v2861, %v2867
  %vm2870 = vc.u32 %v2868, %v2864
  %v2871 = vsel %vm2870, 1, 0
  %v2872 = vadd.s32 %v2868, %v2864
  %v2873 = vadd.s32 %v2869, %v2871
  %v2874 = vadd.s32 %v2873, %v2863
  %v2875 = vadd.s32 %v2874, %v2865
  %v2876 = vand.u32 %v2853, 65535
  %v2877 = vshrl.u32 %v2853, 16
  %v2878 = vand.u32 %v2848, 65535
  %v2879 = vshrl.u32 %v2848, 16
  %v2880 = vmul.u32 %v2876, %v2878
  %v2881 = vmul.u32 %v2876, %v2879
  %v2882 = vmul.u32 %v2877, %v2878
  %v2883 = vmul.u32 %v2877, %v2879
  %v2884 = vshll.u32 %v2881, 16
  %v2885 = vshrl.u32 %v2881, 16
  %v2886 = vshll.u32 %v2882, 16
  %v2887 = vshrl.u32 %v2882, 16
  %vm2888 = vc.u32 %v2880, %v2884
  %v2889 = vsel %vm2888, 1, 0
  %v2890 = vadd.s32 %v2880, %v2884
  %v2891 = vadd.s32 %v2883, %v2889
  %vm2892 = vc.u32 %v2890, %v2886
  %v2893 = vsel %vm2892, 1, 0
  %v2894 = vadd.s32 %v2890, %v2886
  %v2895 = vadd.s32 %v2891, %v2893
  %v2896 = vadd.s32 %v2895, %v2885
  %v2897 = vadd.s32 %v2896, %v2887
  %v2898 = vmul.u32 %v2853, %v2844
  %v2899 = vadd.s32 %v2875, %v2894
  %vm2900 = vc.u32 %v2875, %v2894
  %v2901 = vadd.s32 %v2897, 1
  %v2902 = vsel %vm2900, %v2901, %v2897
  %v2903 = vadd.s32 %v2898, %v2902
  %v2904 = vadd.s32 %v2903, 536870912
  %v2905 = vshrl.u32 %v2904, 30
  %v2906 = vshll.u32 %v2905, 30
  %v2907 = vsub.s32 %v2903, %v2906
  %vm2908 = vcmp.lt.s32.totalorder %v2907, 0
  %v2909 = vsub.s32 0, %v2907
  %v2910 = vsel %vm2908, %v2909, %v2907
  %v2911 = vclz %v2910
  %v2912 = vsub.s32 %v2911, 2
  %vm2913 = vcmp.gt.s32.totalorder 0, %v2912
  %v2914 = vsel %vm2913, 0, %v2912
  %v2915 = vsub.s32 32, %v2914
  %v2916 = vshll.u32 %v2907, %v2914
  %v2917 = vshrl.u32 %v2899, %v2915
  %v2918 = vor.u32 %v2916, %v2917
  %v2919 = vsub.s32 4294967266, %v2914
  %v2920 = vadd.s32 %v2919, 127
  %v2921 = vshll.u32 %v2920, 23
  %v2922 = vor.u32 4788187, %v2921
  %v2923 = vand.u32 2147483647, %v2922
  %v2925 = vcvt.s32.f32 %v2918
  %v2926 = vmul.f32 %v2925, %v2923
  %v2927 = vxor.u32 %v2926, 2147483648
  %v2928 = vsel %vm2807, %v2927, %v2926
  %v2929 = vsub.s32 4, %v2905
  %v2930 = vsel %vm2807, %v2929, %v2905
  %v2931 = vsel %vm2806, %v148, %v2928
  %v2932 = vsel %vm2806, 0, %v2930
  %v2933 = vmul.f32 %v2931, %v2931
  %v2934 = vmul.f32 %v2933, -0.001358992
  %v2935 = vadd.f32 %v2934, 0.041655596
  %v2936 = vmul.f32 %v2933, %v2935
  %v2937 = vadd.f32 %v2936, -0.4999988
  %v2938 = vmul.f32 %v2933, %v2937
  %v2939 = vadd.f32 1.0, %v2938
  %v2940 = vmul.f32 %v2931, %v2931
  %v2941 = vmul.f32 %v2940, -0.00019511016
  %v2942 = vadd.f32 %v2941, 0.008332121
  %v2943 = vmul.f32 %v2940, %v2942
  %v2944 = vadd.f32 %v2943, -0.16666654
  %v2945 = vmul.f32 %v2940, %v2944
  %v2946 = vadd.f32 %v2945, 1.0
  %v2947 = vmul.f32 %v2946, %v2931
  %vm2948 = vweird.f32 %v148
  %v2949 = vadd.s32 %v2932, 3
  %v2950 = vand.u32 %v2949, 3
  %vm2951 = vcmp.lt.s32.totalorder %v2950, 2
  %vm2952 = vcmp.eq.s32.totalorder %v2950, 0
  %v2953 = vxor.u32 %v2947, 2147483648
  %v2954 = vsel %vm2952, %v2939, %v2953
  %vm2955 = vcmp.eq.s32.totalorder %v2950, 2
  %v2956 = vxor.u32 %v2939, 2147483648
  %v2957 = vsel %vm2955, %v2956, %v2947
  %v2958 = vsel %vm2951, %v2954, %v2957
  %v2959 = vsel %vm2948, nan, %v2958
  %v2960 = vand.u32 2147483647, %v153
  %vm2961 = vcmp.le.f32.partialorder %v2960, 0.7853982
  %vm2962 = vcmp.lt.s32.totalorder %v153, 0
  %v2963 = vand.u32 %v153, 2139095040
  %v2964 = vshrl.u32 %v2963, 23
  %v2965 = vsub.s32 %v2964, 127
  %v2966 = vand.u32 2147483647, %v153
  %v2967 = vand.u32 %v2966, 8388607
  %v2968 = vor.u32 %v2967, 8388608
  %v2969 = vsub.s32 0, %v2968
  %v2970 = vadd.s32 %v2965, 1
  %vm2971 = vcmp.gt.s32.totalorder %v2970, 0
  %v2972 = vsel %vm2971, %v2970, 0
  %v2973 = vshrl.u32 %v2972, 5
  %v2974 = vand.u32 %v2972, 31
  %v2975 = vsub.s32 32, %v2974
  %v2976 = vshrl.u32 683565275, %v2975
  %v2977 = vshll.u32 683565275, %v2974
  %v2978 = vshrl.u32 2475754826, %v2975
  %v2979 = vor.u32 %v2977, %v2978
  %v2980 = vshll.u32 2475754826, %v2974
  %v2981 = vshrl.u32 2131351028, %v2975
  %v2982 = vor.u32 %v2980, %v2981
  %v2983 = vshll.u32 2131351028, %v2974
  %v2984 = vshrl.u32 2102212464, %v2975
  %v2985 = vor.u32 %v2983, %v2984
  %v2986 = vshll.u32 2102212464, %v2974
  %v2987 = vshrl.u32 920167782, %v2975
  %v2988 = vor.u32 %v2986, %v2987
  %v2989 = vshll.u32 920167782, %v2974
  %v2990 = vshrl.u32 1326507024, %v2975
  %v2991 = vor.u32 %v2989, %v2990
  %vm2992 = vcmp.lt.s32.totalorder %v2973, 1
  %vm2993 = vcmp.lt.s32.totalorder %v2973, 2
  %vm2994 = vcmp.lt.s32.totalorder %v2973, 3
  %vm2995 = vcmp.lt.s32.totalorder %v2973, 4
  %v2996 = vsel %vm2992, %v2976, %v2979
  %v2997 = vsel %vm2995, %v2985, 2102212464
  %v2998 = vsel %vm2994, %v2982, %v2997
  %v2999 = vsel %vm2993, %v2996, %v2998
  %v3000 = vsel %vm2992, %v2979, %v2982
  %v3001 = vsel %vm2995, %v2988, 920167782
  %v3002 = vsel %vm2994, %v2985, %v3001
  %v3003 = vsel %vm2993, %v3000, %v3002
  %v3004 = vsel %vm2992, %v2982, %v2985
  %v3005 = vsel %vm2995, %v2991, 1326507024
  %v3006 = vsel %vm2994, %v2988, %v3005
  %v3007 = vsel %vm2993, %v3004, %v3006
  %v3008 = vshll.u32 %v2968, 8
  %v3009 = vand.u32 %v3008, 65535
  %v3010 = vshrl.u32 %v3008, 16
  %v3011 = vand.u32 %v3007, 65535
  %v3012 = vshrl.u32 %v3007, 16
  %v3013 = vmul.u32 %v3009, %v3011
  %v3014 = vmul.u32 %v3009, %v3012
  %v3015 = vmul.u32 %v3010, %v3011
  %v3016 = vmul.u32 %v3010, %v3012
  %v3017 = vshll.u32 %v3014, 16
  %v3018 = vshrl.u32 %v3014, 16
  %v3019 = vshll.u32 %v3015, 16
  %v3020 = vshrl.u32 %v3015, 16
  %vm3021 = vc.u32 %v3013, %v3017
  %v3022 = vsel %vm3021, 1, 0
  %v3023 = vadd.s32 %v3013, %v3017
  %v3024 = vadd.s32 %v3016, %v3022
  %vm3025 = vc.u32 %v3023, %v3019
  %v3026 = vsel %vm3025, 1, 0
  %v3027 = vadd.s32 %v3023, %v3019
  %v3028 = vadd.s32 %v3024, %v3026
  %v3029 = vadd.s32 %v3028, %v3018
  %v3030 = vadd.s32 %v3029, %v3020
  %v3031 = vand.u32 %v3008, 65535
  %v3032 = vshrl.u32 %v3008, 16
  %v3033 = vand.u32 %v3003, 65535
  %v3034 = vshrl.u32 %v3003, 16
  %v3035 = vmul.u32 %v3031, %v3033
  %v3036 = vmul.u32 %v3031, %v3034
  %v3037 = vmul.u32 %v3032, %v3033
  %v3038 = vmul.u32 %v3032, %v3034
  %v3039 = vshll.u32 %v3036, 16
  %v3040 = vshrl.u32 %v3036, 16
  %v3041 = vshll.u32 %v3037, 16
  %v3042 = vshrl.u32 %v3037, 16
  %vm3043 = vc.u32 %v3035, %v3039
  %v3044 = vsel %vm3043, 1, 0
  %v3045 = vadd.s32 %v3035, %v3039
  %v3046 = vadd.s32 %v3038, %v3044
  %vm3047 = vc.u32 %v3045, %v3041
  %v3048 = vsel %vm3047, 1, 0
  %v3049 = vadd.s32 %v3045, %v3041
  %v3050 = vadd.s32 %v3046, %v3048
  %v3051 = vadd.s32 %v3050, %v3040
  %v3052 = vadd.s32 %v3051, %v3042
  %v3053 = vmul.u32 %v3008, %v2999
  %v3054 = vadd.s32 %v3030, %v3049
  %vm3055 = vc.u32 %v3030, %v3049
  %v3056 = vadd.s32 %v3052, 1
  %v3057 = vsel %vm3055, %v3056, %v3052
  %v3058 = vadd.s32 %v3053, %v3057
  %v3059 = vadd.s32 %v3058, 536870912
  %v3060 = vshrl.u32 %v3059, 30
  %v3061 = vshll.u32 %v3060, 30
  %v3062 = vsub.s32 %v3058, %v3061
  %vm3063 = vcmp.lt.s32.totalorder %v3062, 0
  %v3064 = vsub.s32 0, %v3062
  %v3065 = vsel %vm3063, %v3064, %v3062
  %v3066 = vclz %v3065
  %v3067 = vsub.s32 %v3066, 2
  %vm3068 = vcmp.gt.s32.totalorder 0, %v3067
  %v3069 = vsel %vm3068, 0, %v3067
  %v3070 = vsub.s32 32, %v3069
  %v3071 = vshll.u32 %v3062, %v3069
  %v3072 = vshrl.u32 %v3054, %v3070
  %v3073 = vor.u32 %v3071, %v3072
  %v3074 = vsub.s32 4294967266, %v3069
  %v3075 = vadd.s32 %v3074, 127
  %v3076 = vshll.u32 %v3075, 23
  %v3077 = vor.u32 4788187, %v3076
  %v3078 = vand.u32 2147483647, %v3077
  %v3080 = vcvt.s32.f32 %v3073
  %v3081 = vmul.f32 %v3080, %v3078
  %v3082 = vxor.u32 %v3081, 2147483648
  %v3083 = vsel %vm2962, %v3082, %v3081
  %v3084 = vsub.s32 4, %v3060
  %v3085 = vsel %vm2962, %v3084, %v3060
  %v3086 = vsel %vm2961, %v153, %v3083
  %v3087 = vsel %vm2961, 0, %v3085
  %v3088 = vmul.f32 %v3086, %v3086
  %v3089 = vmul.f32 %v3088, -0.001358992
  %v3090 = vadd.f32 %v3089, 0.041655596
  %v3091 = vmul.f32 %v3088, %v3090
  %v3092 = vadd.f32 %v3091, -0.4999988
  %v3093 = vmul.f32 %v3088, %v3092
  %v3094 = vadd.f32 1.0, %v3093
  %v3095 = vmul.f32 %v3086, %v3086
  %v3096 = vmul.f32 %v3095, -0.00019511016
  %v3097 = vadd.f32 %v3096, 0.008332121
  %v3098 = vmul.f32 %v3095, %v3097
  %v3099 = vadd.f32 %v3098, -0.16666654
  %v3100 = vmul.f32 %v3095, %v3099
  %v3101 = vadd.f32 %v3100, 1.0
  %v3102 = vmul.f32 %v3101, %v3086
  %vm3103 = vweird.f32 %v153
  %v3104 = vadd.s32 %v3087, 3
  %v3105 = vand.u32 %v3104, 3
  %vm3106 = vcmp.lt.s32.totalorder %v3105, 2
  %vm3107 = vcmp.eq.s32.totalorder %v3105, 0
  %v3108 = vxor.u32 %v3102, 2147483648
  %v3109 = vsel %vm3107, %v3094, %v3108
  %vm3110 = vcmp.eq.s32.totalorder %v3105, 2
  %v3111 = vxor.u32 %v3094, 2147483648
  %v3112 = vsel %vm3110, %v3111, %v3102
  %v3113 = vsel %vm3106, %v3109, %v3112
  %v3114 = vsel %vm3103, nan, %v3113
  %v3115 = vand.u32 2147483647, %v158
  %vm3116 = vcmp.le.f32.partialorder %v3115, 0.7853982
  %vm3117 = vcmp.lt.s32.totalorder %v158, 0
  %v3118 = vand.u32 %v158, 2139095040
  %v3119 = vshrl.u32 %v3118, 23
  %v3120 = vsub.s32 %v3119, 127
  %v3121 = vand.u32 2147483647, %v158
  %v3122 = vand.u32 %v3121, 8388607
  %v3123 = vor.u32 %v3122, 8388608
  %v3124 = vsub.s32 0, %v3123
  %v3125 = vadd.s32 %v3120, 1
  %vm3126 = vcmp.gt.s32.totalorder %v3125, 0
  %v3127 = vsel %vm3126, %v3125, 0
  %v3128 = vshrl.u32 %v3127, 5
  %v3129 = vand.u32 %v3127, 31
  %v3130 = vsub.s32 32, %v3129
  %v3131 = vshrl.u32 683565275, %v3130
  %v3132 = vshll.u32 683565275, %v3129
  %v3133 = vshrl.u32 2475754826, %v3130
  %v3134 = vor.u32 %v3132, %v3133
  %v3135 = vshll.u32 2475754826, %v3129
  %v3136 = vshrl.u32 2131351028, %v3130
  %v3137 = vor.u32 %v3135, %v3136
  %v3138 = vshll.u32 2131351028, %v3129
  %v3139 = vshrl.u32 2102212464, %v3130
  %v3140 = vor.u32 %v3138, %v3139
  %v3141 = vshll.u32 2102212464, %v3129
  %v3142 = vshrl.u32 920167782, %v3130
  %v3143 = vor.u32 %v3141, %v3142
  %v3144 = vshll.u32 920167782, %v3129
  %v3145 = vshrl.u32 1326507024, %v3130
  %v3146 = vor.u32 %v3144, %v3145
  %vm3147 = vcmp.lt.s32.totalorder %v3128, 1
  %vm3148 = vcmp.lt.s32.totalorder %v3128, 2
  %vm3149 = vcmp.lt.s32.totalorder %v3128, 3
  %vm3150 = vcmp.lt.s32.totalorder %v3128, 4
  %v3151 = vsel %vm3147, %v3131, %v3134
  %v3152 = vsel %vm3150, %v3140, 2102212464
  %v3153 = vsel %vm3149, %v3137, %v3152
  %v3154 = vsel %vm3148, %v3151, %v3153
  %v3155 = vsel %vm3147, %v3134, %v3137
  %v3156 = vsel %vm3150, %v3143, 920167782
  %v3157 = vsel %vm3149, %v3140, %v3156
  %v3158 = vsel %vm3148, %v3155, %v3157
  %v3159 = vsel %vm3147, %v3137, %v3140
  %v3160 = vsel %vm3150, %v3146, 1326507024
  %v3161 = vsel %vm3149, %v3143, %v3160
  %v3162 = vsel %vm3148, %v3159, %v3161
  %v3163 = vshll.u32 %v3123, 8
  %v3164 = vand.u32 %v3163, 65535
  %v3165 = vshrl.u32 %v3163, 16
  %v3166 = vand.u32 %v3162, 65535
  %v3167 = vshrl.u32 %v3162, 16
  %v3168 = vmul.u32 %v3164, %v3166
  %v3169 = vmul.u32 %v3164, %v3167
  %v3170 = vmul.u32 %v3165, %v3166
  %v3171 = vmul.u32 %v3165, %v3167
  %v3172 = vshll.u32 %v3169, 16
  %v3173 = vshrl.u32 %v3169, 16
  %v3174 = vshll.u32 %v3170, 16
  %v3175 = vshrl.u32 %v3170, 16
  %vm3176 = vc.u32 %v3168, %v3172
  %v3177 = vsel %vm3176, 1, 0
  %v3178 = vadd.s32 %v3168, %v3172
  %v3179 = vadd.s32 %v3171, %v3177
  %vm3180 = vc.u32 %v3178, %v3174
  %v3181 = vsel %vm3180, 1, 0
  %v3182 = vadd.s32 %v3178, %v3174
  %v3183 = vadd.s32 %v3179, %v3181
  %v3184 = vadd.s32 %v3183, %v3173
  %v3185 = vadd.s32 %v3184, %v3175
  %v3186 = vand.u32 %v3163, 65535
  %v3187 = vshrl.u32 %v3163, 16
  %v3188 = vand.u32 %v3158, 65535
  %v3189 = vshrl.u32 %v3158, 16
  %v3190 = vmul.u32 %v3186, %v3188
  %v3191 = vmul.u32 %v3186, %v3189
  %v3192 = vmul.u32 %v3187, %v3188
  %v3193 = vmul.u32 %v3187, %v3189
  %v3194 = vshll.u32 %v3191, 16
  %v3195 = vshrl.u32 %v3191, 16
  %v3196 = vshll.u32 %v3192, 16
  %v3197 = vshrl.u32 %v3192, 16
  %vm3198 = vc.u32 %v3190, %v3194
  %v3199 = vsel %vm3198, 1, 0
  %v3200 = vadd.s32 %v3190, %v3194
  %v3201 = vadd.s32 %v3193, %v3199
  %vm3202 = vc.u32 %v3200, %v3196
  %v3203 = vsel %vm3202, 1, 0
  %v3204 = vadd.s32 %v3200, %v3196
  %v3205 = vadd.s32 %v3201, %v3203
  %v3206 = vadd.s32 %v3205, %v3195
  %v3207 = vadd.s32 %v3206, %v3197
  %v3208 = vmul.u32 %v3163, %v3154
  %v3209 = vadd.s32 %v3185, %v3204
  %vm3210 = vc.u32 %v3185, %v3204
  %v3211 = vadd.s32 %v3207, 1
  %v3212 = vsel %vm3210, %v3211, %v3207
  %v3213 = vadd.s32 %v3208, %v3212
  %v3214 = vadd.s32 %v3213, 536870912
  %v3215 = vshrl.u32 %v3214, 30
  %v3216 = vshll.u32 %v3215, 30
  %v3217 = vsub.s32 %v3213, %v3216
  %vm3218 = vcmp.lt.s32.totalorder %v3217, 0
  %v3219 = vsub.s32 0, %v3217
  %v3220 = vsel %vm3218, %v3219, %v3217
  %v3221 = vclz %v3220
  %v3222 = vsub.s32 %v3221, 2
  %vm3223 = vcmp.gt.s32.totalorder 0, %v3222
  %v3224 = vsel %vm3223, 0, %v3222
  %v3225 = vsub.s32 32, %v3224
  %v3226 = vshll.u32 %v3217, %v3224
  %v3227 = vshrl.u32 %v3209, %v3225
  %v3228 = vor.u32 %v3226, %v3227
  %v3229 = vsub.s32 4294967266, %v3224
  %v3230 = vadd.s32 %v3229, 127
  %v3231 = vshll.u32 %v3230, 23
  %v3232 = vor.u32 4788187, %v3231
  %v3233 = vand.u32 2147483647, %v3232
  %v3235 = vcvt.s32.f32 %v3228
  %v3236 = vmul.f32 %v3235, %v3233
  %v3237 = vxor.u32 %v3236, 2147483648
  %v3238 = vsel %vm3117, %v3237, %v3236
  %v3239 = vsub.s32 4, %v3215
  %v3240 = vsel %vm3117, %v3239, %v3215
  %v3241 = vsel %vm3116, %v158, %v3238
  %v3242 = vsel %vm3116, 0, %v3240
  %v3243 = vmul.f32 %v3241, %v3241
  %v3244 = vmul.f32 %v3243, -0.001358992
  %v3245 = vadd.f32 %v3244, 0.041655596
  %v3246 = vmul.f32 %v3243, %v3245
  %v3247 = vadd.f32 %v3246, -0.4999988
  %v3248 = vmul.f32 %v3243, %v3247
  %v3249 = vadd.f32 1.0, %v3248
  %v3250 = vmul.f32 %v3241, %v3241
  %v3251 = vmul.f32 %v3250, -0.00019511016
  %v3252 = vadd.f32 %v3251, 0.008332121
  %v3253 = vmul.f32 %v3250, %v3252
  %v3254 = vadd.f32 %v3253, -0.16666654
  %v3255 = vmul.f32 %v3250, %v3254
  %v3256 = vadd.f32 %v3255, 1.0
  %v3257 = vmul.f32 %v3256, %v3241
  %vm3258 = vweird.f32 %v158
  %v3259 = vadd.s32 %v3242, 3
  %v3260 = vand.u32 %v3259, 3
  %vm3261 = vcmp.lt.s32.totalorder %v3260, 2
  %vm3262 = vcmp.eq.s32.totalorder %v3260, 0
  %v3263 = vxor.u32 %v3257, 2147483648
  %v3264 = vsel %vm3262, %v3249, %v3263
  %vm3265 = vcmp.eq.s32.totalorder %v3260, 2
  %v3266 = vxor.u32 %v3249, 2147483648
  %v3267 = vsel %vm3265, %v3266, %v3257
  %v3268 = vsel %vm3261, %v3264, %v3267
  %v3269 = vsel %vm3258, nan, %v3268
  %v3270 = vand.u32 2147483647, %v163
  %vm3271 = vcmp.le.f32.partialorder %v3270, 0.7853982
  %vm3272 = vcmp.lt.s32.totalorder %v163, 0
  %v3273 = vand.u32 %v163, 2139095040
  %v3274 = vshrl.u32 %v3273, 23
  %v3275 = vsub.s32 %v3274, 127
  %v3276 = vand.u32 2147483647, %v163
  %v3277 = vand.u32 %v3276, 8388607
  %v3278 = vor.u32 %v3277, 8388608
  %v3279 = vsub.s32 0, %v3278
  %v3280 = vadd.s32 %v3275, 1
  %vm3281 = vcmp.gt.s32.totalorder %v3280, 0
  %v3282 = vsel %vm3281, %v3280, 0
  %v3283 = vshrl.u32 %v3282, 5
  %v3284 = vand.u32 %v3282, 31
  %v3285 = vsub.s32 32, %v3284
  %v3286 = vshrl.u32 683565275, %v3285
  %v3287 = vshll.u32 683565275, %v3284
  %v3288 = vshrl.u32 2475754826, %v3285
  %v3289 = vor.u32 %v3287, %v3288
  %v3290 = vshll.u32 2475754826, %v3284
  %v3291 = vshrl.u32 2131351028, %v3285
  %v3292 = vor.u32 %v3290, %v3291
  %v3293 = vshll.u32 2131351028, %v3284
  %v3294 = vshrl.u32 2102212464, %v3285
  %v3295 = vor.u32 %v3293, %v3294
  %v3296 = vshll.u32 2102212464, %v3284
  %v3297 = vshrl.u32 920167782, %v3285
  %v3298 = vor.u32 %v3296, %v3297
  %v3299 = vshll.u32 920167782, %v3284
  %v3300 = vshrl.u32 1326507024, %v3285
  %v3301 = vor.u32 %v3299, %v3300
  %vm3302 = vcmp.lt.s32.totalorder %v3283, 1
  %vm3303 = vcmp.lt.s32.totalorder %v3283, 2
  %vm3304 = vcmp.lt.s32.totalorder %v3283, 3
  %vm3305 = vcmp.lt.s32.totalorder %v3283, 4
  %v3306 = vsel %vm3302, %v3286, %v3289
  %v3307 = vsel %vm3305, %v3295, 2102212464
  %v3308 = vsel %vm3304, %v3292, %v3307
  %v3309 = vsel %vm3303, %v3306, %v3308
  %v3310 = vsel %vm3302, %v3289, %v3292
  %v3311 = vsel %vm3305, %v3298, 920167782
  %v3312 = vsel %vm3304, %v3295, %v3311
  %v3313 = vsel %vm3303, %v3310, %v3312
  %v3314 = vsel %vm3302, %v3292, %v3295
  %v3315 = vsel %vm3305, %v3301, 1326507024
  %v3316 = vsel %vm3304, %v3298, %v3315
  %v3317 = vsel %vm3303, %v3314, %v3316
  %v3318 = vshll.u32 %v3278, 8
  %v3319 = vand.u32 %v3318, 65535
  %v3320 = vshrl.u32 %v3318, 16
  %v3321 = vand.u32 %v3317, 65535
  %v3322 = vshrl.u32 %v3317, 16
  %v3323 = vmul.u32 %v3319, %v3321
  %v3324 = vmul.u32 %v3319, %v3322
  %v3325 = vmul.u32 %v3320, %v3321
  %v3326 = vmul.u32 %v3320, %v3322
  %v3327 = vshll.u32 %v3324, 16
  %v3328 = vshrl.u32 %v3324, 16
  %v3329 = vshll.u32 %v3325, 16
  %v3330 = vshrl.u32 %v3325, 16
  %vm3331 = vc.u32 %v3323, %v3327
  %v3332 = vsel %vm3331, 1, 0
  %v3333 = vadd.s32 %v3323, %v3327
  %v3334 = vadd.s32 %v3326, %v3332
  %vm3335 = vc.u32 %v3333, %v3329
  %v3336 = vsel %vm3335, 1, 0
  %v3337 = vadd.s32 %v3333, %v3329
  %v3338 = vadd.s32 %v3334, %v3336
  %v3339 = vadd.s32 %v3338, %v3328
  %v3340 = vadd.s32 %v3339, %v3330
  %v3341 = vand.u32 %v3318, 65535
  %v3342 = vshrl.u32 %v3318, 16
  %v3343 = vand.u32 %v3313, 65535
  %v3344 = vshrl.u32 %v3313, 16
  %v3345 = vmul.u32 %v3341, %v3343
  %v3346 = vmul.u32 %v3341, %v3344
  %v3347 = vmul.u32 %v3342, %v3343
  %v3348 = vmul.u32 %v3342, %v3344
  %v3349 = vshll.u32 %v3346, 16
  %v3350 = vshrl.u32 %v3346, 16
  %v3351 = vshll.u32 %v3347, 16
  %v3352 = vshrl.u32 %v3347, 16
  %vm3353 = vc.u32 %v3345, %v3349
  %v3354 = vsel %vm3353, 1, 0
  %v3355 = vadd.s32 %v3345, %v3349
  %v3356 = vadd.s32 %v3348, %v3354
  %vm3357 = vc.u32 %v3355, %v3351
  %v3358 = vsel %vm3357, 1, 0
  %v3359 = vadd.s32 %v3355, %v3351
  %v3360 = vadd.s32 %v3356, %v3358
  %v3361 = vadd.s32 %v3360, %v3350
  %v3362 = vadd.s32 %v3361, %v3352
  %v3363 = vmul.u32 %v3318, %v3309
  %v3364 = vadd.s32 %v3340, %v3359
  %vm3365 = vc.u32 %v3340, %v3359
  %v3366 = vadd.s32 %v3362, 1
  %v3367 = vsel %vm3365, %v3366, %v3362
  %v3368 = vadd.s32 %v3363, %v3367
  %v3369 = vadd.s32 %v3368, 536870912
  %v3370 = vshrl.u32 %v3369, 30
  %v3371 = vshll.u32 %v3370, 30
  %v3372 = vsub.s32 %v3368, %v3371
  %vm3373 = vcmp.lt.s32.totalorder %v3372, 0
  %v3374 = vsub.s32 0, %v3372
  %v3375 = vsel %vm3373, %v3374, %v3372
  %v3376 = vclz %v3375
  %v3377 = vsub.s32 %v3376, 2
  %vm3378 = vcmp.gt.s32.totalorder 0, %v3377
  %v3379 = vsel %vm3378, 0, %v3377
  %v3380 = vsub.s32 32, %v3379
  %v3381 = vshll.u32 %v3372, %v3379
  %v3382 = vshrl.u32 %v3364, %v3380
  %v3383 = vor.u32 %v3381, %v3382
  %v3384 = vsub.s32 4294967266, %v3379
  %v3385 = vadd.s32 %v3384, 127
  %v3386 = vshll.u32 %v3385, 23
  %v3387 = vor.u32 4788187, %v3386
  %v3388 = vand.u32 2147483647, %v3387
  %v3390 = vcvt.s32.f32 %v3383
  %v3391 = vmul.f32 %v3390, %v3388
  %v3392 = vxor.u32 %v3391, 2147483648
  %v3393 = vsel %vm3272, %v3392, %v3391
  %v3394 = vsub.s32 4, %v3370
  %v3395 = vsel %vm3272, %v3394, %v3370
  %v3396 = vsel %vm3271, %v163, %v3393
  %v3397 = vsel %vm3271, 0, %v3395
  %v3398 = vmul.f32 %v3396, %v3396
  %v3399 = vmul.f32 %v3398, -0.001358992
  %v3400 = vadd.f32 %v3399, 0.041655596
  %v3401 = vmul.f32 %v3398, %v3400
  %v3402 = vadd.f32 %v3401, -0.4999988
  %v3403 = vmul.f32 %v3398, %v3402
  %v3404 = vadd.f32 1.0, %v3403
  %v3405 = vmul.f32 %v3396, %v3396
  %v3406 = vmul.f32 %v3405, -0.00019511016
  %v3407 = vadd.f32 %v3406, 0.008332121
  %v3408 = vmul.f32 %v3405, %v3407
  %v3409 = vadd.f32 %v3408, -0.16666654
  %v3410 = vmul.f32 %v3405, %v3409
  %v3411 = vadd.f32 %v3410, 1.0
  %v3412 = vmul.f32 %v3411, %v3396
  %vm3413 = vweird.f32 %v163
  %v3414 = vadd.s32 %v3397, 3
  %v3415 = vand.u32 %v3414, 3
  %vm3416 = vcmp.lt.s32.totalorder %v3415, 2
  %vm3417 = vcmp.eq.s32.totalorder %v3415, 0
  %v3418 = vxor.u32 %v3412, 2147483648
  %v3419 = vsel %vm3417, %v3404, %v3418
  %vm3420 = vcmp.eq.s32.totalorder %v3415, 2
  %v3421 = vxor.u32 %v3404, 2147483648
  %v3422 = vsel %vm3420, %v3421, %v3412
  %v3423 = vsel %vm3416, %v3419, %v3422
  %v3424 = vsel %vm3413, nan, %v3423
  %v3425 = vand.u32 2147483647, %v168
  %vm3426 = vcmp.le.f32.partialorder %v3425, 0.7853982
  %vm3427 = vcmp.lt.s32.totalorder %v168, 0
  %v3428 = vand.u32 %v168, 2139095040
  %v3429 = vshrl.u32 %v3428, 23
  %v3430 = vsub.s32 %v3429, 127
  %v3431 = vand.u32 2147483647, %v168
  %v3432 = vand.u32 %v3431, 8388607
  %v3433 = vor.u32 %v3432, 8388608
  %v3434 = vsub.s32 0, %v3433
  %v3435 = vadd.s32 %v3430, 1
  %vm3436 = vcmp.gt.s32.totalorder %v3435, 0
  %v3437 = vsel %vm3436, %v3435, 0
  %v3438 = vshrl.u32 %v3437, 5
  %v3439 = vand.u32 %v3437, 31
  %v3440 = vsub.s32 32, %v3439
  %v3441 = vshrl.u32 683565275, %v3440
  %v3442 = vshll.u32 683565275, %v3439
  %v3443 = vshrl.u32 2475754826, %v3440
  %v3444 = vor.u32 %v3442, %v3443
  %v3445 = vshll.u32 2475754826, %v3439
  %v3446 = vshrl.u32 2131351028, %v3440
  %v3447 = vor.u32 %v3445, %v3446
  %v3448 = vshll.u32 2131351028, %v3439
  %v3449 = vshrl.u32 2102212464, %v3440
  %v3450 = vor.u32 %v3448, %v3449
  %v3451 = vshll.u32 2102212464, %v3439
  %v3452 = vshrl.u32 920167782, %v3440
  %v3453 = vor.u32 %v3451, %v3452
  %v3454 = vshll.u32 920167782, %v3439
  %v3455 = vshrl.u32 1326507024, %v3440
  %v3456 = vor.u32 %v3454, %v3455
  %vm3457 = vcmp.lt.s32.totalorder %v3438, 1
  %vm3458 = vcmp.lt.s32.totalorder %v3438, 2
  %vm3459 = vcmp.lt.s32.totalorder %v3438, 3
  %vm3460 = vcmp.lt.s32.totalorder %v3438, 4
  %v3461 = vsel %vm3457, %v3441, %v3444
  %v3462 = vsel %vm3460, %v3450, 2102212464
  %v3463 = vsel %vm3459, %v3447, %v3462
  %v3464 = vsel %vm3458, %v3461, %v3463
  %v3465 = vsel %vm3457, %v3444, %v3447
  %v3466 = vsel %vm3460, %v3453, 920167782
  %v3467 = vsel %vm3459, %v3450, %v3466
  %v3468 = vsel %vm3458, %v3465, %v3467
  %v3469 = vsel %vm3457, %v3447, %v3450
  %v3470 = vsel %vm3460, %v3456, 1326507024
  %v3471 = vsel %vm3459, %v3453, %v3470
  %v3472 = vsel %vm3458, %v3469, %v3471
  %v3473 = vshll.u32 %v3433, 8
  %v3474 = vand.u32 %v3473, 65535
  %v3475 = vshrl.u32 %v3473, 16
  %v3476 = vand.u32 %v3472, 65535
  %v3477 = vshrl.u32 %v3472, 16
  %v3478 = vmul.u32 %v3474, %v3476
  %v3479 = vmul.u32 %v3474, %v3477
  %v3480 = vmul.u32 %v3475, %v3476
  %v3481 = vmul.u32 %v3475, %v3477
  %v3482 = vshll.u32 %v3479, 16
  %v3483 = vshrl.u32 %v3479, 16
  %v3484 = vshll.u32 %v3480, 16
  %v3485 = vshrl.u32 %v3480, 16
  %vm3486 = vc.u32 %v3478, %v3482
  %v3487 = vsel %vm3486, 1, 0
  %v3488 = vadd.s32 %v3478, %v3482
  %v3489 = vadd.s32 %v3481, %v3487
  %vm3490 = vc.u32 %v3488, %v3484
  %v3491 = vsel %vm3490, 1, 0
  %v3492 = vadd.s32 %v3488, %v3484
  %v3493 = vadd.s32 %v3489, %v3491
  %v3494 = vadd.s32 %v3493, %v3483
  %v3495 = vadd.s32 %v3494, %v3485
  %v3496 = vand.u32 %v3473, 65535
  %v3497 = vshrl.u32 %v3473, 16
  %v3498 = vand.u32 %v3468, 65535
  %v3499 = vshrl.u32 %v3468, 16
  %v3500 = vmul.u32 %v3496, %v3498
  %v3501 = vmul.u32 %v3496, %v3499
  %v3502 = vmul.u32 %v3497, %v3498
  %v3503 = vmul.u32 %v3497, %v3499
  %v3504 = vshll.u32 %v3501, 16
  %v3505 = vshrl.u32 %v3501, 16
  %v3506 = vshll.u32 %v3502, 16
  %v3507 = vshrl.u32 %v3502, 16
  %vm3508 = vc.u32 %v3500, %v3504
  %v3509 = vsel %vm3508, 1, 0
  %v3510 = vadd.s32 %v3500, %v3504
  %v3511 = vadd.s32 %v3503, %v3509
  %vm3512 = vc.u32 %v3510, %v3506
  %v3513 = vsel %vm3512, 1, 0
  %v3514 = vadd.s32 %v3510, %v3506
  %v3515 = vadd.s32 %v3511, %v3513
  %v3516 = vadd.s32 %v3515, %v3505
  %v3517 = vadd.s32 %v3516, %v3507
  %v3518 = vmul.u32 %v3473, %v3464
  %v3519 = vadd.s32 %v3495, %v3514
  %vm3520 = vc.u32 %v3495, %v3514
  %v3521 = vadd.s32 %v3517, 1
  %v3522 = vsel %vm3520, %v3521, %v3517
  %v3523 = vadd.s32 %v3518, %v3522
  %v3524 = vadd.s32 %v3523, 536870912
  %v3525 = vshrl.u32 %v3524, 30
  %v3526 = vshll.u32 %v3525, 30
  %v3527 = vsub.s32 %v3523, %v3526
  %vm3528 = vcmp.lt.s32.totalorder %v3527, 0
  %v3529 = vsub.s32 0, %v3527
  %v3530 = vsel %vm3528, %v3529, %v3527
  %v3531 = vclz %v3530
  %v3532 = vsub.s32 %v3531, 2
  %vm3533 = vcmp.gt.s32.totalorder 0, %v3532
  %v3534 = vsel %vm3533, 0, %v3532
  %v3535 = vsub.s32 32, %v3534
  %v3536 = vshll.u32 %v3527, %v3534
  %v3537 = vshrl.u32 %v3519, %v3535
  %v3538 = vor.u32 %v3536, %v3537
  %v3539 = vsub.s32 4294967266, %v3534
  %v3540 = vadd.s32 %v3539, 127
  %v3541 = vshll.u32 %v3540, 23
  %v3542 = vor.u32 4788187, %v3541
  %v3543 = vand.u32 2147483647, %v3542
  %v3545 = vcvt.s32.f32 %v3538
  %v3546 = vmul.f32 %v3545, %v3543
  %v3547 = vxor.u32 %v3546, 2147483648
  %v3548 = vsel %vm3427, %v3547, %v3546
  %v3549 = vsub.s32 4, %v3525
  %v3550 = vsel %vm3427, %v3549, %v3525
  %v3551 = vsel %vm3426, %v168, %v3548
  %v3552 = vsel %vm3426, 0, %v3550
  %v3553 = vmul.f32 %v3551, %v3551
  %v3554 = vmul.f32 %v3553, -0.001358992
  %v3555 = vadd.f32 %v3554, 0.041655596
  %v3556 = vmul.f32 %v3553, %v3555
  %v3557 = vadd.f32 %v3556, -0.4999988
  %v3558 = vmul.f32 %v3553, %v3557
  %v3559 = vadd.f32 1.0, %v3558
  %v3560 = vmul.f32 %v3551, %v3551
  %v3561 = vmul.f32 %v3560, -0.00019511016
  %v3562 = vadd.f32 %v3561, 0.008332121
  %v3563 = vmul.f32 %v3560, %v3562
  %v3564 = vadd.f32 %v3563, -0.16666654
  %v3565 = vmul.f32 %v3560, %v3564
  %v3566 = vadd.f32 %v3565, 1.0
  %v3567 = vmul.f32 %v3566, %v3551
  %vm3568 = vweird.f32 %v168
  %v3569 = vadd.s32 %v3552, 3
  %v3570 = vand.u32 %v3569, 3
  %vm3571 = vcmp.lt.s32.totalorder %v3570, 2
  %vm3572 = vcmp.eq.s32.totalorder %v3570, 0
  %v3573 = vxor.u32 %v3567, 2147483648
  %v3574 = vsel %vm3572, %v3559, %v3573
  %vm3575 = vcmp.eq.s32.totalorder %v3570, 2
  %v3576 = vxor.u32 %v3559, 2147483648
  %v3577 = vsel %vm3575, %v3576, %v3567
  %v3578 = vsel %vm3571, %v3574, %v3577
  %v3579 = vsel %vm3568, nan, %v3578
  %v3580 = vand.u32 2147483647, %v173
  %vm3581 = vcmp.le.f32.partialorder %v3580, 0.7853982
  %vm3582 = vcmp.lt.s32.totalorder %v173, 0
  %v3583 = vand.u32 %v173, 2139095040
  %v3584 = vshrl.u32 %v3583, 23
  %v3585 = vsub.s32 %v3584, 127
  %v3586 = vand.u32 2147483647, %v173
  %v3587 = vand.u32 %v3586, 8388607
  %v3588 = vor.u32 %v3587, 8388608
  %v3589 = vsub.s32 0, %v3588
  %v3590 = vadd.s32 %v3585, 1
  %vm3591 = vcmp.gt.s32.totalorder %v3590, 0
  %v3592 = vsel %vm3591, %v3590, 0
  %v3593 = vshrl.u32 %v3592, 5
  %v3594 = vand.u32 %v3592, 31
  %v3595 = vsub.s32 32, %v3594
  %v3596 = vshrl.u32 683565275, %v3595
  %v3597 = vshll.u32 683565275, %v3594
  %v3598 = vshrl.u32 2475754826, %v3595
  %v3599 = vor.u32 %v3597, %v3598
  %v3600 = vshll.u32 2475754826, %v3594
  %v3601 = vshrl.u32 2131351028, %v3595
  %v3602 = vor.u32 %v3600, %v3601
  %v3603 = vshll.u32 2131351028, %v3594
  %v3604 = vshrl.u32 2102212464, %v3595
  %v3605 = vor.u32 %v3603, %v3604
  %v3606 = vshll.u32 2102212464, %v3594
  %v3607 = vshrl.u32 920167782, %v3595
  %v3608 = vor.u32 %v3606, %v3607
  %v3609 = vshll.u32 920167782, %v3594
  %v3610 = vshrl.u32 1326507024, %v3595
  %v3611 = vor.u32 %v3609, %v3610
  %vm3612 = vcmp.lt.s32.totalorder %v3593, 1
  %vm3613 = vcmp.lt.s32.totalorder %v3593, 2
  %vm3614 = vcmp.lt.s32.totalorder %v3593, 3
  %vm3615 = vcmp.lt.s32.totalorder %v3593, 4
  %v3616 = vsel %vm3612, %v3596, %v3599
  %v3617 = vsel %vm3615, %v3605, 2102212464
  %v3618 = vsel %vm3614, %v3602, %v3617
  %v3619 = vsel %vm3613, %v3616, %v3618
  %v3620 = vsel %vm3612, %v3599, %v3602
  %v3621 = vsel %vm3615, %v3608, 920167782
  %v3622 = vsel %vm3614, %v3605, %v3621
  %v3623 = vsel %vm3613, %v3620, %v3622
  %v3624 = vsel %vm3612, %v3602, %v3605
  %v3625 = vsel %vm3615, %v3611, 1326507024
  %v3626 = vsel %vm3614, %v3608, %v3625
  %v3627 = vsel %vm3613, %v3624, %v3626
  %v3628 = vshll.u32 %v3588, 8
  %v3629 = vand.u32 %v3628, 65535
  %v3630 = vshrl.u32 %v3628, 16
  %v3631 = vand.u32 %v3627, 65535
  %v3632 = vshrl.u32 %v3627, 16
  %v3633 = vmul.u32 %v3629, %v3631
  %v3634 = vmul.u32 %v3629, %v3632
  %v3635 = vmul.u32 %v3630, %v3631
  %v3636 = vmul.u32 %v3630, %v3632
  %v3637 = vshll.u32 %v3634, 16
  %v3638 = vshrl.u32 %v3634, 16
  %v3639 = vshll.u32 %v3635, 16
  %v3640 = vshrl.u32 %v3635, 16
  %vm3641 = vc.u32 %v3633, %v3637
  %v3642 = vsel %vm3641, 1, 0
  %v3643 = vadd.s32 %v3633, %v3637
  %v3644 = vadd.s32 %v3636, %v3642
  %vm3645 = vc.u32 %v3643, %v3639
  %v3646 = vsel %vm3645, 1, 0
  %v3647 = vadd.s32 %v3643, %v3639
  %v3648 = vadd.s32 %v3644, %v3646
  %v3649 = vadd.s32 %v3648, %v3638
  %v3650 = vadd.s32 %v3649, %v3640
  %v3651 = vand.u32 %v3628, 65535
  %v3652 = vshrl.u32 %v3628, 16
  %v3653 = vand.u32 %v3623, 65535
  %v3654 = vshrl.u32 %v3623, 16
  %v3655 = vmul.u32 %v3651, %v3653
  %v3656 = vmul.u32 %v3651, %v3654
  %v3657 = vmul.u32 %v3652, %v3653
  %v3658 = vmul.u32 %v3652, %v3654
  %v3659 = vshll.u32 %v3656, 16
  %v3660 = vshrl.u32 %v3656, 16
  %v3661 = vshll.u32 %v3657, 16
  %v3662 = vshrl.u32 %v3657, 16
  %vm3663 = vc.u32 %v3655, %v3659
  %v3664 = vsel %vm3663, 1, 0
  %v3665 = vadd.s32 %v3655, %v3659
  %v3666 = vadd.s32 %v3658, %v3664
  %vm3667 = vc.u32 %v3665, %v3661
  %v3668 = vsel %vm3667, 1, 0
  %v3669 = vadd.s32 %v3665, %v3661
  %v3670 = vadd.s32 %v3666, %v3668
  %v3671 = vadd.s32 %v3670, %v3660
  %v3672 = vadd.s32 %v3671, %v3662
  %v3673 = vmul.u32 %v3628, %v3619
  %v3674 = vadd.s32 %v3650, %v3669
  %vm3675 = vc.u32 %v3650, %v3669
  %v3676 = vadd.s32 %v3672, 1
  %v3677 = vsel %vm3675, %v3676, %v3672
  %v3678 = vadd.s32 %v3673, %v3677
  %v3679 = vadd.s32 %v3678, 536870912
  %v3680 = vshrl.u32 %v3679, 30
  %v3681 = vshll.u32 %v3680, 30
  %v3682 = vsub.s32 %v3678, %v3681
  %vm3683 = vcmp.lt.s32.totalorder %v3682, 0
  %v3684 = vsub.s32 0, %v3682
  %v3685 = vsel %vm3683, %v3684, %v3682
  %v3686 = vclz %v3685
  %v3687 = vsub.s32 %v3686, 2
  %vm3688 = vcmp.gt.s32.totalorder 0, %v3687
  %v3689 = vsel %vm3688, 0, %v3687
  %v3690 = vsub.s32 32, %v3689
  %v3691 = vshll.u32 %v3682, %v3689
  %v3692 = vshrl.u32 %v3674, %v3690
  %v3693 = vor.u32 %v3691, %v3692
  %v3694 = vsub.s32 4294967266, %v3689
  %v3695 = vadd.s32 %v3694, 127
  %v3696 = vshll.u32 %v3695, 23
  %v3697 = vor.u32 4788187, %v3696
  %v3698 = vand.u32 2147483647, %v3697
  %v3700 = vcvt.s32.f32 %v3693
  %v3701 = vmul.f32 %v3700, %v3698
  %v3702 = vxor.u32 %v3701, 2147483648
  %v3703 = vsel %vm3582, %v3702, %v3701
  %v3704 = vsub.s32 4, %v3680
  %v3705 = vsel %vm3582, %v3704, %v3680
  %v3706 = vsel %vm3581, %v173, %v3703
  %v3707 = vsel %vm3581, 0, %v3705
  %v3708 = vmul.f32 %v3706, %v3706
  %v3709 = vmul.f32 %v3708, -0.001358992
  %v3710 = vadd.f32 %v3709, 0.041655596
  %v3711 = vmul.f32 %v3708, %v3710
  %v3712 = vadd.f32 %v3711, -0.4999988
  %v3713 = vmul.f32 %v3708, %v3712
  %v3714 = vadd.f32 1.0, %v3713
  %v3715 = vmul.f32 %v3706, %v3706
  %v3716 = vmul.f32 %v3715, -0.00019511016
  %v3717 = vadd.f32 %v3716, 0.008332121
  %v3718 = vmul.f32 %v3715, %v3717
  %v3719 = vadd.f32 %v3718, -0.16666654
  %v3720 = vmul.f32 %v3715, %v3719
  %v3721 = vadd.f32 %v3720, 1.0
  %v3722 = vmul.f32 %v3721, %v3706
  %vm3723 = vweird.f32 %v173
  %v3724 = vadd.s32 %v3707, 3
  %v3725 = vand.u32 %v3724, 3
  %vm3726 = vcmp.lt.s32.totalorder %v3725, 2
  %vm3727 = vcmp.eq.s32.totalorder %v3725, 0
  %v3728 = vxor.u32 %v3722, 2147483648
  %v3729 = vsel %vm3727, %v3714, %v3728
  %vm3730 = vcmp.eq.s32.totalorder %v3725, 2
  %v3731 = vxor.u32 %v3714, 2147483648
  %v3732 = vsel %vm3730, %v3731, %v3722
  %v3733 = vsel %vm3726, %v3729, %v3732
  %v3734 = vsel %vm3723, nan, %v3733
  %v3735 = vand.u32 2147483647, %v178
  %vm3736 = vcmp.le.f32.partialorder %v3735, 0.7853982
  %vm3737 = vcmp.lt.s32.totalorder %v178, 0
  %v3738 = vand.u32 %v178, 2139095040
  %v3739 = vshrl.u32 %v3738, 23
  %v3740 = vsub.s32 %v3739, 127
  %v3741 = vand.u32 2147483647, %v178
  %v3742 = vand.u32 %v3741, 8388607
  %v3743 = vor.u32 %v3742, 8388608
  %v3744 = vsub.s32 0, %v3743
  %v3745 = vadd.s32 %v3740, 1
  %vm3746 = vcmp.gt.s32.totalorder %v3745, 0
  %v3747 = vsel %vm3746, %v3745, 0
  %v3748 = vshrl.u32 %v3747, 5
  %v3749 = vand.u32 %v3747, 31
  %v3750 = vsub.s32 32, %v3749
  %v3751 = vshrl.u32 683565275, %v3750
  %v3752 = vshll.u32 683565275, %v3749
  %v3753 = vshrl.u32 2475754826, %v3750
  %v3754 = vor.u32 %v3752, %v3753
  %v3755 = vshll.u32 2475754826, %v3749
  %v3756 = vshrl.u32 2131351028, %v3750
  %v3757 = vor.u32 %v3755, %v3756
  %v3758 = vshll.u32 2131351028, %v3749
  %v3759 = vshrl.u32 2102212464, %v3750
  %v3760 = vor.u32 %v3758, %v3759
  %v3761 = vshll.u32 2102212464, %v3749
  %v3762 = vshrl.u32 920167782, %v3750
  %v3763 = vor.u32 %v3761, %v3762
  %v3764 = vshll.u32 920167782, %v3749
  %v3765 = vshrl.u32 1326507024, %v3750
  %v3766 = vor.u32 %v3764, %v3765
  %vm3767 = vcmp.lt.s32.totalorder %v3748, 1
  %vm3768 = vcmp.lt.s32.totalorder %v3748, 2
  %vm3769 = vcmp.lt.s32.totalorder %v3748, 3
  %vm3770 = vcmp.lt.s32.totalorder %v3748, 4
  %v3771 = vsel %vm3767, %v3751, %v3754
  %v3772 = vsel %vm3770, %v3760, 2102212464
  %v3773 = vsel %vm3769, %v3757, %v3772
  %v3774 = vsel %vm3768, %v3771, %v3773
  %v3775 = vsel %vm3767, %v3754, %v3757
  %v3776 = vsel %vm3770, %v3763, 920167782
  %v3777 = vsel %vm3769, %v3760, %v3776
  %v3778 = vsel %vm3768, %v3775, %v3777
  %v3779 = vsel %vm3767, %v3757, %v3760
  %v3780 = vsel %vm3770, %v3766, 1326507024
  %v3781 = vsel %vm3769, %v3763, %v3780
  %v3782 = vsel %vm3768, %v3779, %v3781
  %v3783 = vshll.u32 %v3743, 8
  %v3784 = vand.u32 %v3783, 65535
  %v3785 = vshrl.u32 %v3783, 16
  %v3786 = vand.u32 %v3782, 65535
  %v3787 = vshrl.u32 %v3782, 16
  %v3788 = vmul.u32 %v3784, %v3786
  %v3789 = vmul.u32 %v3784, %v3787
  %v3790 = vmul.u32 %v3785, %v3786
  %v3791 = vmul.u32 %v3785, %v3787
  %v3792 = vshll.u32 %v3789, 16
  %v3793 = vshrl.u32 %v3789, 16
  %v3794 = vshll.u32 %v3790, 16
  %v3795 = vshrl.u32 %v3790, 16
  %vm3796 = vc.u32 %v3788, %v3792
  %v3797 = vsel %vm3796, 1, 0
  %v3798 = vadd.s32 %v3788, %v3792
  %v3799 = vadd.s32 %v3791, %v3797
  %vm3800 = vc.u32 %v3798, %v3794
  %v3801 = vsel %vm3800, 1, 0
  %v3802 = vadd.s32 %v3798, %v3794
  %v3803 = vadd.s32 %v3799, %v3801
  %v3804 = vadd.s32 %v3803, %v3793
  %v3805 = vadd.s32 %v3804, %v3795
  %v3806 = vand.u32 %v3783, 65535
  %v3807 = vshrl.u32 %v3783, 16
  %v3808 = vand.u32 %v3778, 65535
  %v3809 = vshrl.u32 %v3778, 16
  %v3810 = vmul.u32 %v3806, %v3808
  %v3811 = vmul.u32 %v3806, %v3809
  %v3812 = vmul.u32 %v3807, %v3808
  %v3813 = vmul.u32 %v3807, %v3809
  %v3814 = vshll.u32 %v3811, 16
  %v3815 = vshrl.u32 %v3811, 16
  %v3816 = vshll.u32 %v3812, 16
  %v3817 = vshrl.u32 %v3812, 16
  %vm3818 = vc.u32 %v3810, %v3814
  %v3819 = vsel %vm3818, 1, 0
  %v3820 = vadd.s32 %v3810, %v3814
  %v3821 = vadd.s32 %v3813, %v3819
  %vm3822 = vc.u32 %v3820, %v3816
  %v3823 = vsel %vm3822, 1, 0
  %v3824 = vadd.s32 %v3820, %v3816
  %v3825 = vadd.s32 %v3821, %v3823
  %v3826 = vadd.s32 %v3825, %v3815
  %v3827 = vadd.s32 %v3826, %v3817
  %v3828 = vmul.u32 %v3783, %v3774
  %v3829 = vadd.s32 %v3805, %v3824
  %vm3830 = vc.u32 %v3805, %v3824
  %v3831 = vadd.s32 %v3827, 1
  %v3832 = vsel %vm3830, %v3831, %v3827
  %v3833 = vadd.s32 %v3828, %v3832
  %v3834 = vadd.s32 %v3833, 536870912
  %v3835 = vshrl.u32 %v3834, 30
  %v3836 = vshll.u32 %v3835, 30
  %v3837 = vsub.s32 %v3833, %v3836
  %vm3838 = vcmp.lt.s32.totalorder %v3837, 0
  %v3839 = vsub.s32 0, %v3837
  %v3840 = vsel %vm3838, %v3839, %v3837
  %v3841 = vclz %v3840
  %v3842 = vsub.s32 %v3841, 2
  %vm3843 = vcmp.gt.s32.totalorder 0, %v3842
  %v3844 = vsel %vm3843, 0, %v3842
  %v3845 = vsub.s32 32, %v3844
  %v3846 = vshll.u32 %v3837, %v3844
  %v3847 = vshrl.u32 %v3829, %v3845
  %v3848 = vor.u32 %v3846, %v3847
  %v3849 = vsub.s32 4294967266, %v3844
  %v3850 = vadd.s32 %v3849, 127
  %v3851 = vshll.u32 %v3850, 23
  %v3852 = vor.u32 4788187, %v3851
  %v3853 = vand.u32 2147483647, %v3852
  %v3855 = vcvt.s32.f32 %v3848
  %v3856 = vmul.f32 %v3855, %v3853
  %v3857 = vxor.u32 %v3856, 2147483648
  %v3858 = vsel %vm3737, %v3857, %v3856
  %v3859 = vsub.s32 4, %v3835
  %v3860 = vsel %vm3737, %v3859, %v3835
  %v3861 = vsel %vm3736, %v178, %v3858
  %v3862 = vsel %vm3736, 0, %v3860
  %v3863 = vmul.f32 %v3861, %v3861
  %v3864 = vmul.f32 %v3863, -0.001358992
  %v3865 = vadd.f32 %v3864, 0.041655596
  %v3866 = vmul.f32 %v3863, %v3865
  %v3867 = vadd.f32 %v3866, -0.4999988
  %v3868 = vmul.f32 %v3863, %v3867
  %v3869 = vadd.f32 1.0, %v3868
  %v3870 = vmul.f32 %v3861, %v3861
  %v3871 = vmul.f32 %v3870, -0.00019511016
  %v3872 = vadd.f32 %v3871, 0.008332121
  %v3873 = vmul.f32 %v3870, %v3872
  %v3874 = vadd.f32 %v3873, -0.16666654
  %v3875 = vmul.f32 %v3870, %v3874
  %v3876 = vadd.f32 %v3875, 1.0
  %v3877 = vmul.f32 %v3876, %v3861
  %vm3878 = vweird.f32 %v178
  %v3879 = vadd.s32 %v3862, 3
  %v3880 = vand.u32 %v3879, 3
  %vm3881 = vcmp.lt.s32.totalorder %v3880, 2
  %vm3882 = vcmp.eq.s32.totalorder %v3880, 0
  %v3883 = vxor.u32 %v3877, 2147483648
  %v3884 = vsel %vm3882, %v3869, %v3883
  %vm3885 = vcmp.eq.s32.totalorder %v3880, 2
  %v3886 = vxor.u32 %v3869, 2147483648
  %v3887 = vsel %vm3885, %v3886, %v3877
  %v3888 = vsel %vm3881, %v3884, %v3887
  %v3889 = vsel %vm3878, nan, %v3888
  %v3890 = vand.u32 2147483647, %v183
  %vm3891 = vcmp.le.f32.partialorder %v3890, 0.7853982
  %vm3892 = vcmp.lt.s32.totalorder %v183, 0
  %v3893 = vand.u32 %v183, 2139095040
  %v3894 = vshrl.u32 %v3893, 23
  %v3895 = vsub.s32 %v3894, 127
  %v3896 = vand.u32 2147483647, %v183
  %v3897 = vand.u32 %v3896, 8388607
  %v3898 = vor.u32 %v3897, 8388608
  %v3899 = vsub.s32 0, %v3898
  %v3900 = vadd.s32 %v3895, 1
  %vm3901 = vcmp.gt.s32.totalorder %v3900, 0
  %v3902 = vsel %vm3901, %v3900, 0
  %v3903 = vshrl.u32 %v3902, 5
  %v3904 = vand.u32 %v3902, 31
  %v3905 = vsub.s32 32, %v3904
  %v3906 = vshrl.u32 683565275, %v3905
  %v3907 = vshll.u32 683565275, %v3904
  %v3908 = vshrl.u32 2475754826, %v3905
  %v3909 = vor.u32 %v3907, %v3908
  %v3910 = vshll.u32 2475754826, %v3904
  %v3911 = vshrl.u32 2131351028, %v3905
  %v3912 = vor.u32 %v3910, %v3911
  %v3913 = vshll.u32 2131351028, %v3904
  %v3914 = vshrl.u32 2102212464, %v3905
  %v3915 = vor.u32 %v3913, %v3914
  %v3916 = vshll.u32 2102212464, %v3904
  %v3917 = vshrl.u32 920167782, %v3905
  %v3918 = vor.u32 %v3916, %v3917
  %v3919 = vshll.u32 920167782, %v3904
  %v3920 = vshrl.u32 1326507024, %v3905
  %v3921 = vor.u32 %v3919, %v3920
  %vm3922 = vcmp.lt.s32.totalorder %v3903, 1
  %vm3923 = vcmp.lt.s32.totalorder %v3903, 2
  %vm3924 = vcmp.lt.s32.totalorder %v3903, 3
  %vm3925 = vcmp.lt.s32.totalorder %v3903, 4
  %v3926 = vsel %vm3922, %v3906, %v3909
  %v3927 = vsel %vm3925, %v3915, 2102212464
  %v3928 = vsel %vm3924, %v3912, %v3927
  %v3929 = vsel %vm3923, %v3926, %v3928
  %v3930 = vsel %vm3922, %v3909, %v3912
  %v3931 = vsel %vm3925, %v3918, 920167782
  %v3932 = vsel %vm3924, %v3915, %v3931
  %v3933 = vsel %vm3923, %v3930, %v3932
  %v3934 = vsel %vm3922, %v3912, %v3915
  %v3935 = vsel %vm3925, %v3921, 1326507024
  %v3936 = vsel %vm3924, %v3918, %v3935
  %v3937 = vsel %vm3923, %v3934, %v3936
  %v3938 = vshll.u32 %v3898, 8
  %v3939 = vand.u32 %v3938, 65535
  %v3940 = vshrl.u32 %v3938, 16
  %v3941 = vand.u32 %v3937, 65535
  %v3942 = vshrl.u32 %v3937, 16
  %v3943 = vmul.u32 %v3939, %v3941
  %v3944 = vmul.u32 %v3939, %v3942
  %v3945 = vmul.u32 %v3940, %v3941
  %v3946 = vmul.u32 %v3940, %v3942
  %v3947 = vshll.u32 %v3944, 16
  %v3948 = vshrl.u32 %v3944, 16
  %v3949 = vshll.u32 %v3945, 16
  %v3950 = vshrl.u32 %v3945, 16
  %vm3951 = vc.u32 %v3943, %v3947
  %v3952 = vsel %vm3951, 1, 0
  %v3953 = vadd.s32 %v3943, %v3947
  %v3954 = vadd.s32 %v3946, %v3952
  %vm3955 = vc.u32 %v3953, %v3949
  %v3956 = vsel %vm3955, 1, 0
  %v3957 = vadd.s32 %v3953, %v3949
  %v3958 = vadd.s32 %v3954, %v3956
  %v3959 = vadd.s32 %v3958, %v3948
  %v3960 = vadd.s32 %v3959, %v3950
  %v3961 = vand.u32 %v3938, 65535
  %v3962 = vshrl.u32 %v3938, 16
  %v3963 = vand.u32 %v3933, 65535
  %v3964 = vshrl.u32 %v3933, 16
  %v3965 = vmul.u32 %v3961, %v3963
  %v3966 = vmul.u32 %v3961, %v3964
  %v3967 = vmul.u32 %v3962, %v3963
  %v3968 = vmul.u32 %v3962, %v3964
  %v3969 = vshll.u32 %v3966, 16
  %v3970 = vshrl.u32 %v3966, 16
  %v3971 = vshll.u32 %v3967, 16
  %v3972 = vshrl.u32 %v3967, 16
  %vm3973 = vc.u32 %v3965, %v3969
  %v3974 = vsel %vm3973, 1, 0
  %v3975 = vadd.s32 %v3965, %v3969
  %v3976 = vadd.s32 %v3968, %v3974
  %vm3977 = vc.u32 %v3975, %v3971
  %v3978 = vsel %vm3977, 1, 0
  %v3979 = vadd.s32 %v3975, %v3971
  %v3980 = vadd.s32 %v3976, %v3978
  %v3981 = vadd.s32 %v3980, %v3970
  %v3982 = vadd.s32 %v3981, %v3972
  %v3983 = vmul.u32 %v3938, %v3929
  %v3984 = vadd.s32 %v3960, %v3979
  %vm3985 = vc.u32 %v3960, %v3979
  %v3986 = vadd.s32 %v3982, 1
  %v3987 = vsel %vm3985, %v3986, %v3982
  %v3988 = vadd.s32 %v3983, %v3987
  %v3989 = vadd.s32 %v3988, 536870912
  %v3990 = vshrl.u32 %v3989, 30
  %v3991 = vshll.u32 %v3990, 30
  %v3992 = vsub.s32 %v3988, %v3991
  %vm3993 = vcmp.lt.s32.totalorder %v3992, 0
  %v3994 = vsub.s32 0, %v3992
  %v3995 = vsel %vm3993, %v3994, %v3992
  %v3996 = vclz %v3995
  %v3997 = vsub.s32 %v3996, 2
  %vm3998 = vcmp.gt.s32.totalorder 0, %v3997
  %v3999 = vsel %vm3998, 0, %v3997
  %v4000 = vsub.s32 32, %v3999
  %v4001 = vshll.u32 %v3992, %v3999
  %v4002 = vshrl.u32 %v3984, %v4000
  %v4003 = vor.u32 %v4001, %v4002
  %v4004 = vsub.s32 4294967266, %v3999
  %v4005 = vadd.s32 %v4004, 127
  %v4006 = vshll.u32 %v4005, 23
  %v4007 = vor.u32 4788187, %v4006
  %v4008 = vand.u32 2147483647, %v4007
  %v4010 = vcvt.s32.f32 %v4003
  %v4011 = vmul.f32 %v4010, %v4008
  %v4012 = vxor.u32 %v4011, 2147483648
  %v4013 = vsel %vm3892, %v4012, %v4011
  %v4014 = vsub.s32 4, %v3990
  %v4015 = vsel %vm3892, %v4014, %v3990
  %v4016 = vsel %vm3891, %v183, %v4013
  %v4017 = vsel %vm3891, 0, %v4015
  %v4018 = vmul.f32 %v4016, %v4016
  %v4019 = vmul.f32 %v4018, -0.001358992
  %v4020 = vadd.f32 %v4019, 0.041655596
  %v4021 = vmul.f32 %v4018, %v4020
  %v4022 = vadd.f32 %v4021, -0.4999988
  %v4023 = vmul.f32 %v4018, %v4022
  %v4024 = vadd.f32 1.0, %v4023
  %v4025 = vmul.f32 %v4016, %v4016
  %v4026 = vmul.f32 %v4025, -0.00019511016
  %v4027 = vadd.f32 %v4026, 0.008332121
  %v4028 = vmul.f32 %v4025, %v4027
  %v4029 = vadd.f32 %v4028, -0.16666654
  %v4030 = vmul.f32 %v4025, %v4029
  %v4031 = vadd.f32 %v4030, 1.0
  %v4032 = vmul.f32 %v4031, %v4016
  %vm4033 = vweird.f32 %v183
  %v4034 = vadd.s32 %v4017, 3
  %v4035 = vand.u32 %v4034, 3
  %vm4036 = vcmp.lt.s32.totalorder %v4035, 2
  %vm4037 = vcmp.eq.s32.totalorder %v4035, 0
  %v4038 = vxor.u32 %v4032, 2147483648
  %v4039 = vsel %vm4037, %v4024, %v4038
  %vm4040 = vcmp.eq.s32.totalorder %v4035, 2
  %v4041 = vxor.u32 %v4024, 2147483648
  %v4042 = vsel %vm4040, %v4041, %v4032
  %v4043 = vsel %vm4036, %v4039, %v4042
  %v4044 = vsel %vm4033, nan, %v4043
  %v4045 = vand.u32 2147483647, %v188
  %vm4046 = vcmp.le.f32.partialorder %v4045, 0.7853982
  %vm4047 = vcmp.lt.s32.totalorder %v188, 0
  %v4048 = vand.u32 %v188, 2139095040
  %v4049 = vshrl.u32 %v4048, 23
  %v4050 = vsub.s32 %v4049, 127
  %v4051 = vand.u32 2147483647, %v188
  %v4052 = vand.u32 %v4051, 8388607
  %v4053 = vor.u32 %v4052, 8388608
  %v4054 = vsub.s32 0, %v4053
  %v4055 = vadd.s32 %v4050, 1
  %vm4056 = vcmp.gt.s32.totalorder %v4055, 0
  %v4057 = vsel %vm4056, %v4055, 0
  %v4058 = vshrl.u32 %v4057, 5
  %v4059 = vand.u32 %v4057, 31
  %v4060 = vsub.s32 32, %v4059
  %v4061 = vshrl.u32 683565275, %v4060
  %v4062 = vshll.u32 683565275, %v4059
  %v4063 = vshrl.u32 2475754826, %v4060
  %v4064 = vor.u32 %v4062, %v4063
  %v4065 = vshll.u32 2475754826, %v4059
  %v4066 = vshrl.u32 2131351028, %v4060
  %v4067 = vor.u32 %v4065, %v4066
  %v4068 = vshll.u32 2131351028, %v4059
  %v4069 = vshrl.u32 2102212464, %v4060
  %v4070 = vor.u32 %v4068, %v4069
  %v4071 = vshll.u32 2102212464, %v4059
  %v4072 = vshrl.u32 920167782, %v4060
  %v4073 = vor.u32 %v4071, %v4072
  %v4074 = vshll.u32 920167782, %v4059
  %v4075 = vshrl.u32 1326507024, %v4060
  %v4076 = vor.u32 %v4074, %v4075
  %vm4077 = vcmp.lt.s32.totalorder %v4058, 1
  %vm4078 = vcmp.lt.s32.totalorder %v4058, 2
  %vm4079 = vcmp.lt.s32.totalorder %v4058, 3
  %vm4080 = vcmp.lt.s32.totalorder %v4058, 4
  %v4081 = vsel %vm4077, %v4061, %v4064
  %v4082 = vsel %vm4080, %v4070, 2102212464
  %v4083 = vsel %vm4079, %v4067, %v4082
  %v4084 = vsel %vm4078, %v4081, %v4083
  %v4085 = vsel %vm4077, %v4064, %v4067
  %v4086 = vsel %vm4080, %v4073, 920167782
  %v4087 = vsel %vm4079, %v4070, %v4086
  %v4088 = vsel %vm4078, %v4085, %v4087
  %v4089 = vsel %vm4077, %v4067, %v4070
  %v4090 = vsel %vm4080, %v4076, 1326507024
  %v4091 = vsel %vm4079, %v4073, %v4090
  %v4092 = vsel %vm4078, %v4089, %v4091
  %v4093 = vshll.u32 %v4053, 8
  %v4094 = vand.u32 %v4093, 65535
  %v4095 = vshrl.u32 %v4093, 16
  %v4096 = vand.u32 %v4092, 65535
  %v4097 = vshrl.u32 %v4092, 16
  %v4098 = vmul.u32 %v4094, %v4096
  %v4099 = vmul.u32 %v4094, %v4097
  %v4100 = vmul.u32 %v4095, %v4096
  %v4101 = vmul.u32 %v4095, %v4097
  %v4102 = vshll.u32 %v4099, 16
  %v4103 = vshrl.u32 %v4099, 16
  %v4104 = vshll.u32 %v4100, 16
  %v4105 = vshrl.u32 %v4100, 16
  %vm4106 = vc.u32 %v4098, %v4102
  %v4107 = vsel %vm4106, 1, 0
  %v4108 = vadd.s32 %v4098, %v4102
  %v4109 = vadd.s32 %v4101, %v4107
  %vm4110 = vc.u32 %v4108, %v4104
  %v4111 = vsel %vm4110, 1, 0
  %v4112 = vadd.s32 %v4108, %v4104
  %v4113 = vadd.s32 %v4109, %v4111
  %v4114 = vadd.s32 %v4113, %v4103
  %v4115 = vadd.s32 %v4114, %v4105
  %v4116 = vand.u32 %v4093, 65535
  %v4117 = vshrl.u32 %v4093, 16
  %v4118 = vand.u32 %v4088, 65535
  %v4119 = vshrl.u32 %v4088, 16
  %v4120 = vmul.u32 %v4116, %v4118
  %v4121 = vmul.u32 %v4116, %v4119
  %v4122 = vmul.u32 %v4117, %v4118
  %v4123 = vmul.u32 %v4117, %v4119
  %v4124 = vshll.u32 %v4121, 16
  %v4125 = vshrl.u32 %v4121, 16
  %v4126 = vshll.u32 %v4122, 16
  %v4127 = vshrl.u32 %v4122, 16
  %vm4128 = vc.u32 %v4120, %v4124
  %v4129 = vsel %vm4128, 1, 0
  %v4130 = vadd.s32 %v4120, %v4124
  %v4131 = vadd.s32 %v4123, %v4129
  %vm4132 = vc.u32 %v4130, %v4126
  %v4133 = vsel %vm4132, 1, 0
  %v4134 = vadd.s32 %v4130, %v4126
  %v4135 = vadd.s32 %v4131, %v4133
  %v4136 = vadd.s32 %v4135, %v4125
  %v4137 = vadd.s32 %v4136, %v4127
  %v4138 = vmul.u32 %v4093, %v4084
  %v4139 = vadd.s32 %v4115, %v4134
  %vm4140 = vc.u32 %v4115, %v4134
  %v4141 = vadd.s32 %v4137, 1
  %v4142 = vsel %vm4140, %v4141, %v4137
  %v4143 = vadd.s32 %v4138, %v4142
  %v4144 = vadd.s32 %v4143, 536870912
  %v4145 = vshrl.u32 %v4144, 30
  %v4146 = vshll.u32 %v4145, 30
  %v4147 = vsub.s32 %v4143, %v4146
  %vm4148 = vcmp.lt.s32.totalorder %v4147, 0
  %v4149 = vsub.s32 0, %v4147
  %v4150 = vsel %vm4148, %v4149, %v4147
  %v4151 = vclz %v4150
  %v4152 = vsub.s32 %v4151, 2
  %vm4153 = vcmp.gt.s32.totalorder 0, %v4152
  %v4154 = vsel %vm4153, 0, %v4152
  %v4155 = vsub.s32 32, %v4154
  %v4156 = vshll.u32 %v4147, %v4154
  %v4157 = vshrl.u32 %v4139, %v4155
  %v4158 = vor.u32 %v4156, %v4157
  %v4159 = vsub.s32 4294967266, %v4154
  %v4160 = vadd.s32 %v4159, 127
  %v4161 = vshll.u32 %v4160, 23
  %v4162 = vor.u32 4788187, %v4161
  %v4163 = vand.u32 2147483647, %v4162
  %v4165 = vcvt.s32.f32 %v4158
  %v4166 = vmul.f32 %v4165, %v4163
  %v4167 = vxor.u32 %v4166, 2147483648
  %v4168 = vsel %vm4047, %v4167, %v4166
  %v4169 = vsub.s32 4, %v4145
  %v4170 = vsel %vm4047, %v4169, %v4145
  %v4171 = vsel %vm4046, %v188, %v4168
  %v4172 = vsel %vm4046, 0, %v4170
  %v4173 = vmul.f32 %v4171, %v4171
  %v4174 = vmul.f32 %v4173, -0.001358992
  %v4175 = vadd.f32 %v4174, 0.041655596
  %v4176 = vmul.f32 %v4173, %v4175
  %v4177 = vadd.f32 %v4176, -0.4999988
  %v4178 = vmul.f32 %v4173, %v4177
  %v4179 = vadd.f32 1.0, %v4178
  %v4180 = vmul.f32 %v4171, %v4171
  %v4181 = vmul.f32 %v4180, -0.00019511016
  %v4182 = vadd.f32 %v4181, 0.008332121
  %v4183 = vmul.f32 %v4180, %v4182
  %v4184 = vadd.f32 %v4183, -0.16666654
  %v4185 = vmul.f32 %v4180, %v4184
  %v4186 = vadd.f32 %v4185, 1.0
  %v4187 = vmul.f32 %v4186, %v4171
  %vm4188 = vweird.f32 %v188
  %v4189 = vadd.s32 %v4172, 3
  %v4190 = vand.u32 %v4189, 3
  %vm4191 = vcmp.lt.s32.totalorder %v4190, 2
  %vm4192 = vcmp.eq.s32.totalorder %v4190, 0
  %v4193 = vxor.u32 %v4187, 2147483648
  %v4194 = vsel %vm4192, %v4179, %v4193
  %vm4195 = vcmp.eq.s32.totalorder %v4190, 2
  %v4196 = vxor.u32 %v4179, 2147483648
  %v4197 = vsel %vm4195, %v4196, %v4187
  %v4198 = vsel %vm4191, %v4194, %v4197
  %v4199 = vsel %vm4188, nan, %v4198
  %v4200 = vand.u32 2147483647, %v193
  %vm4201 = vcmp.le.f32.partialorder %v4200, 0.7853982
  %vm4202 = vcmp.lt.s32.totalorder %v193, 0
  %v4203 = vand.u32 %v193, 2139095040
  %v4204 = vshrl.u32 %v4203, 23
  %v4205 = vsub.s32 %v4204, 127
  %v4206 = vand.u32 2147483647, %v193
  %v4207 = vand.u32 %v4206, 8388607
  %v4208 = vor.u32 %v4207, 8388608
  %v4209 = vsub.s32 0, %v4208
  %v4210 = vadd.s32 %v4205, 1
  %vm4211 = vcmp.gt.s32.totalorder %v4210, 0
  %v4212 = vsel %vm4211, %v4210, 0
  %v4213 = vshrl.u32 %v4212, 5
  %v4214 = vand.u32 %v4212, 31
  %v4215 = vsub.s32 32, %v4214
  %v4216 = vshrl.u32 683565275, %v4215
  %v4217 = vshll.u32 683565275, %v4214
  %v4218 = vshrl.u32 2475754826, %v4215
  %v4219 = vor.u32 %v4217, %v4218
  %v4220 = vshll.u32 2475754826, %v4214
  %v4221 = vshrl.u32 2131351028, %v4215
  %v4222 = vor.u32 %v4220, %v4221
  %v4223 = vshll.u32 2131351028, %v4214
  %v4224 = vshrl.u32 2102212464, %v4215
  %v4225 = vor.u32 %v4223, %v4224
  %v4226 = vshll.u32 2102212464, %v4214
  %v4227 = vshrl.u32 920167782, %v4215
  %v4228 = vor.u32 %v4226, %v4227
  %v4229 = vshll.u32 920167782, %v4214
  %v4230 = vshrl.u32 1326507024, %v4215
  %v4231 = vor.u32 %v4229, %v4230
  %vm4232 = vcmp.lt.s32.totalorder %v4213, 1
  %vm4233 = vcmp.lt.s32.totalorder %v4213, 2
  %vm4234 = vcmp.lt.s32.totalorder %v4213, 3
  %vm4235 = vcmp.lt.s32.totalorder %v4213, 4
  %v4236 = vsel %vm4232, %v4216, %v4219
  %v4237 = vsel %vm4235, %v4225, 2102212464
  %v4238 = vsel %vm4234, %v4222, %v4237
  %v4239 = vsel %vm4233, %v4236, %v4238
  %v4240 = vsel %vm4232, %v4219, %v4222
  %v4241 = vsel %vm4235, %v4228, 920167782
  %v4242 = vsel %vm4234, %v4225, %v4241
  %v4243 = vsel %vm4233, %v4240, %v4242
  %v4244 = vsel %vm4232, %v4222, %v4225
  %v4245 = vsel %vm4235, %v4231, 1326507024
  %v4246 = vsel %vm4234, %v4228, %v4245
  %v4247 = vsel %vm4233, %v4244, %v4246
  %v4248 = vshll.u32 %v4208, 8
  %v4249 = vand.u32 %v4248, 65535
  %v4250 = vshrl.u32 %v4248, 16
  %v4251 = vand.u32 %v4247, 65535
  %v4252 = vshrl.u32 %v4247, 16
  %v4253 = vmul.u32 %v4249, %v4251
  %v4254 = vmul.u32 %v4249, %v4252
  %v4255 = vmul.u32 %v4250, %v4251
  %v4256 = vmul.u32 %v4250, %v4252
  %v4257 = vshll.u32 %v4254, 16
  %v4258 = vshrl.u32 %v4254, 16
  %v4259 = vshll.u32 %v4255, 16
  %v4260 = vshrl.u32 %v4255, 16
  %vm4261 = vc.u32 %v4253, %v4257
  %v4262 = vsel %vm4261, 1, 0
  %v4263 = vadd.s32 %v4253, %v4257
  %v4264 = vadd.s32 %v4256, %v4262
  %vm4265 = vc.u32 %v4263, %v4259
  %v4266 = vsel %vm4265, 1, 0
  %v4267 = vadd.s32 %v4263, %v4259
  %v4268 = vadd.s32 %v4264, %v4266
  %v4269 = vadd.s32 %v4268, %v4258
  %v4270 = vadd.s32 %v4269, %v4260
  %v4271 = vand.u32 %v4248, 65535
  %v4272 = vshrl.u32 %v4248, 16
  %v4273 = vand.u32 %v4243, 65535
  %v4274 = vshrl.u32 %v4243, 16
  %v4275 = vmul.u32 %v4271, %v4273
  %v4276 = vmul.u32 %v4271, %v4274
  %v4277 = vmul.u32 %v4272, %v4273
  %v4278 = vmul.u32 %v4272, %v4274
  %v4279 = vshll.u32 %v4276, 16
  %v4280 = vshrl.u32 %v4276, 16
  %v4281 = vshll.u32 %v4277, 16
  %v4282 = vshrl.u32 %v4277, 16
  %vm4283 = vc.u32 %v4275, %v4279
  %v4284 = vsel %vm4283, 1, 0
  %v4285 = vadd.s32 %v4275, %v4279
  %v4286 = vadd.s32 %v4278, %v4284
  %vm4287 = vc.u32 %v4285, %v4281
  %v4288 = vsel %vm4287, 1, 0
  %v4289 = vadd.s32 %v4285, %v4281
  %v4290 = vadd.s32 %v4286, %v4288
  %v4291 = vadd.s32 %v4290, %v4280
  %v4292 = vadd.s32 %v4291, %v4282
  %v4293 = vmul.u32 %v4248, %v4239
  %v4294 = vadd.s32 %v4270, %v4289
  %vm4295 = vc.u32 %v4270, %v4289
  %v4296 = vadd.s32 %v4292, 1
  %v4297 = vsel %vm4295, %v4296, %v4292
  %v4298 = vadd.s32 %v4293, %v4297
  %v4299 = vadd.s32 %v4298, 536870912
  %v4300 = vshrl.u32 %v4299, 30
  %v4301 = vshll.u32 %v4300, 30
  %v4302 = vsub.s32 %v4298, %v4301
  %vm4303 = vcmp.lt.s32.totalorder %v4302, 0
  %v4304 = vsub.s32 0, %v4302
  %v4305 = vsel %vm4303, %v4304, %v4302
  %v4306 = vclz %v4305
  %v4307 = vsub.s32 %v4306, 2
  %vm4308 = vcmp.gt.s32.totalorder 0, %v4307
  %v4309 = vsel %vm4308, 0, %v4307
  %v4310 = vsub.s32 32, %v4309
  %v4311 = vshll.u32 %v4302, %v4309
  %v4312 = vshrl.u32 %v4294, %v4310
  %v4313 = vor.u32 %v4311, %v4312
  %v4314 = vsub.s32 4294967266, %v4309
  %v4315 = vadd.s32 %v4314, 127
  %v4316 = vshll.u32 %v4315, 23
  %v4317 = vor.u32 4788187, %v4316
  %v4318 = vand.u32 2147483647, %v4317
  %v4320 = vcvt.s32.f32 %v4313
  %v4321 = vmul.f32 %v4320, %v4318
  %v4322 = vxor.u32 %v4321, 2147483648
  %v4323 = vsel %vm4202, %v4322, %v4321
  %v4324 = vsub.s32 4, %v4300
  %v4325 = vsel %vm4202, %v4324, %v4300
  %v4326 = vsel %vm4201, %v193, %v4323
  %v4327 = vsel %vm4201, 0, %v4325
  %v4328 = vmul.f32 %v4326, %v4326
  %v4329 = vmul.f32 %v4328, -0.001358992
  %v4330 = vadd.f32 %v4329, 0.041655596
  %v4331 = vmul.f32 %v4328, %v4330
  %v4332 = vadd.f32 %v4331, -0.4999988
  %v4333 = vmul.f32 %v4328, %v4332
  %v4334 = vadd.f32 1.0, %v4333
  %v4335 = vmul.f32 %v4326, %v4326
  %v4336 = vmul.f32 %v4335, -0.00019511016
  %v4337 = vadd.f32 %v4336, 0.008332121
  %v4338 = vmul.f32 %v4335, %v4337
  %v4339 = vadd.f32 %v4338, -0.16666654
  %v4340 = vmul.f32 %v4335, %v4339
  %v4341 = vadd.f32 %v4340, 1.0
  %v4342 = vmul.f32 %v4341, %v4326
  %vm4343 = vweird.f32 %v193
  %v4344 = vadd.s32 %v4327, 3
  %v4345 = vand.u32 %v4344, 3
  %vm4346 = vcmp.lt.s32.totalorder %v4345, 2
  %vm4347 = vcmp.eq.s32.totalorder %v4345, 0
  %v4348 = vxor.u32 %v4342, 2147483648
  %v4349 = vsel %vm4347, %v4334, %v4348
  %vm4350 = vcmp.eq.s32.totalorder %v4345, 2
  %v4351 = vxor.u32 %v4334, 2147483648
  %v4352 = vsel %vm4350, %v4351, %v4342
  %v4353 = vsel %vm4346, %v4349, %v4352
  %v4354 = vsel %vm4343, nan, %v4353
  %v4355 = vand.u32 2147483647, %v198
  %vm4356 = vcmp.le.f32.partialorder %v4355, 0.7853982
  %vm4357 = vcmp.lt.s32.totalorder %v198, 0
  %v4358 = vand.u32 %v198, 2139095040
  %v4359 = vshrl.u32 %v4358, 23
  %v4360 = vsub.s32 %v4359, 127
  %v4361 = vand.u32 2147483647, %v198
  %v4362 = vand.u32 %v4361, 8388607
  %v4363 = vor.u32 %v4362, 8388608
  %v4364 = vsub.s32 0, %v4363
  %v4365 = vadd.s32 %v4360, 1
  %vm4366 = vcmp.gt.s32.totalorder %v4365, 0
  %v4367 = vsel %vm4366, %v4365, 0
  %v4368 = vshrl.u32 %v4367, 5
  %v4369 = vand.u32 %v4367, 31
  %v4370 = vsub.s32 32, %v4369
  %v4371 = vshrl.u32 683565275, %v4370
  %v4372 = vshll.u32 683565275, %v4369
  %v4373 = vshrl.u32 2475754826, %v4370
  %v4374 = vor.u32 %v4372, %v4373
  %v4375 = vshll.u32 2475754826, %v4369
  %v4376 = vshrl.u32 2131351028, %v4370
  %v4377 = vor.u32 %v4375, %v4376
  %v4378 = vshll.u32 2131351028, %v4369
  %v4379 = vshrl.u32 2102212464, %v4370
  %v4380 = vor.u32 %v4378, %v4379
  %v4381 = vshll.u32 2102212464, %v4369
  %v4382 = vshrl.u32 920167782, %v4370
  %v4383 = vor.u32 %v4381, %v4382
  %v4384 = vshll.u32 920167782, %v4369
  %v4385 = vshrl.u32 1326507024, %v4370
  %v4386 = vor.u32 %v4384, %v4385
  %vm4387 = vcmp.lt.s32.totalorder %v4368, 1
  %vm4388 = vcmp.lt.s32.totalorder %v4368, 2
  %vm4389 = vcmp.lt.s32.totalorder %v4368, 3
  %vm4390 = vcmp.lt.s32.totalorder %v4368, 4
  %v4391 = vsel %vm4387, %v4371, %v4374
  %v4392 = vsel %vm4390, %v4380, 2102212464
  %v4393 = vsel %vm4389, %v4377, %v4392
  %v4394 = vsel %vm4388, %v4391, %v4393
  %v4395 = vsel %vm4387, %v4374, %v4377
  %v4396 = vsel %vm4390, %v4383, 920167782
  %v4397 = vsel %vm4389, %v4380, %v4396
  %v4398 = vsel %vm4388, %v4395, %v4397
  %v4399 = vsel %vm4387, %v4377, %v4380
  %v4400 = vsel %vm4390, %v4386, 1326507024
  %v4401 = vsel %vm4389, %v4383, %v4400
  %v4402 = vsel %vm4388, %v4399, %v4401
  %v4403 = vshll.u32 %v4363, 8
  %v4404 = vand.u32 %v4403, 65535
  %v4405 = vshrl.u32 %v4403, 16
  %v4406 = vand.u32 %v4402, 65535
  %v4407 = vshrl.u32 %v4402, 16
  %v4408 = vmul.u32 %v4404, %v4406
  %v4409 = vmul.u32 %v4404, %v4407
  %v4410 = vmul.u32 %v4405, %v4406
  %v4411 = vmul.u32 %v4405, %v4407
  %v4412 = vshll.u32 %v4409, 16
  %v4413 = vshrl.u32 %v4409, 16
  %v4414 = vshll.u32 %v4410, 16
  %v4415 = vshrl.u32 %v4410, 16
  %vm4416 = vc.u32 %v4408, %v4412
  %v4417 = vsel %vm4416, 1, 0
  %v4418 = vadd.s32 %v4408, %v4412
  %v4419 = vadd.s32 %v4411, %v4417
  %vm4420 = vc.u32 %v4418, %v4414
  %v4421 = vsel %vm4420, 1, 0
  %v4422 = vadd.s32 %v4418, %v4414
  %v4423 = vadd.s32 %v4419, %v4421
  %v4424 = vadd.s32 %v4423, %v4413
  %v4425 = vadd.s32 %v4424, %v4415
  %v4426 = vand.u32 %v4403, 65535
  %v4427 = vshrl.u32 %v4403, 16
  %v4428 = vand.u32 %v4398, 65535
  %v4429 = vshrl.u32 %v4398, 16
  %v4430 = vmul.u32 %v4426, %v4428
  %v4431 = vmul.u32 %v4426, %v4429
  %v4432 = vmul.u32 %v4427, %v4428
  %v4433 = vmul.u32 %v4427, %v4429
  %v4434 = vshll.u32 %v4431, 16
  %v4435 = vshrl.u32 %v4431, 16
  %v4436 = vshll.u32 %v4432, 16
  %v4437 = vshrl.u32 %v4432, 16
  %vm4438 = vc.u32 %v4430, %v4434
  %v4439 = vsel %vm4438, 1, 0
  %v4440 = vadd.s32 %v4430, %v4434
  %v4441 = vadd.s32 %v4433, %v4439
  %vm4442 = vc.u32 %v4440, %v4436
  %v4443 = vsel %vm4442, 1, 0
  %v4444 = vadd.s32 %v4440, %v4436
  %v4445 = vadd.s32 %v4441, %v4443
  %v4446 = vadd.s32 %v4445, %v4435
  %v4447 = vadd.s32 %v4446, %v4437
  %v4448 = vmul.u32 %v4403, %v4394
  %v4449 = vadd.s32 %v4425, %v4444
  %vm4450 = vc.u32 %v4425, %v4444
  %v4451 = vadd.s32 %v4447, 1
  %v4452 = vsel %vm4450, %v4451, %v4447
  %v4453 = vadd.s32 %v4448, %v4452
  %v4454 = vadd.s32 %v4453, 536870912
  %v4455 = vshrl.u32 %v4454, 30
  %v4456 = vshll.u32 %v4455, 30
  %v4457 = vsub.s32 %v4453, %v4456
  %vm4458 = vcmp.lt.s32.totalorder %v4457, 0
  %v4459 = vsub.s32 0, %v4457
  %v4460 = vsel %vm4458, %v4459, %v4457
  %v4461 = vclz %v4460
  %v4462 = vsub.s32 %v4461, 2
  %vm4463 = vcmp.gt.s32.totalorder 0, %v4462
  %v4464 = vsel %vm4463, 0, %v4462
  %v4465 = vsub.s32 32, %v4464
  %v4466 = vshll.u32 %v4457, %v4464
  %v4467 = vshrl.u32 %v4449, %v4465
  %v4468 = vor.u32 %v4466, %v4467
  %v4469 = vsub.s32 4294967266, %v4464
  %v4470 = vadd.s32 %v4469, 127
  %v4471 = vshll.u32 %v4470, 23
  %v4472 = vor.u32 4788187, %v4471
  %v4473 = vand.u32 2147483647, %v4472
  %v4475 = vcvt.s32.f32 %v4468
  %v4476 = vmul.f32 %v4475, %v4473
  %v4477 = vxor.u32 %v4476, 2147483648
  %v4478 = vsel %vm4357, %v4477, %v4476
  %v4479 = vsub.s32 4, %v4455
  %v4480 = vsel %vm4357, %v4479, %v4455
  %v4481 = vsel %vm4356, %v198, %v4478
  %v4482 = vsel %vm4356, 0, %v4480
  %v4483 = vmul.f32 %v4481, %v4481
  %v4484 = vmul.f32 %v4483, -0.001358992
  %v4485 = vadd.f32 %v4484, 0.041655596
  %v4486 = vmul.f32 %v4483, %v4485
  %v4487 = vadd.f32 %v4486, -0.4999988
  %v4488 = vmul.f32 %v4483, %v4487
  %v4489 = vadd.f32 1.0, %v4488
  %v4490 = vmul.f32 %v4481, %v4481
  %v4491 = vmul.f32 %v4490, -0.00019511016
  %v4492 = vadd.f32 %v4491, 0.008332121
  %v4493 = vmul.f32 %v4490, %v4492
  %v4494 = vadd.f32 %v4493, -0.16666654
  %v4495 = vmul.f32 %v4490, %v4494
  %v4496 = vadd.f32 %v4495, 1.0
  %v4497 = vmul.f32 %v4496, %v4481
  %vm4498 = vweird.f32 %v198
  %v4499 = vadd.s32 %v4482, 3
  %v4500 = vand.u32 %v4499, 3
  %vm4501 = vcmp.lt.s32.totalorder %v4500, 2
  %vm4502 = vcmp.eq.s32.totalorder %v4500, 0
  %v4503 = vxor.u32 %v4497, 2147483648
  %v4504 = vsel %vm4502, %v4489, %v4503
  %vm4505 = vcmp.eq.s32.totalorder %v4500, 2
  %v4506 = vxor.u32 %v4489, 2147483648
  %v4507 = vsel %vm4505, %v4506, %v4497
  %v4508 = vsel %vm4501, %v4504, %v4507
  %v4509 = vsel %vm4498, nan, %v4508
  %v4510 = vand.u32 2147483647, %v203
  %vm4511 = vcmp.le.f32.partialorder %v4510, 0.7853982
  %vm4512 = vcmp.lt.s32.totalorder %v203, 0
  %v4513 = vand.u32 %v203, 2139095040
  %v4514 = vshrl.u32 %v4513, 23
  %v4515 = vsub.s32 %v4514, 127
  %v4516 = vand.u32 2147483647, %v203
  %v4517 = vand.u32 %v4516, 8388607
  %v4518 = vor.u32 %v4517, 8388608
  %v4519 = vsub.s32 0, %v4518
  %v4520 = vadd.s32 %v4515, 1
  %vm4521 = vcmp.gt.s32.totalorder %v4520, 0
  %v4522 = vsel %vm4521, %v4520, 0
  %v4523 = vshrl.u32 %v4522, 5
  %v4524 = vand.u32 %v4522, 31
  %v4525 = vsub.s32 32, %v4524
  %v4526 = vshrl.u32 683565275, %v4525
  %v4527 = vshll.u32 683565275, %v4524
  %v4528 = vshrl.u32 2475754826, %v4525
  %v4529 = vor.u32 %v4527, %v4528
  %v4530 = vshll.u32 2475754826, %v4524
  %v4531 = vshrl.u32 2131351028, %v4525
  %v4532 = vor.u32 %v4530, %v4531
  %v4533 = vshll.u32 2131351028, %v4524
  %v4534 = vshrl.u32 2102212464, %v4525
  %v4535 = vor.u32 %v4533, %v4534
  %v4536 = vshll.u32 2102212464, %v4524
  %v4537 = vshrl.u32 920167782, %v4525
  %v4538 = vor.u32 %v4536, %v4537
  %v4539 = vshll.u32 920167782, %v4524
  %v4540 = vshrl.u32 1326507024, %v4525
  %v4541 = vor.u32 %v4539, %v4540
  %vm4542 = vcmp.lt.s32.totalorder %v4523, 1
  %vm4543 = vcmp.lt.s32.totalorder %v4523, 2
  %vm4544 = vcmp.lt.s32.totalorder %v4523, 3
  %vm4545 = vcmp.lt.s32.totalorder %v4523, 4
  %v4546 = vsel %vm4542, %v4526, %v4529
  %v4547 = vsel %vm4545, %v4535, 2102212464
  %v4548 = vsel %vm4544, %v4532, %v4547
  %v4549 = vsel %vm4543, %v4546, %v4548
  %v4550 = vsel %vm4542, %v4529, %v4532
  %v4551 = vsel %vm4545, %v4538, 920167782
  %v4552 = vsel %vm4544, %v4535, %v4551
  %v4553 = vsel %vm4543, %v4550, %v4552
  %v4554 = vsel %vm4542, %v4532, %v4535
  %v4555 = vsel %vm4545, %v4541, 1326507024
  %v4556 = vsel %vm4544, %v4538, %v4555
  %v4557 = vsel %vm4543, %v4554, %v4556
  %v4558 = vshll.u32 %v4518, 8
  %v4559 = vand.u32 %v4558, 65535
  %v4560 = vshrl.u32 %v4558, 16
  %v4561 = vand.u32 %v4557, 65535
  %v4562 = vshrl.u32 %v4557, 16
  %v4563 = vmul.u32 %v4559, %v4561
  %v4564 = vmul.u32 %v4559, %v4562
  %v4565 = vmul.u32 %v4560, %v4561
  %v4566 = vmul.u32 %v4560, %v4562
  %v4567 = vshll.u32 %v4564, 16
  %v4568 = vshrl.u32 %v4564, 16
  %v4569 = vshll.u32 %v4565, 16
  %v4570 = vshrl.u32 %v4565, 16
  %vm4571 = vc.u32 %v4563, %v4567
  %v4572 = vsel %vm4571, 1, 0
  %v4573 = vadd.s32 %v4563, %v4567
  %v4574 = vadd.s32 %v4566, %v4572
  %vm4575 = vc.u32 %v4573, %v4569
  %v4576 = vsel %vm4575, 1, 0
  %v4577 = vadd.s32 %v4573, %v4569
  %v4578 = vadd.s32 %v4574, %v4576
  %v4579 = vadd.s32 %v4578, %v4568
  %v4580 = vadd.s32 %v4579, %v4570
  %v4581 = vand.u32 %v4558, 65535
  %v4582 = vshrl.u32 %v4558, 16
  %v4583 = vand.u32 %v4553, 65535
  %v4584 = vshrl.u32 %v4553, 16
  %v4585 = vmul.u32 %v4581, %v4583
  %v4586 = vmul.u32 %v4581, %v4584
  %v4587 = vmul.u32 %v4582, %v4583
  %v4588 = vmul.u32 %v4582, %v4584
  %v4589 = vshll.u32 %v4586, 16
  %v4590 = vshrl.u32 %v4586, 16
  %v4591 = vshll.u32 %v4587, 16
  %v4592 = vshrl.u32 %v4587, 16
  %vm4593 = vc.u32 %v4585, %v4589
  %v4594 = vsel %vm4593, 1, 0
  %v4595 = vadd.s32 %v4585, %v4589
  %v4596 = vadd.s32 %v4588, %v4594
  %vm4597 = vc.u32 %v4595, %v4591
  %v4598 = vsel %vm4597, 1, 0
  %v4599 = vadd.s32 %v4595, %v4591
  %v4600 = vadd.s32 %v4596, %v4598
  %v4601 = vadd.s32 %v4600, %v4590
  %v4602 = vadd.s32 %v4601, %v4592
  %v4603 = vmul.u32 %v4558, %v4549
  %v4604 = vadd.s32 %v4580, %v4599
  %vm4605 = vc.u32 %v4580, %v4599
  %v4606 = vadd.s32 %v4602, 1
  %v4607 = vsel %vm4605, %v4606, %v4602
  %v4608 = vadd.s32 %v4603, %v4607
  %v4609 = vadd.s32 %v4608, 536870912
  %v4610 = vshrl.u32 %v4609, 30
  %v4611 = vshll.u32 %v4610, 30
  %v4612 = vsub.s32 %v4608, %v4611
  %vm4613 = vcmp.lt.s32.totalorder %v4612, 0
  %v4614 = vsub.s32 0, %v4612
  %v4615 = vsel %vm4613, %v4614, %v4612
  %v4616 = vclz %v4615
  %v4617 = vsub.s32 %v4616, 2
  %vm4618 = vcmp.gt.s32.totalorder 0, %v4617
  %v4619 = vsel %vm4618, 0, %v4617
  %v4620 = vsub.s32 32, %v4619
  %v4621 = vshll.u32 %v4612, %v4619
  %v4622 = vshrl.u32 %v4604, %v4620
  %v4623 = vor.u32 %v4621, %v4622
  %v4624 = vsub.s32 4294967266, %v4619
  %v4625 = vadd.s32 %v4624, 127
  %v4626 = vshll.u32 %v4625, 23
  %v4627 = vor.u32 4788187, %v4626
  %v4628 = vand.u32 2147483647, %v4627
  %v4630 = vcvt.s32.f32 %v4623
  %v4631 = vmul.f32 %v4630, %v4628
  %v4632 = vxor.u32 %v4631, 2147483648
  %v4633 = vsel %vm4512, %v4632, %v4631
  %v4634 = vsub.s32 4, %v4610
  %v4635 = vsel %vm4512, %v4634, %v4610
  %v4636 = vsel %vm4511, %v203, %v4633
  %v4637 = vsel %vm4511, 0, %v4635
  %v4638 = vmul.f32 %v4636, %v4636
  %v4639 = vmul.f32 %v4638, -0.001358992
  %v4640 = vadd.f32 %v4639, 0.041655596
  %v4641 = vmul.f32 %v4638, %v4640
  %v4642 = vadd.f32 %v4641, -0.4999988
  %v4643 = vmul.f32 %v4638, %v4642
  %v4644 = vadd.f32 1.0, %v4643
  %v4645 = vmul.f32 %v4636, %v4636
  %v4646 = vmul.f32 %v4645, -0.00019511016
  %v4647 = vadd.f32 %v4646, 0.008332121
  %v4648 = vmul.f32 %v4645, %v4647
  %v4649 = vadd.f32 %v4648, -0.16666654
  %v4650 = vmul.f32 %v4645, %v4649
  %v4651 = vadd.f32 %v4650, 1.0
  %v4652 = vmul.f32 %v4651, %v4636
  %vm4653 = vweird.f32 %v203
  %v4654 = vadd.s32 %v4637, 3
  %v4655 = vand.u32 %v4654, 3
  %vm4656 = vcmp.lt.s32.totalorder %v4655, 2
  %vm4657 = vcmp.eq.s32.totalorder %v4655, 0
  %v4658 = vxor.u32 %v4652, 2147483648
  %v4659 = vsel %vm4657, %v4644, %v4658
  %vm4660 = vcmp.eq.s32.totalorder %v4655, 2
  %v4661 = vxor.u32 %v4644, 2147483648
  %v4662 = vsel %vm4660, %v4661, %v4652
  %v4663 = vsel %vm4656, %v4659, %v4662
  %v4664 = vsel %vm4653, nan, %v4663
  %v4665 = vand.u32 2147483647, %v208
  %vm4666 = vcmp.le.f32.partialorder %v4665, 0.7853982
  %vm4667 = vcmp.lt.s32.totalorder %v208, 0
  %v4668 = vand.u32 %v208, 2139095040
  %v4669 = vshrl.u32 %v4668, 23
  %v4670 = vsub.s32 %v4669, 127
  %v4671 = vand.u32 2147483647, %v208
  %v4672 = vand.u32 %v4671, 8388607
  %v4673 = vor.u32 %v4672, 8388608
  %v4674 = vsub.s32 0, %v4673
  %v4675 = vadd.s32 %v4670, 1
  %vm4676 = vcmp.gt.s32.totalorder %v4675, 0
  %v4677 = vsel %vm4676, %v4675, 0
  %v4678 = vshrl.u32 %v4677, 5
  %v4679 = vand.u32 %v4677, 31
  %v4680 = vsub.s32 32, %v4679
  %v4681 = vshrl.u32 683565275, %v4680
  %v4682 = vshll.u32 683565275, %v4679
  %v4683 = vshrl.u32 2475754826, %v4680
  %v4684 = vor.u32 %v4682, %v4683
  %v4685 = vshll.u32 2475754826, %v4679
  %v4686 = vshrl.u32 2131351028, %v4680
  %v4687 = vor.u32 %v4685, %v4686
  %v4688 = vshll.u32 2131351028, %v4679
  %v4689 = vshrl.u32 2102212464, %v4680
  %v4690 = vor.u32 %v4688, %v4689
  %v4691 = vshll.u32 2102212464, %v4679
  %v4692 = vshrl.u32 920167782, %v4680
  %v4693 = vor.u32 %v4691, %v4692
  %v4694 = vshll.u32 920167782, %v4679
  %v4695 = vshrl.u32 1326507024, %v4680
  %v4696 = vor.u32 %v4694, %v4695
  %vm4697 = vcmp.lt.s32.totalorder %v4678, 1
  %vm4698 = vcmp.lt.s32.totalorder %v4678, 2
  %vm4699 = vcmp.lt.s32.totalorder %v4678, 3
  %vm4700 = vcmp.lt.s32.totalorder %v4678, 4
  %v4701 = vsel %vm4697, %v4681, %v4684
  %v4702 = vsel %vm4700, %v4690, 2102212464
  %v4703 = vsel %vm4699, %v4687, %v4702
  %v4704 = vsel %vm4698, %v4701, %v4703
  %v4705 = vsel %vm4697, %v4684, %v4687
  %v4706 = vsel %vm4700, %v4693, 920167782
  %v4707 = vsel %vm4699, %v4690, %v4706
  %v4708 = vsel %vm4698, %v4705, %v4707
  %v4709 = vsel %vm4697, %v4687, %v4690
  %v4710 = vsel %vm4700, %v4696, 1326507024
  %v4711 = vsel %vm4699, %v4693, %v4710
  %v4712 = vsel %vm4698, %v4709, %v4711
  %v4713 = vshll.u32 %v4673, 8
  %v4714 = vand.u32 %v4713, 65535
  %v4715 = vshrl.u32 %v4713, 16
  %v4716 = vand.u32 %v4712, 65535
  %v4717 = vshrl.u32 %v4712, 16
  %v4718 = vmul.u32 %v4714, %v4716
  %v4719 = vmul.u32 %v4714, %v4717
  %v4720 = vmul.u32 %v4715, %v4716
  %v4721 = vmul.u32 %v4715, %v4717
  %v4722 = vshll.u32 %v4719, 16
  %v4723 = vshrl.u32 %v4719, 16
  %v4724 = vshll.u32 %v4720, 16
  %v4725 = vshrl.u32 %v4720, 16
  %vm4726 = vc.u32 %v4718, %v4722
  %v4727 = vsel %vm4726, 1, 0
  %v4728 = vadd.s32 %v4718, %v4722
  %v4729 = vadd.s32 %v4721, %v4727
  %vm4730 = vc.u32 %v4728, %v4724
  %v4731 = vsel %vm4730, 1, 0
  %v4732 = vadd.s32 %v4728, %v4724
  %v4733 = vadd.s32 %v4729, %v4731
  %v4734 = vadd.s32 %v4733, %v4723
  %v4735 = vadd.s32 %v4734, %v4725
  %v4736 = vand.u32 %v4713, 65535
  %v4737 = vshrl.u32 %v4713, 16
  %v4738 = vand.u32 %v4708, 65535
  %v4739 = vshrl.u32 %v4708, 16
  %v4740 = vmul.u32 %v4736, %v4738
  %v4741 = vmul.u32 %v4736, %v4739
  %v4742 = vmul.u32 %v4737, %v4738
  %v4743 = vmul.u32 %v4737, %v4739
  %v4744 = vshll.u32 %v4741, 16
  %v4745 = vshrl.u32 %v4741, 16
  %v4746 = vshll.u32 %v4742, 16
  %v4747 = vshrl.u32 %v4742, 16
  %vm4748 = vc.u32 %v4740, %v4744
  %v4749 = vsel %vm4748, 1, 0
  %v4750 = vadd.s32 %v4740, %v4744
  %v4751 = vadd.s32 %v4743, %v4749
  %vm4752 = vc.u32 %v4750, %v4746
  %v4753 = vsel %vm4752, 1, 0
  %v4754 = vadd.s32 %v4750, %v4746
  %v4755 = vadd.s32 %v4751, %v4753
  %v4756 = vadd.s32 %v4755, %v4745
  %v4757 = vadd.s32 %v4756, %v4747
  %v4758 = vmul.u32 %v4713, %v4704
  %v4759 = vadd.s32 %v4735, %v4754
  %vm4760 = vc.u32 %v4735, %v4754
  %v4761 = vadd.s32 %v4757, 1
  %v4762 = vsel %vm4760, %v4761, %v4757
  %v4763 = vadd.s32 %v4758, %v4762
  %v4764 = vadd.s32 %v4763, 536870912
  %v4765 = vshrl.u32 %v4764, 30
  %v4766 = vshll.u32 %v4765, 30
  %v4767 = vsub.s32 %v4763, %v4766
  %vm4768 = vcmp.lt.s32.totalorder %v4767, 0
  %v4769 = vsub.s32 0, %v4767
  %v4770 = vsel %vm4768, %v4769, %v4767
  %v4771 = vclz %v4770
  %v4772 = vsub.s32 %v4771, 2
  %vm4773 = vcmp.gt.s32.totalorder 0, %v4772
  %v4774 = vsel %vm4773, 0, %v4772
  %v4775 = vsub.s32 32, %v4774
  %v4776 = vshll.u32 %v4767, %v4774
  %v4777 = vshrl.u32 %v4759, %v4775
  %v4778 = vor.u32 %v4776, %v4777
  %v4779 = vsub.s32 4294967266, %v4774
  %v4780 = vadd.s32 %v4779, 127
  %v4781 = vshll.u32 %v4780, 23
  %v4782 = vor.u32 4788187, %v4781
  %v4783 = vand.u32 2147483647, %v4782
  %v4785 = vcvt.s32.f32 %v4778
  %v4786 = vmul.f32 %v4785, %v4783
  %v4787 = vxor.u32 %v4786, 2147483648
  %v4788 = vsel %vm4667, %v4787, %v4786
  %v4789 = vsub.s32 4, %v4765
  %v4790 = vsel %vm4667, %v4789, %v4765
  %v4791 = vsel %vm4666, %v208, %v4788
  %v4792 = vsel %vm4666, 0, %v4790
  %v4793 = vmul.f32 %v4791, %v4791
  %v4794 = vmul.f32 %v4793, -0.001358992
  %v4795 = vadd.f32 %v4794, 0.041655596
  %v4796 = vmul.f32 %v4793, %v4795
  %v4797 = vadd.f32 %v4796, -0.4999988
  %v4798 = vmul.f32 %v4793, %v4797
  %v4799 = vadd.f32 1.0, %v4798
  %v4800 = vmul.f32 %v4791, %v4791
  %v4801 = vmul.f32 %v4800, -0.00019511016
  %v4802 = vadd.f32 %v4801, 0.008332121
  %v4803 = vmul.f32 %v4800, %v4802
  %v4804 = vadd.f32 %v4803, -0.16666654
  %v4805 = vmul.f32 %v4800, %v4804
  %v4806 = vadd.f32 %v4805, 1.0
  %v4807 = vmul.f32 %v4806, %v4791
  %vm4808 = vweird.f32 %v208
  %v4809 = vadd.s32 %v4792, 3
  %v4810 = vand.u32 %v4809, 3
  %vm4811 = vcmp.lt.s32.totalorder %v4810, 2
  %vm4812 = vcmp.eq.s32.totalorder %v4810, 0
  %v4813 = vxor.u32 %v4807, 2147483648
  %v4814 = vsel %vm4812, %v4799, %v4813
  %vm4815 = vcmp.eq.s32.totalorder %v4810, 2
  %v4816 = vxor.u32 %v4799, 2147483648
  %v4817 = vsel %vm4815, %v4816, %v4807
  %v4818 = vsel %vm4811, %v4814, %v4817
  %v4819 = vsel %vm4808, nan, %v4818
  %v4820 = vand.u32 2147483647, %v213
  %vm4821 = vcmp.le.f32.partialorder %v4820, 0.7853982
  %vm4822 = vcmp.lt.s32.totalorder %v213, 0
  %v4823 = vand.u32 %v213, 2139095040
  %v4824 = vshrl.u32 %v4823, 23
  %v4825 = vsub.s32 %v4824, 127
  %v4826 = vand.u32 2147483647, %v213
  %v4827 = vand.u32 %v4826, 8388607
  %v4828 = vor.u32 %v4827, 8388608
  %v4829 = vsub.s32 0, %v4828
  %v4830 = vadd.s32 %v4825, 1
  %vm4831 = vcmp.gt.s32.totalorder %v4830, 0
  %v4832 = vsel %vm4831, %v4830, 0
  %v4833 = vshrl.u32 %v4832, 5
  %v4834 = vand.u32 %v4832, 31
  %v4835 = vsub.s32 32, %v4834
  %v4836 = vshrl.u32 683565275, %v4835
  %v4837 = vshll.u32 683565275, %v4834
  %v4838 = vshrl.u32 2475754826, %v4835
  %v4839 = vor.u32 %v4837, %v4838
  %v4840 = vshll.u32 2475754826, %v4834
  %v4841 = vshrl.u32 2131351028, %v4835
  %v4842 = vor.u32 %v4840, %v4841
  %v4843 = vshll.u32 2131351028, %v4834
  %v4844 = vshrl.u32 2102212464, %v4835
  %v4845 = vor.u32 %v4843, %v4844
  %v4846 = vshll.u32 2102212464, %v4834
  %v4847 = vshrl.u32 920167782, %v4835
  %v4848 = vor.u32 %v4846, %v4847
  %v4849 = vshll.u32 920167782, %v4834
  %v4850 = vshrl.u32 1326507024, %v4835
  %v4851 = vor.u32 %v4849, %v4850
  %vm4852 = vcmp.lt.s32.totalorder %v4833, 1
  %vm4853 = vcmp.lt.s32.totalorder %v4833, 2
  %vm4854 = vcmp.lt.s32.totalorder %v4833, 3
  %vm4855 = vcmp.lt.s32.totalorder %v4833, 4
  %v4856 = vsel %vm4852, %v4836, %v4839
  %v4857 = vsel %vm4855, %v4845, 2102212464
  %v4858 = vsel %vm4854, %v4842, %v4857
  %v4859 = vsel %vm4853, %v4856, %v4858
  %v4860 = vsel %vm4852, %v4839, %v4842
  %v4861 = vsel %vm4855, %v4848, 920167782
  %v4862 = vsel %vm4854, %v4845, %v4861
  %v4863 = vsel %vm4853, %v4860, %v4862
  %v4864 = vsel %vm4852, %v4842, %v4845
  %v4865 = vsel %vm4855, %v4851, 1326507024
  %v4866 = vsel %vm4854, %v4848, %v4865
  %v4867 = vsel %vm4853, %v4864, %v4866
  %v4868 = vshll.u32 %v4828, 8
  %v4869 = vand.u32 %v4868, 65535
  %v4870 = vshrl.u32 %v4868, 16
  %v4871 = vand.u32 %v4867, 65535
  %v4872 = vshrl.u32 %v4867, 16
  %v4873 = vmul.u32 %v4869, %v4871
  %v4874 = vmul.u32 %v4869, %v4872
  %v4875 = vmul.u32 %v4870, %v4871
  %v4876 = vmul.u32 %v4870, %v4872
  %v4877 = vshll.u32 %v4874, 16
  %v4878 = vshrl.u32 %v4874, 16
  %v4879 = vshll.u32 %v4875, 16
  %v4880 = vshrl.u32 %v4875, 16
  %vm4881 = vc.u32 %v4873, %v4877
  %v4882 = vsel %vm4881, 1, 0
  %v4883 = vadd.s32 %v4873, %v4877
  %v4884 = vadd.s32 %v4876, %v4882
  %vm4885 = vc.u32 %v4883, %v4879
  %v4886 = vsel %vm4885, 1, 0
  %v4887 = vadd.s32 %v4883, %v4879
  %v4888 = vadd.s32 %v4884, %v4886
  %v4889 = vadd.s32 %v4888, %v4878
  %v4890 = vadd.s32 %v4889, %v4880
  %v4891 = vand.u32 %v4868, 65535
  %v4892 = vshrl.u32 %v4868, 16
  %v4893 = vand.u32 %v4863, 65535
  %v4894 = vshrl.u32 %v4863, 16
  %v4895 = vmul.u32 %v4891, %v4893
  %v4896 = vmul.u32 %v4891, %v4894
  %v4897 = vmul.u32 %v4892, %v4893
  %v4898 = vmul.u32 %v4892, %v4894
  %v4899 = vshll.u32 %v4896, 16
  %v4900 = vshrl.u32 %v4896, 16
  %v4901 = vshll.u32 %v4897, 16
  %v4902 = vshrl.u32 %v4897, 16
  %vm4903 = vc.u32 %v4895, %v4899
  %v4904 = vsel %vm4903, 1, 0
  %v4905 = vadd.s32 %v4895, %v4899
  %v4906 = vadd.s32 %v4898, %v4904
  %vm4907 = vc.u32 %v4905, %v4901
  %v4908 = vsel %vm4907, 1, 0
  %v4909 = vadd.s32 %v4905, %v4901
  %v4910 = vadd.s32 %v4906, %v4908
  %v4911 = vadd.s32 %v4910, %v4900
  %v4912 = vadd.s32 %v4911, %v4902
  %v4913 = vmul.u32 %v4868, %v4859
  %v4914 = vadd.s32 %v4890, %v4909
  %vm4915 = vc.u32 %v4890, %v4909
  %v4916 = vadd.s32 %v4912, 1
  %v4917 = vsel %vm4915, %v4916, %v4912
  %v4918 = vadd.s32 %v4913, %v4917
  %v4919 = vadd.s32 %v4918, 536870912
  %v4920 = vshrl.u32 %v4919, 30
  %v4921 = vshll.u32 %v4920, 30
  %v4922 = vsub.s32 %v4918, %v4921
  %vm4923 = vcmp.lt.s32.totalorder %v4922, 0
  %v4924 = vsub.s32 0, %v4922
  %v4925 = vsel %vm4923, %v4924, %v4922
  %v4926 = vclz %v4925
  %v4927 = vsub.s32 %v4926, 2
  %vm4928 = vcmp.gt.s32.totalorder 0, %v4927
  %v4929 = vsel %vm4928, 0, %v4927
  %v4930 = vsub.s32 32, %v4929
  %v4931 = vshll.u32 %v4922, %v4929
  %v4932 = vshrl.u32 %v4914, %v4930
  %v4933 = vor.u32 %v4931, %v4932
  %v4934 = vsub.s32 4294967266, %v4929
  %v4935 = vadd.s32 %v4934, 127
  %v4936 = vshll.u32 %v4935, 23
  %v4937 = vor.u32 4788187, %v4936
  %v4938 = vand.u32 2147483647, %v4937
  %v4940 = vcvt.s32.f32 %v4933
  %v4941 = vmul.f32 %v4940, %v4938
  %v4942 = vxor.u32 %v4941, 2147483648
  %v4943 = vsel %vm4822, %v4942, %v4941
  %v4944 = vsub.s32 4, %v4920
  %v4945 = vsel %vm4822, %v4944, %v4920
  %v4946 = vsel %vm4821, %v213, %v4943
  %v4947 = vsel %vm4821, 0, %v4945
  %v4948 = vmul.f32 %v4946, %v4946
  %v4949 = vmul.f32 %v4948, -0.001358992
  %v4950 = vadd.f32 %v4949, 0.041655596
  %v4951 = vmul.f32 %v4948, %v4950
  %v4952 = vadd.f32 %v4951, -0.4999988
  %v4953 = vmul.f32 %v4948, %v4952
  %v4954 = vadd.f32 1.0, %v4953
  %v4955 = vmul.f32 %v4946, %v4946
  %v4956 = vmul.f32 %v4955, -0.00019511016
  %v4957 = vadd.f32 %v4956, 0.008332121
  %v4958 = vmul.f32 %v4955, %v4957
  %v4959 = vadd.f32 %v4958, -0.16666654
  %v4960 = vmul.f32 %v4955, %v4959
  %v4961 = vadd.f32 %v4960, 1.0
  %v4962 = vmul.f32 %v4961, %v4946
  %vm4963 = vweird.f32 %v213
  %v4964 = vadd.s32 %v4947, 3
  %v4965 = vand.u32 %v4964, 3
  %vm4966 = vcmp.lt.s32.totalorder %v4965, 2
  %vm4967 = vcmp.eq.s32.totalorder %v4965, 0
  %v4968 = vxor.u32 %v4962, 2147483648
  %v4969 = vsel %vm4967, %v4954, %v4968
  %vm4970 = vcmp.eq.s32.totalorder %v4965, 2
  %v4971 = vxor.u32 %v4954, 2147483648
  %v4972 = vsel %vm4970, %v4971, %v4962
  %v4973 = vsel %vm4966, %v4969, %v4972
  %v4974 = vsel %vm4963, nan, %v4973
  %v4975 = vand.u32 2147483647, %v218
  %vm4976 = vcmp.le.f32.partialorder %v4975, 0.7853982
  %vm4977 = vcmp.lt.s32.totalorder %v218, 0
  %v4978 = vand.u32 %v218, 2139095040
  %v4979 = vshrl.u32 %v4978, 23
  %v4980 = vsub.s32 %v4979, 127
  %v4981 = vand.u32 2147483647, %v218
  %v4982 = vand.u32 %v4981, 8388607
  %v4983 = vor.u32 %v4982, 8388608
  %v4984 = vsub.s32 0, %v4983
  %v4985 = vadd.s32 %v4980, 1
  %vm4986 = vcmp.gt.s32.totalorder %v4985, 0
  %v4987 = vsel %vm4986, %v4985, 0
  %v4988 = vshrl.u32 %v4987, 5
  %v4989 = vand.u32 %v4987, 31
  %v4990 = vsub.s32 32, %v4989
  %v4991 = vshrl.u32 683565275, %v4990
  %v4992 = vshll.u32 683565275, %v4989
  %v4993 = vshrl.u32 2475754826, %v4990
  %v4994 = vor.u32 %v4992, %v4993
  %v4995 = vshll.u32 2475754826, %v4989
  %v4996 = vshrl.u32 2131351028, %v4990
  %v4997 = vor.u32 %v4995, %v4996
  %v4998 = vshll.u32 2131351028, %v4989
  %v4999 = vshrl.u32 2102212464, %v4990
  %v5000 = vor.u32 %v4998, %v4999
  %v5001 = vshll.u32 2102212464, %v4989
  %v5002 = vshrl.u32 920167782, %v4990
  %v5003 = vor.u32 %v5001, %v5002
  %v5004 = vshll.u32 920167782, %v4989
  %v5005 = vshrl.u32 1326507024, %v4990
  %v5006 = vor.u32 %v5004, %v5005
  %vm5007 = vcmp.lt.s32.totalorder %v4988, 1
  %vm5008 = vcmp.lt.s32.totalorder %v4988, 2
  %vm5009 = vcmp.lt.s32.totalorder %v4988, 3
  %vm5010 = vcmp.lt.s32.totalorder %v4988, 4
  %v5011 = vsel %vm5007, %v4991, %v4994
  %v5012 = vsel %vm5010, %v5000, 2102212464
  %v5013 = vsel %vm5009, %v4997, %v5012
  %v5014 = vsel %vm5008, %v5011, %v5013
  %v5015 = vsel %vm5007, %v4994, %v4997
  %v5016 = vsel %vm5010, %v5003, 920167782
  %v5017 = vsel %vm5009, %v5000, %v5016
  %v5018 = vsel %vm5008, %v5015, %v5017
  %v5019 = vsel %vm5007, %v4997, %v5000
  %v5020 = vsel %vm5010, %v5006, 1326507024
  %v5021 = vsel %vm5009, %v5003, %v5020
  %v5022 = vsel %vm5008, %v5019, %v5021
  %v5023 = vshll.u32 %v4983, 8
  %v5024 = vand.u32 %v5023, 65535
  %v5025 = vshrl.u32 %v5023, 16
  %v5026 = vand.u32 %v5022, 65535
  %v5027 = vshrl.u32 %v5022, 16
  %v5028 = vmul.u32 %v5024, %v5026
  %v5029 = vmul.u32 %v5024, %v5027
  %v5030 = vmul.u32 %v5025, %v5026
  %v5031 = vmul.u32 %v5025, %v5027
  %v5032 = vshll.u32 %v5029, 16
  %v5033 = vshrl.u32 %v5029, 16
  %v5034 = vshll.u32 %v5030, 16
  %v5035 = vshrl.u32 %v5030, 16
  %vm5036 = vc.u32 %v5028, %v5032
  %v5037 = vsel %vm5036, 1, 0
  %v5038 = vadd.s32 %v5028, %v5032
  %v5039 = vadd.s32 %v5031, %v5037
  %vm5040 = vc.u32 %v5038, %v5034
  %v5041 = vsel %vm5040, 1, 0
  %v5042 = vadd.s32 %v5038, %v5034
  %v5043 = vadd.s32 %v5039, %v5041
  %v5044 = vadd.s32 %v5043, %v5033
  %v5045 = vadd.s32 %v5044, %v5035
  %v5046 = vand.u32 %v5023, 65535
  %v5047 = vshrl.u32 %v5023, 16
  %v5048 = vand.u32 %v5018, 65535
  %v5049 = vshrl.u32 %v5018, 16
  %v5050 = vmul.u32 %v5046, %v5048
  %v5051 = vmul.u32 %v5046, %v5049
  %v5052 = vmul.u32 %v5047, %v5048
  %v5053 = vmul.u32 %v5047, %v5049
  %v5054 = vshll.u32 %v5051, 16
  %v5055 = vshrl.u32 %v5051, 16
  %v5056 = vshll.u32 %v5052, 16
  %v5057 = vshrl.u32 %v5052, 16
  %vm5058 = vc.u32 %v5050, %v5054
  %v5059 = vsel %vm5058, 1, 0
  %v5060 = vadd.s32 %v5050, %v5054
  %v5061 = vadd.s32 %v5053, %v5059
  %vm5062 = vc.u32 %v5060, %v5056
  %v5063 = vsel %vm5062, 1, 0
  %v5064 = vadd.s32 %v5060, %v5056
  %v5065 = vadd.s32 %v5061, %v5063
  %v5066 = vadd.s32 %v5065, %v5055
  %v5067 = vadd.s32 %v5066, %v5057
  %v5068 = vmul.u32 %v5023, %v5014
  %v5069 = vadd.s32 %v5045, %v5064
  %vm5070 = vc.u32 %v5045, %v5064
  %v5071 = vadd.s32 %v5067, 1
  %v5072 = vsel %vm5070, %v5071, %v5067
  %v5073 = vadd.s32 %v5068, %v5072
  %v5074 = vadd.s32 %v5073, 536870912
  %v5075 = vshrl.u32 %v5074, 30
  %v5076 = vshll.u32 %v5075, 30
  %v5077 = vsub.s32 %v5073, %v5076
  %vm5078 = vcmp.lt.s32.totalorder %v5077, 0
  %v5079 = vsub.s32 0, %v5077
  %v5080 = vsel %vm5078, %v5079, %v5077
  %v5081 = vclz %v5080
  %v5082 = vsub.s32 %v5081, 2
  %vm5083 = vcmp.gt.s32.totalorder 0, %v5082
  %v5084 = vsel %vm5083, 0, %v5082
  %v5085 = vsub.s32 32, %v5084
  %v5086 = vshll.u32 %v5077, %v5084
  %v5087 = vshrl.u32 %v5069, %v5085
  %v5088 = vor.u32 %v5086, %v5087
  %v5089 = vsub.s32 4294967266, %v5084
  %v5090 = vadd.s32 %v5089, 127
  %v5091 = vshll.u32 %v5090, 23
  %v5092 = vor.u32 4788187, %v5091
  %v5093 = vand.u32 2147483647, %v5092
  %v5095 = vcvt.s32.f32 %v5088
  %v5096 = vmul.f32 %v5095, %v5093
  %v5097 = vxor.u32 %v5096, 2147483648
  %v5098 = vsel %vm4977, %v5097, %v5096
  %v5099 = vsub.s32 4, %v5075
  %v5100 = vsel %vm4977, %v5099, %v5075
  %v5101 = vsel %vm4976, %v218, %v5098
  %v5102 = vsel %vm4976, 0, %v5100
  %v5103 = vmul.f32 %v5101, %v5101
  %v5104 = vmul.f32 %v5103, -0.001358992
  %v5105 = vadd.f32 %v5104, 0.041655596
  %v5106 = vmul.f32 %v5103, %v5105
  %v5107 = vadd.f32 %v5106, -0.4999988
  %v5108 = vmul.f32 %v5103, %v5107
  %v5109 = vadd.f32 1.0, %v5108
  %v5110 = vmul.f32 %v5101, %v5101
  %v5111 = vmul.f32 %v5110, -0.00019511016
  %v5112 = vadd.f32 %v5111, 0.008332121
  %v5113 = vmul.f32 %v5110, %v5112
  %v5114 = vadd.f32 %v5113, -0.16666654
  %v5115 = vmul.f32 %v5110, %v5114
  %v5116 = vadd.f32 %v5115, 1.0
  %v5117 = vmul.f32 %v5116, %v5101
  %vm5118 = vweird.f32 %v218
  %v5119 = vadd.s32 %v5102, 3
  %v5120 = vand.u32 %v5119, 3
  %vm5121 = vcmp.lt.s32.totalorder %v5120, 2
  %vm5122 = vcmp.eq.s32.totalorder %v5120, 0
  %v5123 = vxor.u32 %v5117, 2147483648
  %v5124 = vsel %vm5122, %v5109, %v5123
  %vm5125 = vcmp.eq.s32.totalorder %v5120, 2
  %v5126 = vxor.u32 %v5109, 2147483648
  %v5127 = vsel %vm5125, %v5126, %v5117
  %v5128 = vsel %vm5121, %v5124, %v5127
  %v5129 = vsel %vm5118, nan, %v5128
  %v5130 = vand.u32 2147483647, %v223
  %vm5131 = vcmp.le.f32.partialorder %v5130, 0.7853982
  %vm5132 = vcmp.lt.s32.totalorder %v223, 0
  %v5133 = vand.u32 %v223, 2139095040
  %v5134 = vshrl.u32 %v5133, 23
  %v5135 = vsub.s32 %v5134, 127
  %v5136 = vand.u32 2147483647, %v223
  %v5137 = vand.u32 %v5136, 8388607
  %v5138 = vor.u32 %v5137, 8388608
  %v5139 = vsub.s32 0, %v5138
  %v5140 = vadd.s32 %v5135, 1
  %vm5141 = vcmp.gt.s32.totalorder %v5140, 0
  %v5142 = vsel %vm5141, %v5140, 0
  %v5143 = vshrl.u32 %v5142, 5
  %v5144 = vand.u32 %v5142, 31
  %v5145 = vsub.s32 32, %v5144
  %v5146 = vshrl.u32 683565275, %v5145
  %v5147 = vshll.u32 683565275, %v5144
  %v5148 = vshrl.u32 2475754826, %v5145
  %v5149 = vor.u32 %v5147, %v5148
  %v5150 = vshll.u32 2475754826, %v5144
  %v5151 = vshrl.u32 2131351028, %v5145
  %v5152 = vor.u32 %v5150, %v5151
  %v5153 = vshll.u32 2131351028, %v5144
  %v5154 = vshrl.u32 2102212464, %v5145
  %v5155 = vor.u32 %v5153, %v5154
  %v5156 = vshll.u32 2102212464, %v5144
  %v5157 = vshrl.u32 920167782, %v5145
  %v5158 = vor.u32 %v5156, %v5157
  %v5159 = vshll.u32 920167782, %v5144
  %v5160 = vshrl.u32 1326507024, %v5145
  %v5161 = vor.u32 %v5159, %v5160
  %vm5162 = vcmp.lt.s32.totalorder %v5143, 1
  %vm5163 = vcmp.lt.s32.totalorder %v5143, 2
  %vm5164 = vcmp.lt.s32.totalorder %v5143, 3
  %vm5165 = vcmp.lt.s32.totalorder %v5143, 4
  %v5166 = vsel %vm5162, %v5146, %v5149
  %v5167 = vsel %vm5165, %v5155, 2102212464
  %v5168 = vsel %vm5164, %v5152, %v5167
  %v5169 = vsel %vm5163, %v5166, %v5168
  %v5170 = vsel %vm5162, %v5149, %v5152
  %v5171 = vsel %vm5165, %v5158, 920167782
  %v5172 = vsel %vm5164, %v5155, %v5171
  %v5173 = vsel %vm5163, %v5170, %v5172
  %v5174 = vsel %vm5162, %v5152, %v5155
  %v5175 = vsel %vm5165, %v5161, 1326507024
  %v5176 = vsel %vm5164, %v5158, %v5175
  %v5177 = vsel %vm5163, %v5174, %v5176
  %v5178 = vshll.u32 %v5138, 8
  %v5179 = vand.u32 %v5178, 65535
  %v5180 = vshrl.u32 %v5178, 16
  %v5181 = vand.u32 %v5177, 65535
  %v5182 = vshrl.u32 %v5177, 16
  %v5183 = vmul.u32 %v5179, %v5181
  %v5184 = vmul.u32 %v5179, %v5182
  %v5185 = vmul.u32 %v5180, %v5181
  %v5186 = vmul.u32 %v5180, %v5182
  %v5187 = vshll.u32 %v5184, 16
  %v5188 = vshrl.u32 %v5184, 16
  %v5189 = vshll.u32 %v5185, 16
  %v5190 = vshrl.u32 %v5185, 16
  %vm5191 = vc.u32 %v5183, %v5187
  %v5192 = vsel %vm5191, 1, 0
  %v5193 = vadd.s32 %v5183, %v5187
  %v5194 = vadd.s32 %v5186, %v5192
  %vm5195 = vc.u32 %v5193, %v5189
  %v5196 = vsel %vm5195, 1, 0
  %v5197 = vadd.s32 %v5193, %v5189
  %v5198 = vadd.s32 %v5194, %v5196
  %v5199 = vadd.s32 %v5198, %v5188
  %v5200 = vadd.s32 %v5199, %v5190
  %v5201 = vand.u32 %v5178, 65535
  %v5202 = vshrl.u32 %v5178, 16
  %v5203 = vand.u32 %v5173, 65535
  %v5204 = vshrl.u32 %v5173, 16
  %v5205 = vmul.u32 %v5201, %v5203
  %v5206 = vmul.u32 %v5201, %v5204
  %v5207 = vmul.u32 %v5202, %v5203
  %v5208 = vmul.u32 %v5202, %v5204
  %v5209 = vshll.u32 %v5206, 16
  %v5210 = vshrl.u32 %v5206, 16
  %v5211 = vshll.u32 %v5207, 16
  %v5212 = vshrl.u32 %v5207, 16
  %vm5213 = vc.u32 %v5205, %v5209
  %v5214 = vsel %vm5213, 1, 0
  %v5215 = vadd.s32 %v5205, %v5209
  %v5216 = vadd.s32 %v5208, %v5214
  %vm5217 = vc.u32 %v5215, %v5211
  %v5218 = vsel %vm5217, 1, 0
  %v5219 = vadd.s32 %v5215, %v5211
  %v5220 = vadd.s32 %v5216, %v5218
  %v5221 = vadd.s32 %v5220, %v5210
  %v5222 = vadd.s32 %v5221, %v5212
  %v5223 = vmul.u32 %v5178, %v5169
  %v5224 = vadd.s32 %v5200, %v5219
  %vm5225 = vc.u32 %v5200, %v5219
  %v5226 = vadd.s32 %v5222, 1
  %v5227 = vsel %vm5225, %v5226, %v5222
  %v5228 = vadd.s32 %v5223, %v5227
  %v5229 = vadd.s32 %v5228, 536870912
  %v5230 = vshrl.u32 %v5229, 30
  %v5231 = vshll.u32 %v5230, 30
  %v5232 = vsub.s32 %v5228, %v5231
  %vm5233 = vcmp.lt.s32.totalorder %v5232, 0
  %v5234 = vsub.s32 0, %v5232
  %v5235 = vsel %vm5233, %v5234, %v5232
  %v5236 = vclz %v5235
  %v5237 = vsub.s32 %v5236, 2
  %vm5238 = vcmp.gt.s32.totalorder 0, %v5237
  %v5239 = vsel %vm5238, 0, %v5237
  %v5240 = vsub.s32 32, %v5239
  %v5241 = vshll.u32 %v5232, %v5239
  %v5242 = vshrl.u32 %v5224, %v5240
  %v5243 = vor.u32 %v5241, %v5242
  %v5244 = vsub.s32 4294967266, %v5239
  %v5245 = vadd.s32 %v5244, 127
  %v5246 = vshll.u32 %v5245, 23
  %v5247 = vor.u32 4788187, %v5246
  %v5248 = vand.u32 2147483647, %v5247
  %v5250 = vcvt.s32.f32 %v5243
  %v5251 = vmul.f32 %v5250, %v5248
  %v5252 = vxor.u32 %v5251, 2147483648
  %v5253 = vsel %vm5132, %v5252, %v5251
  %v5254 = vsub.s32 4, %v5230
  %v5255 = vsel %vm5132, %v5254, %v5230
  %v5256 = vsel %vm5131, %v223, %v5253
  %v5257 = vsel %vm5131, 0, %v5255
  %v5258 = vmul.f32 %v5256, %v5256
  %v5259 = vmul.f32 %v5258, -0.001358992
  %v5260 = vadd.f32 %v5259, 0.041655596
  %v5261 = vmul.f32 %v5258, %v5260
  %v5262 = vadd.f32 %v5261, -0.4999988
  %v5263 = vmul.f32 %v5258, %v5262
  %v5264 = vadd.f32 1.0, %v5263
  %v5265 = vmul.f32 %v5256, %v5256
  %v5266 = vmul.f32 %v5265, -0.00019511016
  %v5267 = vadd.f32 %v5266, 0.008332121
  %v5268 = vmul.f32 %v5265, %v5267
  %v5269 = vadd.f32 %v5268, -0.16666654
  %v5270 = vmul.f32 %v5265, %v5269
  %v5271 = vadd.f32 %v5270, 1.0
  %v5272 = vmul.f32 %v5271, %v5256
  %vm5273 = vweird.f32 %v223
  %v5274 = vadd.s32 %v5257, 3
  %v5275 = vand.u32 %v5274, 3
  %vm5276 = vcmp.lt.s32.totalorder %v5275, 2
  %vm5277 = vcmp.eq.s32.totalorder %v5275, 0
  %v5278 = vxor.u32 %v5272, 2147483648
  %v5279 = vsel %vm5277, %v5264, %v5278
  %vm5280 = vcmp.eq.s32.totalorder %v5275, 2
  %v5281 = vxor.u32 %v5264, 2147483648
  %v5282 = vsel %vm5280, %v5281, %v5272
  %v5283 = vsel %vm5276, %v5279, %v5282
  %v5284 = vsel %vm5273, nan, %v5283
  %vm5285 = vcmp.eq.s32.totalorder %v322, 2
  %v5286 = vand.u32 2147483647, %v68
  %vm5287 = vcmp.le.f32.partialorder %v5286, 0.7853982
  %vm5288 = vcmp.lt.s32.totalorder %v68, 0
  %v5289 = vand.u32 %v68, 2139095040
  %v5290 = vshrl.u32 %v5289, 23
  %v5291 = vsub.s32 %v5290, 127
  %v5292 = vand.u32 2147483647, %v68
  %v5293 = vand.u32 %v5292, 8388607
  %v5294 = vor.u32 %v5293, 8388608
  %v5295 = vsub.s32 0, %v5294
  %v5296 = vadd.s32 %v5291, 1
  %vm5297 = vcmp.gt.s32.totalorder %v5296, 0
  %v5298 = vsel %vm5297, %v5296, 0
  %v5299 = vshrl.u32 %v5298, 5
  %v5300 = vand.u32 %v5298, 31
  %v5301 = vsub.s32 32, %v5300
  %v5302 = vshrl.u32 683565275, %v5301
  %v5303 = vshll.u32 683565275, %v5300
  %v5304 = vshrl.u32 2475754826, %v5301
  %v5305 = vor.u32 %v5303, %v5304
  %v5306 = vshll.u32 2475754826, %v5300
  %v5307 = vshrl.u32 2131351028, %v5301
  %v5308 = vor.u32 %v5306, %v5307
  %v5309 = vshll.u32 2131351028, %v5300
  %v5310 = vshrl.u32 2102212464, %v5301
  %v5311 = vor.u32 %v5309, %v5310
  %v5312 = vshll.u32 2102212464, %v5300
  %v5313 = vshrl.u32 920167782, %v5301
  %v5314 = vor.u32 %v5312, %v5313
  %v5315 = vshll.u32 920167782, %v5300
  %v5316 = vshrl.u32 1326507024, %v5301
  %v5317 = vor.u32 %v5315, %v5316
  %vm5318 = vcmp.lt.s32.totalorder %v5299, 1
  %vm5319 = vcmp.lt.s32.totalorder %v5299, 2
  %vm5320 = vcmp.lt.s32.totalorder %v5299, 3
  %vm5321 = vcmp.lt.s32.totalorder %v5299, 4
  %v5322 = vsel %vm5318, %v5302, %v5305
  %v5323 = vsel %vm5321, %v5311, 2102212464
  %v5324 = vsel %vm5320, %v5308, %v5323
  %v5325 = vsel %vm5319, %v5322, %v5324
  %v5326 = vsel %vm5318, %v5305, %v5308
  %v5327 = vsel %vm5321, %v5314, 920167782
  %v5328 = vsel %vm5320, %v5311, %v5327
  %v5329 = vsel %vm5319, %v5326, %v5328
  %v5330 = vsel %vm5318, %v5308, %v5311
  %v5331 = vsel %vm5321, %v5317, 1326507024
  %v5332 = vsel %vm5320, %v5314, %v5331
  %v5333 = vsel %vm5319, %v5330, %v5332
  %v5334 = vshll.u32 %v5294, 8
  %v5335 = vand.u32 %v5334, 65535
  %v5336 = vshrl.u32 %v5334, 16
  %v5337 = vand.u32 %v5333, 65535
  %v5338 = vshrl.u32 %v5333, 16
  %v5339 = vmul.u32 %v5335, %v5337
  %v5340 = vmul.u32 %v5335, %v5338
  %v5341 = vmul.u32 %v5336, %v5337
  %v5342 = vmul.u32 %v5336, %v5338
  %v5343 = vshll.u32 %v5340, 16
  %v5344 = vshrl.u32 %v5340, 16
  %v5345 = vshll.u32 %v5341, 16
  %v5346 = vshrl.u32 %v5341, 16
  %vm5347 = vc.u32 %v5339, %v5343
  %v5348 = vsel %vm5347, 1, 0
  %v5349 = vadd.s32 %v5339, %v5343
  %v5350 = vadd.s32 %v5342, %v5348
  %vm5351 = vc.u32 %v5349, %v5345
  %v5352 = vsel %vm5351, 1, 0
  %v5353 = vadd.s32 %v5349, %v5345
  %v5354 = vadd.s32 %v5350, %v5352
  %v5355 = vadd.s32 %v5354, %v5344
  %v5356 = vadd.s32 %v5355, %v5346
  %v5357 = vand.u32 %v5334, 65535
  %v5358 = vshrl.u32 %v5334, 16
  %v5359 = vand.u32 %v5329, 65535
  %v5360 = vshrl.u32 %v5329, 16
  %v5361 = vmul.u32 %v5357, %v5359
  %v5362 = vmul.u32 %v5357, %v5360
  %v5363 = vmul.u32 %v5358, %v5359
  %v5364 = vmul.u32 %v5358, %v5360
  %v5365 = vshll.u32 %v5362, 16
  %v5366 = vshrl.u32 %v5362, 16
  %v5367 = vshll.u32 %v5363, 16
  %v5368 = vshrl.u32 %v5363, 16
  %vm5369 = vc.u32 %v5361, %v5365
  %v5370 = vsel %vm5369, 1, 0
  %v5371 = vadd.s32 %v5361, %v5365
  %v5372 = vadd.s32 %v5364, %v5370
  %vm5373 = vc.u32 %v5371, %v5367
  %v5374 = vsel %vm5373, 1, 0
  %v5375 = vadd.s32 %v5371, %v5367
  %v5376 = vadd.s32 %v5372, %v5374
  %v5377 = vadd.s32 %v5376, %v5366
  %v5378 = vadd.s32 %v5377, %v5368
  %v5379 = vmul.u32 %v5334, %v5325
  %v5380 = vadd.s32 %v5356, %v5375
  %vm5381 = vc.u32 %v5356, %v5375
  %v5382 = vadd.s32 %v5378, 1
  %v5383 = vsel %vm5381, %v5382, %v5378
  %v5384 = vadd.s32 %v5379, %v5383
  %v5385 = vadd.s32 %v5384, 536870912
  %v5386 = vshrl.u32 %v5385, 30
  %v5387 = vshll.u32 %v5386, 30
  %v5388 = vsub.s32 %v5384, %v5387
  %vm5389 = vcmp.lt.s32.totalorder %v5388, 0
  %v5390 = vsub.s32 0, %v5388
  %v5391 = vsel %vm5389, %v5390, %v5388
  %v5392 = vclz %v5391
  %v5393 = vsub.s32 %v5392, 2
  %vm5394 = vcmp.gt.s32.totalorder 0, %v5393
  %v5395 = vsel %vm5394, 0, %v5393
  %v5396 = vsub.s32 32, %v5395
  %v5397 = vshll.u32 %v5388, %v5395
  %v5398 = vshrl.u32 %v5380, %v5396
  %v5399 = vor.u32 %v5397, %v5398
  %v5400 = vsub.s32 4294967266, %v5395
  %v5401 = vadd.s32 %v5400, 127
  %v5402 = vshll.u32 %v5401, 23
  %v5403 = vor.u32 4788187, %v5402
  %v5404 = vand.u32 2147483647, %v5403
  %v5406 = vcvt.s32.f32 %v5399
  %v5407 = vmul.f32 %v5406, %v5404
  %v5408 = vxor.u32 %v5407, 2147483648
  %v5409 = vsel %vm5288, %v5408, %v5407
  %v5410 = vsub.s32 4, %v5386
  %v5411 = vsel %vm5288, %v5410, %v5386
  %v5412 = vsel %vm5287, %v68, %v5409
  %v5413 = vsel %vm5287, 0, %v5411
  %v5414 = vmul.f32 %v5412, %v5412
  %v5415 = vmul.f32 %v5414, -0.001358992
  %v5416 = vadd.f32 %v5415, 0.041655596
  %v5417 = vmul.f32 %v5414, %v5416
  %v5418 = vadd.f32 %v5417, -0.4999988
  %v5419 = vmul.f32 %v5414, %v5418
  %v5420 = vadd.f32 1.0, %v5419
  %v5421 = vmul.f32 %v5412, %v5412
  %v5422 = vmul.f32 %v5421, -0.00019511016
  %v5423 = vadd.f32 %v5422, 0.008332121
  %v5424 = vmul.f32 %v5421, %v5423
  %v5425 = vadd.f32 %v5424, -0.16666654
  %v5426 = vmul.f32 %v5421, %v5425
  %v5427 = vadd.f32 %v5426, 1.0
  %v5428 = vmul.f32 %v5427, %v5412
  %vm5429 = vweird.f32 %v68
  %v5430 = vand.u32 %v5413, 3
  %vm5431 = vcmp.lt.s32.totalorder %v5430, 2
  %vm5432 = vcmp.eq.s32.totalorder %v5430, 0
  %v5433 = vxor.u32 %v5428, 2147483648
  %v5434 = vsel %vm5432, %v5420, %v5433
  %vm5435 = vcmp.eq.s32.totalorder %v5430, 2
  %v5436 = vxor.u32 %v5420, 2147483648
  %v5437 = vsel %vm5435, %v5436, %v5428
  %v5438 = vsel %vm5431, %v5434, %v5437
  %v5439 = vsel %vm5429, nan, %v5438
  %v5440 = vand.u32 2147483647, %v73
  %vm5441 = vcmp.le.f32.partialorder %v5440, 0.7853982
  %vm5442 = vcmp.lt.s32.totalorder %v73, 0
  %v5443 = vand.u32 %v73, 2139095040
  %v5444 = vshrl.u32 %v5443, 23
  %v5445 = vsub.s32 %v5444, 127
  %v5446 = vand.u32 2147483647, %v73
  %v5447 = vand.u32 %v5446, 8388607
  %v5448 = vor.u32 %v5447, 8388608
  %v5449 = vsub.s32 0, %v5448
  %v5450 = vadd.s32 %v5445, 1
  %vm5451 = vcmp.gt.s32.totalorder %v5450, 0
  %v5452 = vsel %vm5451, %v5450, 0
  %v5453 = vshrl.u32 %v5452, 5
  %v5454 = vand.u32 %v5452, 31
  %v5455 = vsub.s32 32, %v5454
  %v5456 = vshrl.u32 683565275, %v5455
  %v5457 = vshll.u32 683565275, %v5454
  %v5458 = vshrl.u32 2475754826, %v5455
  %v5459 = vor.u32 %v5457, %v5458
  %v5460 = vshll.u32 2475754826, %v5454
  %v5461 = vshrl.u32 2131351028, %v5455
  %v5462 = vor.u32 %v5460, %v5461
  %v5463 = vshll.u32 2131351028, %v5454
  %v5464 = vshrl.u32 2102212464, %v5455
  %v5465 = vor.u32 %v5463, %v5464
  %v5466 = vshll.u32 2102212464, %v5454
  %v5467 = vshrl.u32 920167782, %v5455
  %v5468 = vor.u32 %v5466, %v5467
  %v5469 = vshll.u32 920167782, %v5454
  %v5470 = vshrl.u32 1326507024, %v5455
  %v5471 = vor.u32 %v5469, %v5470
  %vm5472 = vcmp.lt.s32.totalorder %v5453, 1
  %vm5473 = vcmp.lt.s32.totalorder %v5453, 2
  %vm5474 = vcmp.lt.s32.totalorder %v5453, 3
  %vm5475 = vcmp.lt.s32.totalorder %v5453, 4
  %v5476 = vsel %vm5472, %v5456, %v5459
  %v5477 = vsel %vm5475, %v5465, 2102212464
  %v5478 = vsel %vm5474, %v5462, %v5477
  %v5479 = vsel %vm5473, %v5476, %v5478
  %v5480 = vsel %vm5472, %v5459, %v5462
  %v5481 = vsel %vm5475, %v5468, 920167782
  %v5482 = vsel %vm5474, %v5465, %v5481
  %v5483 = vsel %vm5473, %v5480, %v5482
  %v5484 = vsel %vm5472, %v5462, %v5465
  %v5485 = vsel %vm5475, %v5471, 1326507024
  %v5486 = vsel %vm5474, %v5468, %v5485
  %v5487 = vsel %vm5473, %v5484, %v5486
  %v5488 = vshll.u32 %v5448, 8
  %v5489 = vand.u32 %v5488, 65535
  %v5490 = vshrl.u32 %v5488, 16
  %v5491 = vand.u32 %v5487, 65535
  %v5492 = vshrl.u32 %v5487, 16
  %v5493 = vmul.u32 %v5489, %v5491
  %v5494 = vmul.u32 %v5489, %v5492
  %v5495 = vmul.u32 %v5490, %v5491
  %v5496 = vmul.u32 %v5490, %v5492
  %v5497 = vshll.u32 %v5494, 16
  %v5498 = vshrl.u32 %v5494, 16
  %v5499 = vshll.u32 %v5495, 16
  %v5500 = vshrl.u32 %v5495, 16
  %vm5501 = vc.u32 %v5493, %v5497
  %v5502 = vsel %vm5501, 1, 0
  %v5503 = vadd.s32 %v5493, %v5497
  %v5504 = vadd.s32 %v5496, %v5502
  %vm5505 = vc.u32 %v5503, %v5499
  %v5506 = vsel %vm5505, 1, 0
  %v5507 = vadd.s32 %v5503, %v5499
  %v5508 = vadd.s32 %v5504, %v5506
  %v5509 = vadd.s32 %v5508, %v5498
  %v5510 = vadd.s32 %v5509, %v5500
  %v5511 = vand.u32 %v5488, 65535
  %v5512 = vshrl.u32 %v5488, 16
  %v5513 = vand.u32 %v5483, 65535
  %v5514 = vshrl.u32 %v5483, 16
  %v5515 = vmul.u32 %v5511, %v5513
  %v5516 = vmul.u32 %v5511, %v5514
  %v5517 = vmul.u32 %v5512, %v5513
  %v5518 = vmul.u32 %v5512, %v5514
  %v5519 = vshll.u32 %v5516, 16
  %v5520 = vshrl.u32 %v5516, 16
  %v5521 = vshll.u32 %v5517, 16
  %v5522 = vshrl.u32 %v5517, 16
  %vm5523 = vc.u32 %v5515, %v5519
  %v5524 = vsel %vm5523, 1, 0
  %v5525 = vadd.s32 %v5515, %v5519
  %v5526 = vadd.s32 %v5518, %v5524
  %vm5527 = vc.u32 %v5525, %v5521
  %v5528 = vsel %vm5527, 1, 0
  %v5529 = vadd.s32 %v5525, %v5521
  %v5530 = vadd.s32 %v5526, %v5528
  %v5531 = vadd.s32 %v5530, %v5520
  %v5532 = vadd.s32 %v5531, %v5522
  %v5533 = vmul.u32 %v5488, %v5479
  %v5534 = vadd.s32 %v5510, %v5529
  %vm5535 = vc.u32 %v5510, %v5529
  %v5536 = vadd.s32 %v5532, 1
  %v5537 = vsel %vm5535, %v5536, %v5532
  %v5538 = vadd.s32 %v5533, %v5537
  %v5539 = vadd.s32 %v5538, 536870912
  %v5540 = vshrl.u32 %v5539, 30
  %v5541 = vshll.u32 %v5540, 30
  %v5542 = vsub.s32 %v5538, %v5541
  %vm5543 = vcmp.lt.s32.totalorder %v5542, 0
  %v5544 = vsub.s32 0, %v5542
  %v5545 = vsel %vm5543, %v5544, %v5542
  %v5546 = vclz %v5545
  %v5547 = vsub.s32 %v5546, 2
  %vm5548 = vcmp.gt.s32.totalorder 0, %v5547
  %v5549 = vsel %vm5548, 0, %v5547
  %v5550 = vsub.s32 32, %v5549
  %v5551 = vshll.u32 %v5542, %v5549
  %v5552 = vshrl.u32 %v5534, %v5550
  %v5553 = vor.u32 %v5551, %v5552
  %v5554 = vsub.s32 4294967266, %v5549
  %v5555 = vadd.s32 %v5554, 127
  %v5556 = vshll.u32 %v5555, 23
  %v5557 = vor.u32 4788187, %v5556
  %v5558 = vand.u32 2147483647, %v5557
  %v5560 = vcvt.s32.f32 %v5553
  %v5561 = vmul.f32 %v5560, %v5558
  %v5562 = vxor.u32 %v5561, 2147483648
  %v5563 = vsel %vm5442, %v5562, %v5561
  %v5564 = vsub.s32 4, %v5540
  %v5565 = vsel %vm5442, %v5564, %v5540
  %v5566 = vsel %vm5441, %v73, %v5563
  %v5567 = vsel %vm5441, 0, %v5565
  %v5568 = vmul.f32 %v5566, %v5566
  %v5569 = vmul.f32 %v5568, -0.001358992
  %v5570 = vadd.f32 %v5569, 0.041655596
  %v5571 = vmul.f32 %v5568, %v5570
  %v5572 = vadd.f32 %v5571, -0.4999988
  %v5573 = vmul.f32 %v5568, %v5572
  %v5574 = vadd.f32 1.0, %v5573
  %v5575 = vmul.f32 %v5566, %v5566
  %v5576 = vmul.f32 %v5575, -0.00019511016
  %v5577 = vadd.f32 %v5576, 0.008332121
  %v5578 = vmul.f32 %v5575, %v5577
  %v5579 = vadd.f32 %v5578, -0.16666654
  %v5580 = vmul.f32 %v5575, %v5579
  %v5581 = vadd.f32 %v5580, 1.0
  %v5582 = vmul.f32 %v5581, %v5566
  %vm5583 = vweird.f32 %v73
  %v5584 = vand.u32 %v5567, 3
  %vm5585 = vcmp.lt.s32.totalorder %v5584, 2
  %vm5586 = vcmp.eq.s32.totalorder %v5584, 0
  %v5587 = vxor.u32 %v5582, 2147483648
  %v5588 = vsel %vm5586, %v5574, %v5587
  %vm5589 = vcmp.eq.s32.totalorder %v5584, 2
  %v5590 = vxor.u32 %v5574, 2147483648
  %v5591 = vsel %vm5589, %v5590, %v5582
  %v5592 = vsel %vm5585, %v5588, %v5591
  %v5593 = vsel %vm5583, nan, %v5592
  %v5594 = vand.u32 2147483647, %v78
  %vm5595 = vcmp.le.f32.partialorder %v5594, 0.7853982
  %vm5596 = vcmp.lt.s32.totalorder %v78, 0
  %v5597 = vand.u32 %v78, 2139095040
  %v5598 = vshrl.u32 %v5597, 23
  %v5599 = vsub.s32 %v5598, 127
  %v5600 = vand.u32 2147483647, %v78
  %v5601 = vand.u32 %v5600, 8388607
  %v5602 = vor.u32 %v5601, 8388608
  %v5603 = vsub.s32 0, %v5602
  %v5604 = vadd.s32 %v5599, 1
  %vm5605 = vcmp.gt.s32.totalorder %v5604, 0
  %v5606 = vsel %vm5605, %v5604, 0
  %v5607 = vshrl.u32 %v5606, 5
  %v5608 = vand.u32 %v5606, 31
  %v5609 = vsub.s32 32, %v5608
  %v5610 = vshrl.u32 683565275, %v5609
  %v5611 = vshll.u32 683565275, %v5608
  %v5612 = vshrl.u32 2475754826, %v5609
  %v5613 = vor.u32 %v5611, %v5612
  %v5614 = vshll.u32 2475754826, %v5608
  %v5615 = vshrl.u32 2131351028, %v5609
  %v5616 = vor.u32 %v5614, %v5615
  %v5617 = vshll.u32 2131351028, %v5608
  %v5618 = vshrl.u32 2102212464, %v5609
  %v5619 = vor.u32 %v5617, %v5618
  %v5620 = vshll.u32 2102212464, %v5608
  %v5621 = vshrl.u32 920167782, %v5609
  %v5622 = vor.u32 %v5620, %v5621
  %v5623 = vshll.u32 920167782, %v5608
  %v5624 = vshrl.u32 1326507024, %v5609
  %v5625 = vor.u32 %v5623, %v5624
  %vm5626 = vcmp.lt.s32.totalorder %v5607, 1
  %vm5627 = vcmp.lt.s32.totalorder %v5607, 2
  %vm5628 = vcmp.lt.s32.totalorder %v5607, 3
  %vm5629 = vcmp.lt.s32.totalorder %v5607, 4
  %v5630 = vsel %vm5626, %v5610, %v5613
  %v5631 = vsel %vm5629, %v5619, 2102212464
  %v5632 = vsel %vm5628, %v5616, %v5631
  %v5633 = vsel %vm5627, %v5630, %v5632
  %v5634 = vsel %vm5626, %v5613, %v5616
  %v5635 = vsel %vm5629, %v5622, 920167782
  %v5636 = vsel %vm5628, %v5619, %v5635
  %v5637 = vsel %vm5627, %v5634, %v5636
  %v5638 = vsel %vm5626, %v5616, %v5619
  %v5639 = vsel %vm5629, %v5625, 1326507024
  %v5640 = vsel %vm5628, %v5622, %v5639
  %v5641 = vsel %vm5627, %v5638, %v5640
  %v5642 = vshll.u32 %v5602, 8
  %v5643 = vand.u32 %v5642, 65535
  %v5644 = vshrl.u32 %v5642, 16
  %v5645 = vand.u32 %v5641, 65535
  %v5646 = vshrl.u32 %v5641, 16
  %v5647 = vmul.u32 %v5643, %v5645
  %v5648 = vmul.u32 %v5643, %v5646
  %v5649 = vmul.u32 %v5644, %v5645
  %v5650 = vmul.u32 %v5644, %v5646
  %v5651 = vshll.u32 %v5648, 16
  %v5652 = vshrl.u32 %v5648, 16
  %v5653 = vshll.u32 %v5649, 16
  %v5654 = vshrl.u32 %v5649, 16
  %vm5655 = vc.u32 %v5647, %v5651
  %v5656 = vsel %vm5655, 1, 0
  %v5657 = vadd.s32 %v5647, %v5651
  %v5658 = vadd.s32 %v5650, %v5656
  %vm5659 = vc.u32 %v5657, %v5653
  %v5660 = vsel %vm5659, 1, 0
  %v5661 = vadd.s32 %v5657, %v5653
  %v5662 = vadd.s32 %v5658, %v5660
  %v5663 = vadd.s32 %v5662, %v5652
  %v5664 = vadd.s32 %v5663, %v5654
  %v5665 = vand.u32 %v5642, 65535
  %v5666 = vshrl.u32 %v5642, 16
  %v5667 = vand.u32 %v5637, 65535
  %v5668 = vshrl.u32 %v5637, 16
  %v5669 = vmul.u32 %v5665, %v5667
  %v5670 = vmul.u32 %v5665, %v5668
  %v5671 = vmul.u32 %v5666, %v5667
  %v5672 = vmul.u32 %v5666, %v5668
  %v5673 = vshll.u32 %v5670, 16
  %v5674 = vshrl.u32 %v5670, 16
  %v5675 = vshll.u32 %v5671, 16
  %v5676 = vshrl.u32 %v5671, 16
  %vm5677 = vc.u32 %v5669, %v5673
  %v5678 = vsel %vm5677, 1, 0
  %v5679 = vadd.s32 %v5669, %v5673
  %v5680 = vadd.s32 %v5672, %v5678
  %vm5681 = vc.u32 %v5679, %v5675
  %v5682 = vsel %vm5681, 1, 0
  %v5683 = vadd.s32 %v5679, %v5675
  %v5684 = vadd.s32 %v5680, %v5682
  %v5685 = vadd.s32 %v5684, %v5674
  %v5686 = vadd.s32 %v5685, %v5676
  %v5687 = vmul.u32 %v5642, %v5633
  %v5688 = vadd.s32 %v5664, %v5683
  %vm5689 = vc.u32 %v5664, %v5683
  %v5690 = vadd.s32 %v5686, 1
  %v5691 = vsel %vm5689, %v5690, %v5686
  %v5692 = vadd.s32 %v5687, %v5691
  %v5693 = vadd.s32 %v5692, 536870912
  %v5694 = vshrl.u32 %v5693, 30
  %v5695 = vshll.u32 %v5694, 30
  %v5696 = vsub.s32 %v5692, %v5695
  %vm5697 = vcmp.lt.s32.totalorder %v5696, 0
  %v5698 = vsub.s32 0, %v5696
  %v5699 = vsel %vm5697, %v5698, %v5696
  %v5700 = vclz %v5699
  %v5701 = vsub.s32 %v5700, 2
  %vm5702 = vcmp.gt.s32.totalorder 0, %v5701
  %v5703 = vsel %vm5702, 0, %v5701
  %v5704 = vsub.s32 32, %v5703
  %v5705 = vshll.u32 %v5696, %v5703
  %v5706 = vshrl.u32 %v5688, %v5704
  %v5707 = vor.u32 %v5705, %v5706
  %v5708 = vsub.s32 4294967266, %v5703
  %v5709 = vadd.s32 %v5708, 127
  %v5710 = vshll.u32 %v5709, 23
  %v5711 = vor.u32 4788187, %v5710
  %v5712 = vand.u32 2147483647, %v5711
  %v5714 = vcvt.s32.f32 %v5707
  %v5715 = vmul.f32 %v5714, %v5712
  %v5716 = vxor.u32 %v5715, 2147483648
  %v5717 = vsel %vm5596, %v5716, %v5715
  %v5718 = vsub.s32 4, %v5694
  %v5719 = vsel %vm5596, %v5718, %v5694
  %v5720 = vsel %vm5595, %v78, %v5717
  %v5721 = vsel %vm5595, 0, %v5719
  %v5722 = vmul.f32 %v5720, %v5720
  %v5723 = vmul.f32 %v5722, -0.001358992
  %v5724 = vadd.f32 %v5723, 0.041655596
  %v5725 = vmul.f32 %v5722, %v5724
  %v5726 = vadd.f32 %v5725, -0.4999988
  %v5727 = vmul.f32 %v5722, %v5726
  %v5728 = vadd.f32 1.0, %v5727
  %v5729 = vmul.f32 %v5720, %v5720
  %v5730 = vmul.f32 %v5729, -0.00019511016
  %v5731 = vadd.f32 %v5730, 0.008332121
  %v5732 = vmul.f32 %v5729, %v5731
  %v5733 = vadd.f32 %v5732, -0.16666654
  %v5734 = vmul.f32 %v5729, %v5733
  %v5735 = vadd.f32 %v5734, 1.0
  %v5736 = vmul.f32 %v5735, %v5720
  %vm5737 = vweird.f32 %v78
  %v5738 = vand.u32 %v5721, 3
  %vm5739 = vcmp.lt.s32.totalorder %v5738, 2
  %vm5740 = vcmp.eq.s32.totalorder %v5738, 0
  %v5741 = vxor.u32 %v5736, 2147483648
  %v5742 = vsel %vm5740, %v5728, %v5741
  %vm5743 = vcmp.eq.s32.totalorder %v5738, 2
  %v5744 = vxor.u32 %v5728, 2147483648
  %v5745 = vsel %vm5743, %v5744, %v5736
  %v5746 = vsel %vm5739, %v5742, %v5745
  %v5747 = vsel %vm5737, nan, %v5746
  %v5748 = vand.u32 2147483647, %v83
  %vm5749 = vcmp.le.f32.partialorder %v5748, 0.7853982
  %vm5750 = vcmp.lt.s32.totalorder %v83, 0
  %v5751 = vand.u32 %v83, 2139095040
  %v5752 = vshrl.u32 %v5751, 23
  %v5753 = vsub.s32 %v5752, 127
  %v5754 = vand.u32 2147483647, %v83
  %v5755 = vand.u32 %v5754, 8388607
  %v5756 = vor.u32 %v5755, 8388608
  %v5757 = vsub.s32 0, %v5756
  %v5758 = vadd.s32 %v5753, 1
  %vm5759 = vcmp.gt.s32.totalorder %v5758, 0
  %v5760 = vsel %vm5759, %v5758, 0
  %v5761 = vshrl.u32 %v5760, 5
  %v5762 = vand.u32 %v5760, 31
  %v5763 = vsub.s32 32, %v5762
  %v5764 = vshrl.u32 683565275, %v5763
  %v5765 = vshll.u32 683565275, %v5762
  %v5766 = vshrl.u32 2475754826, %v5763
  %v5767 = vor.u32 %v5765, %v5766
  %v5768 = vshll.u32 2475754826, %v5762
  %v5769 = vshrl.u32 2131351028, %v5763
  %v5770 = vor.u32 %v5768, %v5769
  %v5771 = vshll.u32 2131351028, %v5762
  %v5772 = vshrl.u32 2102212464, %v5763
  %v5773 = vor.u32 %v5771, %v5772
  %v5774 = vshll.u32 2102212464, %v5762
  %v5775 = vshrl.u32 920167782, %v5763
  %v5776 = vor.u32 %v5774, %v5775
  %v5777 = vshll.u32 920167782, %v5762
  %v5778 = vshrl.u32 1326507024, %v5763
  %v5779 = vor.u32 %v5777, %v5778
  %vm5780 = vcmp.lt.s32.totalorder %v5761, 1
  %vm5781 = vcmp.lt.s32.totalorder %v5761, 2
  %vm5782 = vcmp.lt.s32.totalorder %v5761, 3
  %vm5783 = vcmp.lt.s32.totalorder %v5761, 4
  %v5784 = vsel %vm5780, %v5764, %v5767
  %v5785 = vsel %vm5783, %v5773, 2102212464
  %v5786 = vsel %vm5782, %v5770, %v5785
  %v5787 = vsel %vm5781, %v5784, %v5786
  %v5788 = vsel %vm5780, %v5767, %v5770
  %v5789 = vsel %vm5783, %v5776, 920167782
  %v5790 = vsel %vm5782, %v5773, %v5789
  %v5791 = vsel %vm5781, %v5788, %v5790
  %v5792 = vsel %vm5780, %v5770, %v5773
  %v5793 = vsel %vm5783, %v5779, 1326507024
  %v5794 = vsel %vm5782, %v5776, %v5793
  %v5795 = vsel %vm5781, %v5792, %v5794
  %v5796 = vshll.u32 %v5756, 8
  %v5797 = vand.u32 %v5796, 65535
  %v5798 = vshrl.u32 %v5796, 16
  %v5799 = vand.u32 %v5795, 65535
  %v5800 = vshrl.u32 %v5795, 16
  %v5801 = vmul.u32 %v5797, %v5799
  %v5802 = vmul.u32 %v5797, %v5800
  %v5803 = vmul.u32 %v5798, %v5799
  %v5804 = vmul.u32 %v5798, %v5800
  %v5805 = vshll.u32 %v5802, 16
  %v5806 = vshrl.u32 %v5802, 16
  %v5807 = vshll.u32 %v5803, 16
  %v5808 = vshrl.u32 %v5803, 16
  %vm5809 = vc.u32 %v5801, %v5805
  %v5810 = vsel %vm5809, 1, 0
  %v5811 = vadd.s32 %v5801, %v5805
  %v5812 = vadd.s32 %v5804, %v5810
  %vm5813 = vc.u32 %v5811, %v5807
  %v5814 = vsel %vm5813, 1, 0
  %v5815 = vadd.s32 %v5811, %v5807
  %v5816 = vadd.s32 %v5812, %v5814
  %v5817 = vadd.s32 %v5816, %v5806
  %v5818 = vadd.s32 %v5817, %v5808
  %v5819 = vand.u32 %v5796, 65535
  %v5820 = vshrl.u32 %v5796, 16
  %v5821 = vand.u32 %v5791, 65535
  %v5822 = vshrl.u32 %v5791, 16
  %v5823 = vmul.u32 %v5819, %v5821
  %v5824 = vmul.u32 %v5819, %v5822
  %v5825 = vmul.u32 %v5820, %v5821
  %v5826 = vmul.u32 %v5820, %v5822
  %v5827 = vshll.u32 %v5824, 16
  %v5828 = vshrl.u32 %v5824, 16
  %v5829 = vshll.u32 %v5825, 16
  %v5830 = vshrl.u32 %v5825, 16
  %vm5831 = vc.u32 %v5823, %v5827
  %v5832 = vsel %vm5831, 1, 0
  %v5833 = vadd.s32 %v5823, %v5827
  %v5834 = vadd.s32 %v5826, %v5832
  %vm5835 = vc.u32 %v5833, %v5829
  %v5836 = vsel %vm5835, 1, 0
  %v5837 = vadd.s32 %v5833, %v5829
  %v5838 = vadd.s32 %v5834, %v5836
  %v5839 = vadd.s32 %v5838, %v5828
  %v5840 = vadd.s32 %v5839, %v5830
  %v5841 = vmul.u32 %v5796, %v5787
  %v5842 = vadd.s32 %v5818, %v5837
  %vm5843 = vc.u32 %v5818, %v5837
  %v5844 = vadd.s32 %v5840, 1
  %v5845 = vsel %vm5843, %v5844, %v5840
  %v5846 = vadd.s32 %v5841, %v5845
  %v5847 = vadd.s32 %v5846, 536870912
  %v5848 = vshrl.u32 %v5847, 30
  %v5849 = vshll.u32 %v5848, 30
  %v5850 = vsub.s32 %v5846, %v5849
  %vm5851 = vcmp.lt.s32.totalorder %v5850, 0
  %v5852 = vsub.s32 0, %v5850
  %v5853 = vsel %vm5851, %v5852, %v5850
  %v5854 = vclz %v5853
  %v5855 = vsub.s32 %v5854, 2
  %vm5856 = vcmp.gt.s32.totalorder 0, %v5855
  %v5857 = vsel %vm5856, 0, %v5855
  %v5858 = vsub.s32 32, %v5857
  %v5859 = vshll.u32 %v5850, %v5857
  %v5860 = vshrl.u32 %v5842, %v5858
  %v5861 = vor.u32 %v5859, %v5860
  %v5862 = vsub.s32 4294967266, %v5857
  %v5863 = vadd.s32 %v5862, 127
  %v5864 = vshll.u32 %v5863, 23
  %v5865 = vor.u32 4788187, %v5864
  %v5866 = vand.u32 2147483647, %v5865
  %v5868 = vcvt.s32.f32 %v5861
  %v5869 = vmul.f32 %v5868, %v5866
  %v5870 = vxor.u32 %v5869, 2147483648
  %v5871 = vsel %vm5750, %v5870, %v5869
  %v5872 = vsub.s32 4, %v5848
  %v5873 = vsel %vm5750, %v5872, %v5848
  %v5874 = vsel %vm5749, %v83, %v5871
  %v5875 = vsel %vm5749, 0, %v5873
  %v5876 = vmul.f32 %v5874, %v5874
  %v5877 = vmul.f32 %v5876, -0.001358992
  %v5878 = vadd.f32 %v5877, 0.041655596
  %v5879 = vmul.f32 %v5876, %v5878
  %v5880 = vadd.f32 %v5879, -0.4999988
  %v5881 = vmul.f32 %v5876, %v5880
  %v5882 = vadd.f32 1.0, %v5881
  %v5883 = vmul.f32 %v5874, %v5874
  %v5884 = vmul.f32 %v5883, -0.00019511016
  %v5885 = vadd.f32 %v5884, 0.008332121
  %v5886 = vmul.f32 %v5883, %v5885
  %v5887 = vadd.f32 %v5886, -0.16666654
  %v5888 = vmul.f32 %v5883, %v5887
  %v5889 = vadd.f32 %v5888, 1.0
  %v5890 = vmul.f32 %v5889, %v5874
  %vm5891 = vweird.f32 %v83
  %v5892 = vand.u32 %v5875, 3
  %vm5893 = vcmp.lt.s32.totalorder %v5892, 2
  %vm5894 = vcmp.eq.s32.totalorder %v5892, 0
  %v5895 = vxor.u32 %v5890, 2147483648
  %v5896 = vsel %vm5894, %v5882, %v5895
  %vm5897 = vcmp.eq.s32.totalorder %v5892, 2
  %v5898 = vxor.u32 %v5882, 2147483648
  %v5899 = vsel %vm5897, %v5898, %v5890
  %v5900 = vsel %vm5893, %v5896, %v5899
  %v5901 = vsel %vm5891, nan, %v5900
  %v5902 = vand.u32 2147483647, %v88
  %vm5903 = vcmp.le.f32.partialorder %v5902, 0.7853982
  %vm5904 = vcmp.lt.s32.totalorder %v88, 0
  %v5905 = vand.u32 %v88, 2139095040
  %v5906 = vshrl.u32 %v5905, 23
  %v5907 = vsub.s32 %v5906, 127
  %v5908 = vand.u32 2147483647, %v88
  %v5909 = vand.u32 %v5908, 8388607
  %v5910 = vor.u32 %v5909, 8388608
  %v5911 = vsub.s32 0, %v5910
  %v5912 = vadd.s32 %v5907, 1
  %vm5913 = vcmp.gt.s32.totalorder %v5912, 0
  %v5914 = vsel %vm5913, %v5912, 0
  %v5915 = vshrl.u32 %v5914, 5
  %v5916 = vand.u32 %v5914, 31
  %v5917 = vsub.s32 32, %v5916
  %v5918 = vshrl.u32 683565275, %v5917
  %v5919 = vshll.u32 683565275, %v5916
  %v5920 = vshrl.u32 2475754826, %v5917
  %v5921 = vor.u32 %v5919, %v5920
  %v5922 = vshll.u32 2475754826, %v5916
  %v5923 = vshrl.u32 2131351028, %v5917
  %v5924 = vor.u32 %v5922, %v5923
  %v5925 = vshll.u32 2131351028, %v5916
  %v5926 = vshrl.u32 2102212464, %v5917
  %v5927 = vor.u32 %v5925, %v5926
  %v5928 = vshll.u32 2102212464, %v5916
  %v5929 = vshrl.u32 920167782, %v5917
  %v5930 = vor.u32 %v5928, %v5929
  %v5931 = vshll.u32 920167782, %v5916
  %v5932 = vshrl.u32 1326507024, %v5917
  %v5933 = vor.u32 %v5931, %v5932
  %vm5934 = vcmp.lt.s32.totalorder %v5915, 1
  %vm5935 = vcmp.lt.s32.totalorder %v5915, 2
  %vm5936 = vcmp.lt.s32.totalorder %v5915, 3
  %vm5937 = vcmp.lt.s32.totalorder %v5915, 4
  %v5938 = vsel %vm5934, %v5918, %v5921
  %v5939 = vsel %vm5937, %v5927, 2102212464
  %v5940 = vsel %vm5936, %v5924, %v5939
  %v5941 = vsel %vm5935, %v5938, %v5940
  %v5942 = vsel %vm5934, %v5921, %v5924
  %v5943 = vsel %vm5937, %v5930, 920167782
  %v5944 = vsel %vm5936, %v5927, %v5943
  %v5945 = vsel %vm5935, %v5942, %v5944
  %v5946 = vsel %vm5934, %v5924, %v5927
  %v5947 = vsel %vm5937, %v5933, 1326507024
  %v5948 = vsel %vm5936, %v5930, %v5947
  %v5949 = vsel %vm5935, %v5946, %v5948
  %v5950 = vshll.u32 %v5910, 8
  %v5951 = vand.u32 %v5950, 65535
  %v5952 = vshrl.u32 %v5950, 16
  %v5953 = vand.u32 %v5949, 65535
  %v5954 = vshrl.u32 %v5949, 16
  %v5955 = vmul.u32 %v5951, %v5953
  %v5956 = vmul.u32 %v5951, %v5954
  %v5957 = vmul.u32 %v5952, %v5953
  %v5958 = vmul.u32 %v5952, %v5954
  %v5959 = vshll.u32 %v5956, 16
  %v5960 = vshrl.u32 %v5956, 16
  %v5961 = vshll.u32 %v5957, 16
  %v5962 = vshrl.u32 %v5957, 16
  %vm5963 = vc.u32 %v5955, %v5959
  %v5964 = vsel %vm5963, 1, 0
  %v5965 = vadd.s32 %v5955, %v5959
  %v5966 = vadd.s32 %v5958, %v5964
  %vm5967 = vc.u32 %v5965, %v5961
  %v5968 = vsel %vm5967, 1, 0
  %v5969 = vadd.s32 %v5965, %v5961
  %v5970 = vadd.s32 %v5966, %v5968
  %v5971 = vadd.s32 %v5970, %v5960
  %v5972 = vadd.s32 %v5971, %v5962
  %v5973 = vand.u32 %v5950, 65535
  %v5974 = vshrl.u32 %v5950, 16
  %v5975 = vand.u32 %v5945, 65535
  %v5976 = vshrl.u32 %v5945, 16
  %v5977 = vmul.u32 %v5973, %v5975
  %v5978 = vmul.u32 %v5973, %v5976
  %v5979 = vmul.u32 %v5974, %v5975
  %v5980 = vmul.u32 %v5974, %v5976
  %v5981 = vshll.u32 %v5978, 16
  %v5982 = vshrl.u32 %v5978, 16
  %v5983 = vshll.u32 %v5979, 16
  %v5984 = vshrl.u32 %v5979, 16
  %vm5985 = vc.u32 %v5977, %v5981
  %v5986 = vsel %vm5985, 1, 0
  %v5987 = vadd.s32 %v5977, %v5981
  %v5988 = vadd.s32 %v5980, %v5986
  %vm5989 = vc.u32 %v5987, %v5983
  %v5990 = vsel %vm5989, 1, 0
  %v5991 = vadd.s32 %v5987, %v5983
  %v5992 = vadd.s32 %v5988, %v5990
  %v5993 = vadd.s32 %v5992, %v5982
  %v5994 = vadd.s32 %v5993, %v5984
  %v5995 = vmul.u32 %v5950, %v5941
  %v5996 = vadd.s32 %v5972, %v5991
  %vm5997 = vc.u32 %v5972, %v5991
  %v5998 = vadd.s32 %v5994, 1
  %v5999 = vsel %vm5997, %v5998, %v5994
  %v6000 = vadd.s32 %v5995, %v5999
  %v6001 = vadd.s32 %v6000, 536870912
  %v6002 = vshrl.u32 %v6001, 30
  %v6003 = vshll.u32 %v6002, 30
  %v6004 = vsub.s32 %v6000, %v6003
  %vm6005 = vcmp.lt.s32.totalorder %v6004, 0
  %v6006 = vsub.s32 0, %v6004
  %v6007 = vsel %vm6005, %v6006, %v6004
  %v6008 = vclz %v6007
  %v6009 = vsub.s32 %v6008, 2
  %vm6010 = vcmp.gt.s32.totalorder 0, %v6009
  %v6011 = vsel %vm6010, 0, %v6009
  %v6012 = vsub.s32 32, %v6011
  %v6013 = vshll.u32 %v6004, %v6011
  %v6014 = vshrl.u32 %v5996, %v6012
  %v6015 = vor.u32 %v6013, %v6014
  %v6016 = vsub.s32 4294967266, %v6011
  %v6017 = vadd.s32 %v6016, 127
  %v6018 = vshll.u32 %v6017, 23
  %v6019 = vor.u32 4788187, %v6018
  %v6020 = vand.u32 2147483647, %v6019
  %v6022 = vcvt.s32.f32 %v6015
  %v6023 = vmul.f32 %v6022, %v6020
  %v6024 = vxor.u32 %v6023, 2147483648
  %v6025 = vsel %vm5904, %v6024, %v6023
  %v6026 = vsub.s32 4, %v6002
  %v6027 = vsel %vm5904, %v6026, %v6002
  %v6028 = vsel %vm5903, %v88, %v6025
  %v6029 = vsel %vm5903, 0, %v6027
  %v6030 = vmul.f32 %v6028, %v6028
  %v6031 = vmul.f32 %v6030, -0.001358992
  %v6032 = vadd.f32 %v6031, 0.041655596
  %v6033 = vmul.f32 %v6030, %v6032
  %v6034 = vadd.f32 %v6033, -0.4999988
  %v6035 = vmul.f32 %v6030, %v6034
  %v6036 = vadd.f32 1.0, %v6035
  %v6037 = vmul.f32 %v6028, %v6028
  %v6038 = vmul.f32 %v6037, -0.00019511016
  %v6039 = vadd.f32 %v6038, 0.008332121
  %v6040 = vmul.f32 %v6037, %v6039
  %v6041 = vadd.f32 %v6040, -0.16666654
  %v6042 = vmul.f32 %v6037, %v6041
  %v6043 = vadd.f32 %v6042, 1.0
  %v6044 = vmul.f32 %v6043, %v6028
  %vm6045 = vweird.f32 %v88
  %v6046 = vand.u32 %v6029, 3
  %vm6047 = vcmp.lt.s32.totalorder %v6046, 2
  %vm6048 = vcmp.eq.s32.totalorder %v6046, 0
  %v6049 = vxor.u32 %v6044, 2147483648
  %v6050 = vsel %vm6048, %v6036, %v6049
  %vm6051 = vcmp.eq.s32.totalorder %v6046, 2
  %v6052 = vxor.u32 %v6036, 2147483648
  %v6053 = vsel %vm6051, %v6052, %v6044
  %v6054 = vsel %vm6047, %v6050, %v6053
  %v6055 = vsel %vm6045, nan, %v6054
  %v6056 = vand.u32 2147483647, %v93
  %vm6057 = vcmp.le.f32.partialorder %v6056, 0.7853982
  %vm6058 = vcmp.lt.s32.totalorder %v93, 0
  %v6059 = vand.u32 %v93, 2139095040
  %v6060 = vshrl.u32 %v6059, 23
  %v6061 = vsub.s32 %v6060, 127
  %v6062 = vand.u32 2147483647, %v93
  %v6063 = vand.u32 %v6062, 8388607
  %v6064 = vor.u32 %v6063, 8388608
  %v6065 = vsub.s32 0, %v6064
  %v6066 = vadd.s32 %v6061, 1
  %vm6067 = vcmp.gt.s32.totalorder %v6066, 0
  %v6068 = vsel %vm6067, %v6066, 0
  %v6069 = vshrl.u32 %v6068, 5
  %v6070 = vand.u32 %v6068, 31
  %v6071 = vsub.s32 32, %v6070
  %v6072 = vshrl.u32 683565275, %v6071
  %v6073 = vshll.u32 683565275, %v6070
  %v6074 = vshrl.u32 2475754826, %v6071
  %v6075 = vor.u32 %v6073, %v6074
  %v6076 = vshll.u32 2475754826, %v6070
  %v6077 = vshrl.u32 2131351028, %v6071
  %v6078 = vor.u32 %v6076, %v6077
  %v6079 = vshll.u32 2131351028, %v6070
  %v6080 = vshrl.u32 2102212464, %v6071
  %v6081 = vor.u32 %v6079, %v6080
  %v6082 = vshll.u32 2102212464, %v6070
  %v6083 = vshrl.u32 920167782, %v6071
  %v6084 = vor.u32 %v6082, %v6083
  %v6085 = vshll.u32 920167782, %v6070
  %v6086 = vshrl.u32 1326507024, %v6071
  %v6087 = vor.u32 %v6085, %v6086
  %vm6088 = vcmp.lt.s32.totalorder %v6069, 1
  %vm6089 = vcmp.lt.s32.totalorder %v6069, 2
  %vm6090 = vcmp.lt.s32.totalorder %v6069, 3
  %vm6091 = vcmp.lt.s32.totalorder %v6069, 4
  %v6092 = vsel %vm6088, %v6072, %v6075
  %v6093 = vsel %vm6091, %v6081, 2102212464
  %v6094 = vsel %vm6090, %v6078, %v6093
  %v6095 = vsel %vm6089, %v6092, %v6094
  %v6096 = vsel %vm6088, %v6075, %v6078
  %v6097 = vsel %vm6091, %v6084, 920167782
  %v6098 = vsel %vm6090, %v6081, %v6097
  %v6099 = vsel %vm6089, %v6096, %v6098
  %v6100 = vsel %vm6088, %v6078, %v6081
  %v6101 = vsel %vm6091, %v6087, 1326507024
  %v6102 = vsel %vm6090, %v6084, %v6101
  %v6103 = vsel %vm6089, %v6100, %v6102
  %v6104 = vshll.u32 %v6064, 8
  %v6105 = vand.u32 %v6104, 65535
  %v6106 = vshrl.u32 %v6104, 16
  %v6107 = vand.u32 %v6103, 65535
  %v6108 = vshrl.u32 %v6103, 16
  %v6109 = vmul.u32 %v6105, %v6107
  %v6110 = vmul.u32 %v6105, %v6108
  %v6111 = vmul.u32 %v6106, %v6107
  %v6112 = vmul.u32 %v6106, %v6108
  %v6113 = vshll.u32 %v6110, 16
  %v6114 = vshrl.u32 %v6110, 16
  %v6115 = vshll.u32 %v6111, 16
  %v6116 = vshrl.u32 %v6111, 16
  %vm6117 = vc.u32 %v6109, %v6113
  %v6118 = vsel %vm6117, 1, 0
  %v6119 = vadd.s32 %v6109, %v6113
  %v6120 = vadd.s32 %v6112, %v6118
  %vm6121 = vc.u32 %v6119, %v6115
  %v6122 = vsel %vm6121, 1, 0
  %v6123 = vadd.s32 %v6119, %v6115
  %v6124 = vadd.s32 %v6120, %v6122
  %v6125 = vadd.s32 %v6124, %v6114
  %v6126 = vadd.s32 %v6125, %v6116
  %v6127 = vand.u32 %v6104, 65535
  %v6128 = vshrl.u32 %v6104, 16
  %v6129 = vand.u32 %v6099, 65535
  %v6130 = vshrl.u32 %v6099, 16
  %v6131 = vmul.u32 %v6127, %v6129
  %v6132 = vmul.u32 %v6127, %v6130
  %v6133 = vmul.u32 %v6128, %v6129
  %v6134 = vmul.u32 %v6128, %v6130
  %v6135 = vshll.u32 %v6132, 16
  %v6136 = vshrl.u32 %v6132, 16
  %v6137 = vshll.u32 %v6133, 16
  %v6138 = vshrl.u32 %v6133, 16
  %vm6139 = vc.u32 %v6131, %v6135
  %v6140 = vsel %vm6139, 1, 0
  %v6141 = vadd.s32 %v6131, %v6135
  %v6142 = vadd.s32 %v6134, %v6140
  %vm6143 = vc.u32 %v6141, %v6137
  %v6144 = vsel %vm6143, 1, 0
  %v6145 = vadd.s32 %v6141, %v6137
  %v6146 = vadd.s32 %v6142, %v6144
  %v6147 = vadd.s32 %v6146, %v6136
  %v6148 = vadd.s32 %v6147, %v6138
  %v6149 = vmul.u32 %v6104, %v6095
  %v6150 = vadd.s32 %v6126, %v6145
  %vm6151 = vc.u32 %v6126, %v6145
  %v6152 = vadd.s32 %v6148, 1
  %v6153 = vsel %vm6151, %v6152, %v6148
  %v6154 = vadd.s32 %v6149, %v6153
  %v6155 = vadd.s32 %v6154, 536870912
  %v6156 = vshrl.u32 %v6155, 30
  %v6157 = vshll.u32 %v6156, 30
  %v6158 = vsub.s32 %v6154, %v6157
  %vm6159 = vcmp.lt.s32.totalorder %v6158, 0
  %v6160 = vsub.s32 0, %v6158
  %v6161 = vsel %vm6159, %v6160, %v6158
  %v6162 = vclz %v6161
  %v6163 = vsub.s32 %v6162, 2
  %vm6164 = vcmp.gt.s32.totalorder 0, %v6163
  %v6165 = vsel %vm6164, 0, %v6163
  %v6166 = vsub.s32 32, %v6165
  %v6167 = vshll.u32 %v6158, %v6165
  %v6168 = vshrl.u32 %v6150, %v6166
  %v6169 = vor.u32 %v6167, %v6168
  %v6170 = vsub.s32 4294967266, %v6165
  %v6171 = vadd.s32 %v6170, 127
  %v6172 = vshll.u32 %v6171, 23
  %v6173 = vor.u32 4788187, %v6172
  %v6174 = vand.u32 2147483647, %v6173
  %v6176 = vcvt.s32.f32 %v6169
  %v6177 = vmul.f32 %v6176, %v6174
  %v6178 = vxor.u32 %v6177, 2147483648
  %v6179 = vsel %vm6058, %v6178, %v6177
  %v6180 = vsub.s32 4, %v6156
  %v6181 = vsel %vm6058, %v6180, %v6156
  %v6182 = vsel %vm6057, %v93, %v6179
  %v6183 = vsel %vm6057, 0, %v6181
  %v6184 = vmul.f32 %v6182, %v6182
  %v6185 = vmul.f32 %v6184, -0.001358992
  %v6186 = vadd.f32 %v6185, 0.041655596
  %v6187 = vmul.f32 %v6184, %v6186
  %v6188 = vadd.f32 %v6187, -0.4999988
  %v6189 = vmul.f32 %v6184, %v6188
  %v6190 = vadd.f32 1.0, %v6189
  %v6191 = vmul.f32 %v6182, %v6182
  %v6192 = vmul.f32 %v6191, -0.00019511016
  %v6193 = vadd.f32 %v6192, 0.008332121
  %v6194 = vmul.f32 %v6191, %v6193
  %v6195 = vadd.f32 %v6194, -0.16666654
  %v6196 = vmul.f32 %v6191, %v6195
  %v6197 = vadd.f32 %v6196, 1.0
  %v6198 = vmul.f32 %v6197, %v6182
  %vm6199 = vweird.f32 %v93
  %v6200 = vand.u32 %v6183, 3
  %vm6201 = vcmp.lt.s32.totalorder %v6200, 2
  %vm6202 = vcmp.eq.s32.totalorder %v6200, 0
  %v6203 = vxor.u32 %v6198, 2147483648
  %v6204 = vsel %vm6202, %v6190, %v6203
  %vm6205 = vcmp.eq.s32.totalorder %v6200, 2
  %v6206 = vxor.u32 %v6190, 2147483648
  %v6207 = vsel %vm6205, %v6206, %v6198
  %v6208 = vsel %vm6201, %v6204, %v6207
  %v6209 = vsel %vm6199, nan, %v6208
  %v6210 = vand.u32 2147483647, %v98
  %vm6211 = vcmp.le.f32.partialorder %v6210, 0.7853982
  %vm6212 = vcmp.lt.s32.totalorder %v98, 0
  %v6213 = vand.u32 %v98, 2139095040
  %v6214 = vshrl.u32 %v6213, 23
  %v6215 = vsub.s32 %v6214, 127
  %v6216 = vand.u32 2147483647, %v98
  %v6217 = vand.u32 %v6216, 8388607
  %v6218 = vor.u32 %v6217, 8388608
  %v6219 = vsub.s32 0, %v6218
  %v6220 = vadd.s32 %v6215, 1
  %vm6221 = vcmp.gt.s32.totalorder %v6220, 0
  %v6222 = vsel %vm6221, %v6220, 0
  %v6223 = vshrl.u32 %v6222, 5
  %v6224 = vand.u32 %v6222, 31
  %v6225 = vsub.s32 32, %v6224
  %v6226 = vshrl.u32 683565275, %v6225
  %v6227 = vshll.u32 683565275, %v6224
  %v6228 = vshrl.u32 2475754826, %v6225
  %v6229 = vor.u32 %v6227, %v6228
  %v6230 = vshll.u32 2475754826, %v6224
  %v6231 = vshrl.u32 2131351028, %v6225
  %v6232 = vor.u32 %v6230, %v6231
  %v6233 = vshll.u32 2131351028, %v6224
  %v6234 = vshrl.u32 2102212464, %v6225
  %v6235 = vor.u32 %v6233, %v6234
  %v6236 = vshll.u32 2102212464, %v6224
  %v6237 = vshrl.u32 920167782, %v6225
  %v6238 = vor.u32 %v6236, %v6237
  %v6239 = vshll.u32 920167782, %v6224
  %v6240 = vshrl.u32 1326507024, %v6225
  %v6241 = vor.u32 %v6239, %v6240
  %vm6242 = vcmp.lt.s32.totalorder %v6223, 1
  %vm6243 = vcmp.lt.s32.totalorder %v6223, 2
  %vm6244 = vcmp.lt.s32.totalorder %v6223, 3
  %vm6245 = vcmp.lt.s32.totalorder %v6223, 4
  %v6246 = vsel %vm6242, %v6226, %v6229
  %v6247 = vsel %vm6245, %v6235, 2102212464
  %v6248 = vsel %vm6244, %v6232, %v6247
  %v6249 = vsel %vm6243, %v6246, %v6248
  %v6250 = vsel %vm6242, %v6229, %v6232
  %v6251 = vsel %vm6245, %v6238, 920167782
  %v6252 = vsel %vm6244, %v6235, %v6251
  %v6253 = vsel %vm6243, %v6250, %v6252
  %v6254 = vsel %vm6242, %v6232, %v6235
  %v6255 = vsel %vm6245, %v6241, 1326507024
  %v6256 = vsel %vm6244, %v6238, %v6255
  %v6257 = vsel %vm6243, %v6254, %v6256
  %v6258 = vshll.u32 %v6218, 8
  %v6259 = vand.u32 %v6258, 65535
  %v6260 = vshrl.u32 %v6258, 16
  %v6261 = vand.u32 %v6257, 65535
  %v6262 = vshrl.u32 %v6257, 16
  %v6263 = vmul.u32 %v6259, %v6261
  %v6264 = vmul.u32 %v6259, %v6262
  %v6265 = vmul.u32 %v6260, %v6261
  %v6266 = vmul.u32 %v6260, %v6262
  %v6267 = vshll.u32 %v6264, 16
  %v6268 = vshrl.u32 %v6264, 16
  %v6269 = vshll.u32 %v6265, 16
  %v6270 = vshrl.u32 %v6265, 16
  %vm6271 = vc.u32 %v6263, %v6267
  %v6272 = vsel %vm6271, 1, 0
  %v6273 = vadd.s32 %v6263, %v6267
  %v6274 = vadd.s32 %v6266, %v6272
  %vm6275 = vc.u32 %v6273, %v6269
  %v6276 = vsel %vm6275, 1, 0
  %v6277 = vadd.s32 %v6273, %v6269
  %v6278 = vadd.s32 %v6274, %v6276
  %v6279 = vadd.s32 %v6278, %v6268
  %v6280 = vadd.s32 %v6279, %v6270
  %v6281 = vand.u32 %v6258, 65535
  %v6282 = vshrl.u32 %v6258, 16
  %v6283 = vand.u32 %v6253, 65535
  %v6284 = vshrl.u32 %v6253, 16
  %v6285 = vmul.u32 %v6281, %v6283
  %v6286 = vmul.u32 %v6281, %v6284
  %v6287 = vmul.u32 %v6282, %v6283
  %v6288 = vmul.u32 %v6282, %v6284
  %v6289 = vshll.u32 %v6286, 16
  %v6290 = vshrl.u32 %v6286, 16
  %v6291 = vshll.u32 %v6287, 16
  %v6292 = vshrl.u32 %v6287, 16
  %vm6293 = vc.u32 %v6285, %v6289
  %v6294 = vsel %vm6293, 1, 0
  %v6295 = vadd.s32 %v6285, %v6289
  %v6296 = vadd.s32 %v6288, %v6294
  %vm6297 = vc.u32 %v6295, %v6291
  %v6298 = vsel %vm6297, 1, 0
  %v6299 = vadd.s32 %v6295, %v6291
  %v6300 = vadd.s32 %v6296, %v6298
  %v6301 = vadd.s32 %v6300, %v6290
  %v6302 = vadd.s32 %v6301, %v6292
  %v6303 = vmul.u32 %v6258, %v6249
  %v6304 = vadd.s32 %v6280, %v6299
  %vm6305 = vc.u32 %v6280, %v6299
  %v6306 = vadd.s32 %v6302, 1
  %v6307 = vsel %vm6305, %v6306, %v6302
  %v6308 = vadd.s32 %v6303, %v6307
  %v6309 = vadd.s32 %v6308, 536870912
  %v6310 = vshrl.u32 %v6309, 30
  %v6311 = vshll.u32 %v6310, 30
  %v6312 = vsub.s32 %v6308, %v6311
  %vm6313 = vcmp.lt.s32.totalorder %v6312, 0
  %v6314 = vsub.s32 0, %v6312
  %v6315 = vsel %vm6313, %v6314, %v6312
  %v6316 = vclz %v6315
  %v6317 = vsub.s32 %v6316, 2
  %vm6318 = vcmp.gt.s32.totalorder 0, %v6317
  %v6319 = vsel %vm6318, 0, %v6317
  %v6320 = vsub.s32 32, %v6319
  %v6321 = vshll.u32 %v6312, %v6319
  %v6322 = vshrl.u32 %v6304, %v6320
  %v6323 = vor.u32 %v6321, %v6322
  %v6324 = vsub.s32 4294967266, %v6319
  %v6325 = vadd.s32 %v6324, 127
  %v6326 = vshll.u32 %v6325, 23
  %v6327 = vor.u32 4788187, %v6326
  %v6328 = vand.u32 2147483647, %v6327
  %v6330 = vcvt.s32.f32 %v6323
  %v6331 = vmul.f32 %v6330, %v6328
  %v6332 = vxor.u32 %v6331, 2147483648
  %v6333 = vsel %vm6212, %v6332, %v6331
  %v6334 = vsub.s32 4, %v6310
  %v6335 = vsel %vm6212, %v6334, %v6310
  %v6336 = vsel %vm6211, %v98, %v6333
  %v6337 = vsel %vm6211, 0, %v6335
  %v6338 = vmul.f32 %v6336, %v6336
  %v6339 = vmul.f32 %v6338, -0.001358992
  %v6340 = vadd.f32 %v6339, 0.041655596
  %v6341 = vmul.f32 %v6338, %v6340
  %v6342 = vadd.f32 %v6341, -0.4999988
  %v6343 = vmul.f32 %v6338, %v6342
  %v6344 = vadd.f32 1.0, %v6343
  %v6345 = vmul.f32 %v6336, %v6336
  %v6346 = vmul.f32 %v6345, -0.00019511016
  %v6347 = vadd.f32 %v6346, 0.008332121
  %v6348 = vmul.f32 %v6345, %v6347
  %v6349 = vadd.f32 %v6348, -0.16666654
  %v6350 = vmul.f32 %v6345, %v6349
  %v6351 = vadd.f32 %v6350, 1.0
  %v6352 = vmul.f32 %v6351, %v6336
  %vm6353 = vweird.f32 %v98
  %v6354 = vand.u32 %v6337, 3
  %vm6355 = vcmp.lt.s32.totalorder %v6354, 2
  %vm6356 = vcmp.eq.s32.totalorder %v6354, 0
  %v6357 = vxor.u32 %v6352, 2147483648
  %v6358 = vsel %vm6356, %v6344, %v6357
  %vm6359 = vcmp.eq.s32.totalorder %v6354, 2
  %v6360 = vxor.u32 %v6344, 2147483648
  %v6361 = vsel %vm6359, %v6360, %v6352
  %v6362 = vsel %vm6355, %v6358, %v6361
  %v6363 = vsel %vm6353, nan, %v6362
  %v6364 = vand.u32 2147483647, %v103
  %vm6365 = vcmp.le.f32.partialorder %v6364, 0.7853982
  %vm6366 = vcmp.lt.s32.totalorder %v103, 0
  %v6367 = vand.u32 %v103, 2139095040
  %v6368 = vshrl.u32 %v6367, 23
  %v6369 = vsub.s32 %v6368, 127
  %v6370 = vand.u32 2147483647, %v103
  %v6371 = vand.u32 %v6370, 8388607
  %v6372 = vor.u32 %v6371, 8388608
  %v6373 = vsub.s32 0, %v6372
  %v6374 = vadd.s32 %v6369, 1
  %vm6375 = vcmp.gt.s32.totalorder %v6374, 0
  %v6376 = vsel %vm6375, %v6374, 0
  %v6377 = vshrl.u32 %v6376, 5
  %v6378 = vand.u32 %v6376, 31
  %v6379 = vsub.s32 32, %v6378
  %v6380 = vshrl.u32 683565275, %v6379
  %v6381 = vshll.u32 683565275, %v6378
  %v6382 = vshrl.u32 2475754826, %v6379
  %v6383 = vor.u32 %v6381, %v6382
  %v6384 = vshll.u32 2475754826, %v6378
  %v6385 = vshrl.u32 2131351028, %v6379
  %v6386 = vor.u32 %v6384, %v6385
  %v6387 = vshll.u32 2131351028, %v6378
  %v6388 = vshrl.u32 2102212464, %v6379
  %v6389 = vor.u32 %v6387, %v6388
  %v6390 = vshll.u32 2102212464, %v6378
  %v6391 = vshrl.u32 920167782, %v6379
  %v6392 = vor.u32 %v6390, %v6391
  %v6393 = vshll.u32 920167782, %v6378
  %v6394 = vshrl.u32 1326507024, %v6379
  %v6395 = vor.u32 %v6393, %v6394
  %vm6396 = vcmp.lt.s32.totalorder %v6377, 1
  %vm6397 = vcmp.lt.s32.totalorder %v6377, 2
  %vm6398 = vcmp.lt.s32.totalorder %v6377, 3
  %vm6399 = vcmp.lt.s32.totalorder %v6377, 4
  %v6400 = vsel %vm6396, %v6380, %v6383
  %v6401 = vsel %vm6399, %v6389, 2102212464
  %v6402 = vsel %vm6398, %v6386, %v6401
  %v6403 = vsel %vm6397, %v6400, %v6402
  %v6404 = vsel %vm6396, %v6383, %v6386
  %v6405 = vsel %vm6399, %v6392, 920167782
  %v6406 = vsel %vm6398, %v6389, %v6405
  %v6407 = vsel %vm6397, %v6404, %v6406
  %v6408 = vsel %vm6396, %v6386, %v6389
  %v6409 = vsel %vm6399, %v6395, 1326507024
  %v6410 = vsel %vm6398, %v6392, %v6409
  %v6411 = vsel %vm6397, %v6408, %v6410
  %v6412 = vshll.u32 %v6372, 8
  %v6413 = vand.u32 %v6412, 65535
  %v6414 = vshrl.u32 %v6412, 16
  %v6415 = vand.u32 %v6411, 65535
  %v6416 = vshrl.u32 %v6411, 16
  %v6417 = vmul.u32 %v6413, %v6415
  %v6418 = vmul.u32 %v6413, %v6416
  %v6419 = vmul.u32 %v6414, %v6415
  %v6420 = vmul.u32 %v6414, %v6416
  %v6421 = vshll.u32 %v6418, 16
  %v6422 = vshrl.u32 %v6418, 16
  %v6423 = vshll.u32 %v6419, 16
  %v6424 = vshrl.u32 %v6419, 16
  %vm6425 = vc.u32 %v6417, %v6421
  %v6426 = vsel %vm6425, 1, 0
  %v6427 = vadd.s32 %v6417, %v6421
  %v6428 = vadd.s32 %v6420, %v6426
  %vm6429 = vc.u32 %v6427, %v6423
  %v6430 = vsel %vm6429, 1, 0
  %v6431 = vadd.s32 %v6427, %v6423
  %v6432 = vadd.s32 %v6428, %v6430
  %v6433 = vadd.s32 %v6432, %v6422
  %v6434 = vadd.s32 %v6433, %v6424
  %v6435 = vand.u32 %v6412, 65535
  %v6436 = vshrl.u32 %v6412, 16
  %v6437 = vand.u32 %v6407, 65535
  %v6438 = vshrl.u32 %v6407, 16
  %v6439 = vmul.u32 %v6435, %v6437
  %v6440 = vmul.u32 %v6435, %v6438
  %v6441 = vmul.u32 %v6436, %v6437
  %v6442 = vmul.u32 %v6436, %v6438
  %v6443 = vshll.u32 %v6440, 16
  %v6444 = vshrl.u32 %v6440, 16
  %v6445 = vshll.u32 %v6441, 16
  %v6446 = vshrl.u32 %v6441, 16
  %vm6447 = vc.u32 %v6439, %v6443
  %v6448 = vsel %vm6447, 1, 0
  %v6449 = vadd.s32 %v6439, %v6443
  %v6450 = vadd.s32 %v6442, %v6448
  %vm6451 = vc.u32 %v6449, %v6445
  %v6452 = vsel %vm6451, 1, 0
  %v6453 = vadd.s32 %v6449, %v6445
  %v6454 = vadd.s32 %v6450, %v6452
  %v6455 = vadd.s32 %v6454, %v6444
  %v6456 = vadd.s32 %v6455, %v6446
  %v6457 = vmul.u32 %v6412, %v6403
  %v6458 = vadd.s32 %v6434, %v6453
  %vm6459 = vc.u32 %v6434, %v6453
  %v6460 = vadd.s32 %v6456, 1
  %v6461 = vsel %vm6459, %v6460, %v6456
  %v6462 = vadd.s32 %v6457, %v6461
  %v6463 = vadd.s32 %v6462, 536870912
  %v6464 = vshrl.u32 %v6463, 30
  %v6465 = vshll.u32 %v6464, 30
  %v6466 = vsub.s32 %v6462, %v6465
  %vm6467 = vcmp.lt.s32.totalorder %v6466, 0
  %v6468 = vsub.s32 0, %v6466
  %v6469 = vsel %vm6467, %v6468, %v6466
  %v6470 = vclz %v6469
  %v6471 = vsub.s32 %v6470, 2
  %vm6472 = vcmp.gt.s32.totalorder 0, %v6471
  %v6473 = vsel %vm6472, 0, %v6471
  %v6474 = vsub.s32 32, %v6473
  %v6475 = vshll.u32 %v6466, %v6473
  %v6476 = vshrl.u32 %v6458, %v6474
  %v6477 = vor.u32 %v6475, %v6476
  %v6478 = vsub.s32 4294967266, %v6473
  %v6479 = vadd.s32 %v6478, 127
  %v6480 = vshll.u32 %v6479, 23
  %v6481 = vor.u32 4788187, %v6480
  %v6482 = vand.u32 2147483647, %v6481
  %v6484 = vcvt.s32.f32 %v6477
  %v6485 = vmul.f32 %v6484, %v6482
  %v6486 = vxor.u32 %v6485, 2147483648
  %v6487 = vsel %vm6366, %v6486, %v6485
  %v6488 = vsub.s32 4, %v6464
  %v6489 = vsel %vm6366, %v6488, %v6464
  %v6490 = vsel %vm6365, %v103, %v6487
  %v6491 = vsel %vm6365, 0, %v6489
  %v6492 = vmul.f32 %v6490, %v6490
  %v6493 = vmul.f32 %v6492, -0.001358992
  %v6494 = vadd.f32 %v6493, 0.041655596
  %v6495 = vmul.f32 %v6492, %v6494
  %v6496 = vadd.f32 %v6495, -0.4999988
  %v6497 = vmul.f32 %v6492, %v6496
  %v6498 = vadd.f32 1.0, %v6497
  %v6499 = vmul.f32 %v6490, %v6490
  %v6500 = vmul.f32 %v6499, -0.00019511016
  %v6501 = vadd.f32 %v6500, 0.008332121
  %v6502 = vmul.f32 %v6499, %v6501
  %v6503 = vadd.f32 %v6502, -0.16666654
  %v6504 = vmul.f32 %v6499, %v6503
  %v6505 = vadd.f32 %v6504, 1.0
  %v6506 = vmul.f32 %v6505, %v6490
  %vm6507 = vweird.f32 %v103
  %v6508 = vand.u32 %v6491, 3
  %vm6509 = vcmp.lt.s32.totalorder %v6508, 2
  %vm6510 = vcmp.eq.s32.totalorder %v6508, 0
  %v6511 = vxor.u32 %v6506, 2147483648
  %v6512 = vsel %vm6510, %v6498, %v6511
  %vm6513 = vcmp.eq.s32.totalorder %v6508, 2
  %v6514 = vxor.u32 %v6498, 2147483648
  %v6515 = vsel %vm6513, %v6514, %v6506
  %v6516 = vsel %vm6509, %v6512, %v6515
  %v6517 = vsel %vm6507, nan, %v6516
  %v6518 = vand.u32 2147483647, %v108
  %vm6519 = vcmp.le.f32.partialorder %v6518, 0.7853982
  %vm6520 = vcmp.lt.s32.totalorder %v108, 0
  %v6521 = vand.u32 %v108, 2139095040
  %v6522 = vshrl.u32 %v6521, 23
  %v6523 = vsub.s32 %v6522, 127
  %v6524 = vand.u32 2147483647, %v108
  %v6525 = vand.u32 %v6524, 8388607
  %v6526 = vor.u32 %v6525, 8388608
  %v6527 = vsub.s32 0, %v6526
  %v6528 = vadd.s32 %v6523, 1
  %vm6529 = vcmp.gt.s32.totalorder %v6528, 0
  %v6530 = vsel %vm6529, %v6528, 0
  %v6531 = vshrl.u32 %v6530, 5
  %v6532 = vand.u32 %v6530, 31
  %v6533 = vsub.s32 32, %v6532
  %v6534 = vshrl.u32 683565275, %v6533
  %v6535 = vshll.u32 683565275, %v6532
  %v6536 = vshrl.u32 2475754826, %v6533
  %v6537 = vor.u32 %v6535, %v6536
  %v6538 = vshll.u32 2475754826, %v6532
  %v6539 = vshrl.u32 2131351028, %v6533
  %v6540 = vor.u32 %v6538, %v6539
  %v6541 = vshll.u32 2131351028, %v6532
  %v6542 = vshrl.u32 2102212464, %v6533
  %v6543 = vor.u32 %v6541, %v6542
  %v6544 = vshll.u32 2102212464, %v6532
  %v6545 = vshrl.u32 920167782, %v6533
  %v6546 = vor.u32 %v6544, %v6545
  %v6547 = vshll.u32 920167782, %v6532
  %v6548 = vshrl.u32 1326507024, %v6533
  %v6549 = vor.u32 %v6547, %v6548
  %vm6550 = vcmp.lt.s32.totalorder %v6531, 1
  %vm6551 = vcmp.lt.s32.totalorder %v6531, 2
  %vm6552 = vcmp.lt.s32.totalorder %v6531, 3
  %vm6553 = vcmp.lt.s32.totalorder %v6531, 4
  %v6554 = vsel %vm6550, %v6534, %v6537
  %v6555 = vsel %vm6553, %v6543, 2102212464
  %v6556 = vsel %vm6552, %v6540, %v6555
  %v6557 = vsel %vm6551, %v6554, %v6556
  %v6558 = vsel %vm6550, %v6537, %v6540
  %v6559 = vsel %vm6553, %v6546, 920167782
  %v6560 = vsel %vm6552, %v6543, %v6559
  %v6561 = vsel %vm6551, %v6558, %v6560
  %v6562 = vsel %vm6550, %v6540, %v6543
  %v6563 = vsel %vm6553, %v6549, 1326507024
  %v6564 = vsel %vm6552, %v6546, %v6563
  %v6565 = vsel %vm6551, %v6562, %v6564
  %v6566 = vshll.u32 %v6526, 8
  %v6567 = vand.u32 %v6566, 65535
  %v6568 = vshrl.u32 %v6566, 16
  %v6569 = vand.u32 %v6565, 65535
  %v6570 = vshrl.u32 %v6565, 16
  %v6571 = vmul.u32 %v6567, %v6569
  %v6572 = vmul.u32 %v6567, %v6570
  %v6573 = vmul.u32 %v6568, %v6569
  %v6574 = vmul.u32 %v6568, %v6570
  %v6575 = vshll.u32 %v6572, 16
  %v6576 = vshrl.u32 %v6572, 16
  %v6577 = vshll.u32 %v6573, 16
  %v6578 = vshrl.u32 %v6573, 16
  %vm6579 = vc.u32 %v6571, %v6575
  %v6580 = vsel %vm6579, 1, 0
  %v6581 = vadd.s32 %v6571, %v6575
  %v6582 = vadd.s32 %v6574, %v6580
  %vm6583 = vc.u32 %v6581, %v6577
  %v6584 = vsel %vm6583, 1, 0
  %v6585 = vadd.s32 %v6581, %v6577
  %v6586 = vadd.s32 %v6582, %v6584
  %v6587 = vadd.s32 %v6586, %v6576
  %v6588 = vadd.s32 %v6587, %v6578
  %v6589 = vand.u32 %v6566, 65535
  %v6590 = vshrl.u32 %v6566, 16
  %v6591 = vand.u32 %v6561, 65535
  %v6592 = vshrl.u32 %v6561, 16
  %v6593 = vmul.u32 %v6589, %v6591
  %v6594 = vmul.u32 %v6589, %v6592
  %v6595 = vmul.u32 %v6590, %v6591
  %v6596 = vmul.u32 %v6590, %v6592
  %v6597 = vshll.u32 %v6594, 16
  %v6598 = vshrl.u32 %v6594, 16
  %v6599 = vshll.u32 %v6595, 16
  %v6600 = vshrl.u32 %v6595, 16
  %vm6601 = vc.u32 %v6593, %v6597
  %v6602 = vsel %vm6601, 1, 0
  %v6603 = vadd.s32 %v6593, %v6597
  %v6604 = vadd.s32 %v6596, %v6602
  %vm6605 = vc.u32 %v6603, %v6599
  %v6606 = vsel %vm6605, 1, 0
  %v6607 = vadd.s32 %v6603, %v6599
  %v6608 = vadd.s32 %v6604, %v6606
  %v6609 = vadd.s32 %v6608, %v6598
  %v6610 = vadd.s32 %v6609, %v6600
  %v6611 = vmul.u32 %v6566, %v6557
  %v6612 = vadd.s32 %v6588, %v6607
  %vm6613 = vc.u32 %v6588, %v6607
  %v6614 = vadd.s32 %v6610, 1
  %v6615 = vsel %vm6613, %v6614, %v6610
  %v6616 = vadd.s32 %v6611, %v6615
  %v6617 = vadd.s32 %v6616, 536870912
  %v6618 = vshrl.u32 %v6617, 30
  %v6619 = vshll.u32 %v6618, 30
  %v6620 = vsub.s32 %v6616, %v6619
  %vm6621 = vcmp.lt.s32.totalorder %v6620, 0
  %v6622 = vsub.s32 0, %v6620
  %v6623 = vsel %vm6621, %v6622, %v6620
  %v6624 = vclz %v6623
  %v6625 = vsub.s32 %v6624, 2
  %vm6626 = vcmp.gt.s32.totalorder 0, %v6625
  %v6627 = vsel %vm6626, 0, %v6625
  %v6628 = vsub.s32 32, %v6627
  %v6629 = vshll.u32 %v6620, %v6627
  %v6630 = vshrl.u32 %v6612, %v6628
  %v6631 = vor.u32 %v6629, %v6630
  %v6632 = vsub.s32 4294967266, %v6627
  %v6633 = vadd.s32 %v6632, 127
  %v6634 = vshll.u32 %v6633, 23
  %v6635 = vor.u32 4788187, %v6634
  %v6636 = vand.u32 2147483647, %v6635
  %v6638 = vcvt.s32.f32 %v6631
  %v6639 = vmul.f32 %v6638, %v6636
  %v6640 = vxor.u32 %v6639, 2147483648
  %v6641 = vsel %vm6520, %v6640, %v6639
  %v6642 = vsub.s32 4, %v6618
  %v6643 = vsel %vm6520, %v6642, %v6618
  %v6644 = vsel %vm6519, %v108, %v6641
  %v6645 = vsel %vm6519, 0, %v6643
  %v6646 = vmul.f32 %v6644, %v6644
  %v6647 = vmul.f32 %v6646, -0.001358992
  %v6648 = vadd.f32 %v6647, 0.041655596
  %v6649 = vmul.f32 %v6646, %v6648
  %v6650 = vadd.f32 %v6649, -0.4999988
  %v6651 = vmul.f32 %v6646, %v6650
  %v6652 = vadd.f32 1.0, %v6651
  %v6653 = vmul.f32 %v6644, %v6644
  %v6654 = vmul.f32 %v6653, -0.00019511016
  %v6655 = vadd.f32 %v6654, 0.008332121
  %v6656 = vmul.f32 %v6653, %v6655
  %v6657 = vadd.f32 %v6656, -0.16666654
  %v6658 = vmul.f32 %v6653, %v6657
  %v6659 = vadd.f32 %v6658, 1.0
  %v6660 = vmul.f32 %v6659, %v6644
  %vm6661 = vweird.f32 %v108
  %v6662 = vand.u32 %v6645, 3
  %vm6663 = vcmp.lt.s32.totalorder %v6662, 2
  %vm6664 = vcmp.eq.s32.totalorder %v6662, 0
  %v6665 = vxor.u32 %v6660, 2147483648
  %v6666 = vsel %vm6664, %v6652, %v6665
  %vm6667 = vcmp.eq.s32.totalorder %v6662, 2
  %v6668 = vxor.u32 %v6652, 2147483648
  %v6669 = vsel %vm6667, %v6668, %v6660
  %v6670 = vsel %vm6663, %v6666, %v6669
  %v6671 = vsel %vm6661, nan, %v6670
  %v6672 = vand.u32 2147483647, %v113
  %vm6673 = vcmp.le.f32.partialorder %v6672, 0.7853982
  %vm6674 = vcmp.lt.s32.totalorder %v113, 0
  %v6675 = vand.u32 %v113, 2139095040
  %v6676 = vshrl.u32 %v6675, 23
  %v6677 = vsub.s32 %v6676, 127
  %v6678 = vand.u32 2147483647, %v113
  %v6679 = vand.u32 %v6678, 8388607
  %v6680 = vor.u32 %v6679, 8388608
  %v6681 = vsub.s32 0, %v6680
  %v6682 = vadd.s32 %v6677, 1
  %vm6683 = vcmp.gt.s32.totalorder %v6682, 0
  %v6684 = vsel %vm6683, %v6682, 0
  %v6685 = vshrl.u32 %v6684, 5
  %v6686 = vand.u32 %v6684, 31
  %v6687 = vsub.s32 32, %v6686
  %v6688 = vshrl.u32 683565275, %v6687
  %v6689 = vshll.u32 683565275, %v6686
  %v6690 = vshrl.u32 2475754826, %v6687
  %v6691 = vor.u32 %v6689, %v6690
  %v6692 = vshll.u32 2475754826, %v6686
  %v6693 = vshrl.u32 2131351028, %v6687
  %v6694 = vor.u32 %v6692, %v6693
  %v6695 = vshll.u32 2131351028, %v6686
  %v6696 = vshrl.u32 2102212464, %v6687
  %v6697 = vor.u32 %v6695, %v6696
  %v6698 = vshll.u32 2102212464, %v6686
  %v6699 = vshrl.u32 920167782, %v6687
  %v6700 = vor.u32 %v6698, %v6699
  %v6701 = vshll.u32 920167782, %v6686
  %v6702 = vshrl.u32 1326507024, %v6687
  %v6703 = vor.u32 %v6701, %v6702
  %vm6704 = vcmp.lt.s32.totalorder %v6685, 1
  %vm6705 = vcmp.lt.s32.totalorder %v6685, 2
  %vm6706 = vcmp.lt.s32.totalorder %v6685, 3
  %vm6707 = vcmp.lt.s32.totalorder %v6685, 4
  %v6708 = vsel %vm6704, %v6688, %v6691
  %v6709 = vsel %vm6707, %v6697, 2102212464
  %v6710 = vsel %vm6706, %v6694, %v6709
  %v6711 = vsel %vm6705, %v6708, %v6710
  %v6712 = vsel %vm6704, %v6691, %v6694
  %v6713 = vsel %vm6707, %v6700, 920167782
  %v6714 = vsel %vm6706, %v6697, %v6713
  %v6715 = vsel %vm6705, %v6712, %v6714
  %v6716 = vsel %vm6704, %v6694, %v6697
  %v6717 = vsel %vm6707, %v6703, 1326507024
  %v6718 = vsel %vm6706, %v6700, %v6717
  %v6719 = vsel %vm6705, %v6716, %v6718
  %v6720 = vshll.u32 %v6680, 8
  %v6721 = vand.u32 %v6720, 65535
  %v6722 = vshrl.u32 %v6720, 16
  %v6723 = vand.u32 %v6719, 65535
  %v6724 = vshrl.u32 %v6719, 16
  %v6725 = vmul.u32 %v6721, %v6723
  %v6726 = vmul.u32 %v6721, %v6724
  %v6727 = vmul.u32 %v6722, %v6723
  %v6728 = vmul.u32 %v6722, %v6724
  %v6729 = vshll.u32 %v6726, 16
  %v6730 = vshrl.u32 %v6726, 16
  %v6731 = vshll.u32 %v6727, 16
  %v6732 = vshrl.u32 %v6727, 16
  %vm6733 = vc.u32 %v6725, %v6729
  %v6734 = vsel %vm6733, 1, 0
  %v6735 = vadd.s32 %v6725, %v6729
  %v6736 = vadd.s32 %v6728, %v6734
  %vm6737 = vc.u32 %v6735, %v6731
  %v6738 = vsel %vm6737, 1, 0
  %v6739 = vadd.s32 %v6735, %v6731
  %v6740 = vadd.s32 %v6736, %v6738
  %v6741 = vadd.s32 %v6740, %v6730
  %v6742 = vadd.s32 %v6741, %v6732
  %v6743 = vand.u32 %v6720, 65535
  %v6744 = vshrl.u32 %v6720, 16
  %v6745 = vand.u32 %v6715, 65535
  %v6746 = vshrl.u32 %v6715, 16
  %v6747 = vmul.u32 %v6743, %v6745
  %v6748 = vmul.u32 %v6743, %v6746
  %v6749 = vmul.u32 %v6744, %v6745
  %v6750 = vmul.u32 %v6744, %v6746
  %v6751 = vshll.u32 %v6748, 16
  %v6752 = vshrl.u32 %v6748, 16
  %v6753 = vshll.u32 %v6749, 16
  %v6754 = vshrl.u32 %v6749, 16
  %vm6755 = vc.u32 %v6747, %v6751
  %v6756 = vsel %vm6755, 1, 0
  %v6757 = vadd.s32 %v6747, %v6751
  %v6758 = vadd.s32 %v6750, %v6756
  %vm6759 = vc.u32 %v6757, %v6753
  %v6760 = vsel %vm6759, 1, 0
  %v6761 = vadd.s32 %v6757, %v6753
  %v6762 = vadd.s32 %v6758, %v6760
  %v6763 = vadd.s32 %v6762, %v6752
  %v6764 = vadd.s32 %v6763, %v6754
  %v6765 = vmul.u32 %v6720, %v6711
  %v6766 = vadd.s32 %v6742, %v6761
  %vm6767 = vc.u32 %v6742, %v6761
  %v6768 = vadd.s32 %v6764, 1
  %v6769 = vsel %vm6767, %v6768, %v6764
  %v6770 = vadd.s32 %v6765, %v6769
  %v6771 = vadd.s32 %v6770, 536870912
  %v6772 = vshrl.u32 %v6771, 30
  %v6773 = vshll.u32 %v6772, 30
  %v6774 = vsub.s32 %v6770, %v6773
  %vm6775 = vcmp.lt.s32.totalorder %v6774, 0
  %v6776 = vsub.s32 0, %v6774
  %v6777 = vsel %vm6775, %v6776, %v6774
  %v6778 = vclz %v6777
  %v6779 = vsub.s32 %v6778, 2
  %vm6780 = vcmp.gt.s32.totalorder 0, %v6779
  %v6781 = vsel %vm6780, 0, %v6779
  %v6782 = vsub.s32 32, %v6781
  %v6783 = vshll.u32 %v6774, %v6781
  %v6784 = vshrl.u32 %v6766, %v6782
  %v6785 = vor.u32 %v6783, %v6784
  %v6786 = vsub.s32 4294967266, %v6781
  %v6787 = vadd.s32 %v6786, 127
  %v6788 = vshll.u32 %v6787, 23
  %v6789 = vor.u32 4788187, %v6788
  %v6790 = vand.u32 2147483647, %v6789
  %v6792 = vcvt.s32.f32 %v6785
  %v6793 = vmul.f32 %v6792, %v6790
  %v6794 = vxor.u32 %v6793, 2147483648
  %v6795 = vsel %vm6674, %v6794, %v6793
  %v6796 = vsub.s32 4, %v6772
  %v6797 = vsel %vm6674, %v6796, %v6772
  %v6798 = vsel %vm6673, %v113, %v6795
  %v6799 = vsel %vm6673, 0, %v6797
  %v6800 = vmul.f32 %v6798, %v6798
  %v6801 = vmul.f32 %v6800, -0.001358992
  %v6802 = vadd.f32 %v6801, 0.041655596
  %v6803 = vmul.f32 %v6800, %v6802
  %v6804 = vadd.f32 %v6803, -0.4999988
  %v6805 = vmul.f32 %v6800, %v6804
  %v6806 = vadd.f32 1.0, %v6805
  %v6807 = vmul.f32 %v6798, %v6798
  %v6808 = vmul.f32 %v6807, -0.00019511016
  %v6809 = vadd.f32 %v6808, 0.008332121
  %v6810 = vmul.f32 %v6807, %v6809
  %v6811 = vadd.f32 %v6810, -0.16666654
  %v6812 = vmul.f32 %v6807, %v6811
  %v6813 = vadd.f32 %v6812, 1.0
  %v6814 = vmul.f32 %v6813, %v6798
  %vm6815 = vweird.f32 %v113
  %v6816 = vand.u32 %v6799, 3
  %vm6817 = vcmp.lt.s32.totalorder %v6816, 2
  %vm6818 = vcmp.eq.s32.totalorder %v6816, 0
  %v6819 = vxor.u32 %v6814, 2147483648
  %v6820 = vsel %vm6818, %v6806, %v6819
  %vm6821 = vcmp.eq.s32.totalorder %v6816, 2
  %v6822 = vxor.u32 %v6806, 2147483648
  %v6823 = vsel %vm6821, %v6822, %v6814
  %v6824 = vsel %vm6817, %v6820, %v6823
  %v6825 = vsel %vm6815, nan, %v6824
  %v6826 = vand.u32 2147483647, %v118
  %vm6827 = vcmp.le.f32.partialorder %v6826, 0.7853982
  %vm6828 = vcmp.lt.s32.totalorder %v118, 0
  %v6829 = vand.u32 %v118, 2139095040
  %v6830 = vshrl.u32 %v6829, 23
  %v6831 = vsub.s32 %v6830, 127
  %v6832 = vand.u32 2147483647, %v118
  %v6833 = vand.u32 %v6832, 8388607
  %v6834 = vor.u32 %v6833, 8388608
  %v6835 = vsub.s32 0, %v6834
  %v6836 = vadd.s32 %v6831, 1
  %vm6837 = vcmp.gt.s32.totalorder %v6836, 0
  %v6838 = vsel %vm6837, %v6836, 0
  %v6839 = vshrl.u32 %v6838, 5
  %v6840 = vand.u32 %v6838, 31
  %v6841 = vsub.s32 32, %v6840
  %v6842 = vshrl.u32 683565275, %v6841
  %v6843 = vshll.u32 683565275, %v6840
  %v6844 = vshrl.u32 2475754826, %v6841
  %v6845 = vor.u32 %v6843, %v6844
  %v6846 = vshll.u32 2475754826, %v6840
  %v6847 = vshrl.u32 2131351028, %v6841
  %v6848 = vor.u32 %v6846, %v6847
  %v6849 = vshll.u32 2131351028, %v6840
  %v6850 = vshrl.u32 2102212464, %v6841
  %v6851 = vor.u32 %v6849, %v6850
  %v6852 = vshll.u32 2102212464, %v6840
  %v6853 = vshrl.u32 920167782, %v6841
  %v6854 = vor.u32 %v6852, %v6853
  %v6855 = vshll.u32 920167782, %v6840
  %v6856 = vshrl.u32 1326507024, %v6841
  %v6857 = vor.u32 %v6855, %v6856
  %vm6858 = vcmp.lt.s32.totalorder %v6839, 1
  %vm6859 = vcmp.lt.s32.totalorder %v6839, 2
  %vm6860 = vcmp.lt.s32.totalorder %v6839, 3
  %vm6861 = vcmp.lt.s32.totalorder %v6839, 4
  %v6862 = vsel %vm6858, %v6842, %v6845
  %v6863 = vsel %vm6861, %v6851, 2102212464
  %v6864 = vsel %vm6860, %v6848, %v6863
  %v6865 = vsel %vm6859, %v6862, %v6864
  %v6866 = vsel %vm6858, %v6845, %v6848
  %v6867 = vsel %vm6861, %v6854, 920167782
  %v6868 = vsel %vm6860, %v6851, %v6867
  %v6869 = vsel %vm6859, %v6866, %v6868
  %v6870 = vsel %vm6858, %v6848, %v6851
  %v6871 = vsel %vm6861, %v6857, 1326507024
  %v6872 = vsel %vm6860, %v6854, %v6871
  %v6873 = vsel %vm6859, %v6870, %v6872
  %v6874 = vshll.u32 %v6834, 8
  %v6875 = vand.u32 %v6874, 65535
  %v6876 = vshrl.u32 %v6874, 16
  %v6877 = vand.u32 %v6873, 65535
  %v6878 = vshrl.u32 %v6873, 16
  %v6879 = vmul.u32 %v6875, %v6877
  %v6880 = vmul.u32 %v6875, %v6878
  %v6881 = vmul.u32 %v6876, %v6877
  %v6882 = vmul.u32 %v6876, %v6878
  %v6883 = vshll.u32 %v6880, 16
  %v6884 = vshrl.u32 %v6880, 16
  %v6885 = vshll.u32 %v6881, 16
  %v6886 = vshrl.u32 %v6881, 16
  %vm6887 = vc.u32 %v6879, %v6883
  %v6888 = vsel %vm6887, 1, 0
  %v6889 = vadd.s32 %v6879, %v6883
  %v6890 = vadd.s32 %v6882, %v6888
  %vm6891 = vc.u32 %v6889, %v6885
  %v6892 = vsel %vm6891, 1, 0
  %v6893 = vadd.s32 %v6889, %v6885
  %v6894 = vadd.s32 %v6890, %v6892
  %v6895 = vadd.s32 %v6894, %v6884
  %v6896 = vadd.s32 %v6895, %v6886
  %v6897 = vand.u32 %v6874, 65535
  %v6898 = vshrl.u32 %v6874, 16
  %v6899 = vand.u32 %v6869, 65535
  %v6900 = vshrl.u32 %v6869, 16
  %v6901 = vmul.u32 %v6897, %v6899
  %v6902 = vmul.u32 %v6897, %v6900
  %v6903 = vmul.u32 %v6898, %v6899
  %v6904 = vmul.u32 %v6898, %v6900
  %v6905 = vshll.u32 %v6902, 16
  %v6906 = vshrl.u32 %v6902, 16
  %v6907 = vshll.u32 %v6903, 16
  %v6908 = vshrl.u32 %v6903, 16
  %vm6909 = vc.u32 %v6901, %v6905
  %v6910 = vsel %vm6909, 1, 0
  %v6911 = vadd.s32 %v6901, %v6905
  %v6912 = vadd.s32 %v6904, %v6910
  %vm6913 = vc.u32 %v6911, %v6907
  %v6914 = vsel %vm6913, 1, 0
  %v6915 = vadd.s32 %v6911, %v6907
  %v6916 = vadd.s32 %v6912, %v6914
  %v6917 = vadd.s32 %v6916, %v6906
  %v6918 = vadd.s32 %v6917, %v6908
  %v6919 = vmul.u32 %v6874, %v6865
  %v6920 = vadd.s32 %v6896, %v6915
  %vm6921 = vc.u32 %v6896, %v6915
  %v6922 = vadd.s32 %v6918, 1
  %v6923 = vsel %vm6921, %v6922, %v6918
  %v6924 = vadd.s32 %v6919, %v6923
  %v6925 = vadd.s32 %v6924, 536870912
  %v6926 = vshrl.u32 %v6925, 30
  %v6927 = vshll.u32 %v6926, 30
  %v6928 = vsub.s32 %v6924, %v6927
  %vm6929 = vcmp.lt.s32.totalorder %v6928, 0
  %v6930 = vsub.s32 0, %v6928
  %v6931 = vsel %vm6929, %v6930, %v6928
  %v6932 = vclz %v6931
  %v6933 = vsub.s32 %v6932, 2
  %vm6934 = vcmp.gt.s32.totalorder 0, %v6933
  %v6935 = vsel %vm6934, 0, %v6933
  %v6936 = vsub.s32 32, %v6935
  %v6937 = vshll.u32 %v6928, %v6935
  %v6938 = vshrl.u32 %v6920, %v6936
  %v6939 = vor.u32 %v6937, %v6938
  %v6940 = vsub.s32 4294967266, %v6935
  %v6941 = vadd.s32 %v6940, 127
  %v6942 = vshll.u32 %v6941, 23
  %v6943 = vor.u32 4788187, %v6942
  %v6944 = vand.u32 2147483647, %v6943
  %v6946 = vcvt.s32.f32 %v6939
  %v6947 = vmul.f32 %v6946, %v6944
  %v6948 = vxor.u32 %v6947, 2147483648
  %v6949 = vsel %vm6828, %v6948, %v6947
  %v6950 = vsub.s32 4, %v6926
  %v6951 = vsel %vm6828, %v6950, %v6926
  %v6952 = vsel %vm6827, %v118, %v6949
  %v6953 = vsel %vm6827, 0, %v6951
  %v6954 = vmul.f32 %v6952, %v6952
  %v6955 = vmul.f32 %v6954, -0.001358992
  %v6956 = vadd.f32 %v6955, 0.041655596
  %v6957 = vmul.f32 %v6954, %v6956
  %v6958 = vadd.f32 %v6957, -0.4999988
  %v6959 = vmul.f32 %v6954, %v6958
  %v6960 = vadd.f32 1.0, %v6959
  %v6961 = vmul.f32 %v6952, %v6952
  %v6962 = vmul.f32 %v6961, -0.00019511016
  %v6963 = vadd.f32 %v6962, 0.008332121
  %v6964 = vmul.f32 %v6961, %v6963
  %v6965 = vadd.f32 %v6964, -0.16666654
  %v6966 = vmul.f32 %v6961, %v6965
  %v6967 = vadd.f32 %v6966, 1.0
  %v6968 = vmul.f32 %v6967, %v6952
  %vm6969 = vweird.f32 %v118
  %v6970 = vand.u32 %v6953, 3
  %vm6971 = vcmp.lt.s32.totalorder %v6970, 2
  %vm6972 = vcmp.eq.s32.totalorder %v6970, 0
  %v6973 = vxor.u32 %v6968, 2147483648
  %v6974 = vsel %vm6972, %v6960, %v6973
  %vm6975 = vcmp.eq.s32.totalorder %v6970, 2
  %v6976 = vxor.u32 %v6960, 2147483648
  %v6977 = vsel %vm6975, %v6976, %v6968
  %v6978 = vsel %vm6971, %v6974, %v6977
  %v6979 = vsel %vm6969, nan, %v6978
  %v6980 = vand.u32 2147483647, %v123
  %vm6981 = vcmp.le.f32.partialorder %v6980, 0.7853982
  %vm6982 = vcmp.lt.s32.totalorder %v123, 0
  %v6983 = vand.u32 %v123, 2139095040
  %v6984 = vshrl.u32 %v6983, 23
  %v6985 = vsub.s32 %v6984, 127
  %v6986 = vand.u32 2147483647, %v123
  %v6987 = vand.u32 %v6986, 8388607
  %v6988 = vor.u32 %v6987, 8388608
  %v6989 = vsub.s32 0, %v6988
  %v6990 = vadd.s32 %v6985, 1
  %vm6991 = vcmp.gt.s32.totalorder %v6990, 0
  %v6992 = vsel %vm6991, %v6990, 0
  %v6993 = vshrl.u32 %v6992, 5
  %v6994 = vand.u32 %v6992, 31
  %v6995 = vsub.s32 32, %v6994
  %v6996 = vshrl.u32 683565275, %v6995
  %v6997 = vshll.u32 683565275, %v6994
  %v6998 = vshrl.u32 2475754826, %v6995
  %v6999 = vor.u32 %v6997, %v6998
  %v7000 = vshll.u32 2475754826, %v6994
  %v7001 = vshrl.u32 2131351028, %v6995
  %v7002 = vor.u32 %v7000, %v7001
  %v7003 = vshll.u32 2131351028, %v6994
  %v7004 = vshrl.u32 2102212464, %v6995
  %v7005 = vor.u32 %v7003, %v7004
  %v7006 = vshll.u32 2102212464, %v6994
  %v7007 = vshrl.u32 920167782, %v6995
  %v7008 = vor.u32 %v7006, %v7007
  %v7009 = vshll.u32 920167782, %v6994
  %v7010 = vshrl.u32 1326507024, %v6995
  %v7011 = vor.u32 %v7009, %v7010
  %vm7012 = vcmp.lt.s32.totalorder %v6993, 1
  %vm7013 = vcmp.lt.s32.totalorder %v6993, 2
  %vm7014 = vcmp.lt.s32.totalorder %v6993, 3
  %vm7015 = vcmp.lt.s32.totalorder %v6993, 4
  %v7016 = vsel %vm7012, %v6996, %v6999
  %v7017 = vsel %vm7015, %v7005, 2102212464
  %v7018 = vsel %vm7014, %v7002, %v7017
  %v7019 = vsel %vm7013, %v7016, %v7018
  %v7020 = vsel %vm7012, %v6999, %v7002
  %v7021 = vsel %vm7015, %v7008, 920167782
  %v7022 = vsel %vm7014, %v7005, %v7021
  %v7023 = vsel %vm7013, %v7020, %v7022
  %v7024 = vsel %vm7012, %v7002, %v7005
  %v7025 = vsel %vm7015, %v7011, 1326507024
  %v7026 = vsel %vm7014, %v7008, %v7025
  %v7027 = vsel %vm7013, %v7024, %v7026
  %v7028 = vshll.u32 %v6988, 8
  %v7029 = vand.u32 %v7028, 65535
  %v7030 = vshrl.u32 %v7028, 16
  %v7031 = vand.u32 %v7027, 65535
  %v7032 = vshrl.u32 %v7027, 16
  %v7033 = vmul.u32 %v7029, %v7031
  %v7034 = vmul.u32 %v7029, %v7032
  %v7035 = vmul.u32 %v7030, %v7031
  %v7036 = vmul.u32 %v7030, %v7032
  %v7037 = vshll.u32 %v7034, 16
  %v7038 = vshrl.u32 %v7034, 16
  %v7039 = vshll.u32 %v7035, 16
  %v7040 = vshrl.u32 %v7035, 16
  %vm7041 = vc.u32 %v7033, %v7037
  %v7042 = vsel %vm7041, 1, 0
  %v7043 = vadd.s32 %v7033, %v7037
  %v7044 = vadd.s32 %v7036, %v7042
  %vm7045 = vc.u32 %v7043, %v7039
  %v7046 = vsel %vm7045, 1, 0
  %v7047 = vadd.s32 %v7043, %v7039
  %v7048 = vadd.s32 %v7044, %v7046
  %v7049 = vadd.s32 %v7048, %v7038
  %v7050 = vadd.s32 %v7049, %v7040
  %v7051 = vand.u32 %v7028, 65535
  %v7052 = vshrl.u32 %v7028, 16
  %v7053 = vand.u32 %v7023, 65535
  %v7054 = vshrl.u32 %v7023, 16
  %v7055 = vmul.u32 %v7051, %v7053
  %v7056 = vmul.u32 %v7051, %v7054
  %v7057 = vmul.u32 %v7052, %v7053
  %v7058 = vmul.u32 %v7052, %v7054
  %v7059 = vshll.u32 %v7056, 16
  %v7060 = vshrl.u32 %v7056, 16
  %v7061 = vshll.u32 %v7057, 16
  %v7062 = vshrl.u32 %v7057, 16
  %vm7063 = vc.u32 %v7055, %v7059
  %v7064 = vsel %vm7063, 1, 0
  %v7065 = vadd.s32 %v7055, %v7059
  %v7066 = vadd.s32 %v7058, %v7064
  %vm7067 = vc.u32 %v7065, %v7061
  %v7068 = vsel %vm7067, 1, 0
  %v7069 = vadd.s32 %v7065, %v7061
  %v7070 = vadd.s32 %v7066, %v7068
  %v7071 = vadd.s32 %v7070, %v7060
  %v7072 = vadd.s32 %v7071, %v7062
  %v7073 = vmul.u32 %v7028, %v7019
  %v7074 = vadd.s32 %v7050, %v7069
  %vm7075 = vc.u32 %v7050, %v7069
  %v7076 = vadd.s32 %v7072, 1
  %v7077 = vsel %vm7075, %v7076, %v7072
  %v7078 = vadd.s32 %v7073, %v7077
  %v7079 = vadd.s32 %v7078, 536870912
  %v7080 = vshrl.u32 %v7079, 30
  %v7081 = vshll.u32 %v7080, 30
  %v7082 = vsub.s32 %v7078, %v7081
  %vm7083 = vcmp.lt.s32.totalorder %v7082, 0
  %v7084 = vsub.s32 0, %v7082
  %v7085 = vsel %vm7083, %v7084, %v7082
  %v7086 = vclz %v7085
  %v7087 = vsub.s32 %v7086, 2
  %vm7088 = vcmp.gt.s32.totalorder 0, %v7087
  %v7089 = vsel %vm7088, 0, %v7087
  %v7090 = vsub.s32 32, %v7089
  %v7091 = vshll.u32 %v7082, %v7089
  %v7092 = vshrl.u32 %v7074, %v7090
  %v7093 = vor.u32 %v7091, %v7092
  %v7094 = vsub.s32 4294967266, %v7089
  %v7095 = vadd.s32 %v7094, 127
  %v7096 = vshll.u32 %v7095, 23
  %v7097 = vor.u32 4788187, %v7096
  %v7098 = vand.u32 2147483647, %v7097
  %v7100 = vcvt.s32.f32 %v7093
  %v7101 = vmul.f32 %v7100, %v7098
  %v7102 = vxor.u32 %v7101, 2147483648
  %v7103 = vsel %vm6982, %v7102, %v7101
  %v7104 = vsub.s32 4, %v7080
  %v7105 = vsel %vm6982, %v7104, %v7080
  %v7106 = vsel %vm6981, %v123, %v7103
  %v7107 = vsel %vm6981, 0, %v7105
  %v7108 = vmul.f32 %v7106, %v7106
  %v7109 = vmul.f32 %v7108, -0.001358992
  %v7110 = vadd.f32 %v7109, 0.041655596
  %v7111 = vmul.f32 %v7108, %v7110
  %v7112 = vadd.f32 %v7111, -0.4999988
  %v7113 = vmul.f32 %v7108, %v7112
  %v7114 = vadd.f32 1.0, %v7113
  %v7115 = vmul.f32 %v7106, %v7106
  %v7116 = vmul.f32 %v7115, -0.00019511016
  %v7117 = vadd.f32 %v7116, 0.008332121
  %v7118 = vmul.f32 %v7115, %v7117
  %v7119 = vadd.f32 %v7118, -0.16666654
  %v7120 = vmul.f32 %v7115, %v7119
  %v7121 = vadd.f32 %v7120, 1.0
  %v7122 = vmul.f32 %v7121, %v7106
  %vm7123 = vweird.f32 %v123
  %v7124 = vand.u32 %v7107, 3
  %vm7125 = vcmp.lt.s32.totalorder %v7124, 2
  %vm7126 = vcmp.eq.s32.totalorder %v7124, 0
  %v7127 = vxor.u32 %v7122, 2147483648
  %v7128 = vsel %vm7126, %v7114, %v7127
  %vm7129 = vcmp.eq.s32.totalorder %v7124, 2
  %v7130 = vxor.u32 %v7114, 2147483648
  %v7131 = vsel %vm7129, %v7130, %v7122
  %v7132 = vsel %vm7125, %v7128, %v7131
  %v7133 = vsel %vm7123, nan, %v7132
  %v7134 = vand.u32 2147483647, %v128
  %vm7135 = vcmp.le.f32.partialorder %v7134, 0.7853982
  %vm7136 = vcmp.lt.s32.totalorder %v128, 0
  %v7137 = vand.u32 %v128, 2139095040
  %v7138 = vshrl.u32 %v7137, 23
  %v7139 = vsub.s32 %v7138, 127
  %v7140 = vand.u32 2147483647, %v128
  %v7141 = vand.u32 %v7140, 8388607
  %v7142 = vor.u32 %v7141, 8388608
  %v7143 = vsub.s32 0, %v7142
  %v7144 = vadd.s32 %v7139, 1
  %vm7145 = vcmp.gt.s32.totalorder %v7144, 0
  %v7146 = vsel %vm7145, %v7144, 0
  %v7147 = vshrl.u32 %v7146, 5
  %v7148 = vand.u32 %v7146, 31
  %v7149 = vsub.s32 32, %v7148
  %v7150 = vshrl.u32 683565275, %v7149
  %v7151 = vshll.u32 683565275, %v7148
  %v7152 = vshrl.u32 2475754826, %v7149
  %v7153 = vor.u32 %v7151, %v7152
  %v7154 = vshll.u32 2475754826, %v7148
  %v7155 = vshrl.u32 2131351028, %v7149
  %v7156 = vor.u32 %v7154, %v7155
  %v7157 = vshll.u32 2131351028, %v7148
  %v7158 = vshrl.u32 2102212464, %v7149
  %v7159 = vor.u32 %v7157, %v7158
  %v7160 = vshll.u32 2102212464, %v7148
  %v7161 = vshrl.u32 920167782, %v7149
  %v7162 = vor.u32 %v7160, %v7161
  %v7163 = vshll.u32 920167782, %v7148
  %v7164 = vshrl.u32 1326507024, %v7149
  %v7165 = vor.u32 %v7163, %v7164
  %vm7166 = vcmp.lt.s32.totalorder %v7147, 1
  %vm7167 = vcmp.lt.s32.totalorder %v7147, 2
  %vm7168 = vcmp.lt.s32.totalorder %v7147, 3
  %vm7169 = vcmp.lt.s32.totalorder %v7147, 4
  %v7170 = vsel %vm7166, %v7150, %v7153
  %v7171 = vsel %vm7169, %v7159, 2102212464
  %v7172 = vsel %vm7168, %v7156, %v7171
  %v7173 = vsel %vm7167, %v7170, %v7172
  %v7174 = vsel %vm7166, %v7153, %v7156
  %v7175 = vsel %vm7169, %v7162, 920167782
  %v7176 = vsel %vm7168, %v7159, %v7175
  %v7177 = vsel %vm7167, %v7174, %v7176
  %v7178 = vsel %vm7166, %v7156, %v7159
  %v7179 = vsel %vm7169, %v7165, 1326507024
  %v7180 = vsel %vm7168, %v7162, %v7179
  %v7181 = vsel %vm7167, %v7178, %v7180
  %v7182 = vshll.u32 %v7142, 8
  %v7183 = vand.u32 %v7182, 65535
  %v7184 = vshrl.u32 %v7182, 16
  %v7185 = vand.u32 %v7181, 65535
  %v7186 = vshrl.u32 %v7181, 16
  %v7187 = vmul.u32 %v7183, %v7185
  %v7188 = vmul.u32 %v7183, %v7186
  %v7189 = vmul.u32 %v7184, %v7185
  %v7190 = vmul.u32 %v7184, %v7186
  %v7191 = vshll.u32 %v7188, 16
  %v7192 = vshrl.u32 %v7188, 16
  %v7193 = vshll.u32 %v7189, 16
  %v7194 = vshrl.u32 %v7189, 16
  %vm7195 = vc.u32 %v7187, %v7191
  %v7196 = vsel %vm7195, 1, 0
  %v7197 = vadd.s32 %v7187, %v7191
  %v7198 = vadd.s32 %v7190, %v7196
  %vm7199 = vc.u32 %v7197, %v7193
  %v7200 = vsel %vm7199, 1, 0
  %v7201 = vadd.s32 %v7197, %v7193
  %v7202 = vadd.s32 %v7198, %v7200
  %v7203 = vadd.s32 %v7202, %v7192
  %v7204 = vadd.s32 %v7203, %v7194
  %v7205 = vand.u32 %v7182, 65535
  %v7206 = vshrl.u32 %v7182, 16
  %v7207 = vand.u32 %v7177, 65535
  %v7208 = vshrl.u32 %v7177, 16
  %v7209 = vmul.u32 %v7205, %v7207
  %v7210 = vmul.u32 %v7205, %v7208
  %v7211 = vmul.u32 %v7206, %v7207
  %v7212 = vmul.u32 %v7206, %v7208
  %v7213 = vshll.u32 %v7210, 16
  %v7214 = vshrl.u32 %v7210, 16
  %v7215 = vshll.u32 %v7211, 16
  %v7216 = vshrl.u32 %v7211, 16
  %vm7217 = vc.u32 %v7209, %v7213
  %v7218 = vsel %vm7217, 1, 0
  %v7219 = vadd.s32 %v7209, %v7213
  %v7220 = vadd.s32 %v7212, %v7218
  %vm7221 = vc.u32 %v7219, %v7215
  %v7222 = vsel %vm7221, 1, 0
  %v7223 = vadd.s32 %v7219, %v7215
  %v7224 = vadd.s32 %v7220, %v7222
  %v7225 = vadd.s32 %v7224, %v7214
  %v7226 = vadd.s32 %v7225, %v7216
  %v7227 = vmul.u32 %v7182, %v7173
  %v7228 = vadd.s32 %v7204, %v7223
  %vm7229 = vc.u32 %v7204, %v7223
  %v7230 = vadd.s32 %v7226, 1
  %v7231 = vsel %vm7229, %v7230, %v7226
  %v7232 = vadd.s32 %v7227, %v7231
  %v7233 = vadd.s32 %v7232, 536870912
  %v7234 = vshrl.u32 %v7233, 30
  %v7235 = vshll.u32 %v7234, 30
  %v7236 = vsub.s32 %v7232, %v7235
  %vm7237 = vcmp.lt.s32.totalorder %v7236, 0
  %v7238 = vsub.s32 0, %v7236
  %v7239 = vsel %vm7237, %v7238, %v7236
  %v7240 = vclz %v7239
  %v7241 = vsub.s32 %v7240, 2
  %vm7242 = vcmp.gt.s32.totalorder 0, %v7241
  %v7243 = vsel %vm7242, 0, %v7241
  %v7244 = vsub.s32 32, %v7243
  %v7245 = vshll.u32 %v7236, %v7243
  %v7246 = vshrl.u32 %v7228, %v7244
  %v7247 = vor.u32 %v7245, %v7246
  %v7248 = vsub.s32 4294967266, %v7243
  %v7249 = vadd.s32 %v7248, 127
  %v7250 = vshll.u32 %v7249, 23
  %v7251 = vor.u32 4788187, %v7250
  %v7252 = vand.u32 2147483647, %v7251
  %v7254 = vcvt.s32.f32 %v7247
  %v7255 = vmul.f32 %v7254, %v7252
  %v7256 = vxor.u32 %v7255, 2147483648
  %v7257 = vsel %vm7136, %v7256, %v7255
  %v7258 = vsub.s32 4, %v7234
  %v7259 = vsel %vm7136, %v7258, %v7234
  %v7260 = vsel %vm7135, %v128, %v7257
  %v7261 = vsel %vm7135, 0, %v7259
  %v7262 = vmul.f32 %v7260, %v7260
  %v7263 = vmul.f32 %v7262, -0.001358992
  %v7264 = vadd.f32 %v7263, 0.041655596
  %v7265 = vmul.f32 %v7262, %v7264
  %v7266 = vadd.f32 %v7265, -0.4999988
  %v7267 = vmul.f32 %v7262, %v7266
  %v7268 = vadd.f32 1.0, %v7267
  %v7269 = vmul.f32 %v7260, %v7260
  %v7270 = vmul.f32 %v7269, -0.00019511016
  %v7271 = vadd.f32 %v7270, 0.008332121
  %v7272 = vmul.f32 %v7269, %v7271
  %v7273 = vadd.f32 %v7272, -0.16666654
  %v7274 = vmul.f32 %v7269, %v7273
  %v7275 = vadd.f32 %v7274, 1.0
  %v7276 = vmul.f32 %v7275, %v7260
  %vm7277 = vweird.f32 %v128
  %v7278 = vand.u32 %v7261, 3
  %vm7279 = vcmp.lt.s32.totalorder %v7278, 2
  %vm7280 = vcmp.eq.s32.totalorder %v7278, 0
  %v7281 = vxor.u32 %v7276, 2147483648
  %v7282 = vsel %vm7280, %v7268, %v7281
  %vm7283 = vcmp.eq.s32.totalorder %v7278, 2
  %v7284 = vxor.u32 %v7268, 2147483648
  %v7285 = vsel %vm7283, %v7284, %v7276
  %v7286 = vsel %vm7279, %v7282, %v7285
  %v7287 = vsel %vm7277, nan, %v7286
  %v7288 = vand.u32 2147483647, %v133
  %vm7289 = vcmp.le.f32.partialorder %v7288, 0.7853982
  %vm7290 = vcmp.lt.s32.totalorder %v133, 0
  %v7291 = vand.u32 %v133, 2139095040
  %v7292 = vshrl.u32 %v7291, 23
  %v7293 = vsub.s32 %v7292, 127
  %v7294 = vand.u32 2147483647, %v133
  %v7295 = vand.u32 %v7294, 8388607
  %v7296 = vor.u32 %v7295, 8388608
  %v7297 = vsub.s32 0, %v7296
  %v7298 = vadd.s32 %v7293, 1
  %vm7299 = vcmp.gt.s32.totalorder %v7298, 0
  %v7300 = vsel %vm7299, %v7298, 0
  %v7301 = vshrl.u32 %v7300, 5
  %v7302 = vand.u32 %v7300, 31
  %v7303 = vsub.s32 32, %v7302
  %v7304 = vshrl.u32 683565275, %v7303
  %v7305 = vshll.u32 683565275, %v7302
  %v7306 = vshrl.u32 2475754826, %v7303
  %v7307 = vor.u32 %v7305, %v7306
  %v7308 = vshll.u32 2475754826, %v7302
  %v7309 = vshrl.u32 2131351028, %v7303
  %v7310 = vor.u32 %v7308, %v7309
  %v7311 = vshll.u32 2131351028, %v7302
  %v7312 = vshrl.u32 2102212464, %v7303
  %v7313 = vor.u32 %v7311, %v7312
  %v7314 = vshll.u32 2102212464, %v7302
  %v7315 = vshrl.u32 920167782, %v7303
  %v7316 = vor.u32 %v7314, %v7315
  %v7317 = vshll.u32 920167782, %v7302
  %v7318 = vshrl.u32 1326507024, %v7303
  %v7319 = vor.u32 %v7317, %v7318
  %vm7320 = vcmp.lt.s32.totalorder %v7301, 1
  %vm7321 = vcmp.lt.s32.totalorder %v7301, 2
  %vm7322 = vcmp.lt.s32.totalorder %v7301, 3
  %vm7323 = vcmp.lt.s32.totalorder %v7301, 4
  %v7324 = vsel %vm7320, %v7304, %v7307
  %v7325 = vsel %vm7323, %v7313, 2102212464
  %v7326 = vsel %vm7322, %v7310, %v7325
  %v7327 = vsel %vm7321, %v7324, %v7326
  %v7328 = vsel %vm7320, %v7307, %v7310
  %v7329 = vsel %vm7323, %v7316, 920167782
  %v7330 = vsel %vm7322, %v7313, %v7329
  %v7331 = vsel %vm7321, %v7328, %v7330
  %v7332 = vsel %vm7320, %v7310, %v7313
  %v7333 = vsel %vm7323, %v7319, 1326507024
  %v7334 = vsel %vm7322, %v7316, %v7333
  %v7335 = vsel %vm7321, %v7332, %v7334
  %v7336 = vshll.u32 %v7296, 8
  %v7337 = vand.u32 %v7336, 65535
  %v7338 = vshrl.u32 %v7336, 16
  %v7339 = vand.u32 %v7335, 65535
  %v7340 = vshrl.u32 %v7335, 16
  %v7341 = vmul.u32 %v7337, %v7339
  %v7342 = vmul.u32 %v7337, %v7340
  %v7343 = vmul.u32 %v7338, %v7339
  %v7344 = vmul.u32 %v7338, %v7340
  %v7345 = vshll.u32 %v7342, 16
  %v7346 = vshrl.u32 %v7342, 16
  %v7347 = vshll.u32 %v7343, 16
  %v7348 = vshrl.u32 %v7343, 16
  %vm7349 = vc.u32 %v7341, %v7345
  %v7350 = vsel %vm7349, 1, 0
  %v7351 = vadd.s32 %v7341, %v7345
  %v7352 = vadd.s32 %v7344, %v7350
  %vm7353 = vc.u32 %v7351, %v7347
  %v7354 = vsel %vm7353, 1, 0
  %v7355 = vadd.s32 %v7351, %v7347
  %v7356 = vadd.s32 %v7352, %v7354
  %v7357 = vadd.s32 %v7356, %v7346
  %v7358 = vadd.s32 %v7357, %v7348
  %v7359 = vand.u32 %v7336, 65535
  %v7360 = vshrl.u32 %v7336, 16
  %v7361 = vand.u32 %v7331, 65535
  %v7362 = vshrl.u32 %v7331, 16
  %v7363 = vmul.u32 %v7359, %v7361
  %v7364 = vmul.u32 %v7359, %v7362
  %v7365 = vmul.u32 %v7360, %v7361
  %v7366 = vmul.u32 %v7360, %v7362
  %v7367 = vshll.u32 %v7364, 16
  %v7368 = vshrl.u32 %v7364, 16
  %v7369 = vshll.u32 %v7365, 16
  %v7370 = vshrl.u32 %v7365, 16
  %vm7371 = vc.u32 %v7363, %v7367
  %v7372 = vsel %vm7371, 1, 0
  %v7373 = vadd.s32 %v7363, %v7367
  %v7374 = vadd.s32 %v7366, %v7372
  %vm7375 = vc.u32 %v7373, %v7369
  %v7376 = vsel %vm7375, 1, 0
  %v7377 = vadd.s32 %v7373, %v7369
  %v7378 = vadd.s32 %v7374, %v7376
  %v7379 = vadd.s32 %v7378, %v7368
  %v7380 = vadd.s32 %v7379, %v7370
  %v7381 = vmul.u32 %v7336, %v7327
  %v7382 = vadd.s32 %v7358, %v7377
  %vm7383 = vc.u32 %v7358, %v7377
  %v7384 = vadd.s32 %v7380, 1
  %v7385 = vsel %vm7383, %v7384, %v7380
  %v7386 = vadd.s32 %v7381, %v7385
  %v7387 = vadd.s32 %v7386, 536870912
  %v7388 = vshrl.u32 %v7387, 30
  %v7389 = vshll.u32 %v7388, 30
  %v7390 = vsub.s32 %v7386, %v7389
  %vm7391 = vcmp.lt.s32.totalorder %v7390, 0
  %v7392 = vsub.s32 0, %v7390
  %v7393 = vsel %vm7391, %v7392, %v7390
  %v7394 = vclz %v7393
  %v7395 = vsub.s32 %v7394, 2
  %vm7396 = vcmp.gt.s32.totalorder 0, %v7395
  %v7397 = vsel %vm7396, 0, %v7395
  %v7398 = vsub.s32 32, %v7397
  %v7399 = vshll.u32 %v7390, %v7397
  %v7400 = vshrl.u32 %v7382, %v7398
  %v7401 = vor.u32 %v7399, %v7400
  %v7402 = vsub.s32 4294967266, %v7397
  %v7403 = vadd.s32 %v7402, 127
  %v7404 = vshll.u32 %v7403, 23
  %v7405 = vor.u32 4788187, %v7404
  %v7406 = vand.u32 2147483647, %v7405
  %v7408 = vcvt.s32.f32 %v7401
  %v7409 = vmul.f32 %v7408, %v7406
  %v7410 = vxor.u32 %v7409, 2147483648
  %v7411 = vsel %vm7290, %v7410, %v7409
  %v7412 = vsub.s32 4, %v7388
  %v7413 = vsel %vm7290, %v7412, %v7388
  %v7414 = vsel %vm7289, %v133, %v7411
  %v7415 = vsel %vm7289, 0, %v7413
  %v7416 = vmul.f32 %v7414, %v7414
  %v7417 = vmul.f32 %v7416, -0.001358992
  %v7418 = vadd.f32 %v7417, 0.041655596
  %v7419 = vmul.f32 %v7416, %v7418
  %v7420 = vadd.f32 %v7419, -0.4999988
  %v7421 = vmul.f32 %v7416, %v7420
  %v7422 = vadd.f32 1.0, %v7421
  %v7423 = vmul.f32 %v7414, %v7414
  %v7424 = vmul.f32 %v7423, -0.00019511016
  %v7425 = vadd.f32 %v7424, 0.008332121
  %v7426 = vmul.f32 %v7423, %v7425
  %v7427 = vadd.f32 %v7426, -0.16666654
  %v7428 = vmul.f32 %v7423, %v7427
  %v7429 = vadd.f32 %v7428, 1.0
  %v7430 = vmul.f32 %v7429, %v7414
  %vm7431 = vweird.f32 %v133
  %v7432 = vand.u32 %v7415, 3
  %vm7433 = vcmp.lt.s32.totalorder %v7432, 2
  %vm7434 = vcmp.eq.s32.totalorder %v7432, 0
  %v7435 = vxor.u32 %v7430, 2147483648
  %v7436 = vsel %vm7434, %v7422, %v7435
  %vm7437 = vcmp.eq.s32.totalorder %v7432, 2
  %v7438 = vxor.u32 %v7422, 2147483648
  %v7439 = vsel %vm7437, %v7438, %v7430
  %v7440 = vsel %vm7433, %v7436, %v7439
  %v7441 = vsel %vm7431, nan, %v7440
  %v7442 = vand.u32 2147483647, %v138
  %vm7443 = vcmp.le.f32.partialorder %v7442, 0.7853982
  %vm7444 = vcmp.lt.s32.totalorder %v138, 0
  %v7445 = vand.u32 %v138, 2139095040
  %v7446 = vshrl.u32 %v7445, 23
  %v7447 = vsub.s32 %v7446, 127
  %v7448 = vand.u32 2147483647, %v138
  %v7449 = vand.u32 %v7448, 8388607
  %v7450 = vor.u32 %v7449, 8388608
  %v7451 = vsub.s32 0, %v7450
  %v7452 = vadd.s32 %v7447, 1
  %vm7453 = vcmp.gt.s32.totalorder %v7452, 0
  %v7454 = vsel %vm7453, %v7452, 0
  %v7455 = vshrl.u32 %v7454, 5
  %v7456 = vand.u32 %v7454, 31
  %v7457 = vsub.s32 32, %v7456
  %v7458 = vshrl.u32 683565275, %v7457
  %v7459 = vshll.u32 683565275, %v7456
  %v7460 = vshrl.u32 2475754826, %v7457
  %v7461 = vor.u32 %v7459, %v7460
  %v7462 = vshll.u32 2475754826, %v7456
  %v7463 = vshrl.u32 2131351028, %v7457
  %v7464 = vor.u32 %v7462, %v7463
  %v7465 = vshll.u32 2131351028, %v7456
  %v7466 = vshrl.u32 2102212464, %v7457
  %v7467 = vor.u32 %v7465, %v7466
  %v7468 = vshll.u32 2102212464, %v7456
  %v7469 = vshrl.u32 920167782, %v7457
  %v7470 = vor.u32 %v7468, %v7469
  %v7471 = vshll.u32 920167782, %v7456
  %v7472 = vshrl.u32 1326507024, %v7457
  %v7473 = vor.u32 %v7471, %v7472
  %vm7474 = vcmp.lt.s32.totalorder %v7455, 1
  %vm7475 = vcmp.lt.s32.totalorder %v7455, 2
  %vm7476 = vcmp.lt.s32.totalorder %v7455, 3
  %vm7477 = vcmp.lt.s32.totalorder %v7455, 4
  %v7478 = vsel %vm7474, %v7458, %v7461
  %v7479 = vsel %vm7477, %v7467, 2102212464
  %v7480 = vsel %vm7476, %v7464, %v7479
  %v7481 = vsel %vm7475, %v7478, %v7480
  %v7482 = vsel %vm7474, %v7461, %v7464
  %v7483 = vsel %vm7477, %v7470, 920167782
  %v7484 = vsel %vm7476, %v7467, %v7483
  %v7485 = vsel %vm7475, %v7482, %v7484
  %v7486 = vsel %vm7474, %v7464, %v7467
  %v7487 = vsel %vm7477, %v7473, 1326507024
  %v7488 = vsel %vm7476, %v7470, %v7487
  %v7489 = vsel %vm7475, %v7486, %v7488
  %v7490 = vshll.u32 %v7450, 8
  %v7491 = vand.u32 %v7490, 65535
  %v7492 = vshrl.u32 %v7490, 16
  %v7493 = vand.u32 %v7489, 65535
  %v7494 = vshrl.u32 %v7489, 16
  %v7495 = vmul.u32 %v7491, %v7493
  %v7496 = vmul.u32 %v7491, %v7494
  %v7497 = vmul.u32 %v7492, %v7493
  %v7498 = vmul.u32 %v7492, %v7494
  %v7499 = vshll.u32 %v7496, 16
  %v7500 = vshrl.u32 %v7496, 16
  %v7501 = vshll.u32 %v7497, 16
  %v7502 = vshrl.u32 %v7497, 16
  %vm7503 = vc.u32 %v7495, %v7499
  %v7504 = vsel %vm7503, 1, 0
  %v7505 = vadd.s32 %v7495, %v7499
  %v7506 = vadd.s32 %v7498, %v7504
  %vm7507 = vc.u32 %v7505, %v7501
  %v7508 = vsel %vm7507, 1, 0
  %v7509 = vadd.s32 %v7505, %v7501
  %v7510 = vadd.s32 %v7506, %v7508
  %v7511 = vadd.s32 %v7510, %v7500
  %v7512 = vadd.s32 %v7511, %v7502
  %v7513 = vand.u32 %v7490, 65535
  %v7514 = vshrl.u32 %v7490, 16
  %v7515 = vand.u32 %v7485, 65535
  %v7516 = vshrl.u32 %v7485, 16
  %v7517 = vmul.u32 %v7513, %v7515
  %v7518 = vmul.u32 %v7513, %v7516
  %v7519 = vmul.u32 %v7514, %v7515
  %v7520 = vmul.u32 %v7514, %v7516
  %v7521 = vshll.u32 %v7518, 16
  %v7522 = vshrl.u32 %v7518, 16
  %v7523 = vshll.u32 %v7519, 16
  %v7524 = vshrl.u32 %v7519, 16
  %vm7525 = vc.u32 %v7517, %v7521
  %v7526 = vsel %vm7525, 1, 0
  %v7527 = vadd.s32 %v7517, %v7521
  %v7528 = vadd.s32 %v7520, %v7526
  %vm7529 = vc.u32 %v7527, %v7523
  %v7530 = vsel %vm7529, 1, 0
  %v7531 = vadd.s32 %v7527, %v7523
  %v7532 = vadd.s32 %v7528, %v7530
  %v7533 = vadd.s32 %v7532, %v7522
  %v7534 = vadd.s32 %v7533, %v7524
  %v7535 = vmul.u32 %v7490, %v7481
  %v7536 = vadd.s32 %v7512, %v7531
  %vm7537 = vc.u32 %v7512, %v7531
  %v7538 = vadd.s32 %v7534, 1
  %v7539 = vsel %vm7537, %v7538, %v7534
  %v7540 = vadd.s32 %v7535, %v7539
  %v7541 = vadd.s32 %v7540, 536870912
  %v7542 = vshrl.u32 %v7541, 30
  %v7543 = vshll.u32 %v7542, 30
  %v7544 = vsub.s32 %v7540, %v7543
  %vm7545 = vcmp.lt.s32.totalorder %v7544, 0
  %v7546 = vsub.s32 0, %v7544
  %v7547 = vsel %vm7545, %v7546, %v7544
  %v7548 = vclz %v7547
  %v7549 = vsub.s32 %v7548, 2
  %vm7550 = vcmp.gt.s32.totalorder 0, %v7549
  %v7551 = vsel %vm7550, 0, %v7549
  %v7552 = vsub.s32 32, %v7551
  %v7553 = vshll.u32 %v7544, %v7551
  %v7554 = vshrl.u32 %v7536, %v7552
  %v7555 = vor.u32 %v7553, %v7554
  %v7556 = vsub.s32 4294967266, %v7551
  %v7557 = vadd.s32 %v7556, 127
  %v7558 = vshll.u32 %v7557, 23
  %v7559 = vor.u32 4788187, %v7558
  %v7560 = vand.u32 2147483647, %v7559
  %v7562 = vcvt.s32.f32 %v7555
  %v7563 = vmul.f32 %v7562, %v7560
  %v7564 = vxor.u32 %v7563, 2147483648
  %v7565 = vsel %vm7444, %v7564, %v7563
  %v7566 = vsub.s32 4, %v7542
  %v7567 = vsel %vm7444, %v7566, %v7542
  %v7568 = vsel %vm7443, %v138, %v7565
  %v7569 = vsel %vm7443, 0, %v7567
  %v7570 = vmul.f32 %v7568, %v7568
  %v7571 = vmul.f32 %v7570, -0.001358992
  %v7572 = vadd.f32 %v7571, 0.041655596
  %v7573 = vmul.f32 %v7570, %v7572
  %v7574 = vadd.f32 %v7573, -0.4999988
  %v7575 = vmul.f32 %v7570, %v7574
  %v7576 = vadd.f32 1.0, %v7575
  %v7577 = vmul.f32 %v7568, %v7568
  %v7578 = vmul.f32 %v7577, -0.00019511016
  %v7579 = vadd.f32 %v7578, 0.008332121
  %v7580 = vmul.f32 %v7577, %v7579
  %v7581 = vadd.f32 %v7580, -0.16666654
  %v7582 = vmul.f32 %v7577, %v7581
  %v7583 = vadd.f32 %v7582, 1.0
  %v7584 = vmul.f32 %v7583, %v7568
  %vm7585 = vweird.f32 %v138
  %v7586 = vand.u32 %v7569, 3
  %vm7587 = vcmp.lt.s32.totalorder %v7586, 2
  %vm7588 = vcmp.eq.s32.totalorder %v7586, 0
  %v7589 = vxor.u32 %v7584, 2147483648
  %v7590 = vsel %vm7588, %v7576, %v7589
  %vm7591 = vcmp.eq.s32.totalorder %v7586, 2
  %v7592 = vxor.u32 %v7576, 2147483648
  %v7593 = vsel %vm7591, %v7592, %v7584
  %v7594 = vsel %vm7587, %v7590, %v7593
  %v7595 = vsel %vm7585, nan, %v7594
  %v7596 = vand.u32 2147483647, %v143
  %vm7597 = vcmp.le.f32.partialorder %v7596, 0.7853982
  %vm7598 = vcmp.lt.s32.totalorder %v143, 0
  %v7599 = vand.u32 %v143, 2139095040
  %v7600 = vshrl.u32 %v7599, 23
  %v7601 = vsub.s32 %v7600, 127
  %v7602 = vand.u32 2147483647, %v143
  %v7603 = vand.u32 %v7602, 8388607
  %v7604 = vor.u32 %v7603, 8388608
  %v7605 = vsub.s32 0, %v7604
  %v7606 = vadd.s32 %v7601, 1
  %vm7607 = vcmp.gt.s32.totalorder %v7606, 0
  %v7608 = vsel %vm7607, %v7606, 0
  %v7609 = vshrl.u32 %v7608, 5
  %v7610 = vand.u32 %v7608, 31
  %v7611 = vsub.s32 32, %v7610
  %v7612 = vshrl.u32 683565275, %v7611
  %v7613 = vshll.u32 683565275, %v7610
  %v7614 = vshrl.u32 2475754826, %v7611
  %v7615 = vor.u32 %v7613, %v7614
  %v7616 = vshll.u32 2475754826, %v7610
  %v7617 = vshrl.u32 2131351028, %v7611
  %v7618 = vor.u32 %v7616, %v7617
  %v7619 = vshll.u32 2131351028, %v7610
  %v7620 = vshrl.u32 2102212464, %v7611
  %v7621 = vor.u32 %v7619, %v7620
  %v7622 = vshll.u32 2102212464, %v7610
  %v7623 = vshrl.u32 920167782, %v7611
  %v7624 = vor.u32 %v7622, %v7623
  %v7625 = vshll.u32 920167782, %v7610
  %v7626 = vshrl.u32 1326507024, %v7611
  %v7627 = vor.u32 %v7625, %v7626
  %vm7628 = vcmp.lt.s32.totalorder %v7609, 1
  %vm7629 = vcmp.lt.s32.totalorder %v7609, 2
  %vm7630 = vcmp.lt.s32.totalorder %v7609, 3
  %vm7631 = vcmp.lt.s32.totalorder %v7609, 4
  %v7632 = vsel %vm7628, %v7612, %v7615
  %v7633 = vsel %vm7631, %v7621, 2102212464
  %v7634 = vsel %vm7630, %v7618, %v7633
  %v7635 = vsel %vm7629, %v7632, %v7634
  %v7636 = vsel %vm7628, %v7615, %v7618
  %v7637 = vsel %vm7631, %v7624, 920167782
  %v7638 = vsel %vm7630, %v7621, %v7637
  %v7639 = vsel %vm7629, %v7636, %v7638
  %v7640 = vsel %vm7628, %v7618, %v7621
  %v7641 = vsel %vm7631, %v7627, 1326507024
  %v7642 = vsel %vm7630, %v7624, %v7641
  %v7643 = vsel %vm7629, %v7640, %v7642
  %v7644 = vshll.u32 %v7604, 8
  %v7645 = vand.u32 %v7644, 65535
  %v7646 = vshrl.u32 %v7644, 16
  %v7647 = vand.u32 %v7643, 65535
  %v7648 = vshrl.u32 %v7643, 16
  %v7649 = vmul.u32 %v7645, %v7647
  %v7650 = vmul.u32 %v7645, %v7648
  %v7651 = vmul.u32 %v7646, %v7647
  %v7652 = vmul.u32 %v7646, %v7648
  %v7653 = vshll.u32 %v7650, 16
  %v7654 = vshrl.u32 %v7650, 16
  %v7655 = vshll.u32 %v7651, 16
  %v7656 = vshrl.u32 %v7651, 16
  %vm7657 = vc.u32 %v7649, %v7653
  %v7658 = vsel %vm7657, 1, 0
  %v7659 = vadd.s32 %v7649, %v7653
  %v7660 = vadd.s32 %v7652, %v7658
  %vm7661 = vc.u32 %v7659, %v7655
  %v7662 = vsel %vm7661, 1, 0
  %v7663 = vadd.s32 %v7659, %v7655
  %v7664 = vadd.s32 %v7660, %v7662
  %v7665 = vadd.s32 %v7664, %v7654
  %v7666 = vadd.s32 %v7665, %v7656
  %v7667 = vand.u32 %v7644, 65535
  %v7668 = vshrl.u32 %v7644, 16
  %v7669 = vand.u32 %v7639, 65535
  %v7670 = vshrl.u32 %v7639, 16
  %v7671 = vmul.u32 %v7667, %v7669
  %v7672 = vmul.u32 %v7667, %v7670
  %v7673 = vmul.u32 %v7668, %v7669
  %v7674 = vmul.u32 %v7668, %v7670
  %v7675 = vshll.u32 %v7672, 16
  %v7676 = vshrl.u32 %v7672, 16
  %v7677 = vshll.u32 %v7673, 16
  %v7678 = vshrl.u32 %v7673, 16
  %vm7679 = vc.u32 %v7671, %v7675
  %v7680 = vsel %vm7679, 1, 0
  %v7681 = vadd.s32 %v7671, %v7675
  %v7682 = vadd.s32 %v7674, %v7680
  %vm7683 = vc.u32 %v7681, %v7677
  %v7684 = vsel %vm7683, 1, 0
  %v7685 = vadd.s32 %v7681, %v7677
  %v7686 = vadd.s32 %v7682, %v7684
  %v7687 = vadd.s32 %v7686, %v7676
  %v7688 = vadd.s32 %v7687, %v7678
  %v7689 = vmul.u32 %v7644, %v7635
  %v7690 = vadd.s32 %v7666, %v7685
  %vm7691 = vc.u32 %v7666, %v7685
  %v7692 = vadd.s32 %v7688, 1
  %v7693 = vsel %vm7691, %v7692, %v7688
  %v7694 = vadd.s32 %v7689, %v7693
  %v7695 = vadd.s32 %v7694, 536870912
  %v7696 = vshrl.u32 %v7695, 30
  %v7697 = vshll.u32 %v7696, 30
  %v7698 = vsub.s32 %v7694, %v7697
  %vm7699 = vcmp.lt.s32.totalorder %v7698, 0
  %v7700 = vsub.s32 0, %v7698
  %v7701 = vsel %vm7699, %v7700, %v7698
  %v7702 = vclz %v7701
  %v7703 = vsub.s32 %v7702, 2
  %vm7704 = vcmp.gt.s32.totalorder 0, %v7703
  %v7705 = vsel %vm7704, 0, %v7703
  %v7706 = vsub.s32 32, %v7705
  %v7707 = vshll.u32 %v7698, %v7705
  %v7708 = vshrl.u32 %v7690, %v7706
  %v7709 = vor.u32 %v7707, %v7708
  %v7710 = vsub.s32 4294967266, %v7705
  %v7711 = vadd.s32 %v7710, 127
  %v7712 = vshll.u32 %v7711, 23
  %v7713 = vor.u32 4788187, %v7712
  %v7714 = vand.u32 2147483647, %v7713
  %v7716 = vcvt.s32.f32 %v7709
  %v7717 = vmul.f32 %v7716, %v7714
  %v7718 = vxor.u32 %v7717, 2147483648
  %v7719 = vsel %vm7598, %v7718, %v7717
  %v7720 = vsub.s32 4, %v7696
  %v7721 = vsel %vm7598, %v7720, %v7696
  %v7722 = vsel %vm7597, %v143, %v7719
  %v7723 = vsel %vm7597, 0, %v7721
  %v7724 = vmul.f32 %v7722, %v7722
  %v7725 = vmul.f32 %v7724, -0.001358992
  %v7726 = vadd.f32 %v7725, 0.041655596
  %v7727 = vmul.f32 %v7724, %v7726
  %v7728 = vadd.f32 %v7727, -0.4999988
  %v7729 = vmul.f32 %v7724, %v7728
  %v7730 = vadd.f32 1.0, %v7729
  %v7731 = vmul.f32 %v7722, %v7722
  %v7732 = vmul.f32 %v7731, -0.00019511016
  %v7733 = vadd.f32 %v7732, 0.008332121
  %v7734 = vmul.f32 %v7731, %v7733
  %v7735 = vadd.f32 %v7734, -0.16666654
  %v7736 = vmul.f32 %v7731, %v7735
  %v7737 = vadd.f32 %v7736, 1.0
  %v7738 = vmul.f32 %v7737, %v7722
  %vm7739 = vweird.f32 %v143
  %v7740 = vand.u32 %v7723, 3
  %vm7741 = vcmp.lt.s32.totalorder %v7740, 2
  %vm7742 = vcmp.eq.s32.totalorder %v7740, 0
  %v7743 = vxor.u32 %v7738, 2147483648
  %v7744 = vsel %vm7742, %v7730, %v7743
  %vm7745 = vcmp.eq.s32.totalorder %v7740, 2
  %v7746 = vxor.u32 %v7730, 2147483648
  %v7747 = vsel %vm7745, %v7746, %v7738
  %v7748 = vsel %vm7741, %v7744, %v7747
  %v7749 = vsel %vm7739, nan, %v7748
  %v7750 = vand.u32 2147483647, %v148
  %vm7751 = vcmp.le.f32.partialorder %v7750, 0.7853982
  %vm7752 = vcmp.lt.s32.totalorder %v148, 0
  %v7753 = vand.u32 %v148, 2139095040
  %v7754 = vshrl.u32 %v7753, 23
  %v7755 = vsub.s32 %v7754, 127
  %v7756 = vand.u32 2147483647, %v148
  %v7757 = vand.u32 %v7756, 8388607
  %v7758 = vor.u32 %v7757, 8388608
  %v7759 = vsub.s32 0, %v7758
  %v7760 = vadd.s32 %v7755, 1
  %vm7761 = vcmp.gt.s32.totalorder %v7760, 0
  %v7762 = vsel %vm7761, %v7760, 0
  %v7763 = vshrl.u32 %v7762, 5
  %v7764 = vand.u32 %v7762, 31
  %v7765 = vsub.s32 32, %v7764
  %v7766 = vshrl.u32 683565275, %v7765
  %v7767 = vshll.u32 683565275, %v7764
  %v7768 = vshrl.u32 2475754826, %v7765
  %v7769 = vor.u32 %v7767, %v7768
  %v7770 = vshll.u32 2475754826, %v7764
  %v7771 = vshrl.u32 2131351028, %v7765
  %v7772 = vor.u32 %v7770, %v7771
  %v7773 = vshll.u32 2131351028, %v7764
  %v7774 = vshrl.u32 2102212464, %v7765
  %v7775 = vor.u32 %v7773, %v7774
  %v7776 = vshll.u32 2102212464, %v7764
  %v7777 = vshrl.u32 920167782, %v7765
  %v7778 = vor.u32 %v7776, %v7777
  %v7779 = vshll.u32 920167782, %v7764
  %v7780 = vshrl.u32 1326507024, %v7765
  %v7781 = vor.u32 %v7779, %v7780
  %vm7782 = vcmp.lt.s32.totalorder %v7763, 1
  %vm7783 = vcmp.lt.s32.totalorder %v7763, 2
  %vm7784 = vcmp.lt.s32.totalorder %v7763, 3
  %vm7785 = vcmp.lt.s32.totalorder %v7763, 4
  %v7786 = vsel %vm7782, %v7766, %v7769
  %v7787 = vsel %vm7785, %v7775, 2102212464
  %v7788 = vsel %vm7784, %v7772, %v7787
  %v7789 = vsel %vm7783, %v7786, %v7788
  %v7790 = vsel %vm7782, %v7769, %v7772
  %v7791 = vsel %vm7785, %v7778, 920167782
  %v7792 = vsel %vm7784, %v7775, %v7791
  %v7793 = vsel %vm7783, %v7790, %v7792
  %v7794 = vsel %vm7782, %v7772, %v7775
  %v7795 = vsel %vm7785, %v7781, 1326507024
  %v7796 = vsel %vm7784, %v7778, %v7795
  %v7797 = vsel %vm7783, %v7794, %v7796
  %v7798 = vshll.u32 %v7758, 8
  %v7799 = vand.u32 %v7798, 65535
  %v7800 = vshrl.u32 %v7798, 16
  %v7801 = vand.u32 %v7797, 65535
  %v7802 = vshrl.u32 %v7797, 16
  %v7803 = vmul.u32 %v7799, %v7801
  %v7804 = vmul.u32 %v7799, %v7802
  %v7805 = vmul.u32 %v7800, %v7801
  %v7806 = vmul.u32 %v7800, %v7802
  %v7807 = vshll.u32 %v7804, 16
  %v7808 = vshrl.u32 %v7804, 16
  %v7809 = vshll.u32 %v7805, 16
  %v7810 = vshrl.u32 %v7805, 16
  %vm7811 = vc.u32 %v7803, %v7807
  %v7812 = vsel %vm7811, 1, 0
  %v7813 = vadd.s32 %v7803, %v7807
  %v7814 = vadd.s32 %v7806, %v7812
  %vm7815 = vc.u32 %v7813, %v7809
  %v7816 = vsel %vm7815, 1, 0
  %v7817 = vadd.s32 %v7813, %v7809
  %v7818 = vadd.s32 %v7814, %v7816
  %v7819 = vadd.s32 %v7818, %v7808
  %v7820 = vadd.s32 %v7819, %v7810
  %v7821 = vand.u32 %v7798, 65535
  %v7822 = vshrl.u32 %v7798, 16
  %v7823 = vand.u32 %v7793, 65535
  %v7824 = vshrl.u32 %v7793, 16
  %v7825 = vmul.u32 %v7821, %v7823
  %v7826 = vmul.u32 %v7821, %v7824
  %v7827 = vmul.u32 %v7822, %v7823
  %v7828 = vmul.u32 %v7822, %v7824
  %v7829 = vshll.u32 %v7826, 16
  %v7830 = vshrl.u32 %v7826, 16
  %v7831 = vshll.u32 %v7827, 16
  %v7832 = vshrl.u32 %v7827, 16
  %vm7833 = vc.u32 %v7825, %v7829
  %v7834 = vsel %vm7833, 1, 0
  %v7835 = vadd.s32 %v7825, %v7829
  %v7836 = vadd.s32 %v7828, %v7834
  %vm7837 = vc.u32 %v7835, %v7831
  %v7838 = vsel %vm7837, 1, 0
  %v7839 = vadd.s32 %v7835, %v7831
  %v7840 = vadd.s32 %v7836, %v7838
  %v7841 = vadd.s32 %v7840, %v7830
  %v7842 = vadd.s32 %v7841, %v7832
  %v7843 = vmul.u32 %v7798, %v7789
  %v7844 = vadd.s32 %v7820, %v7839
  %vm7845 = vc.u32 %v7820, %v7839
  %v7846 = vadd.s32 %v7842, 1
  %v7847 = vsel %vm7845, %v7846, %v7842
  %v7848 = vadd.s32 %v7843, %v7847
  %v7849 = vadd.s32 %v7848, 536870912
  %v7850 = vshrl.u32 %v7849, 30
  %v7851 = vshll.u32 %v7850, 30
  %v7852 = vsub.s32 %v7848, %v7851
  %vm7853 = vcmp.lt.s32.totalorder %v7852, 0
  %v7854 = vsub.s32 0, %v7852
  %v7855 = vsel %vm7853, %v7854, %v7852
  %v7856 = vclz %v7855
  %v7857 = vsub.s32 %v7856, 2
  %vm7858 = vcmp.gt.s32.totalorder 0, %v7857
  %v7859 = vsel %vm7858, 0, %v7857
  %v7860 = vsub.s32 32, %v7859
  %v7861 = vshll.u32 %v7852, %v7859
  %v7862 = vshrl.u32 %v7844, %v7860
  %v7863 = vor.u32 %v7861, %v7862
  %v7864 = vsub.s32 4294967266, %v7859
  %v7865 = vadd.s32 %v7864, 127
  %v7866 = vshll.u32 %v7865, 23
  %v7867 = vor.u32 4788187, %v7866
  %v7868 = vand.u32 2147483647, %v7867
  %v7870 = vcvt.s32.f32 %v7863
  %v7871 = vmul.f32 %v7870, %v7868
  %v7872 = vxor.u32 %v7871, 2147483648
  %v7873 = vsel %vm7752, %v7872, %v7871
  %v7874 = vsub.s32 4, %v7850
  %v7875 = vsel %vm7752, %v7874, %v7850
  %v7876 = vsel %vm7751, %v148, %v7873
  %v7877 = vsel %vm7751, 0, %v7875
  %v7878 = vmul.f32 %v7876, %v7876
  %v7879 = vmul.f32 %v7878, -0.001358992
  %v7880 = vadd.f32 %v7879, 0.041655596
  %v7881 = vmul.f32 %v7878, %v7880
  %v7882 = vadd.f32 %v7881, -0.4999988
  %v7883 = vmul.f32 %v7878, %v7882
  %v7884 = vadd.f32 1.0, %v7883
  %v7885 = vmul.f32 %v7876, %v7876
  %v7886 = vmul.f32 %v7885, -0.00019511016
  %v7887 = vadd.f32 %v7886, 0.008332121
  %v7888 = vmul.f32 %v7885, %v7887
  %v7889 = vadd.f32 %v7888, -0.16666654
  %v7890 = vmul.f32 %v7885, %v7889
  %v7891 = vadd.f32 %v7890, 1.0
  %v7892 = vmul.f32 %v7891, %v7876
  %vm7893 = vweird.f32 %v148
  %v7894 = vand.u32 %v7877, 3
  %vm7895 = vcmp.lt.s32.totalorder %v7894, 2
  %vm7896 = vcmp.eq.s32.totalorder %v7894, 0
  %v7897 = vxor.u32 %v7892, 2147483648
  %v7898 = vsel %vm7896, %v7884, %v7897
  %vm7899 = vcmp.eq.s32.totalorder %v7894, 2
  %v7900 = vxor.u32 %v7884, 2147483648
  %v7901 = vsel %vm7899, %v7900, %v7892
  %v7902 = vsel %vm7895, %v7898, %v7901
  %v7903 = vsel %vm7893, nan, %v7902
  %v7904 = vand.u32 2147483647, %v153
  %vm7905 = vcmp.le.f32.partialorder %v7904, 0.7853982
  %vm7906 = vcmp.lt.s32.totalorder %v153, 0
  %v7907 = vand.u32 %v153, 2139095040
  %v7908 = vshrl.u32 %v7907, 23
  %v7909 = vsub.s32 %v7908, 127
  %v7910 = vand.u32 2147483647, %v153
  %v7911 = vand.u32 %v7910, 8388607
  %v7912 = vor.u32 %v7911, 8388608
  %v7913 = vsub.s32 0, %v7912
  %v7914 = vadd.s32 %v7909, 1
  %vm7915 = vcmp.gt.s32.totalorder %v7914, 0
  %v7916 = vsel %vm7915, %v7914, 0
  %v7917 = vshrl.u32 %v7916, 5
  %v7918 = vand.u32 %v7916, 31
  %v7919 = vsub.s32 32, %v7918
  %v7920 = vshrl.u32 683565275, %v7919
  %v7921 = vshll.u32 683565275, %v7918
  %v7922 = vshrl.u32 2475754826, %v7919
  %v7923 = vor.u32 %v7921, %v7922
  %v7924 = vshll.u32 2475754826, %v7918
  %v7925 = vshrl.u32 2131351028, %v7919
  %v7926 = vor.u32 %v7924, %v7925
  %v7927 = vshll.u32 2131351028, %v7918
  %v7928 = vshrl.u32 2102212464, %v7919
  %v7929 = vor.u32 %v7927, %v7928
  %v7930 = vshll.u32 2102212464, %v7918
  %v7931 = vshrl.u32 920167782, %v7919
  %v7932 = vor.u32 %v7930, %v7931
  %v7933 = vshll.u32 920167782, %v7918
  %v7934 = vshrl.u32 1326507024, %v7919
  %v7935 = vor.u32 %v7933, %v7934
  %vm7936 = vcmp.lt.s32.totalorder %v7917, 1
  %vm7937 = vcmp.lt.s32.totalorder %v7917, 2
  %vm7938 = vcmp.lt.s32.totalorder %v7917, 3
  %vm7939 = vcmp.lt.s32.totalorder %v7917, 4
  %v7940 = vsel %vm7936, %v7920, %v7923
  %v7941 = vsel %vm7939, %v7929, 2102212464
  %v7942 = vsel %vm7938, %v7926, %v7941
  %v7943 = vsel %vm7937, %v7940, %v7942
  %v7944 = vsel %vm7936, %v7923, %v7926
  %v7945 = vsel %vm7939, %v7932, 920167782
  %v7946 = vsel %vm7938, %v7929, %v7945
  %v7947 = vsel %vm7937, %v7944, %v7946
  %v7948 = vsel %vm7936, %v7926, %v7929
  %v7949 = vsel %vm7939, %v7935, 1326507024
  %v7950 = vsel %vm7938, %v7932, %v7949
  %v7951 = vsel %vm7937, %v7948, %v7950
  %v7952 = vshll.u32 %v7912, 8
  %v7953 = vand.u32 %v7952, 65535
  %v7954 = vshrl.u32 %v7952, 16
  %v7955 = vand.u32 %v7951, 65535
  %v7956 = vshrl.u32 %v7951, 16
  %v7957 = vmul.u32 %v7953, %v7955
  %v7958 = vmul.u32 %v7953, %v7956
  %v7959 = vmul.u32 %v7954, %v7955
  %v7960 = vmul.u32 %v7954, %v7956
  %v7961 = vshll.u32 %v7958, 16
  %v7962 = vshrl.u32 %v7958, 16
  %v7963 = vshll.u32 %v7959, 16
  %v7964 = vshrl.u32 %v7959, 16
  %vm7965 = vc.u32 %v7957, %v7961
  %v7966 = vsel %vm7965, 1, 0
  %v7967 = vadd.s32 %v7957, %v7961
  %v7968 = vadd.s32 %v7960, %v7966
  %vm7969 = vc.u32 %v7967, %v7963
  %v7970 = vsel %vm7969, 1, 0
  %v7971 = vadd.s32 %v7967, %v7963
  %v7972 = vadd.s32 %v7968, %v7970
  %v7973 = vadd.s32 %v7972, %v7962
  %v7974 = vadd.s32 %v7973, %v7964
  %v7975 = vand.u32 %v7952, 65535
  %v7976 = vshrl.u32 %v7952, 16
  %v7977 = vand.u32 %v7947, 65535
  %v7978 = vshrl.u32 %v7947, 16
  %v7979 = vmul.u32 %v7975, %v7977
  %v7980 = vmul.u32 %v7975, %v7978
  %v7981 = vmul.u32 %v7976, %v7977
  %v7982 = vmul.u32 %v7976, %v7978
  %v7983 = vshll.u32 %v7980, 16
  %v7984 = vshrl.u32 %v7980, 16
  %v7985 = vshll.u32 %v7981, 16
  %v7986 = vshrl.u32 %v7981, 16
  %vm7987 = vc.u32 %v7979, %v7983
  %v7988 = vsel %vm7987, 1, 0
  %v7989 = vadd.s32 %v7979, %v7983
  %v7990 = vadd.s32 %v7982, %v7988
  %vm7991 = vc.u32 %v7989, %v7985
  %v7992 = vsel %vm7991, 1, 0
  %v7993 = vadd.s32 %v7989, %v7985
  %v7994 = vadd.s32 %v7990, %v7992
  %v7995 = vadd.s32 %v7994, %v7984
  %v7996 = vadd.s32 %v7995, %v7986
  %v7997 = vmul.u32 %v7952, %v7943
  %v7998 = vadd.s32 %v7974, %v7993
  %vm7999 = vc.u32 %v7974, %v7993
  %v8000 = vadd.s32 %v7996, 1
  %v8001 = vsel %vm7999, %v8000, %v7996
  %v8002 = vadd.s32 %v7997, %v8001
  %v8003 = vadd.s32 %v8002, 536870912
  %v8004 = vshrl.u32 %v8003, 30
  %v8005 = vshll.u32 %v8004, 30
  %v8006 = vsub.s32 %v8002, %v8005
  %vm8007 = vcmp.lt.s32.totalorder %v8006, 0
  %v8008 = vsub.s32 0, %v8006
  %v8009 = vsel %vm8007, %v8008, %v8006
  %v8010 = vclz %v8009
  %v8011 = vsub.s32 %v8010, 2
  %vm8012 = vcmp.gt.s32.totalorder 0, %v8011
  %v8013 = vsel %vm8012, 0, %v8011
  %v8014 = vsub.s32 32, %v8013
  %v8015 = vshll.u32 %v8006, %v8013
  %v8016 = vshrl.u32 %v7998, %v8014
  %v8017 = vor.u32 %v8015, %v8016
  %v8018 = vsub.s32 4294967266, %v8013
  %v8019 = vadd.s32 %v8018, 127
  %v8020 = vshll.u32 %v8019, 23
  %v8021 = vor.u32 4788187, %v8020
  %v8022 = vand.u32 2147483647, %v8021
  %v8024 = vcvt.s32.f32 %v8017
  %v8025 = vmul.f32 %v8024, %v8022
  %v8026 = vxor.u32 %v8025, 2147483648
  %v8027 = vsel %vm7906, %v8026, %v8025
  %v8028 = vsub.s32 4, %v8004
  %v8029 = vsel %vm7906, %v8028, %v8004
  %v8030 = vsel %vm7905, %v153, %v8027
  %v8031 = vsel %vm7905, 0, %v8029
  %v8032 = vmul.f32 %v8030, %v8030
  %v8033 = vmul.f32 %v8032, -0.001358992
  %v8034 = vadd.f32 %v8033, 0.041655596
  %v8035 = vmul.f32 %v8032, %v8034
  %v8036 = vadd.f32 %v8035, -0.4999988
  %v8037 = vmul.f32 %v8032, %v8036
  %v8038 = vadd.f32 1.0, %v8037
  %v8039 = vmul.f32 %v8030, %v8030
  %v8040 = vmul.f32 %v8039, -0.00019511016
  %v8041 = vadd.f32 %v8040, 0.008332121
  %v8042 = vmul.f32 %v8039, %v8041
  %v8043 = vadd.f32 %v8042, -0.16666654
  %v8044 = vmul.f32 %v8039, %v8043
  %v8045 = vadd.f32 %v8044, 1.0
  %v8046 = vmul.f32 %v8045, %v8030
  %vm8047 = vweird.f32 %v153
  %v8048 = vand.u32 %v8031, 3
  %vm8049 = vcmp.lt.s32.totalorder %v8048, 2
  %vm8050 = vcmp.eq.s32.totalorder %v8048, 0
  %v8051 = vxor.u32 %v8046, 2147483648
  %v8052 = vsel %vm8050, %v8038, %v8051
  %vm8053 = vcmp.eq.s32.totalorder %v8048, 2
  %v8054 = vxor.u32 %v8038, 2147483648
  %v8055 = vsel %vm8053, %v8054, %v8046
  %v8056 = vsel %vm8049, %v8052, %v8055
  %v8057 = vsel %vm8047, nan, %v8056
  %v8058 = vand.u32 2147483647, %v158
  %vm8059 = vcmp.le.f32.partialorder %v8058, 0.7853982
  %vm8060 = vcmp.lt.s32.totalorder %v158, 0
  %v8061 = vand.u32 %v158, 2139095040
  %v8062 = vshrl.u32 %v8061, 23
  %v8063 = vsub.s32 %v8062, 127
  %v8064 = vand.u32 2147483647, %v158
  %v8065 = vand.u32 %v8064, 8388607
  %v8066 = vor.u32 %v8065, 8388608
  %v8067 = vsub.s32 0, %v8066
  %v8068 = vadd.s32 %v8063, 1
  %vm8069 = vcmp.gt.s32.totalorder %v8068, 0
  %v8070 = vsel %vm8069, %v8068, 0
  %v8071 = vshrl.u32 %v8070, 5
  %v8072 = vand.u32 %v8070, 31
  %v8073 = vsub.s32 32, %v8072
  %v8074 = vshrl.u32 683565275, %v8073
  %v8075 = vshll.u32 683565275, %v8072
  %v8076 = vshrl.u32 2475754826, %v8073
  %v8077 = vor.u32 %v8075, %v8076
  %v8078 = vshll.u32 2475754826, %v8072
  %v8079 = vshrl.u32 2131351028, %v8073
  %v8080 = vor.u32 %v8078, %v8079
  %v8081 = vshll.u32 2131351028, %v8072
  %v8082 = vshrl.u32 2102212464, %v8073
  %v8083 = vor.u32 %v8081, %v8082
  %v8084 = vshll.u32 2102212464, %v8072
  %v8085 = vshrl.u32 920167782, %v8073
  %v8086 = vor.u32 %v8084, %v8085
  %v8087 = vshll.u32 920167782, %v8072
  %v8088 = vshrl.u32 1326507024, %v8073
  %v8089 = vor.u32 %v8087, %v8088
  %vm8090 = vcmp.lt.s32.totalorder %v8071, 1
  %vm8091 = vcmp.lt.s32.totalorder %v8071, 2
  %vm8092 = vcmp.lt.s32.totalorder %v8071, 3
  %vm8093 = vcmp.lt.s32.totalorder %v8071, 4
  %v8094 = vsel %vm8090, %v8074, %v8077
  %v8095 = vsel %vm8093, %v8083, 2102212464
  %v8096 = vsel %vm8092, %v8080, %v8095
  %v8097 = vsel %vm8091, %v8094, %v8096
  %v8098 = vsel %vm8090, %v8077, %v8080
  %v8099 = vsel %vm8093, %v8086, 920167782
  %v8100 = vsel %vm8092, %v8083, %v8099
  %v8101 = vsel %vm8091, %v8098, %v8100
  %v8102 = vsel %vm8090, %v8080, %v8083
  %v8103 = vsel %vm8093, %v8089, 1326507024
  %v8104 = vsel %vm8092, %v8086, %v8103
  %v8105 = vsel %vm8091, %v8102, %v8104
  %v8106 = vshll.u32 %v8066, 8
  %v8107 = vand.u32 %v8106, 65535
  %v8108 = vshrl.u32 %v8106, 16
  %v8109 = vand.u32 %v8105, 65535
  %v8110 = vshrl.u32 %v8105, 16
  %v8111 = vmul.u32 %v8107, %v8109
  %v8112 = vmul.u32 %v8107, %v8110
  %v8113 = vmul.u32 %v8108, %v8109
  %v8114 = vmul.u32 %v8108, %v8110
  %v8115 = vshll.u32 %v8112, 16
  %v8116 = vshrl.u32 %v8112, 16
  %v8117 = vshll.u32 %v8113, 16
  %v8118 = vshrl.u32 %v8113, 16
  %vm8119 = vc.u32 %v8111, %v8115
  %v8120 = vsel %vm8119, 1, 0
  %v8121 = vadd.s32 %v8111, %v8115
  %v8122 = vadd.s32 %v8114, %v8120
  %vm8123 = vc.u32 %v8121, %v8117
  %v8124 = vsel %vm8123, 1, 0
  %v8125 = vadd.s32 %v8121, %v8117
  %v8126 = vadd.s32 %v8122, %v8124
  %v8127 = vadd.s32 %v8126, %v8116
  %v8128 = vadd.s32 %v8127, %v8118
  %v8129 = vand.u32 %v8106, 65535
  %v8130 = vshrl.u32 %v8106, 16
  %v8131 = vand.u32 %v8101, 65535
  %v8132 = vshrl.u32 %v8101, 16
  %v8133 = vmul.u32 %v8129, %v8131
  %v8134 = vmul.u32 %v8129, %v8132
  %v8135 = vmul.u32 %v8130, %v8131
  %v8136 = vmul.u32 %v8130, %v8132
  %v8137 = vshll.u32 %v8134, 16
  %v8138 = vshrl.u32 %v8134, 16
  %v8139 = vshll.u32 %v8135, 16
  %v8140 = vshrl.u32 %v8135, 16
  %vm8141 = vc.u32 %v8133, %v8137
  %v8142 = vsel %vm8141, 1, 0
  %v8143 = vadd.s32 %v8133, %v8137
  %v8144 = vadd.s32 %v8136, %v8142
  %vm8145 = vc.u32 %v8143, %v8139
  %v8146 = vsel %vm8145, 1, 0
  %v8147 = vadd.s32 %v8143, %v8139
  %v8148 = vadd.s32 %v8144, %v8146
  %v8149 = vadd.s32 %v8148, %v8138
  %v8150 = vadd.s32 %v8149, %v8140
  %v8151 = vmul.u32 %v8106, %v8097
  %v8152 = vadd.s32 %v8128, %v8147
  %vm8153 = vc.u32 %v8128, %v8147
  %v8154 = vadd.s32 %v8150, 1
  %v8155 = vsel %vm8153, %v8154, %v8150
  %v8156 = vadd.s32 %v8151, %v8155
  %v8157 = vadd.s32 %v8156, 536870912
  %v8158 = vshrl.u32 %v8157, 30
  %v8159 = vshll.u32 %v8158, 30
  %v8160 = vsub.s32 %v8156, %v8159
  %vm8161 = vcmp.lt.s32.totalorder %v8160, 0
  %v8162 = vsub.s32 0, %v8160
  %v8163 = vsel %vm8161, %v8162, %v8160
  %v8164 = vclz %v8163
  %v8165 = vsub.s32 %v8164, 2
  %vm8166 = vcmp.gt.s32.totalorder 0, %v8165
  %v8167 = vsel %vm8166, 0, %v8165
  %v8168 = vsub.s32 32, %v8167
  %v8169 = vshll.u32 %v8160, %v8167
  %v8170 = vshrl.u32 %v8152, %v8168
  %v8171 = vor.u32 %v8169, %v8170
  %v8172 = vsub.s32 4294967266, %v8167
  %v8173 = vadd.s32 %v8172, 127
  %v8174 = vshll.u32 %v8173, 23
  %v8175 = vor.u32 4788187, %v8174
  %v8176 = vand.u32 2147483647, %v8175
  %v8178 = vcvt.s32.f32 %v8171
  %v8179 = vmul.f32 %v8178, %v8176
  %v8180 = vxor.u32 %v8179, 2147483648
  %v8181 = vsel %vm8060, %v8180, %v8179
  %v8182 = vsub.s32 4, %v8158
  %v8183 = vsel %vm8060, %v8182, %v8158
  %v8184 = vsel %vm8059, %v158, %v8181
  %v8185 = vsel %vm8059, 0, %v8183
  %v8186 = vmul.f32 %v8184, %v8184
  %v8187 = vmul.f32 %v8186, -0.001358992
  %v8188 = vadd.f32 %v8187, 0.041655596
  %v8189 = vmul.f32 %v8186, %v8188
  %v8190 = vadd.f32 %v8189, -0.4999988
  %v8191 = vmul.f32 %v8186, %v8190
  %v8192 = vadd.f32 1.0, %v8191
  %v8193 = vmul.f32 %v8184, %v8184
  %v8194 = vmul.f32 %v8193, -0.00019511016
  %v8195 = vadd.f32 %v8194, 0.008332121
  %v8196 = vmul.f32 %v8193, %v8195
  %v8197 = vadd.f32 %v8196, -0.16666654
  %v8198 = vmul.f32 %v8193, %v8197
  %v8199 = vadd.f32 %v8198, 1.0
  %v8200 = vmul.f32 %v8199, %v8184
  %vm8201 = vweird.f32 %v158
  %v8202 = vand.u32 %v8185, 3
  %vm8203 = vcmp.lt.s32.totalorder %v8202, 2
  %vm8204 = vcmp.eq.s32.totalorder %v8202, 0
  %v8205 = vxor.u32 %v8200, 2147483648
  %v8206 = vsel %vm8204, %v8192, %v8205
  %vm8207 = vcmp.eq.s32.totalorder %v8202, 2
  %v8208 = vxor.u32 %v8192, 2147483648
  %v8209 = vsel %vm8207, %v8208, %v8200
  %v8210 = vsel %vm8203, %v8206, %v8209
  %v8211 = vsel %vm8201, nan, %v8210
  %v8212 = vand.u32 2147483647, %v163
  %vm8213 = vcmp.le.f32.partialorder %v8212, 0.7853982
  %vm8214 = vcmp.lt.s32.totalorder %v163, 0
  %v8215 = vand.u32 %v163, 2139095040
  %v8216 = vshrl.u32 %v8215, 23
  %v8217 = vsub.s32 %v8216, 127
  %v8218 = vand.u32 2147483647, %v163
  %v8219 = vand.u32 %v8218, 8388607
  %v8220 = vor.u32 %v8219, 8388608
  %v8221 = vsub.s32 0, %v8220
  %v8222 = vadd.s32 %v8217, 1
  %vm8223 = vcmp.gt.s32.totalorder %v8222, 0
  %v8224 = vsel %vm8223, %v8222, 0
  %v8225 = vshrl.u32 %v8224, 5
  %v8226 = vand.u32 %v8224, 31
  %v8227 = vsub.s32 32, %v8226
  %v8228 = vshrl.u32 683565275, %v8227
  %v8229 = vshll.u32 683565275, %v8226
  %v8230 = vshrl.u32 2475754826, %v8227
  %v8231 = vor.u32 %v8229, %v8230
  %v8232 = vshll.u32 2475754826, %v8226
  %v8233 = vshrl.u32 2131351028, %v8227
  %v8234 = vor.u32 %v8232, %v8233
  %v8235 = vshll.u32 2131351028, %v8226
  %v8236 = vshrl.u32 2102212464, %v8227
  %v8237 = vor.u32 %v8235, %v8236
  %v8238 = vshll.u32 2102212464, %v8226
  %v8239 = vshrl.u32 920167782, %v8227
  %v8240 = vor.u32 %v8238, %v8239
  %v8241 = vshll.u32 920167782, %v8226
  %v8242 = vshrl.u32 1326507024, %v8227
  %v8243 = vor.u32 %v8241, %v8242
  %vm8244 = vcmp.lt.s32.totalorder %v8225, 1
  %vm8245 = vcmp.lt.s32.totalorder %v8225, 2
  %vm8246 = vcmp.lt.s32.totalorder %v8225, 3
  %vm8247 = vcmp.lt.s32.totalorder %v8225, 4
  %v8248 = vsel %vm8244, %v8228, %v8231
  %v8249 = vsel %vm8247, %v8237, 2102212464
  %v8250 = vsel %vm8246, %v8234, %v8249
  %v8251 = vsel %vm8245, %v8248, %v8250
  %v8252 = vsel %vm8244, %v8231, %v8234
  %v8253 = vsel %vm8247, %v8240, 920167782
  %v8254 = vsel %vm8246, %v8237, %v8253
  %v8255 = vsel %vm8245, %v8252, %v8254
  %v8256 = vsel %vm8244, %v8234, %v8237
  %v8257 = vsel %vm8247, %v8243, 1326507024
  %v8258 = vsel %vm8246, %v8240, %v8257
  %v8259 = vsel %vm8245, %v8256, %v8258
  %v8260 = vshll.u32 %v8220, 8
  %v8261 = vand.u32 %v8260, 65535
  %v8262 = vshrl.u32 %v8260, 16
  %v8263 = vand.u32 %v8259, 65535
  %v8264 = vshrl.u32 %v8259, 16
  %v8265 = vmul.u32 %v8261, %v8263
  %v8266 = vmul.u32 %v8261, %v8264
  %v8267 = vmul.u32 %v8262, %v8263
  %v8268 = vmul.u32 %v8262, %v8264
  %v8269 = vshll.u32 %v8266, 16
  %v8270 = vshrl.u32 %v8266, 16
  %v8271 = vshll.u32 %v8267, 16
  %v8272 = vshrl.u32 %v8267, 16
  %vm8273 = vc.u32 %v8265, %v8269
  %v8274 = vsel %vm8273, 1, 0
  %v8275 = vadd.s32 %v8265, %v8269
  %v8276 = vadd.s32 %v8268, %v8274
  %vm8277 = vc.u32 %v8275, %v8271
  %v8278 = vsel %vm8277, 1, 0
  %v8279 = vadd.s32 %v8275, %v8271
  %v8280 = vadd.s32 %v8276, %v8278
  %v8281 = vadd.s32 %v8280, %v8270
  %v8282 = vadd.s32 %v8281, %v8272
  %v8283 = vand.u32 %v8260, 65535
  %v8284 = vshrl.u32 %v8260, 16
  %v8285 = vand.u32 %v8255, 65535
  %v8286 = vshrl.u32 %v8255, 16
  %v8287 = vmul.u32 %v8283, %v8285
  %v8288 = vmul.u32 %v8283, %v8286
  %v8289 = vmul.u32 %v8284, %v8285
  %v8290 = vmul.u32 %v8284, %v8286
  %v8291 = vshll.u32 %v8288, 16
  %v8292 = vshrl.u32 %v8288, 16
  %v8293 = vshll.u32 %v8289, 16
  %v8294 = vshrl.u32 %v8289, 16
  %vm8295 = vc.u32 %v8287, %v8291
  %v8296 = vsel %vm8295, 1, 0
  %v8297 = vadd.s32 %v8287, %v8291
  %v8298 = vadd.s32 %v8290, %v8296
  %vm8299 = vc.u32 %v8297, %v8293
  %v8300 = vsel %vm8299, 1, 0
  %v8301 = vadd.s32 %v8297, %v8293
  %v8302 = vadd.s32 %v8298, %v8300
  %v8303 = vadd.s32 %v8302, %v8292
  %v8304 = vadd.s32 %v8303, %v8294
  %v8305 = vmul.u32 %v8260, %v8251
  %v8306 = vadd.s32 %v8282, %v8301
  %vm8307 = vc.u32 %v8282, %v8301
  %v8308 = vadd.s32 %v8304, 1
  %v8309 = vsel %vm8307, %v8308, %v8304
  %v8310 = vadd.s32 %v8305, %v8309
  %v8311 = vadd.s32 %v8310, 536870912
  %v8312 = vshrl.u32 %v8311, 30
  %v8313 = vshll.u32 %v8312, 30
  %v8314 = vsub.s32 %v8310, %v8313
  %vm8315 = vcmp.lt.s32.totalorder %v8314, 0
  %v8316 = vsub.s32 0, %v8314
  %v8317 = vsel %vm8315, %v8316, %v8314
  %v8318 = vclz %v8317
  %v8319 = vsub.s32 %v8318, 2
  %vm8320 = vcmp.gt.s32.totalorder 0, %v8319
  %v8321 = vsel %vm8320, 0, %v8319
  %v8322 = vsub.s32 32, %v8321
  %v8323 = vshll.u32 %v8314, %v8321
  %v8324 = vshrl.u32 %v8306, %v8322
  %v8325 = vor.u32 %v8323, %v8324
  %v8326 = vsub.s32 4294967266, %v8321
  %v8327 = vadd.s32 %v8326, 127
  %v8328 = vshll.u32 %v8327, 23
  %v8329 = vor.u32 4788187, %v8328
  %v8330 = vand.u32 2147483647, %v8329
  %v8332 = vcvt.s32.f32 %v8325
  %v8333 = vmul.f32 %v8332, %v8330
  %v8334 = vxor.u32 %v8333, 2147483648
  %v8335 = vsel %vm8214, %v8334, %v8333
  %v8336 = vsub.s32 4, %v8312
  %v8337 = vsel %vm8214, %v8336, %v8312
  %v8338 = vsel %vm8213, %v163, %v8335
  %v8339 = vsel %vm8213, 0, %v8337
  %v8340 = vmul.f32 %v8338, %v8338
  %v8341 = vmul.f32 %v8340, -0.001358992
  %v8342 = vadd.f32 %v8341, 0.041655596
  %v8343 = vmul.f32 %v8340, %v8342
  %v8344 = vadd.f32 %v8343, -0.4999988
  %v8345 = vmul.f32 %v8340, %v8344
  %v8346 = vadd.f32 1.0, %v8345
  %v8347 = vmul.f32 %v8338, %v8338
  %v8348 = vmul.f32 %v8347, -0.00019511016
  %v8349 = vadd.f32 %v8348, 0.008332121
  %v8350 = vmul.f32 %v8347, %v8349
  %v8351 = vadd.f32 %v8350, -0.16666654
  %v8352 = vmul.f32 %v8347, %v8351
  %v8353 = vadd.f32 %v8352, 1.0
  %v8354 = vmul.f32 %v8353, %v8338
  %vm8355 = vweird.f32 %v163
  %v8356 = vand.u32 %v8339, 3
  %vm8357 = vcmp.lt.s32.totalorder %v8356, 2
  %vm8358 = vcmp.eq.s32.totalorder %v8356, 0
  %v8359 = vxor.u32 %v8354, 2147483648
  %v8360 = vsel %vm8358, %v8346, %v8359
  %vm8361 = vcmp.eq.s32.totalorder %v8356, 2
  %v8362 = vxor.u32 %v8346, 2147483648
  %v8363 = vsel %vm8361, %v8362, %v8354
  %v8364 = vsel %vm8357, %v8360, %v8363
  %v8365 = vsel %vm8355, nan, %v8364
  %v8366 = vand.u32 2147483647, %v168
  %vm8367 = vcmp.le.f32.partialorder %v8366, 0.7853982
  %vm8368 = vcmp.lt.s32.totalorder %v168, 0
  %v8369 = vand.u32 %v168, 2139095040
  %v8370 = vshrl.u32 %v8369, 23
  %v8371 = vsub.s32 %v8370, 127
  %v8372 = vand.u32 2147483647, %v168
  %v8373 = vand.u32 %v8372, 8388607
  %v8374 = vor.u32 %v8373, 8388608
  %v8375 = vsub.s32 0, %v8374
  %v8376 = vadd.s32 %v8371, 1
  %vm8377 = vcmp.gt.s32.totalorder %v8376, 0
  %v8378 = vsel %vm8377, %v8376, 0
  %v8379 = vshrl.u32 %v8378, 5
  %v8380 = vand.u32 %v8378, 31
  %v8381 = vsub.s32 32, %v8380
  %v8382 = vshrl.u32 683565275, %v8381
  %v8383 = vshll.u32 683565275, %v8380
  %v8384 = vshrl.u32 2475754826, %v8381
  %v8385 = vor.u32 %v8383, %v8384
  %v8386 = vshll.u32 2475754826, %v8380
  %v8387 = vshrl.u32 2131351028, %v8381
  %v8388 = vor.u32 %v8386, %v8387
  %v8389 = vshll.u32 2131351028, %v8380
  %v8390 = vshrl.u32 2102212464, %v8381
  %v8391 = vor.u32 %v8389, %v8390
  %v8392 = vshll.u32 2102212464, %v8380
  %v8393 = vshrl.u32 920167782, %v8381
  %v8394 = vor.u32 %v8392, %v8393
  %v8395 = vshll.u32 920167782, %v8380
  %v8396 = vshrl.u32 1326507024, %v8381
  %v8397 = vor.u32 %v8395, %v8396
  %vm8398 = vcmp.lt.s32.totalorder %v8379, 1
  %vm8399 = vcmp.lt.s32.totalorder %v8379, 2
  %vm8400 = vcmp.lt.s32.totalorder %v8379, 3
  %vm8401 = vcmp.lt.s32.totalorder %v8379, 4
  %v8402 = vsel %vm8398, %v8382, %v8385
  %v8403 = vsel %vm8401, %v8391, 2102212464
  %v8404 = vsel %vm8400, %v8388, %v8403
  %v8405 = vsel %vm8399, %v8402, %v8404
  %v8406 = vsel %vm8398, %v8385, %v8388
  %v8407 = vsel %vm8401, %v8394, 920167782
  %v8408 = vsel %vm8400, %v8391, %v8407
  %v8409 = vsel %vm8399, %v8406, %v8408
  %v8410 = vsel %vm8398, %v8388, %v8391
  %v8411 = vsel %vm8401, %v8397, 1326507024
  %v8412 = vsel %vm8400, %v8394, %v8411
  %v8413 = vsel %vm8399, %v8410, %v8412
  %v8414 = vshll.u32 %v8374, 8
  %v8415 = vand.u32 %v8414, 65535
  %v8416 = vshrl.u32 %v8414, 16
  %v8417 = vand.u32 %v8413, 65535
  %v8418 = vshrl.u32 %v8413, 16
  %v8419 = vmul.u32 %v8415, %v8417
  %v8420 = vmul.u32 %v8415, %v8418
  %v8421 = vmul.u32 %v8416, %v8417
  %v8422 = vmul.u32 %v8416, %v8418
  %v8423 = vshll.u32 %v8420, 16
  %v8424 = vshrl.u32 %v8420, 16
  %v8425 = vshll.u32 %v8421, 16
  %v8426 = vshrl.u32 %v8421, 16
  %vm8427 = vc.u32 %v8419, %v8423
  %v8428 = vsel %vm8427, 1, 0
  %v8429 = vadd.s32 %v8419, %v8423
  %v8430 = vadd.s32 %v8422, %v8428
  %vm8431 = vc.u32 %v8429, %v8425
  %v8432 = vsel %vm8431, 1, 0
  %v8433 = vadd.s32 %v8429, %v8425
  %v8434 = vadd.s32 %v8430, %v8432
  %v8435 = vadd.s32 %v8434, %v8424
  %v8436 = vadd.s32 %v8435, %v8426
  %v8437 = vand.u32 %v8414, 65535
  %v8438 = vshrl.u32 %v8414, 16
  %v8439 = vand.u32 %v8409, 65535
  %v8440 = vshrl.u32 %v8409, 16
  %v8441 = vmul.u32 %v8437, %v8439
  %v8442 = vmul.u32 %v8437, %v8440
  %v8443 = vmul.u32 %v8438, %v8439
  %v8444 = vmul.u32 %v8438, %v8440
  %v8445 = vshll.u32 %v8442, 16
  %v8446 = vshrl.u32 %v8442, 16
  %v8447 = vshll.u32 %v8443, 16
  %v8448 = vshrl.u32 %v8443, 16
  %vm8449 = vc.u32 %v8441, %v8445
  %v8450 = vsel %vm8449, 1, 0
  %v8451 = vadd.s32 %v8441, %v8445
  %v8452 = vadd.s32 %v8444, %v8450
  %vm8453 = vc.u32 %v8451, %v8447
  %v8454 = vsel %vm8453, 1, 0
  %v8455 = vadd.s32 %v8451, %v8447
  %v8456 = vadd.s32 %v8452, %v8454
  %v8457 = vadd.s32 %v8456, %v8446
  %v8458 = vadd.s32 %v8457, %v8448
  %v8459 = vmul.u32 %v8414, %v8405
  %v8460 = vadd.s32 %v8436, %v8455
  %vm8461 = vc.u32 %v8436, %v8455
  %v8462 = vadd.s32 %v8458, 1
  %v8463 = vsel %vm8461, %v8462, %v8458
  %v8464 = vadd.s32 %v8459, %v8463
  %v8465 = vadd.s32 %v8464, 536870912
  %v8466 = vshrl.u32 %v8465, 30
  %v8467 = vshll.u32 %v8466, 30
  %v8468 = vsub.s32 %v8464, %v8467
  %vm8469 = vcmp.lt.s32.totalorder %v8468, 0
  %v8470 = vsub.s32 0, %v8468
  %v8471 = vsel %vm8469, %v8470, %v8468
  %v8472 = vclz %v8471
  %v8473 = vsub.s32 %v8472, 2
  %vm8474 = vcmp.gt.s32.totalorder 0, %v8473
  %v8475 = vsel %vm8474, 0, %v8473
  %v8476 = vsub.s32 32, %v8475
  %v8477 = vshll.u32 %v8468, %v8475
  %v8478 = vshrl.u32 %v8460, %v8476
  %v8479 = vor.u32 %v8477, %v8478
  %v8480 = vsub.s32 4294967266, %v8475
  %v8481 = vadd.s32 %v8480, 127
  %v8482 = vshll.u32 %v8481, 23
  %v8483 = vor.u32 4788187, %v8482
  %v8484 = vand.u32 2147483647, %v8483
  %v8486 = vcvt.s32.f32 %v8479
  %v8487 = vmul.f32 %v8486, %v8484
  %v8488 = vxor.u32 %v8487, 2147483648
  %v8489 = vsel %vm8368, %v8488, %v8487
  %v8490 = vsub.s32 4, %v8466
  %v8491 = vsel %vm8368, %v8490, %v8466
  %v8492 = vsel %vm8367, %v168, %v8489
  %v8493 = vsel %vm8367, 0, %v8491
  %v8494 = vmul.f32 %v8492, %v8492
  %v8495 = vmul.f32 %v8494, -0.001358992
  %v8496 = vadd.f32 %v8495, 0.041655596
  %v8497 = vmul.f32 %v8494, %v8496
  %v8498 = vadd.f32 %v8497, -0.4999988
  %v8499 = vmul.f32 %v8494, %v8498
  %v8500 = vadd.f32 1.0, %v8499
  %v8501 = vmul.f32 %v8492, %v8492
  %v8502 = vmul.f32 %v8501, -0.00019511016
  %v8503 = vadd.f32 %v8502, 0.008332121
  %v8504 = vmul.f32 %v8501, %v8503
  %v8505 = vadd.f32 %v8504, -0.16666654
  %v8506 = vmul.f32 %v8501, %v8505
  %v8507 = vadd.f32 %v8506, 1.0
  %v8508 = vmul.f32 %v8507, %v8492
  %vm8509 = vweird.f32 %v168
  %v8510 = vand.u32 %v8493, 3
  %vm8511 = vcmp.lt.s32.totalorder %v8510, 2
  %vm8512 = vcmp.eq.s32.totalorder %v8510, 0
  %v8513 = vxor.u32 %v8508, 2147483648
  %v8514 = vsel %vm8512, %v8500, %v8513
  %vm8515 = vcmp.eq.s32.totalorder %v8510, 2
  %v8516 = vxor.u32 %v8500, 2147483648
  %v8517 = vsel %vm8515, %v8516, %v8508
  %v8518 = vsel %vm8511, %v8514, %v8517
  %v8519 = vsel %vm8509, nan, %v8518
  %v8520 = vand.u32 2147483647, %v173
  %vm8521 = vcmp.le.f32.partialorder %v8520, 0.7853982
  %vm8522 = vcmp.lt.s32.totalorder %v173, 0
  %v8523 = vand.u32 %v173, 2139095040
  %v8524 = vshrl.u32 %v8523, 23
  %v8525 = vsub.s32 %v8524, 127
  %v8526 = vand.u32 2147483647, %v173
  %v8527 = vand.u32 %v8526, 8388607
  %v8528 = vor.u32 %v8527, 8388608
  %v8529 = vsub.s32 0, %v8528
  %v8530 = vadd.s32 %v8525, 1
  %vm8531 = vcmp.gt.s32.totalorder %v8530, 0
  %v8532 = vsel %vm8531, %v8530, 0
  %v8533 = vshrl.u32 %v8532, 5
  %v8534 = vand.u32 %v8532, 31
  %v8535 = vsub.s32 32, %v8534
  %v8536 = vshrl.u32 683565275, %v8535
  %v8537 = vshll.u32 683565275, %v8534
  %v8538 = vshrl.u32 2475754826, %v8535
  %v8539 = vor.u32 %v8537, %v8538
  %v8540 = vshll.u32 2475754826, %v8534
  %v8541 = vshrl.u32 2131351028, %v8535
  %v8542 = vor.u32 %v8540, %v8541
  %v8543 = vshll.u32 2131351028, %v8534
  %v8544 = vshrl.u32 2102212464, %v8535
  %v8545 = vor.u32 %v8543, %v8544
  %v8546 = vshll.u32 2102212464, %v8534
  %v8547 = vshrl.u32 920167782, %v8535
  %v8548 = vor.u32 %v8546, %v8547
  %v8549 = vshll.u32 920167782, %v8534
  %v8550 = vshrl.u32 1326507024, %v8535
  %v8551 = vor.u32 %v8549, %v8550
  %vm8552 = vcmp.lt.s32.totalorder %v8533, 1
  %vm8553 = vcmp.lt.s32.totalorder %v8533, 2
  %vm8554 = vcmp.lt.s32.totalorder %v8533, 3
  %vm8555 = vcmp.lt.s32.totalorder %v8533, 4
  %v8556 = vsel %vm8552, %v8536, %v8539
  %v8557 = vsel %vm8555, %v8545, 2102212464
  %v8558 = vsel %vm8554, %v8542, %v8557
  %v8559 = vsel %vm8553, %v8556, %v8558
  %v8560 = vsel %vm8552, %v8539, %v8542
  %v8561 = vsel %vm8555, %v8548, 920167782
  %v8562 = vsel %vm8554, %v8545, %v8561
  %v8563 = vsel %vm8553, %v8560, %v8562
  %v8564 = vsel %vm8552, %v8542, %v8545
  %v8565 = vsel %vm8555, %v8551, 1326507024
  %v8566 = vsel %vm8554, %v8548, %v8565
  %v8567 = vsel %vm8553, %v8564, %v8566
  %v8568 = vshll.u32 %v8528, 8
  %v8569 = vand.u32 %v8568, 65535
  %v8570 = vshrl.u32 %v8568, 16
  %v8571 = vand.u32 %v8567, 65535
  %v8572 = vshrl.u32 %v8567, 16
  %v8573 = vmul.u32 %v8569, %v8571
  %v8574 = vmul.u32 %v8569, %v8572
  %v8575 = vmul.u32 %v8570, %v8571
  %v8576 = vmul.u32 %v8570, %v8572
  %v8577 = vshll.u32 %v8574, 16
  %v8578 = vshrl.u32 %v8574, 16
  %v8579 = vshll.u32 %v8575, 16
  %v8580 = vshrl.u32 %v8575, 16
  %vm8581 = vc.u32 %v8573, %v8577
  %v8582 = vsel %vm8581, 1, 0
  %v8583 = vadd.s32 %v8573, %v8577
  %v8584 = vadd.s32 %v8576, %v8582
  %vm8585 = vc.u32 %v8583, %v8579
  %v8586 = vsel %vm8585, 1, 0
  %v8587 = vadd.s32 %v8583, %v8579
  %v8588 = vadd.s32 %v8584, %v8586
  %v8589 = vadd.s32 %v8588, %v8578
  %v8590 = vadd.s32 %v8589, %v8580
  %v8591 = vand.u32 %v8568, 65535
  %v8592 = vshrl.u32 %v8568, 16
  %v8593 = vand.u32 %v8563, 65535
  %v8594 = vshrl.u32 %v8563, 16
  %v8595 = vmul.u32 %v8591, %v8593
  %v8596 = vmul.u32 %v8591, %v8594
  %v8597 = vmul.u32 %v8592, %v8593
  %v8598 = vmul.u32 %v8592, %v8594
  %v8599 = vshll.u32 %v8596, 16
  %v8600 = vshrl.u32 %v8596, 16
  %v8601 = vshll.u32 %v8597, 16
  %v8602 = vshrl.u32 %v8597, 16
  %vm8603 = vc.u32 %v8595, %v8599
  %v8604 = vsel %vm8603, 1, 0
  %v8605 = vadd.s32 %v8595, %v8599
  %v8606 = vadd.s32 %v8598, %v8604
  %vm8607 = vc.u32 %v8605, %v8601
  %v8608 = vsel %vm8607, 1, 0
  %v8609 = vadd.s32 %v8605, %v8601
  %v8610 = vadd.s32 %v8606, %v8608
  %v8611 = vadd.s32 %v8610, %v8600
  %v8612 = vadd.s32 %v8611, %v8602
  %v8613 = vmul.u32 %v8568, %v8559
  %v8614 = vadd.s32 %v8590, %v8609
  %vm8615 = vc.u32 %v8590, %v8609
  %v8616 = vadd.s32 %v8612, 1
  %v8617 = vsel %vm8615, %v8616, %v8612
  %v8618 = vadd.s32 %v8613, %v8617
  %v8619 = vadd.s32 %v8618, 536870912
  %v8620 = vshrl.u32 %v8619, 30
  %v8621 = vshll.u32 %v8620, 30
  %v8622 = vsub.s32 %v8618, %v8621
  %vm8623 = vcmp.lt.s32.totalorder %v8622, 0
  %v8624 = vsub.s32 0, %v8622
  %v8625 = vsel %vm8623, %v8624, %v8622
  %v8626 = vclz %v8625
  %v8627 = vsub.s32 %v8626, 2
  %vm8628 = vcmp.gt.s32.totalorder 0, %v8627
  %v8629 = vsel %vm8628, 0, %v8627
  %v8630 = vsub.s32 32, %v8629
  %v8631 = vshll.u32 %v8622, %v8629
  %v8632 = vshrl.u32 %v8614, %v8630
  %v8633 = vor.u32 %v8631, %v8632
  %v8634 = vsub.s32 4294967266, %v8629
  %v8635 = vadd.s32 %v8634, 127
  %v8636 = vshll.u32 %v8635, 23
  %v8637 = vor.u32 4788187, %v8636
  %v8638 = vand.u32 2147483647, %v8637
  %v8640 = vcvt.s32.f32 %v8633
  %v8641 = vmul.f32 %v8640, %v8638
  %v8642 = vxor.u32 %v8641, 2147483648
  %v8643 = vsel %vm8522, %v8642, %v8641
  %v8644 = vsub.s32 4, %v8620
  %v8645 = vsel %vm8522, %v8644, %v8620
  %v8646 = vsel %vm8521, %v173, %v8643
  %v8647 = vsel %vm8521, 0, %v8645
  %v8648 = vmul.f32 %v8646, %v8646
  %v8649 = vmul.f32 %v8648, -0.001358992
  %v8650 = vadd.f32 %v8649, 0.041655596
  %v8651 = vmul.f32 %v8648, %v8650
  %v8652 = vadd.f32 %v8651, -0.4999988
  %v8653 = vmul.f32 %v8648, %v8652
  %v8654 = vadd.f32 1.0, %v8653
  %v8655 = vmul.f32 %v8646, %v8646
  %v8656 = vmul.f32 %v8655, -0.00019511016
  %v8657 = vadd.f32 %v8656, 0.008332121
  %v8658 = vmul.f32 %v8655, %v8657
  %v8659 = vadd.f32 %v8658, -0.16666654
  %v8660 = vmul.f32 %v8655, %v8659
  %v8661 = vadd.f32 %v8660, 1.0
  %v8662 = vmul.f32 %v8661, %v8646
  %vm8663 = vweird.f32 %v173
  %v8664 = vand.u32 %v8647, 3
  %vm8665 = vcmp.lt.s32.totalorder %v8664, 2
  %vm8666 = vcmp.eq.s32.totalorder %v8664, 0
  %v8667 = vxor.u32 %v8662, 2147483648
  %v8668 = vsel %vm8666, %v8654, %v8667
  %vm8669 = vcmp.eq.s32.totalorder %v8664, 2
  %v8670 = vxor.u32 %v8654, 2147483648
  %v8671 = vsel %vm8669, %v8670, %v8662
  %v8672 = vsel %vm8665, %v8668, %v8671
  %v8673 = vsel %vm8663, nan, %v8672
  %v8674 = vand.u32 2147483647, %v178
  %vm8675 = vcmp.le.f32.partialorder %v8674, 0.7853982
  %vm8676 = vcmp.lt.s32.totalorder %v178, 0
  %v8677 = vand.u32 %v178, 2139095040
  %v8678 = vshrl.u32 %v8677, 23
  %v8679 = vsub.s32 %v8678, 127
  %v8680 = vand.u32 2147483647, %v178
  %v8681 = vand.u32 %v8680, 8388607
  %v8682 = vor.u32 %v8681, 8388608
  %v8683 = vsub.s32 0, %v8682
  %v8684 = vadd.s32 %v8679, 1
  %vm8685 = vcmp.gt.s32.totalorder %v8684, 0
  %v8686 = vsel %vm8685, %v8684, 0
  %v8687 = vshrl.u32 %v8686, 5
  %v8688 = vand.u32 %v8686, 31
  %v8689 = vsub.s32 32, %v8688
  %v8690 = vshrl.u32 683565275, %v8689
  %v8691 = vshll.u32 683565275, %v8688
  %v8692 = vshrl.u32 2475754826, %v8689
  %v8693 = vor.u32 %v8691, %v8692
  %v8694 = vshll.u32 2475754826, %v8688
  %v8695 = vshrl.u32 2131351028, %v8689
  %v8696 = vor.u32 %v8694, %v8695
  %v8697 = vshll.u32 2131351028, %v8688
  %v8698 = vshrl.u32 2102212464, %v8689
  %v8699 = vor.u32 %v8697, %v8698
  %v8700 = vshll.u32 2102212464, %v8688
  %v8701 = vshrl.u32 920167782, %v8689
  %v8702 = vor.u32 %v8700, %v8701
  %v8703 = vshll.u32 920167782, %v8688
  %v8704 = vshrl.u32 1326507024, %v8689
  %v8705 = vor.u32 %v8703, %v8704
  %vm8706 = vcmp.lt.s32.totalorder %v8687, 1
  %vm8707 = vcmp.lt.s32.totalorder %v8687, 2
  %vm8708 = vcmp.lt.s32.totalorder %v8687, 3
  %vm8709 = vcmp.lt.s32.totalorder %v8687, 4
  %v8710 = vsel %vm8706, %v8690, %v8693
  %v8711 = vsel %vm8709, %v8699, 2102212464
  %v8712 = vsel %vm8708, %v8696, %v8711
  %v8713 = vsel %vm8707, %v8710, %v8712
  %v8714 = vsel %vm8706, %v8693, %v8696
  %v8715 = vsel %vm8709, %v8702, 920167782
  %v8716 = vsel %vm8708, %v8699, %v8715
  %v8717 = vsel %vm8707, %v8714, %v8716
  %v8718 = vsel %vm8706, %v8696, %v8699
  %v8719 = vsel %vm8709, %v8705, 1326507024
  %v8720 = vsel %vm8708, %v8702, %v8719
  %v8721 = vsel %vm8707, %v8718, %v8720
  %v8722 = vshll.u32 %v8682, 8
  %v8723 = vand.u32 %v8722, 65535
  %v8724 = vshrl.u32 %v8722, 16
  %v8725 = vand.u32 %v8721, 65535
  %v8726 = vshrl.u32 %v8721, 16
  %v8727 = vmul.u32 %v8723, %v8725
  %v8728 = vmul.u32 %v8723, %v8726
  %v8729 = vmul.u32 %v8724, %v8725
  %v8730 = vmul.u32 %v8724, %v8726
  %v8731 = vshll.u32 %v8728, 16
  %v8732 = vshrl.u32 %v8728, 16
  %v8733 = vshll.u32 %v8729, 16
  %v8734 = vshrl.u32 %v8729, 16
  %vm8735 = vc.u32 %v8727, %v8731
  %v8736 = vsel %vm8735, 1, 0
  %v8737 = vadd.s32 %v8727, %v8731
  %v8738 = vadd.s32 %v8730, %v8736
  %vm8739 = vc.u32 %v8737, %v8733
  %v8740 = vsel %vm8739, 1, 0
  %v8741 = vadd.s32 %v8737, %v8733
  %v8742 = vadd.s32 %v8738, %v8740
  %v8743 = vadd.s32 %v8742, %v8732
  %v8744 = vadd.s32 %v8743, %v8734
  %v8745 = vand.u32 %v8722, 65535
  %v8746 = vshrl.u32 %v8722, 16
  %v8747 = vand.u32 %v8717, 65535
  %v8748 = vshrl.u32 %v8717, 16
  %v8749 = vmul.u32 %v8745, %v8747
  %v8750 = vmul.u32 %v8745, %v8748
  %v8751 = vmul.u32 %v8746, %v8747
  %v8752 = vmul.u32 %v8746, %v8748
  %v8753 = vshll.u32 %v8750, 16
  %v8754 = vshrl.u32 %v8750, 16
  %v8755 = vshll.u32 %v8751, 16
  %v8756 = vshrl.u32 %v8751, 16
  %vm8757 = vc.u32 %v8749, %v8753
  %v8758 = vsel %vm8757, 1, 0
  %v8759 = vadd.s32 %v8749, %v8753
  %v8760 = vadd.s32 %v8752, %v8758
  %vm8761 = vc.u32 %v8759, %v8755
  %v8762 = vsel %vm8761, 1, 0
  %v8763 = vadd.s32 %v8759, %v8755
  %v8764 = vadd.s32 %v8760, %v8762
  %v8765 = vadd.s32 %v8764, %v8754
  %v8766 = vadd.s32 %v8765, %v8756
  %v8767 = vmul.u32 %v8722, %v8713
  %v8768 = vadd.s32 %v8744, %v8763
  %vm8769 = vc.u32 %v8744, %v8763
  %v8770 = vadd.s32 %v8766, 1
  %v8771 = vsel %vm8769, %v8770, %v8766
  %v8772 = vadd.s32 %v8767, %v8771
  %v8773 = vadd.s32 %v8772, 536870912
  %v8774 = vshrl.u32 %v8773, 30
  %v8775 = vshll.u32 %v8774, 30
  %v8776 = vsub.s32 %v8772, %v8775
  %vm8777 = vcmp.lt.s32.totalorder %v8776, 0
  %v8778 = vsub.s32 0, %v8776
  %v8779 = vsel %vm8777, %v8778, %v8776
  %v8780 = vclz %v8779
  %v8781 = vsub.s32 %v8780, 2
  %vm8782 = vcmp.gt.s32.totalorder 0, %v8781
  %v8783 = vsel %vm8782, 0, %v8781
  %v8784 = vsub.s32 32, %v8783
  %v8785 = vshll.u32 %v8776, %v8783
  %v8786 = vshrl.u32 %v8768, %v8784
  %v8787 = vor.u32 %v8785, %v8786
  %v8788 = vsub.s32 4294967266, %v8783
  %v8789 = vadd.s32 %v8788, 127
  %v8790 = vshll.u32 %v8789, 23
  %v8791 = vor.u32 4788187, %v8790
  %v8792 = vand.u32 2147483647, %v8791
  %v8794 = vcvt.s32.f32 %v8787
  %v8795 = vmul.f32 %v8794, %v8792
  %v8796 = vxor.u32 %v8795, 2147483648
  %v8797 = vsel %vm8676, %v8796, %v8795
  %v8798 = vsub.s32 4, %v8774
  %v8799 = vsel %vm8676, %v8798, %v8774
  %v8800 = vsel %vm8675, %v178, %v8797
  %v8801 = vsel %vm8675, 0, %v8799
  %v8802 = vmul.f32 %v8800, %v8800
  %v8803 = vmul.f32 %v8802, -0.001358992
  %v8804 = vadd.f32 %v8803, 0.041655596
  %v8805 = vmul.f32 %v8802, %v8804
  %v8806 = vadd.f32 %v8805, -0.4999988
  %v8807 = vmul.f32 %v8802, %v8806
  %v8808 = vadd.f32 1.0, %v8807
  %v8809 = vmul.f32 %v8800, %v8800
  %v8810 = vmul.f32 %v8809, -0.00019511016
  %v8811 = vadd.f32 %v8810, 0.008332121
  %v8812 = vmul.f32 %v8809, %v8811
  %v8813 = vadd.f32 %v8812, -0.16666654
  %v8814 = vmul.f32 %v8809, %v8813
  %v8815 = vadd.f32 %v8814, 1.0
  %v8816 = vmul.f32 %v8815, %v8800
  %vm8817 = vweird.f32 %v178
  %v8818 = vand.u32 %v8801, 3
  %vm8819 = vcmp.lt.s32.totalorder %v8818, 2
  %vm8820 = vcmp.eq.s32.totalorder %v8818, 0
  %v8821 = vxor.u32 %v8816, 2147483648
  %v8822 = vsel %vm8820, %v8808, %v8821
  %vm8823 = vcmp.eq.s32.totalorder %v8818, 2
  %v8824 = vxor.u32 %v8808, 2147483648
  %v8825 = vsel %vm8823, %v8824, %v8816
  %v8826 = vsel %vm8819, %v8822, %v8825
  %v8827 = vsel %vm8817, nan, %v8826
  %v8828 = vand.u32 2147483647, %v183
  %vm8829 = vcmp.le.f32.partialorder %v8828, 0.7853982
  %vm8830 = vcmp.lt.s32.totalorder %v183, 0
  %v8831 = vand.u32 %v183, 2139095040
  %v8832 = vshrl.u32 %v8831, 23
  %v8833 = vsub.s32 %v8832, 127
  %v8834 = vand.u32 2147483647, %v183
  %v8835 = vand.u32 %v8834, 8388607
  %v8836 = vor.u32 %v8835, 8388608
  %v8837 = vsub.s32 0, %v8836
  %v8838 = vadd.s32 %v8833, 1
  %vm8839 = vcmp.gt.s32.totalorder %v8838, 0
  %v8840 = vsel %vm8839, %v8838, 0
  %v8841 = vshrl.u32 %v8840, 5
  %v8842 = vand.u32 %v8840, 31
  %v8843 = vsub.s32 32, %v8842
  %v8844 = vshrl.u32 683565275, %v8843
  %v8845 = vshll.u32 683565275, %v8842
  %v8846 = vshrl.u32 2475754826, %v8843
  %v8847 = vor.u32 %v8845, %v8846
  %v8848 = vshll.u32 2475754826, %v8842
  %v8849 = vshrl.u32 2131351028, %v8843
  %v8850 = vor.u32 %v8848, %v8849
  %v8851 = vshll.u32 2131351028, %v8842
  %v8852 = vshrl.u32 2102212464, %v8843
  %v8853 = vor.u32 %v8851, %v8852
  %v8854 = vshll.u32 2102212464, %v8842
  %v8855 = vshrl.u32 920167782, %v8843
  %v8856 = vor.u32 %v8854, %v8855
  %v8857 = vshll.u32 920167782, %v8842
  %v8858 = vshrl.u32 1326507024, %v8843
  %v8859 = vor.u32 %v8857, %v8858
  %vm8860 = vcmp.lt.s32.totalorder %v8841, 1
  %vm8861 = vcmp.lt.s32.totalorder %v8841, 2
  %vm8862 = vcmp.lt.s32.totalorder %v8841, 3
  %vm8863 = vcmp.lt.s32.totalorder %v8841, 4
  %v8864 = vsel %vm8860, %v8844, %v8847
  %v8865 = vsel %vm8863, %v8853, 2102212464
  %v8866 = vsel %vm8862, %v8850, %v8865
  %v8867 = vsel %vm8861, %v8864, %v8866
  %v8868 = vsel %vm8860, %v8847, %v8850
  %v8869 = vsel %vm8863, %v8856, 920167782
  %v8870 = vsel %vm8862, %v8853, %v8869
  %v8871 = vsel %vm8861, %v8868, %v8870
  %v8872 = vsel %vm8860, %v8850, %v8853
  %v8873 = vsel %vm8863, %v8859, 1326507024
  %v8874 = vsel %vm8862, %v8856, %v8873
  %v8875 = vsel %vm8861, %v8872, %v8874
  %v8876 = vshll.u32 %v8836, 8
  %v8877 = vand.u32 %v8876, 65535
  %v8878 = vshrl.u32 %v8876, 16
  %v8879 = vand.u32 %v8875, 65535
  %v8880 = vshrl.u32 %v8875, 16
  %v8881 = vmul.u32 %v8877, %v8879
  %v8882 = vmul.u32 %v8877, %v8880
  %v8883 = vmul.u32 %v8878, %v8879
  %v8884 = vmul.u32 %v8878, %v8880
  %v8885 = vshll.u32 %v8882, 16
  %v8886 = vshrl.u32 %v8882, 16
  %v8887 = vshll.u32 %v8883, 16
  %v8888 = vshrl.u32 %v8883, 16
  %vm8889 = vc.u32 %v8881, %v8885
  %v8890 = vsel %vm8889, 1, 0
  %v8891 = vadd.s32 %v8881, %v8885
  %v8892 = vadd.s32 %v8884, %v8890
  %vm8893 = vc.u32 %v8891, %v8887
  %v8894 = vsel %vm8893, 1, 0
  %v8895 = vadd.s32 %v8891, %v8887
  %v8896 = vadd.s32 %v8892, %v8894
  %v8897 = vadd.s32 %v8896, %v8886
  %v8898 = vadd.s32 %v8897, %v8888
  %v8899 = vand.u32 %v8876, 65535
  %v8900 = vshrl.u32 %v8876, 16
  %v8901 = vand.u32 %v8871, 65535
  %v8902 = vshrl.u32 %v8871, 16
  %v8903 = vmul.u32 %v8899, %v8901
  %v8904 = vmul.u32 %v8899, %v8902
  %v8905 = vmul.u32 %v8900, %v8901
  %v8906 = vmul.u32 %v8900, %v8902
  %v8907 = vshll.u32 %v8904, 16
  %v8908 = vshrl.u32 %v8904, 16
  %v8909 = vshll.u32 %v8905, 16
  %v8910 = vshrl.u32 %v8905, 16
  %vm8911 = vc.u32 %v8903, %v8907
  %v8912 = vsel %vm8911, 1, 0
  %v8913 = vadd.s32 %v8903, %v8907
  %v8914 = vadd.s32 %v8906, %v8912
  %vm8915 = vc.u32 %v8913, %v8909
  %v8916 = vsel %vm8915, 1, 0
  %v8917 = vadd.s32 %v8913, %v8909
  %v8918 = vadd.s32 %v8914, %v8916
  %v8919 = vadd.s32 %v8918, %v8908
  %v8920 = vadd.s32 %v8919, %v8910
  %v8921 = vmul.u32 %v8876, %v8867
  %v8922 = vadd.s32 %v8898, %v8917
  %vm8923 = vc.u32 %v8898, %v8917
  %v8924 = vadd.s32 %v8920, 1
  %v8925 = vsel %vm8923, %v8924, %v8920
  %v8926 = vadd.s32 %v8921, %v8925
  %v8927 = vadd.s32 %v8926, 536870912
  %v8928 = vshrl.u32 %v8927, 30
  %v8929 = vshll.u32 %v8928, 30
  %v8930 = vsub.s32 %v8926, %v8929
  %vm8931 = vcmp.lt.s32.totalorder %v8930, 0
  %v8932 = vsub.s32 0, %v8930
  %v8933 = vsel %vm8931, %v8932, %v8930
  %v8934 = vclz %v8933
  %v8935 = vsub.s32 %v8934, 2
  %vm8936 = vcmp.gt.s32.totalorder 0, %v8935
  %v8937 = vsel %vm8936, 0, %v8935
  %v8938 = vsub.s32 32, %v8937
  %v8939 = vshll.u32 %v8930, %v8937
  %v8940 = vshrl.u32 %v8922, %v8938
  %v8941 = vor.u32 %v8939, %v8940
  %v8942 = vsub.s32 4294967266, %v8937
  %v8943 = vadd.s32 %v8942, 127
  %v8944 = vshll.u32 %v8943, 23
  %v8945 = vor.u32 4788187, %v8944
  %v8946 = vand.u32 2147483647, %v8945
  %v8948 = vcvt.s32.f32 %v8941
  %v8949 = vmul.f32 %v8948, %v8946
  %v8950 = vxor.u32 %v8949, 2147483648
  %v8951 = vsel %vm8830, %v8950, %v8949
  %v8952 = vsub.s32 4, %v8928
  %v8953 = vsel %vm8830, %v8952, %v8928
  %v8954 = vsel %vm8829, %v183, %v8951
  %v8955 = vsel %vm8829, 0, %v8953
  %v8956 = vmul.f32 %v8954, %v8954
  %v8957 = vmul.f32 %v8956, -0.001358992
  %v8958 = vadd.f32 %v8957, 0.041655596
  %v8959 = vmul.f32 %v8956, %v8958
  %v8960 = vadd.f32 %v8959, -0.4999988
  %v8961 = vmul.f32 %v8956, %v8960
  %v8962 = vadd.f32 1.0, %v8961
  %v8963 = vmul.f32 %v8954, %v8954
  %v8964 = vmul.f32 %v8963, -0.00019511016
  %v8965 = vadd.f32 %v8964, 0.008332121
  %v8966 = vmul.f32 %v8963, %v8965
  %v8967 = vadd.f32 %v8966, -0.16666654
  %v8968 = vmul.f32 %v8963, %v8967
  %v8969 = vadd.f32 %v8968, 1.0
  %v8970 = vmul.f32 %v8969, %v8954
  %vm8971 = vweird.f32 %v183
  %v8972 = vand.u32 %v8955, 3
  %vm8973 = vcmp.lt.s32.totalorder %v8972, 2
  %vm8974 = vcmp.eq.s32.totalorder %v8972, 0
  %v8975 = vxor.u32 %v8970, 2147483648
  %v8976 = vsel %vm8974, %v8962, %v8975
  %vm8977 = vcmp.eq.s32.totalorder %v8972, 2
  %v8978 = vxor.u32 %v8962, 2147483648
  %v8979 = vsel %vm8977, %v8978, %v8970
  %v8980 = vsel %vm8973, %v8976, %v8979
  %v8981 = vsel %vm8971, nan, %v8980
  %v8982 = vand.u32 2147483647, %v188
  %vm8983 = vcmp.le.f32.partialorder %v8982, 0.7853982
  %vm8984 = vcmp.lt.s32.totalorder %v188, 0
  %v8985 = vand.u32 %v188, 2139095040
  %v8986 = vshrl.u32 %v8985, 23
  %v8987 = vsub.s32 %v8986, 127
  %v8988 = vand.u32 2147483647, %v188
  %v8989 = vand.u32 %v8988, 8388607
  %v8990 = vor.u32 %v8989, 8388608
  %v8991 = vsub.s32 0, %v8990
  %v8992 = vadd.s32 %v8987, 1
  %vm8993 = vcmp.gt.s32.totalorder %v8992, 0
  %v8994 = vsel %vm8993, %v8992, 0
  %v8995 = vshrl.u32 %v8994, 5
  %v8996 = vand.u32 %v8994, 31
  %v8997 = vsub.s32 32, %v8996
  %v8998 = vshrl.u32 683565275, %v8997
  %v8999 = vshll.u32 683565275, %v8996
  %v9000 = vshrl.u32 2475754826, %v8997
  %v9001 = vor.u32 %v8999, %v9000
  %v9002 = vshll.u32 2475754826, %v8996
  %v9003 = vshrl.u32 2131351028, %v8997
  %v9004 = vor.u32 %v9002, %v9003
  %v9005 = vshll.u32 2131351028, %v8996
  %v9006 = vshrl.u32 2102212464, %v8997
  %v9007 = vor.u32 %v9005, %v9006
  %v9008 = vshll.u32 2102212464, %v8996
  %v9009 = vshrl.u32 920167782, %v8997
  %v9010 = vor.u32 %v9008, %v9009
  %v9011 = vshll.u32 920167782, %v8996
  %v9012 = vshrl.u32 1326507024, %v8997
  %v9013 = vor.u32 %v9011, %v9012
  %vm9014 = vcmp.lt.s32.totalorder %v8995, 1
  %vm9015 = vcmp.lt.s32.totalorder %v8995, 2
  %vm9016 = vcmp.lt.s32.totalorder %v8995, 3
  %vm9017 = vcmp.lt.s32.totalorder %v8995, 4
  %v9018 = vsel %vm9014, %v8998, %v9001
  %v9019 = vsel %vm9017, %v9007, 2102212464
  %v9020 = vsel %vm9016, %v9004, %v9019
  %v9021 = vsel %vm9015, %v9018, %v9020
  %v9022 = vsel %vm9014, %v9001, %v9004
  %v9023 = vsel %vm9017, %v9010, 920167782
  %v9024 = vsel %vm9016, %v9007, %v9023
  %v9025 = vsel %vm9015, %v9022, %v9024
  %v9026 = vsel %vm9014, %v9004, %v9007
  %v9027 = vsel %vm9017, %v9013, 1326507024
  %v9028 = vsel %vm9016, %v9010, %v9027
  %v9029 = vsel %vm9015, %v9026, %v9028
  %v9030 = vshll.u32 %v8990, 8
  %v9031 = vand.u32 %v9030, 65535
  %v9032 = vshrl.u32 %v9030, 16
  %v9033 = vand.u32 %v9029, 65535
  %v9034 = vshrl.u32 %v9029, 16
  %v9035 = vmul.u32 %v9031, %v9033
  %v9036 = vmul.u32 %v9031, %v9034
  %v9037 = vmul.u32 %v9032, %v9033
  %v9038 = vmul.u32 %v9032, %v9034
  %v9039 = vshll.u32 %v9036, 16
  %v9040 = vshrl.u32 %v9036, 16
  %v9041 = vshll.u32 %v9037, 16
  %v9042 = vshrl.u32 %v9037, 16
  %vm9043 = vc.u32 %v9035, %v9039
  %v9044 = vsel %vm9043, 1, 0
  %v9045 = vadd.s32 %v9035, %v9039
  %v9046 = vadd.s32 %v9038, %v9044
  %vm9047 = vc.u32 %v9045, %v9041
  %v9048 = vsel %vm9047, 1, 0
  %v9049 = vadd.s32 %v9045, %v9041
  %v9050 = vadd.s32 %v9046, %v9048
  %v9051 = vadd.s32 %v9050, %v9040
  %v9052 = vadd.s32 %v9051, %v9042
  %v9053 = vand.u32 %v9030, 65535
  %v9054 = vshrl.u32 %v9030, 16
  %v9055 = vand.u32 %v9025, 65535
  %v9056 = vshrl.u32 %v9025, 16
  %v9057 = vmul.u32 %v9053, %v9055
  %v9058 = vmul.u32 %v9053, %v9056
  %v9059 = vmul.u32 %v9054, %v9055
  %v9060 = vmul.u32 %v9054, %v9056
  %v9061 = vshll.u32 %v9058, 16
  %v9062 = vshrl.u32 %v9058, 16
  %v9063 = vshll.u32 %v9059, 16
  %v9064 = vshrl.u32 %v9059, 16
  %vm9065 = vc.u32 %v9057, %v9061
  %v9066 = vsel %vm9065, 1, 0
  %v9067 = vadd.s32 %v9057, %v9061
  %v9068 = vadd.s32 %v9060, %v9066
  %vm9069 = vc.u32 %v9067, %v9063
  %v9070 = vsel %vm9069, 1, 0
  %v9071 = vadd.s32 %v9067, %v9063
  %v9072 = vadd.s32 %v9068, %v9070
  %v9073 = vadd.s32 %v9072, %v9062
  %v9074 = vadd.s32 %v9073, %v9064
  %v9075 = vmul.u32 %v9030, %v9021
  %v9076 = vadd.s32 %v9052, %v9071
  %vm9077 = vc.u32 %v9052, %v9071
  %v9078 = vadd.s32 %v9074, 1
  %v9079 = vsel %vm9077, %v9078, %v9074
  %v9080 = vadd.s32 %v9075, %v9079
  %v9081 = vadd.s32 %v9080, 536870912
  %v9082 = vshrl.u32 %v9081, 30
  %v9083 = vshll.u32 %v9082, 30
  %v9084 = vsub.s32 %v9080, %v9083
  %vm9085 = vcmp.lt.s32.totalorder %v9084, 0
  %v9086 = vsub.s32 0, %v9084
  %v9087 = vsel %vm9085, %v9086, %v9084
  %v9088 = vclz %v9087
  %v9089 = vsub.s32 %v9088, 2
  %vm9090 = vcmp.gt.s32.totalorder 0, %v9089
  %v9091 = vsel %vm9090, 0, %v9089
  %v9092 = vsub.s32 32, %v9091
  %v9093 = vshll.u32 %v9084, %v9091
  %v9094 = vshrl.u32 %v9076, %v9092
  %v9095 = vor.u32 %v9093, %v9094
  %v9096 = vsub.s32 4294967266, %v9091
  %v9097 = vadd.s32 %v9096, 127
  %v9098 = vshll.u32 %v9097, 23
  %v9099 = vor.u32 4788187, %v9098
  %v9100 = vand.u32 2147483647, %v9099
  %v9102 = vcvt.s32.f32 %v9095
  %v9103 = vmul.f32 %v9102, %v9100
  %v9104 = vxor.u32 %v9103, 2147483648
  %v9105 = vsel %vm8984, %v9104, %v9103
  %v9106 = vsub.s32 4, %v9082
  %v9107 = vsel %vm8984, %v9106, %v9082
  %v9108 = vsel %vm8983, %v188, %v9105
  %v9109 = vsel %vm8983, 0, %v9107
  %v9110 = vmul.f32 %v9108, %v9108
  %v9111 = vmul.f32 %v9110, -0.001358992
  %v9112 = vadd.f32 %v9111, 0.041655596
  %v9113 = vmul.f32 %v9110, %v9112
  %v9114 = vadd.f32 %v9113, -0.4999988
  %v9115 = vmul.f32 %v9110, %v9114
  %v9116 = vadd.f32 1.0, %v9115
  %v9117 = vmul.f32 %v9108, %v9108
  %v9118 = vmul.f32 %v9117, -0.00019511016
  %v9119 = vadd.f32 %v9118, 0.008332121
  %v9120 = vmul.f32 %v9117, %v9119
  %v9121 = vadd.f32 %v9120, -0.16666654
  %v9122 = vmul.f32 %v9117, %v9121
  %v9123 = vadd.f32 %v9122, 1.0
  %v9124 = vmul.f32 %v9123, %v9108
  %vm9125 = vweird.f32 %v188
  %v9126 = vand.u32 %v9109, 3
  %vm9127 = vcmp.lt.s32.totalorder %v9126, 2
  %vm9128 = vcmp.eq.s32.totalorder %v9126, 0
  %v9129 = vxor.u32 %v9124, 2147483648
  %v9130 = vsel %vm9128, %v9116, %v9129
  %vm9131 = vcmp.eq.s32.totalorder %v9126, 2
  %v9132 = vxor.u32 %v9116, 2147483648
  %v9133 = vsel %vm9131, %v9132, %v9124
  %v9134 = vsel %vm9127, %v9130, %v9133
  %v9135 = vsel %vm9125, nan, %v9134
  %v9136 = vand.u32 2147483647, %v193
  %vm9137 = vcmp.le.f32.partialorder %v9136, 0.7853982
  %vm9138 = vcmp.lt.s32.totalorder %v193, 0
  %v9139 = vand.u32 %v193, 2139095040
  %v9140 = vshrl.u32 %v9139, 23
  %v9141 = vsub.s32 %v9140, 127
  %v9142 = vand.u32 2147483647, %v193
  %v9143 = vand.u32 %v9142, 8388607
  %v9144 = vor.u32 %v9143, 8388608
  %v9145 = vsub.s32 0, %v9144
  %v9146 = vadd.s32 %v9141, 1
  %vm9147 = vcmp.gt.s32.totalorder %v9146, 0
  %v9148 = vsel %vm9147, %v9146, 0
  %v9149 = vshrl.u32 %v9148, 5
  %v9150 = vand.u32 %v9148, 31
  %v9151 = vsub.s32 32, %v9150
  %v9152 = vshrl.u32 683565275, %v9151
  %v9153 = vshll.u32 683565275, %v9150
  %v9154 = vshrl.u32 2475754826, %v9151
  %v9155 = vor.u32 %v9153, %v9154
  %v9156 = vshll.u32 2475754826, %v9150
  %v9157 = vshrl.u32 2131351028, %v9151
  %v9158 = vor.u32 %v9156, %v9157
  %v9159 = vshll.u32 2131351028, %v9150
  %v9160 = vshrl.u32 2102212464, %v9151
  %v9161 = vor.u32 %v9159, %v9160
  %v9162 = vshll.u32 2102212464, %v9150
  %v9163 = vshrl.u32 920167782, %v9151
  %v9164 = vor.u32 %v9162, %v9163
  %v9165 = vshll.u32 920167782, %v9150
  %v9166 = vshrl.u32 1326507024, %v9151
  %v9167 = vor.u32 %v9165, %v9166
  %vm9168 = vcmp.lt.s32.totalorder %v9149, 1
  %vm9169 = vcmp.lt.s32.totalorder %v9149, 2
  %vm9170 = vcmp.lt.s32.totalorder %v9149, 3
  %vm9171 = vcmp.lt.s32.totalorder %v9149, 4
  %v9172 = vsel %vm9168, %v9152, %v9155
  %v9173 = vsel %vm9171, %v9161, 2102212464
  %v9174 = vsel %vm9170, %v9158, %v9173
  %v9175 = vsel %vm9169, %v9172, %v9174
  %v9176 = vsel %vm9168, %v9155, %v9158
  %v9177 = vsel %vm9171, %v9164, 920167782
  %v9178 = vsel %vm9170, %v9161, %v9177
  %v9179 = vsel %vm9169, %v9176, %v9178
  %v9180 = vsel %vm9168, %v9158, %v9161
  %v9181 = vsel %vm9171, %v9167, 1326507024
  %v9182 = vsel %vm9170, %v9164, %v9181
  %v9183 = vsel %vm9169, %v9180, %v9182
  %v9184 = vshll.u32 %v9144, 8
  %v9185 = vand.u32 %v9184, 65535
  %v9186 = vshrl.u32 %v9184, 16
  %v9187 = vand.u32 %v9183, 65535
  %v9188 = vshrl.u32 %v9183, 16
  %v9189 = vmul.u32 %v9185, %v9187
  %v9190 = vmul.u32 %v9185, %v9188
  %v9191 = vmul.u32 %v9186, %v9187
  %v9192 = vmul.u32 %v9186, %v9188
  %v9193 = vshll.u32 %v9190, 16
  %v9194 = vshrl.u32 %v9190, 16
  %v9195 = vshll.u32 %v9191, 16
  %v9196 = vshrl.u32 %v9191, 16
  %vm9197 = vc.u32 %v9189, %v9193
  %v9198 = vsel %vm9197, 1, 0
  %v9199 = vadd.s32 %v9189, %v9193
  %v9200 = vadd.s32 %v9192, %v9198
  %vm9201 = vc.u32 %v9199, %v9195
  %v9202 = vsel %vm9201, 1, 0
  %v9203 = vadd.s32 %v9199, %v9195
  %v9204 = vadd.s32 %v9200, %v9202
  %v9205 = vadd.s32 %v9204, %v9194
  %v9206 = vadd.s32 %v9205, %v9196
  %v9207 = vand.u32 %v9184, 65535
  %v9208 = vshrl.u32 %v9184, 16
  %v9209 = vand.u32 %v9179, 65535
  %v9210 = vshrl.u32 %v9179, 16
  %v9211 = vmul.u32 %v9207, %v9209
  %v9212 = vmul.u32 %v9207, %v9210
  %v9213 = vmul.u32 %v9208, %v9209
  %v9214 = vmul.u32 %v9208, %v9210
  %v9215 = vshll.u32 %v9212, 16
  %v9216 = vshrl.u32 %v9212, 16
  %v9217 = vshll.u32 %v9213, 16
  %v9218 = vshrl.u32 %v9213, 16
  %vm9219 = vc.u32 %v9211, %v9215
  %v9220 = vsel %vm9219, 1, 0
  %v9221 = vadd.s32 %v9211, %v9215
  %v9222 = vadd.s32 %v9214, %v9220
  %vm9223 = vc.u32 %v9221, %v9217
  %v9224 = vsel %vm9223, 1, 0
  %v9225 = vadd.s32 %v9221, %v9217
  %v9226 = vadd.s32 %v9222, %v9224
  %v9227 = vadd.s32 %v9226, %v9216
  %v9228 = vadd.s32 %v9227, %v9218
  %v9229 = vmul.u32 %v9184, %v9175
  %v9230 = vadd.s32 %v9206, %v9225
  %vm9231 = vc.u32 %v9206, %v9225
  %v9232 = vadd.s32 %v9228, 1
  %v9233 = vsel %vm9231, %v9232, %v9228
  %v9234 = vadd.s32 %v9229, %v9233
  %v9235 = vadd.s32 %v9234, 536870912
  %v9236 = vshrl.u32 %v9235, 30
  %v9237 = vshll.u32 %v9236, 30
  %v9238 = vsub.s32 %v9234, %v9237
  %vm9239 = vcmp.lt.s32.totalorder %v9238, 0
  %v9240 = vsub.s32 0, %v9238
  %v9241 = vsel %vm9239, %v9240, %v9238
  %v9242 = vclz %v9241
  %v9243 = vsub.s32 %v9242, 2
  %vm9244 = vcmp.gt.s32.totalorder 0, %v9243
  %v9245 = vsel %vm9244, 0, %v9243
  %v9246 = vsub.s32 32, %v9245
  %v9247 = vshll.u32 %v9238, %v9245
  %v9248 = vshrl.u32 %v9230, %v9246
  %v9249 = vor.u32 %v9247, %v9248
  %v9250 = vsub.s32 4294967266, %v9245
  %v9251 = vadd.s32 %v9250, 127
  %v9252 = vshll.u32 %v9251, 23
  %v9253 = vor.u32 4788187, %v9252
  %v9254 = vand.u32 2147483647, %v9253
  %v9256 = vcvt.s32.f32 %v9249
  %v9257 = vmul.f32 %v9256, %v9254
  %v9258 = vxor.u32 %v9257, 2147483648
  %v9259 = vsel %vm9138, %v9258, %v9257
  %v9260 = vsub.s32 4, %v9236
  %v9261 = vsel %vm9138, %v9260, %v9236
  %v9262 = vsel %vm9137, %v193, %v9259
  %v9263 = vsel %vm9137, 0, %v9261
  %v9264 = vmul.f32 %v9262, %v9262
  %v9265 = vmul.f32 %v9264, -0.001358992
  %v9266 = vadd.f32 %v9265, 0.041655596
  %v9267 = vmul.f32 %v9264, %v9266
  %v9268 = vadd.f32 %v9267, -0.4999988
  %v9269 = vmul.f32 %v9264, %v9268
  %v9270 = vadd.f32 1.0, %v9269
  %v9271 = vmul.f32 %v9262, %v9262
  %v9272 = vmul.f32 %v9271, -0.00019511016
  %v9273 = vadd.f32 %v9272, 0.008332121
  %v9274 = vmul.f32 %v9271, %v9273
  %v9275 = vadd.f32 %v9274, -0.16666654
  %v9276 = vmul.f32 %v9271, %v9275
  %v9277 = vadd.f32 %v9276, 1.0
  %v9278 = vmul.f32 %v9277, %v9262
  %vm9279 = vweird.f32 %v193
  %v9280 = vand.u32 %v9263, 3
  %vm9281 = vcmp.lt.s32.totalorder %v9280, 2
  %vm9282 = vcmp.eq.s32.totalorder %v9280, 0
  %v9283 = vxor.u32 %v9278, 2147483648
  %v9284 = vsel %vm9282, %v9270, %v9283
  %vm9285 = vcmp.eq.s32.totalorder %v9280, 2
  %v9286 = vxor.u32 %v9270, 2147483648
  %v9287 = vsel %vm9285, %v9286, %v9278
  %v9288 = vsel %vm9281, %v9284, %v9287
  %v9289 = vsel %vm9279, nan, %v9288
  %v9290 = vand.u32 2147483647, %v198
  %vm9291 = vcmp.le.f32.partialorder %v9290, 0.7853982
  %vm9292 = vcmp.lt.s32.totalorder %v198, 0
  %v9293 = vand.u32 %v198, 2139095040
  %v9294 = vshrl.u32 %v9293, 23
  %v9295 = vsub.s32 %v9294, 127
  %v9296 = vand.u32 2147483647, %v198
  %v9297 = vand.u32 %v9296, 8388607
  %v9298 = vor.u32 %v9297, 8388608
  %v9299 = vsub.s32 0, %v9298
  %v9300 = vadd.s32 %v9295, 1
  %vm9301 = vcmp.gt.s32.totalorder %v9300, 0
  %v9302 = vsel %vm9301, %v9300, 0
  %v9303 = vshrl.u32 %v9302, 5
  %v9304 = vand.u32 %v9302, 31
  %v9305 = vsub.s32 32, %v9304
  %v9306 = vshrl.u32 683565275, %v9305
  %v9307 = vshll.u32 683565275, %v9304
  %v9308 = vshrl.u32 2475754826, %v9305
  %v9309 = vor.u32 %v9307, %v9308
  %v9310 = vshll.u32 2475754826, %v9304
  %v9311 = vshrl.u32 2131351028, %v9305
  %v9312 = vor.u32 %v9310, %v9311
  %v9313 = vshll.u32 2131351028, %v9304
  %v9314 = vshrl.u32 2102212464, %v9305
  %v9315 = vor.u32 %v9313, %v9314
  %v9316 = vshll.u32 2102212464, %v9304
  %v9317 = vshrl.u32 920167782, %v9305
  %v9318 = vor.u32 %v9316, %v9317
  %v9319 = vshll.u32 920167782, %v9304
  %v9320 = vshrl.u32 1326507024, %v9305
  %v9321 = vor.u32 %v9319, %v9320
  %vm9322 = vcmp.lt.s32.totalorder %v9303, 1
  %vm9323 = vcmp.lt.s32.totalorder %v9303, 2
  %vm9324 = vcmp.lt.s32.totalorder %v9303, 3
  %vm9325 = vcmp.lt.s32.totalorder %v9303, 4
  %v9326 = vsel %vm9322, %v9306, %v9309
  %v9327 = vsel %vm9325, %v9315, 2102212464
  %v9328 = vsel %vm9324, %v9312, %v9327
  %v9329 = vsel %vm9323, %v9326, %v9328
  %v9330 = vsel %vm9322, %v9309, %v9312
  %v9331 = vsel %vm9325, %v9318, 920167782
  %v9332 = vsel %vm9324, %v9315, %v9331
  %v9333 = vsel %vm9323, %v9330, %v9332
  %v9334 = vsel %vm9322, %v9312, %v9315
  %v9335 = vsel %vm9325, %v9321, 1326507024
  %v9336 = vsel %vm9324, %v9318, %v9335
  %v9337 = vsel %vm9323, %v9334, %v9336
  %v9338 = vshll.u32 %v9298, 8
  %v9339 = vand.u32 %v9338, 65535
  %v9340 = vshrl.u32 %v9338, 16
  %v9341 = vand.u32 %v9337, 65535
  %v9342 = vshrl.u32 %v9337, 16
  %v9343 = vmul.u32 %v9339, %v9341
  %v9344 = vmul.u32 %v9339, %v9342
  %v9345 = vmul.u32 %v9340, %v9341
  %v9346 = vmul.u32 %v9340, %v9342
  %v9347 = vshll.u32 %v9344, 16
  %v9348 = vshrl.u32 %v9344, 16
  %v9349 = vshll.u32 %v9345, 16
  %v9350 = vshrl.u32 %v9345, 16
  %vm9351 = vc.u32 %v9343, %v9347
  %v9352 = vsel %vm9351, 1, 0
  %v9353 = vadd.s32 %v9343, %v9347
  %v9354 = vadd.s32 %v9346, %v9352
  %vm9355 = vc.u32 %v9353, %v9349
  %v9356 = vsel %vm9355, 1, 0
  %v9357 = vadd.s32 %v9353, %v9349
  %v9358 = vadd.s32 %v9354, %v9356
  %v9359 = vadd.s32 %v9358, %v9348
  %v9360 = vadd.s32 %v9359, %v9350
  %v9361 = vand.u32 %v9338, 65535
  %v9362 = vshrl.u32 %v9338, 16
  %v9363 = vand.u32 %v9333, 65535
  %v9364 = vshrl.u32 %v9333, 16
  %v9365 = vmul.u32 %v9361, %v9363
  %v9366 = vmul.u32 %v9361, %v9364
  %v9367 = vmul.u32 %v9362, %v9363
  %v9368 = vmul.u32 %v9362, %v9364
  %v9369 = vshll.u32 %v9366, 16
  %v9370 = vshrl.u32 %v9366, 16
  %v9371 = vshll.u32 %v9367, 16
  %v9372 = vshrl.u32 %v9367, 16
  %vm9373 = vc.u32 %v9365, %v9369
  %v9374 = vsel %vm9373, 1, 0
  %v9375 = vadd.s32 %v9365, %v9369
  %v9376 = vadd.s32 %v9368, %v9374
  %vm9377 = vc.u32 %v9375, %v9371
  %v9378 = vsel %vm9377, 1, 0
  %v9379 = vadd.s32 %v9375, %v9371
  %v9380 = vadd.s32 %v9376, %v9378
  %v9381 = vadd.s32 %v9380, %v9370
  %v9382 = vadd.s32 %v9381, %v9372
  %v9383 = vmul.u32 %v9338, %v9329
  %v9384 = vadd.s32 %v9360, %v9379
  %vm9385 = vc.u32 %v9360, %v9379
  %v9386 = vadd.s32 %v9382, 1
  %v9387 = vsel %vm9385, %v9386, %v9382
  %v9388 = vadd.s32 %v9383, %v9387
  %v9389 = vadd.s32 %v9388, 536870912
  %v9390 = vshrl.u32 %v9389, 30
  %v9391 = vshll.u32 %v9390, 30
  %v9392 = vsub.s32 %v9388, %v9391
  %vm9393 = vcmp.lt.s32.totalorder %v9392, 0
  %v9394 = vsub.s32 0, %v9392
  %v9395 = vsel %vm9393, %v9394, %v9392
  %v9396 = vclz %v9395
  %v9397 = vsub.s32 %v9396, 2
  %vm9398 = vcmp.gt.s32.totalorder 0, %v9397
  %v9399 = vsel %vm9398, 0, %v9397
  %v9400 = vsub.s32 32, %v9399
  %v9401 = vshll.u32 %v9392, %v9399
  %v9402 = vshrl.u32 %v9384, %v9400
  %v9403 = vor.u32 %v9401, %v9402
  %v9404 = vsub.s32 4294967266, %v9399
  %v9405 = vadd.s32 %v9404, 127
  %v9406 = vshll.u32 %v9405, 23
  %v9407 = vor.u32 4788187, %v9406
  %v9408 = vand.u32 2147483647, %v9407
  %v9410 = vcvt.s32.f32 %v9403
  %v9411 = vmul.f32 %v9410, %v9408
  %v9412 = vxor.u32 %v9411, 2147483648
  %v9413 = vsel %vm9292, %v9412, %v9411
  %v9414 = vsub.s32 4, %v9390
  %v9415 = vsel %vm9292, %v9414, %v9390
  %v9416 = vsel %vm9291, %v198, %v9413
  %v9417 = vsel %vm9291, 0, %v9415
  %v9418 = vmul.f32 %v9416, %v9416
  %v9419 = vmul.f32 %v9418, -0.001358992
  %v9420 = vadd.f32 %v9419, 0.041655596
  %v9421 = vmul.f32 %v9418, %v9420
  %v9422 = vadd.f32 %v9421, -0.4999988
  %v9423 = vmul.f32 %v9418, %v9422
  %v9424 = vadd.f32 1.0, %v9423
  %v9425 = vmul.f32 %v9416, %v9416
  %v9426 = vmul.f32 %v9425, -0.00019511016
  %v9427 = vadd.f32 %v9426, 0.008332121
  %v9428 = vmul.f32 %v9425, %v9427
  %v9429 = vadd.f32 %v9428, -0.16666654
  %v9430 = vmul.f32 %v9425, %v9429
  %v9431 = vadd.f32 %v9430, 1.0
  %v9432 = vmul.f32 %v9431, %v9416
  %vm9433 = vweird.f32 %v198
  %v9434 = vand.u32 %v9417, 3
  %vm9435 = vcmp.lt.s32.totalorder %v9434, 2
  %vm9436 = vcmp.eq.s32.totalorder %v9434, 0
  %v9437 = vxor.u32 %v9432, 2147483648
  %v9438 = vsel %vm9436, %v9424, %v9437
  %vm9439 = vcmp.eq.s32.totalorder %v9434, 2
  %v9440 = vxor.u32 %v9424, 2147483648
  %v9441 = vsel %vm9439, %v9440, %v9432
  %v9442 = vsel %vm9435, %v9438, %v9441
  %v9443 = vsel %vm9433, nan, %v9442
  %v9444 = vand.u32 2147483647, %v203
  %vm9445 = vcmp.le.f32.partialorder %v9444, 0.7853982
  %vm9446 = vcmp.lt.s32.totalorder %v203, 0
  %v9447 = vand.u32 %v203, 2139095040
  %v9448 = vshrl.u32 %v9447, 23
  %v9449 = vsub.s32 %v9448, 127
  %v9450 = vand.u32 2147483647, %v203
  %v9451 = vand.u32 %v9450, 8388607
  %v9452 = vor.u32 %v9451, 8388608
  %v9453 = vsub.s32 0, %v9452
  %v9454 = vadd.s32 %v9449, 1
  %vm9455 = vcmp.gt.s32.totalorder %v9454, 0
  %v9456 = vsel %vm9455, %v9454, 0
  %v9457 = vshrl.u32 %v9456, 5
  %v9458 = vand.u32 %v9456, 31
  %v9459 = vsub.s32 32, %v9458
  %v9460 = vshrl.u32 683565275, %v9459
  %v9461 = vshll.u32 683565275, %v9458
  %v9462 = vshrl.u32 2475754826, %v9459
  %v9463 = vor.u32 %v9461, %v9462
  %v9464 = vshll.u32 2475754826, %v9458
  %v9465 = vshrl.u32 2131351028, %v9459
  %v9466 = vor.u32 %v9464, %v9465
  %v9467 = vshll.u32 2131351028, %v9458
  %v9468 = vshrl.u32 2102212464, %v9459
  %v9469 = vor.u32 %v9467, %v9468
  %v9470 = vshll.u32 2102212464, %v9458
  %v9471 = vshrl.u32 920167782, %v9459
  %v9472 = vor.u32 %v9470, %v9471
  %v9473 = vshll.u32 920167782, %v9458
  %v9474 = vshrl.u32 1326507024, %v9459
  %v9475 = vor.u32 %v9473, %v9474
  %vm9476 = vcmp.lt.s32.totalorder %v9457, 1
  %vm9477 = vcmp.lt.s32.totalorder %v9457, 2
  %vm9478 = vcmp.lt.s32.totalorder %v9457, 3
  %vm9479 = vcmp.lt.s32.totalorder %v9457, 4
  %v9480 = vsel %vm9476, %v9460, %v9463
  %v9481 = vsel %vm9479, %v9469, 2102212464
  %v9482 = vsel %vm9478, %v9466, %v9481
  %v9483 = vsel %vm9477, %v9480, %v9482
  %v9484 = vsel %vm9476, %v9463, %v9466
  %v9485 = vsel %vm9479, %v9472, 920167782
  %v9486 = vsel %vm9478, %v9469, %v9485
  %v9487 = vsel %vm9477, %v9484, %v9486
  %v9488 = vsel %vm9476, %v9466, %v9469
  %v9489 = vsel %vm9479, %v9475, 1326507024
  %v9490 = vsel %vm9478, %v9472, %v9489
  %v9491 = vsel %vm9477, %v9488, %v9490
  %v9492 = vshll.u32 %v9452, 8
  %v9493 = vand.u32 %v9492, 65535
  %v9494 = vshrl.u32 %v9492, 16
  %v9495 = vand.u32 %v9491, 65535
  %v9496 = vshrl.u32 %v9491, 16
  %v9497 = vmul.u32 %v9493, %v9495
  %v9498 = vmul.u32 %v9493, %v9496
  %v9499 = vmul.u32 %v9494, %v9495
  %v9500 = vmul.u32 %v9494, %v9496
  %v9501 = vshll.u32 %v9498, 16
  %v9502 = vshrl.u32 %v9498, 16
  %v9503 = vshll.u32 %v9499, 16
  %v9504 = vshrl.u32 %v9499, 16
  %vm9505 = vc.u32 %v9497, %v9501
  %v9506 = vsel %vm9505, 1, 0
  %v9507 = vadd.s32 %v9497, %v9501
  %v9508 = vadd.s32 %v9500, %v9506
  %vm9509 = vc.u32 %v9507, %v9503
  %v9510 = vsel %vm9509, 1, 0
  %v9511 = vadd.s32 %v9507, %v9503
  %v9512 = vadd.s32 %v9508, %v9510
  %v9513 = vadd.s32 %v9512, %v9502
  %v9514 = vadd.s32 %v9513, %v9504
  %v9515 = vand.u32 %v9492, 65535
  %v9516 = vshrl.u32 %v9492, 16
  %v9517 = vand.u32 %v9487, 65535
  %v9518 = vshrl.u32 %v9487, 16
  %v9519 = vmul.u32 %v9515, %v9517
  %v9520 = vmul.u32 %v9515, %v9518
  %v9521 = vmul.u32 %v9516, %v9517
  %v9522 = vmul.u32 %v9516, %v9518
  %v9523 = vshll.u32 %v9520, 16
  %v9524 = vshrl.u32 %v9520, 16
  %v9525 = vshll.u32 %v9521, 16
  %v9526 = vshrl.u32 %v9521, 16
  %vm9527 = vc.u32 %v9519, %v9523
  %v9528 = vsel %vm9527, 1, 0
  %v9529 = vadd.s32 %v9519, %v9523
  %v9530 = vadd.s32 %v9522, %v9528
  %vm9531 = vc.u32 %v9529, %v9525
  %v9532 = vsel %vm9531, 1, 0
  %v9533 = vadd.s32 %v9529, %v9525
  %v9534 = vadd.s32 %v9530, %v9532
  %v9535 = vadd.s32 %v9534, %v9524
  %v9536 = vadd.s32 %v9535, %v9526
  %v9537 = vmul.u32 %v9492, %v9483
  %v9538 = vadd.s32 %v9514, %v9533
  %vm9539 = vc.u32 %v9514, %v9533
  %v9540 = vadd.s32 %v9536, 1
  %v9541 = vsel %vm9539, %v9540, %v9536
  %v9542 = vadd.s32 %v9537, %v9541
  %v9543 = vadd.s32 %v9542, 536870912
  %v9544 = vshrl.u32 %v9543, 30
  %v9545 = vshll.u32 %v9544, 30
  %v9546 = vsub.s32 %v9542, %v9545
  %vm9547 = vcmp.lt.s32.totalorder %v9546, 0
  %v9548 = vsub.s32 0, %v9546
  %v9549 = vsel %vm9547, %v9548, %v9546
  %v9550 = vclz %v9549
  %v9551 = vsub.s32 %v9550, 2
  %vm9552 = vcmp.gt.s32.totalorder 0, %v9551
  %v9553 = vsel %vm9552, 0, %v9551
  %v9554 = vsub.s32 32, %v9553
  %v9555 = vshll.u32 %v9546, %v9553
  %v9556 = vshrl.u32 %v9538, %v9554
  %v9557 = vor.u32 %v9555, %v9556
  %v9558 = vsub.s32 4294967266, %v9553
  %v9559 = vadd.s32 %v9558, 127
  %v9560 = vshll.u32 %v9559, 23
  %v9561 = vor.u32 4788187, %v9560
  %v9562 = vand.u32 2147483647, %v9561
  %v9564 = vcvt.s32.f32 %v9557
  %v9565 = vmul.f32 %v9564, %v9562
  %v9566 = vxor.u32 %v9565, 2147483648
  %v9567 = vsel %vm9446, %v9566, %v9565
  %v9568 = vsub.s32 4, %v9544
  %v9569 = vsel %vm9446, %v9568, %v9544
  %v9570 = vsel %vm9445, %v203, %v9567
  %v9571 = vsel %vm9445, 0, %v9569
  %v9572 = vmul.f32 %v9570, %v9570
  %v9573 = vmul.f32 %v9572, -0.001358992
  %v9574 = vadd.f32 %v9573, 0.041655596
  %v9575 = vmul.f32 %v9572, %v9574
  %v9576 = vadd.f32 %v9575, -0.4999988
  %v9577 = vmul.f32 %v9572, %v9576
  %v9578 = vadd.f32 1.0, %v9577
  %v9579 = vmul.f32 %v9570, %v9570
  %v9580 = vmul.f32 %v9579, -0.00019511016
  %v9581 = vadd.f32 %v9580, 0.008332121
  %v9582 = vmul.f32 %v9579, %v9581
  %v9583 = vadd.f32 %v9582, -0.16666654
  %v9584 = vmul.f32 %v9579, %v9583
  %v9585 = vadd.f32 %v9584, 1.0
  %v9586 = vmul.f32 %v9585, %v9570
  %vm9587 = vweird.f32 %v203
  %v9588 = vand.u32 %v9571, 3
  %vm9589 = vcmp.lt.s32.totalorder %v9588, 2
  %vm9590 = vcmp.eq.s32.totalorder %v9588, 0
  %v9591 = vxor.u32 %v9586, 2147483648
  %v9592 = vsel %vm9590, %v9578, %v9591
  %vm9593 = vcmp.eq.s32.totalorder %v9588, 2
  %v9594 = vxor.u32 %v9578, 2147483648
  %v9595 = vsel %vm9593, %v9594, %v9586
  %v9596 = vsel %vm9589, %v9592, %v9595
  %v9597 = vsel %vm9587, nan, %v9596
  %v9598 = vand.u32 2147483647, %v208
  %vm9599 = vcmp.le.f32.partialorder %v9598, 0.7853982
  %vm9600 = vcmp.lt.s32.totalorder %v208, 0
  %v9601 = vand.u32 %v208, 2139095040
  %v9602 = vshrl.u32 %v9601, 23
  %v9603 = vsub.s32 %v9602, 127
  %v9604 = vand.u32 2147483647, %v208
  %v9605 = vand.u32 %v9604, 8388607
  %v9606 = vor.u32 %v9605, 8388608
  %v9607 = vsub.s32 0, %v9606
  %v9608 = vadd.s32 %v9603, 1
  %vm9609 = vcmp.gt.s32.totalorder %v9608, 0
  %v9610 = vsel %vm9609, %v9608, 0
  %v9611 = vshrl.u32 %v9610, 5
  %v9612 = vand.u32 %v9610, 31
  %v9613 = vsub.s32 32, %v9612
  %v9614 = vshrl.u32 683565275, %v9613
  %v9615 = vshll.u32 683565275, %v9612
  %v9616 = vshrl.u32 2475754826, %v9613
  %v9617 = vor.u32 %v9615, %v9616
  %v9618 = vshll.u32 2475754826, %v9612
  %v9619 = vshrl.u32 2131351028, %v9613
  %v9620 = vor.u32 %v9618, %v9619
  %v9621 = vshll.u32 2131351028, %v9612
  %v9622 = vshrl.u32 2102212464, %v9613
  %v9623 = vor.u32 %v9621, %v9622
  %v9624 = vshll.u32 2102212464, %v9612
  %v9625 = vshrl.u32 920167782, %v9613
  %v9626 = vor.u32 %v9624, %v9625
  %v9627 = vshll.u32 920167782, %v9612
  %v9628 = vshrl.u32 1326507024, %v9613
  %v9629 = vor.u32 %v9627, %v9628
  %vm9630 = vcmp.lt.s32.totalorder %v9611, 1
  %vm9631 = vcmp.lt.s32.totalorder %v9611, 2
  %vm9632 = vcmp.lt.s32.totalorder %v9611, 3
  %vm9633 = vcmp.lt.s32.totalorder %v9611, 4
  %v9634 = vsel %vm9630, %v9614, %v9617
  %v9635 = vsel %vm9633, %v9623, 2102212464
  %v9636 = vsel %vm9632, %v9620, %v9635
  %v9637 = vsel %vm9631, %v9634, %v9636
  %v9638 = vsel %vm9630, %v9617, %v9620
  %v9639 = vsel %vm9633, %v9626, 920167782
  %v9640 = vsel %vm9632, %v9623, %v9639
  %v9641 = vsel %vm9631, %v9638, %v9640
  %v9642 = vsel %vm9630, %v9620, %v9623
  %v9643 = vsel %vm9633, %v9629, 1326507024
  %v9644 = vsel %vm9632, %v9626, %v9643
  %v9645 = vsel %vm9631, %v9642, %v9644
  %v9646 = vshll.u32 %v9606, 8
  %v9647 = vand.u32 %v9646, 65535
  %v9648 = vshrl.u32 %v9646, 16
  %v9649 = vand.u32 %v9645, 65535
  %v9650 = vshrl.u32 %v9645, 16
  %v9651 = vmul.u32 %v9647, %v9649
  %v9652 = vmul.u32 %v9647, %v9650
  %v9653 = vmul.u32 %v9648, %v9649
  %v9654 = vmul.u32 %v9648, %v9650
  %v9655 = vshll.u32 %v9652, 16
  %v9656 = vshrl.u32 %v9652, 16
  %v9657 = vshll.u32 %v9653, 16
  %v9658 = vshrl.u32 %v9653, 16
  %vm9659 = vc.u32 %v9651, %v9655
  %v9660 = vsel %vm9659, 1, 0
  %v9661 = vadd.s32 %v9651, %v9655
  %v9662 = vadd.s32 %v9654, %v9660
  %vm9663 = vc.u32 %v9661, %v9657
  %v9664 = vsel %vm9663, 1, 0
  %v9665 = vadd.s32 %v9661, %v9657
  %v9666 = vadd.s32 %v9662, %v9664
  %v9667 = vadd.s32 %v9666, %v9656
  %v9668 = vadd.s32 %v9667, %v9658
  %v9669 = vand.u32 %v9646, 65535
  %v9670 = vshrl.u32 %v9646, 16
  %v9671 = vand.u32 %v9641, 65535
  %v9672 = vshrl.u32 %v9641, 16
  %v9673 = vmul.u32 %v9669, %v9671
  %v9674 = vmul.u32 %v9669, %v9672
  %v9675 = vmul.u32 %v9670, %v9671
  %v9676 = vmul.u32 %v9670, %v9672
  %v9677 = vshll.u32 %v9674, 16
  %v9678 = vshrl.u32 %v9674, 16
  %v9679 = vshll.u32 %v9675, 16
  %v9680 = vshrl.u32 %v9675, 16
  %vm9681 = vc.u32 %v9673, %v9677
  %v9682 = vsel %vm9681, 1, 0
  %v9683 = vadd.s32 %v9673, %v9677
  %v9684 = vadd.s32 %v9676, %v9682
  %vm9685 = vc.u32 %v9683, %v9679
  %v9686 = vsel %vm9685, 1, 0
  %v9687 = vadd.s32 %v9683, %v9679
  %v9688 = vadd.s32 %v9684, %v9686
  %v9689 = vadd.s32 %v9688, %v9678
  %v9690 = vadd.s32 %v9689, %v9680
  %v9691 = vmul.u32 %v9646, %v9637
  %v9692 = vadd.s32 %v9668, %v9687
  %vm9693 = vc.u32 %v9668, %v9687
  %v9694 = vadd.s32 %v9690, 1
  %v9695 = vsel %vm9693, %v9694, %v9690
  %v9696 = vadd.s32 %v9691, %v9695
  %v9697 = vadd.s32 %v9696, 536870912
  %v9698 = vshrl.u32 %v9697, 30
  %v9699 = vshll.u32 %v9698, 30
  %v9700 = vsub.s32 %v9696, %v9699
  %vm9701 = vcmp.lt.s32.totalorder %v9700, 0
  %v9702 = vsub.s32 0, %v9700
  %v9703 = vsel %vm9701, %v9702, %v9700
  %v9704 = vclz %v9703
  %v9705 = vsub.s32 %v9704, 2
  %vm9706 = vcmp.gt.s32.totalorder 0, %v9705
  %v9707 = vsel %vm9706, 0, %v9705
  %v9708 = vsub.s32 32, %v9707
  %v9709 = vshll.u32 %v9700, %v9707
  %v9710 = vshrl.u32 %v9692, %v9708
  %v9711 = vor.u32 %v9709, %v9710
  %v9712 = vsub.s32 4294967266, %v9707
  %v9713 = vadd.s32 %v9712, 127
  %v9714 = vshll.u32 %v9713, 23
  %v9715 = vor.u32 4788187, %v9714
  %v9716 = vand.u32 2147483647, %v9715
  %v9718 = vcvt.s32.f32 %v9711
  %v9719 = vmul.f32 %v9718, %v9716
  %v9720 = vxor.u32 %v9719, 2147483648
  %v9721 = vsel %vm9600, %v9720, %v9719
  %v9722 = vsub.s32 4, %v9698
  %v9723 = vsel %vm9600, %v9722, %v9698
  %v9724 = vsel %vm9599, %v208, %v9721
  %v9725 = vsel %vm9599, 0, %v9723
  %v9726 = vmul.f32 %v9724, %v9724
  %v9727 = vmul.f32 %v9726, -0.001358992
  %v9728 = vadd.f32 %v9727, 0.041655596
  %v9729 = vmul.f32 %v9726, %v9728
  %v9730 = vadd.f32 %v9729, -0.4999988
  %v9731 = vmul.f32 %v9726, %v9730
  %v9732 = vadd.f32 1.0, %v9731
  %v9733 = vmul.f32 %v9724, %v9724
  %v9734 = vmul.f32 %v9733, -0.00019511016
  %v9735 = vadd.f32 %v9734, 0.008332121
  %v9736 = vmul.f32 %v9733, %v9735
  %v9737 = vadd.f32 %v9736, -0.16666654
  %v9738 = vmul.f32 %v9733, %v9737
  %v9739 = vadd.f32 %v9738, 1.0
  %v9740 = vmul.f32 %v9739, %v9724
  %vm9741 = vweird.f32 %v208
  %v9742 = vand.u32 %v9725, 3
  %vm9743 = vcmp.lt.s32.totalorder %v9742, 2
  %vm9744 = vcmp.eq.s32.totalorder %v9742, 0
  %v9745 = vxor.u32 %v9740, 2147483648
  %v9746 = vsel %vm9744, %v9732, %v9745
  %vm9747 = vcmp.eq.s32.totalorder %v9742, 2
  %v9748 = vxor.u32 %v9732, 2147483648
  %v9749 = vsel %vm9747, %v9748, %v9740
  %v9750 = vsel %vm9743, %v9746, %v9749
  %v9751 = vsel %vm9741, nan, %v9750
  %v9752 = vand.u32 2147483647, %v213
  %vm9753 = vcmp.le.f32.partialorder %v9752, 0.7853982
  %vm9754 = vcmp.lt.s32.totalorder %v213, 0
  %v9755 = vand.u32 %v213, 2139095040
  %v9756 = vshrl.u32 %v9755, 23
  %v9757 = vsub.s32 %v9756, 127
  %v9758 = vand.u32 2147483647, %v213
  %v9759 = vand.u32 %v9758, 8388607
  %v9760 = vor.u32 %v9759, 8388608
  %v9761 = vsub.s32 0, %v9760
  %v9762 = vadd.s32 %v9757, 1
  %vm9763 = vcmp.gt.s32.totalorder %v9762, 0
  %v9764 = vsel %vm9763, %v9762, 0
  %v9765 = vshrl.u32 %v9764, 5
  %v9766 = vand.u32 %v9764, 31
  %v9767 = vsub.s32 32, %v9766
  %v9768 = vshrl.u32 683565275, %v9767
  %v9769 = vshll.u32 683565275, %v9766
  %v9770 = vshrl.u32 2475754826, %v9767
  %v9771 = vor.u32 %v9769, %v9770
  %v9772 = vshll.u32 2475754826, %v9766
  %v9773 = vshrl.u32 2131351028, %v9767
  %v9774 = vor.u32 %v9772, %v9773
  %v9775 = vshll.u32 2131351028, %v9766
  %v9776 = vshrl.u32 2102212464, %v9767
  %v9777 = vor.u32 %v9775, %v9776
  %v9778 = vshll.u32 2102212464, %v9766
  %v9779 = vshrl.u32 920167782, %v9767
  %v9780 = vor.u32 %v9778, %v9779
  %v9781 = vshll.u32 920167782, %v9766
  %v9782 = vshrl.u32 1326507024, %v9767
  %v9783 = vor.u32 %v9781, %v9782
  %vm9784 = vcmp.lt.s32.totalorder %v9765, 1
  %vm9785 = vcmp.lt.s32.totalorder %v9765, 2
  %vm9786 = vcmp.lt.s32.totalorder %v9765, 3
  %vm9787 = vcmp.lt.s32.totalorder %v9765, 4
  %v9788 = vsel %vm9784, %v9768, %v9771
  %v9789 = vsel %vm9787, %v9777, 2102212464
  %v9790 = vsel %vm9786, %v9774, %v9789
  %v9791 = vsel %vm9785, %v9788, %v9790
  %v9792 = vsel %vm9784, %v9771, %v9774
  %v9793 = vsel %vm9787, %v9780, 920167782
  %v9794 = vsel %vm9786, %v9777, %v9793
  %v9795 = vsel %vm9785, %v9792, %v9794
  %v9796 = vsel %vm9784, %v9774, %v9777
  %v9797 = vsel %vm9787, %v9783, 1326507024
  %v9798 = vsel %vm9786, %v9780, %v9797
  %v9799 = vsel %vm9785, %v9796, %v9798
  %v9800 = vshll.u32 %v9760, 8
  %v9801 = vand.u32 %v9800, 65535
  %v9802 = vshrl.u32 %v9800, 16
  %v9803 = vand.u32 %v9799, 65535
  %v9804 = vshrl.u32 %v9799, 16
  %v9805 = vmul.u32 %v9801, %v9803
  %v9806 = vmul.u32 %v9801, %v9804
  %v9807 = vmul.u32 %v9802, %v9803
  %v9808 = vmul.u32 %v9802, %v9804
  %v9809 = vshll.u32 %v9806, 16
  %v9810 = vshrl.u32 %v9806, 16
  %v9811 = vshll.u32 %v9807, 16
  %v9812 = vshrl.u32 %v9807, 16
  %vm9813 = vc.u32 %v9805, %v9809
  %v9814 = vsel %vm9813, 1, 0
  %v9815 = vadd.s32 %v9805, %v9809
  %v9816 = vadd.s32 %v9808, %v9814
  %vm9817 = vc.u32 %v9815, %v9811
  %v9818 = vsel %vm9817, 1, 0
  %v9819 = vadd.s32 %v9815, %v9811
  %v9820 = vadd.s32 %v9816, %v9818
  %v9821 = vadd.s32 %v9820, %v9810
  %v9822 = vadd.s32 %v9821, %v9812
  %v9823 = vand.u32 %v9800, 65535
  %v9824 = vshrl.u32 %v9800, 16
  %v9825 = vand.u32 %v9795, 65535
  %v9826 = vshrl.u32 %v9795, 16
  %v9827 = vmul.u32 %v9823, %v9825
  %v9828 = vmul.u32 %v9823, %v9826
  %v9829 = vmul.u32 %v9824, %v9825
  %v9830 = vmul.u32 %v9824, %v9826
  %v9831 = vshll.u32 %v9828, 16
  %v9832 = vshrl.u32 %v9828, 16
  %v9833 = vshll.u32 %v9829, 16
  %v9834 = vshrl.u32 %v9829, 16
  %vm9835 = vc.u32 %v9827, %v9831
  %v9836 = vsel %vm9835, 1, 0
  %v9837 = vadd.s32 %v9827, %v9831
  %v9838 = vadd.s32 %v9830, %v9836
  %vm9839 = vc.u32 %v9837, %v9833
  %v9840 = vsel %vm9839, 1, 0
  %v9841 = vadd.s32 %v9837, %v9833
  %v9842 = vadd.s32 %v9838, %v9840
  %v9843 = vadd.s32 %v9842, %v9832
  %v9844 = vadd.s32 %v9843, %v9834
  %v9845 = vmul.u32 %v9800, %v9791
  %v9846 = vadd.s32 %v9822, %v9841
  %vm9847 = vc.u32 %v9822, %v9841
  %v9848 = vadd.s32 %v9844, 1
  %v9849 = vsel %vm9847, %v9848, %v9844
  %v9850 = vadd.s32 %v9845, %v9849
  %v9851 = vadd.s32 %v9850, 536870912
  %v9852 = vshrl.u32 %v9851, 30
  %v9853 = vshll.u32 %v9852, 30
  %v9854 = vsub.s32 %v9850, %v9853
  %vm9855 = vcmp.lt.s32.totalorder %v9854, 0
  %v9856 = vsub.s32 0, %v9854
  %v9857 = vsel %vm9855, %v9856, %v9854
  %v9858 = vclz %v9857
  %v9859 = vsub.s32 %v9858, 2
  %vm9860 = vcmp.gt.s32.totalorder 0, %v9859
  %v9861 = vsel %vm9860, 0, %v9859
  %v9862 = vsub.s32 32, %v9861
  %v9863 = vshll.u32 %v9854, %v9861
  %v9864 = vshrl.u32 %v9846, %v9862
  %v9865 = vor.u32 %v9863, %v9864
  %v9866 = vsub.s32 4294967266, %v9861
  %v9867 = vadd.s32 %v9866, 127
  %v9868 = vshll.u32 %v9867, 23
  %v9869 = vor.u32 4788187, %v9868
  %v9870 = vand.u32 2147483647, %v9869
  %v9872 = vcvt.s32.f32 %v9865
  %v9873 = vmul.f32 %v9872, %v9870
  %v9874 = vxor.u32 %v9873, 2147483648
  %v9875 = vsel %vm9754, %v9874, %v9873
  %v9876 = vsub.s32 4, %v9852
  %v9877 = vsel %vm9754, %v9876, %v9852
  %v9878 = vsel %vm9753, %v213, %v9875
  %v9879 = vsel %vm9753, 0, %v9877
  %v9880 = vmul.f32 %v9878, %v9878
  %v9881 = vmul.f32 %v9880, -0.001358992
  %v9882 = vadd.f32 %v9881, 0.041655596
  %v9883 = vmul.f32 %v9880, %v9882
  %v9884 = vadd.f32 %v9883, -0.4999988
  %v9885 = vmul.f32 %v9880, %v9884
  %v9886 = vadd.f32 1.0, %v9885
  %v9887 = vmul.f32 %v9878, %v9878
  %v9888 = vmul.f32 %v9887, -0.00019511016
  %v9889 = vadd.f32 %v9888, 0.008332121
  %v9890 = vmul.f32 %v9887, %v9889
  %v9891 = vadd.f32 %v9890, -0.16666654
  %v9892 = vmul.f32 %v9887, %v9891
  %v9893 = vadd.f32 %v9892, 1.0
  %v9894 = vmul.f32 %v9893, %v9878
  %vm9895 = vweird.f32 %v213
  %v9896 = vand.u32 %v9879, 3
  %vm9897 = vcmp.lt.s32.totalorder %v9896, 2
  %vm9898 = vcmp.eq.s32.totalorder %v9896, 0
  %v9899 = vxor.u32 %v9894, 2147483648
  %v9900 = vsel %vm9898, %v9886, %v9899
  %vm9901 = vcmp.eq.s32.totalorder %v9896, 2
  %v9902 = vxor.u32 %v9886, 2147483648
  %v9903 = vsel %vm9901, %v9902, %v9894
  %v9904 = vsel %vm9897, %v9900, %v9903
  %v9905 = vsel %vm9895, nan, %v9904
  %v9906 = vand.u32 2147483647, %v218
  %vm9907 = vcmp.le.f32.partialorder %v9906, 0.7853982
  %vm9908 = vcmp.lt.s32.totalorder %v218, 0
  %v9909 = vand.u32 %v218, 2139095040
  %v9910 = vshrl.u32 %v9909, 23
  %v9911 = vsub.s32 %v9910, 127
  %v9912 = vand.u32 2147483647, %v218
  %v9913 = vand.u32 %v9912, 8388607
  %v9914 = vor.u32 %v9913, 8388608
  %v9915 = vsub.s32 0, %v9914
  %v9916 = vadd.s32 %v9911, 1
  %vm9917 = vcmp.gt.s32.totalorder %v9916, 0
  %v9918 = vsel %vm9917, %v9916, 0
  %v9919 = vshrl.u32 %v9918, 5
  %v9920 = vand.u32 %v9918, 31
  %v9921 = vsub.s32 32, %v9920
  %v9922 = vshrl.u32 683565275, %v9921
  %v9923 = vshll.u32 683565275, %v9920
  %v9924 = vshrl.u32 2475754826, %v9921
  %v9925 = vor.u32 %v9923, %v9924
  %v9926 = vshll.u32 2475754826, %v9920
  %v9927 = vshrl.u32 2131351028, %v9921
  %v9928 = vor.u32 %v9926, %v9927
  %v9929 = vshll.u32 2131351028, %v9920
  %v9930 = vshrl.u32 2102212464, %v9921
  %v9931 = vor.u32 %v9929, %v9930
  %v9932 = vshll.u32 2102212464, %v9920
  %v9933 = vshrl.u32 920167782, %v9921
  %v9934 = vor.u32 %v9932, %v9933
  %v9935 = vshll.u32 920167782, %v9920
  %v9936 = vshrl.u32 1326507024, %v9921
  %v9937 = vor.u32 %v9935, %v9936
  %vm9938 = vcmp.lt.s32.totalorder %v9919, 1
  %vm9939 = vcmp.lt.s32.totalorder %v9919, 2
  %vm9940 = vcmp.lt.s32.totalorder %v9919, 3
  %vm9941 = vcmp.lt.s32.totalorder %v9919, 4
  %v9942 = vsel %vm9938, %v9922, %v9925
  %v9943 = vsel %vm9941, %v9931, 2102212464
  %v9944 = vsel %vm9940, %v9928, %v9943
  %v9945 = vsel %vm9939, %v9942, %v9944
  %v9946 = vsel %vm9938, %v9925, %v9928
  %v9947 = vsel %vm9941, %v9934, 920167782
  %v9948 = vsel %vm9940, %v9931, %v9947
  %v9949 = vsel %vm9939, %v9946, %v9948
  %v9950 = vsel %vm9938, %v9928, %v9931
  %v9951 = vsel %vm9941, %v9937, 1326507024
  %v9952 = vsel %vm9940, %v9934, %v9951
  %v9953 = vsel %vm9939, %v9950, %v9952
  %v9954 = vshll.u32 %v9914, 8
  %v9955 = vand.u32 %v9954, 65535
  %v9956 = vshrl.u32 %v9954, 16
  %v9957 = vand.u32 %v9953, 65535
  %v9958 = vshrl.u32 %v9953, 16
  %v9959 = vmul.u32 %v9955, %v9957
  %v9960 = vmul.u32 %v9955, %v9958
  %v9961 = vmul.u32 %v9956, %v9957
  %v9962 = vmul.u32 %v9956, %v9958
  %v9963 = vshll.u32 %v9960, 16
  %v9964 = vshrl.u32 %v9960, 16
  %v9965 = vshll.u32 %v9961, 16
  %v9966 = vshrl.u32 %v9961, 16
  %vm9967 = vc.u32 %v9959, %v9963
  %v9968 = vsel %vm9967, 1, 0
  %v9969 = vadd.s32 %v9959, %v9963
  %v9970 = vadd.s32 %v9962, %v9968
  %vm9971 = vc.u32 %v9969, %v9965
  %v9972 = vsel %vm9971, 1, 0
  %v9973 = vadd.s32 %v9969, %v9965
  %v9974 = vadd.s32 %v9970, %v9972
  %v9975 = vadd.s32 %v9974, %v9964
  %v9976 = vadd.s32 %v9975, %v9966
  %v9977 = vand.u32 %v9954, 65535
  %v9978 = vshrl.u32 %v9954, 16
  %v9979 = vand.u32 %v9949, 65535
  %v9980 = vshrl.u32 %v9949, 16
  %v9981 = vmul.u32 %v9977, %v9979
  %v9982 = vmul.u32 %v9977, %v9980
  %v9983 = vmul.u32 %v9978, %v9979
  %v9984 = vmul.u32 %v9978, %v9980
  %v9985 = vshll.u32 %v9982, 16
  %v9986 = vshrl.u32 %v9982, 16
  %v9987 = vshll.u32 %v9983, 16
  %v9988 = vshrl.u32 %v9983, 16
  %vm9989 = vc.u32 %v9981, %v9985
  %v9990 = vsel %vm9989, 1, 0
  %v9991 = vadd.s32 %v9981, %v9985
  %v9992 = vadd.s32 %v9984, %v9990
  %vm9993 = vc.u32 %v9991, %v9987
  %v9994 = vsel %vm9993, 1, 0
  %v9995 = vadd.s32 %v9991, %v9987
  %v9996 = vadd.s32 %v9992, %v9994
  %v9997 = vadd.s32 %v9996, %v9986
  %v9998 = vadd.s32 %v9997, %v9988
  %v9999 = vmul.u32 %v9954, %v9945
  %v10000 = vadd.s32 %v9976, %v9995
  %vm10001 = vc.u32 %v9976, %v9995
  %v10002 = vadd.s32 %v9998, 1
  %v10003 = vsel %vm10001, %v10002, %v9998
  %v10004 = vadd.s32 %v9999, %v10003
  %v10005 = vadd.s32 %v10004, 536870912
  %v10006 = vshrl.u32 %v10005, 30
  %v10007 = vshll.u32 %v10006, 30
  %v10008 = vsub.s32 %v10004, %v10007
  %vm10009 = vcmp.lt.s32.totalorder %v10008, 0
  %v10010 = vsub.s32 0, %v10008
  %v10011 = vsel %vm10009, %v10010, %v10008
  %v10012 = vclz %v10011
  %v10013 = vsub.s32 %v10012, 2
  %vm10014 = vcmp.gt.s32.totalorder 0, %v10013
  %v10015 = vsel %vm10014, 0, %v10013
  %v10016 = vsub.s32 32, %v10015
  %v10017 = vshll.u32 %v10008, %v10015
  %v10018 = vshrl.u32 %v10000, %v10016
  %v10019 = vor.u32 %v10017, %v10018
  %v10020 = vsub.s32 4294967266, %v10015
  %v10021 = vadd.s32 %v10020, 127
  %v10022 = vshll.u32 %v10021, 23
  %v10023 = vor.u32 4788187, %v10022
  %v10024 = vand.u32 2147483647, %v10023
  %v10026 = vcvt.s32.f32 %v10019
  %v10027 = vmul.f32 %v10026, %v10024
  %v10028 = vxor.u32 %v10027, 2147483648
  %v10029 = vsel %vm9908, %v10028, %v10027
  %v10030 = vsub.s32 4, %v10006
  %v10031 = vsel %vm9908, %v10030, %v10006
  %v10032 = vsel %vm9907, %v218, %v10029
  %v10033 = vsel %vm9907, 0, %v10031
  %v10034 = vmul.f32 %v10032, %v10032
  %v10035 = vmul.f32 %v10034, -0.001358992
  %v10036 = vadd.f32 %v10035, 0.041655596
  %v10037 = vmul.f32 %v10034, %v10036
  %v10038 = vadd.f32 %v10037, -0.4999988
  %v10039 = vmul.f32 %v10034, %v10038
  %v10040 = vadd.f32 1.0, %v10039
  %v10041 = vmul.f32 %v10032, %v10032
  %v10042 = vmul.f32 %v10041, -0.00019511016
  %v10043 = vadd.f32 %v10042, 0.008332121
  %v10044 = vmul.f32 %v10041, %v10043
  %v10045 = vadd.f32 %v10044, -0.16666654
  %v10046 = vmul.f32 %v10041, %v10045
  %v10047 = vadd.f32 %v10046, 1.0
  %v10048 = vmul.f32 %v10047, %v10032
  %vm10049 = vweird.f32 %v218
  %v10050 = vand.u32 %v10033, 3
  %vm10051 = vcmp.lt.s32.totalorder %v10050, 2
  %vm10052 = vcmp.eq.s32.totalorder %v10050, 0
  %v10053 = vxor.u32 %v10048, 2147483648
  %v10054 = vsel %vm10052, %v10040, %v10053
  %vm10055 = vcmp.eq.s32.totalorder %v10050, 2
  %v10056 = vxor.u32 %v10040, 2147483648
  %v10057 = vsel %vm10055, %v10056, %v10048
  %v10058 = vsel %vm10051, %v10054, %v10057
  %v10059 = vsel %vm10049, nan, %v10058
  %v10060 = vand.u32 2147483647, %v223
  %vm10061 = vcmp.le.f32.partialorder %v10060, 0.7853982
  %vm10062 = vcmp.lt.s32.totalorder %v223, 0
  %v10063 = vand.u32 %v223, 2139095040
  %v10064 = vshrl.u32 %v10063, 23
  %v10065 = vsub.s32 %v10064, 127
  %v10066 = vand.u32 2147483647, %v223
  %v10067 = vand.u32 %v10066, 8388607
  %v10068 = vor.u32 %v10067, 8388608
  %v10069 = vsub.s32 0, %v10068
  %v10070 = vadd.s32 %v10065, 1
  %vm10071 = vcmp.gt.s32.totalorder %v10070, 0
  %v10072 = vsel %vm10071, %v10070, 0
  %v10073 = vshrl.u32 %v10072, 5
  %v10074 = vand.u32 %v10072, 31
  %v10075 = vsub.s32 32, %v10074
  %v10076 = vshrl.u32 683565275, %v10075
  %v10077 = vshll.u32 683565275, %v10074
  %v10078 = vshrl.u32 2475754826, %v10075
  %v10079 = vor.u32 %v10077, %v10078
  %v10080 = vshll.u32 2475754826, %v10074
  %v10081 = vshrl.u32 2131351028, %v10075
  %v10082 = vor.u32 %v10080, %v10081
  %v10083 = vshll.u32 2131351028, %v10074
  %v10084 = vshrl.u32 2102212464, %v10075
  %v10085 = vor.u32 %v10083, %v10084
  %v10086 = vshll.u32 2102212464, %v10074
  %v10087 = vshrl.u32 920167782, %v10075
  %v10088 = vor.u32 %v10086, %v10087
  %v10089 = vshll.u32 920167782, %v10074
  %v10090 = vshrl.u32 1326507024, %v10075
  %v10091 = vor.u32 %v10089, %v10090
  %vm10092 = vcmp.lt.s32.totalorder %v10073, 1
  %vm10093 = vcmp.lt.s32.totalorder %v10073, 2
  %vm10094 = vcmp.lt.s32.totalorder %v10073, 3
  %vm10095 = vcmp.lt.s32.totalorder %v10073, 4
  %v10096 = vsel %vm10092, %v10076, %v10079
  %v10097 = vsel %vm10095, %v10085, 2102212464
  %v10098 = vsel %vm10094, %v10082, %v10097
  %v10099 = vsel %vm10093, %v10096, %v10098
  %v10100 = vsel %vm10092, %v10079, %v10082
  %v10101 = vsel %vm10095, %v10088, 920167782
  %v10102 = vsel %vm10094, %v10085, %v10101
  %v10103 = vsel %vm10093, %v10100, %v10102
  %v10104 = vsel %vm10092, %v10082, %v10085
  %v10105 = vsel %vm10095, %v10091, 1326507024
  %v10106 = vsel %vm10094, %v10088, %v10105
  %v10107 = vsel %vm10093, %v10104, %v10106
  %v10108 = vshll.u32 %v10068, 8
  %v10109 = vand.u32 %v10108, 65535
  %v10110 = vshrl.u32 %v10108, 16
  %v10111 = vand.u32 %v10107, 65535
  %v10112 = vshrl.u32 %v10107, 16
  %v10113 = vmul.u32 %v10109, %v10111
  %v10114 = vmul.u32 %v10109, %v10112
  %v10115 = vmul.u32 %v10110, %v10111
  %v10116 = vmul.u32 %v10110, %v10112
  %v10117 = vshll.u32 %v10114, 16
  %v10118 = vshrl.u32 %v10114, 16
  %v10119 = vshll.u32 %v10115, 16
  %v10120 = vshrl.u32 %v10115, 16
  %vm10121 = vc.u32 %v10113, %v10117
  %v10122 = vsel %vm10121, 1, 0
  %v10123 = vadd.s32 %v10113, %v10117
  %v10124 = vadd.s32 %v10116, %v10122
  %vm10125 = vc.u32 %v10123, %v10119
  %v10126 = vsel %vm10125, 1, 0
  %v10127 = vadd.s32 %v10123, %v10119
  %v10128 = vadd.s32 %v10124, %v10126
  %v10129 = vadd.s32 %v10128, %v10118
  %v10130 = vadd.s32 %v10129, %v10120
  %v10131 = vand.u32 %v10108, 65535
  %v10132 = vshrl.u32 %v10108, 16
  %v10133 = vand.u32 %v10103, 65535
  %v10134 = vshrl.u32 %v10103, 16
  %v10135 = vmul.u32 %v10131, %v10133
  %v10136 = vmul.u32 %v10131, %v10134
  %v10137 = vmul.u32 %v10132, %v10133
  %v10138 = vmul.u32 %v10132, %v10134
  %v10139 = vshll.u32 %v10136, 16
  %v10140 = vshrl.u32 %v10136, 16
  %v10141 = vshll.u32 %v10137, 16
  %v10142 = vshrl.u32 %v10137, 16
  %vm10143 = vc.u32 %v10135, %v10139
  %v10144 = vsel %vm10143, 1, 0
  %v10145 = vadd.s32 %v10135, %v10139
  %v10146 = vadd.s32 %v10138, %v10144
  %vm10147 = vc.u32 %v10145, %v10141
  %v10148 = vsel %vm10147, 1, 0
  %v10149 = vadd.s32 %v10145, %v10141
  %v10150 = vadd.s32 %v10146, %v10148
  %v10151 = vadd.s32 %v10150, %v10140
  %v10152 = vadd.s32 %v10151, %v10142
  %v10153 = vmul.u32 %v10108, %v10099
  %v10154 = vadd.s32 %v10130, %v10149
  %vm10155 = vc.u32 %v10130, %v10149
  %v10156 = vadd.s32 %v10152, 1
  %v10157 = vsel %vm10155, %v10156, %v10152
  %v10158 = vadd.s32 %v10153, %v10157
  %v10159 = vadd.s32 %v10158, 536870912
  %v10160 = vshrl.u32 %v10159, 30
  %v10161 = vshll.u32 %v10160, 30
  %v10162 = vsub.s32 %v10158, %v10161
  %vm10163 = vcmp.lt.s32.totalorder %v10162, 0
  %v10164 = vsub.s32 0, %v10162
  %v10165 = vsel %vm10163, %v10164, %v10162
  %v10166 = vclz %v10165
  %v10167 = vsub.s32 %v10166, 2
  %vm10168 = vcmp.gt.s32.totalorder 0, %v10167
  %v10169 = vsel %vm10168, 0, %v10167
  %v10170 = vsub.s32 32, %v10169
  %v10171 = vshll.u32 %v10162, %v10169
  %v10172 = vshrl.u32 %v10154, %v10170
  %v10173 = vor.u32 %v10171, %v10172
  %v10174 = vsub.s32 4294967266, %v10169
  %v10175 = vadd.s32 %v10174, 127
  %v10176 = vshll.u32 %v10175, 23
  %v10177 = vor.u32 4788187, %v10176
  %v10178 = vand.u32 2147483647, %v10177
  %v10180 = vcvt.s32.f32 %v10173
  %v10181 = vmul.f32 %v10180, %v10178
  %v10182 = vxor.u32 %v10181, 2147483648
  %v10183 = vsel %vm10062, %v10182, %v10181
  %v10184 = vsub.s32 4, %v10160
  %v10185 = vsel %vm10062, %v10184, %v10160
  %v10186 = vsel %vm10061, %v223, %v10183
  %v10187 = vsel %vm10061, 0, %v10185
  %v10188 = vmul.f32 %v10186, %v10186
  %v10189 = vmul.f32 %v10188, -0.001358992
  %v10190 = vadd.f32 %v10189, 0.041655596
  %v10191 = vmul.f32 %v10188, %v10190
  %v10192 = vadd.f32 %v10191, -0.4999988
  %v10193 = vmul.f32 %v10188, %v10192
  %v10194 = vadd.f32 1.0, %v10193
  %v10195 = vmul.f32 %v10186, %v10186
  %v10196 = vmul.f32 %v10195, -0.00019511016
  %v10197 = vadd.f32 %v10196, 0.008332121
  %v10198 = vmul.f32 %v10195, %v10197
  %v10199 = vadd.f32 %v10198, -0.16666654
  %v10200 = vmul.f32 %v10195, %v10199
  %v10201 = vadd.f32 %v10200, 1.0
  %v10202 = vmul.f32 %v10201, %v10186
  %vm10203 = vweird.f32 %v223
  %v10204 = vand.u32 %v10187, 3
  %vm10205 = vcmp.lt.s32.totalorder %v10204, 2
  %vm10206 = vcmp.eq.s32.totalorder %v10204, 0
  %v10207 = vxor.u32 %v10202, 2147483648
  %v10208 = vsel %vm10206, %v10194, %v10207
  %vm10209 = vcmp.eq.s32.totalorder %v10204, 2
  %v10210 = vxor.u32 %v10194, 2147483648
  %v10211 = vsel %vm10209, %v10210, %v10202
  %v10212 = vsel %vm10205, %v10208, %v10211
  %v10213 = vsel %vm10203, nan, %v10212
  %vm10214 = vcmp.eq.s32.totalorder %v322, 3
  %vm10215 = vcmp.eq.s32.totalorder %v322, 4
  %vm10216 = vcmp.eq.s32.totalorder %v322, 5
  %v10217 = vsel %vm10216, %v289, 0.0
  %v10218 = vsel %vm10216, %v290, 0.0
  %v10219 = vsel %vm10216, %v291, 0.0
  %v10220 = vsel %vm10216, %v292, 0.0
  %v10221 = vsel %vm10216, %v293, 0.0
  %v10222 = vsel %vm10216, %v294, 0.0
  %v10223 = vsel %vm10216, %v295, 0.0
  %v10224 = vsel %vm10216, %v296, 0.0
  %v10225 = vsel %vm10216, %v297, 0.0
  %v10226 = vsel %vm10216, %v298, 0.0
  %v10227 = vsel %vm10216, %v299, 0.0
  %v10228 = vsel %vm10216, %v300, 0.0
  %v10229 = vsel %vm10216, %v301, 0.0
  %v10230 = vsel %vm10216, %v302, 0.0
  %v10231 = vsel %vm10216, %v303, 0.0
  %v10232 = vsel %vm10216, %v304, 0.0
  %v10233 = vsel %vm10216, %v305, 0.0
  %v10234 = vsel %vm10216, %v306, 0.0
  %v10235 = vsel %vm10216, %v307, 0.0
  %v10236 = vsel %vm10216, %v308, 0.0
  %v10237 = vsel %vm10216, %v309, 0.0
  %v10238 = vsel %vm10216, %v310, 0.0
  %v10239 = vsel %vm10216, %v311, 0.0
  %v10240 = vsel %vm10216, %v312, 0.0
  %v10241 = vsel %vm10216, %v313, 0.0
  %v10242 = vsel %vm10216, %v314, 0.0
  %v10243 = vsel %vm10216, %v315, 0.0
  %v10244 = vsel %vm10216, %v316, 0.0
  %v10245 = vsel %vm10216, %v317, 0.0
  %v10246 = vsel %vm10216, %v318, 0.0
  %v10247 = vsel %vm10216, %v319, 0.0
  %v10248 = vsel %vm10216, %v320, 0.0
  %v10249 = vsel %vm10215, %v257, %v10217
  %v10250 = vsel %vm10215, %v258, %v10218
  %v10251 = vsel %vm10215, %v259, %v10219
  %v10252 = vsel %vm10215, %v260, %v10220
  %v10253 = vsel %vm10215, %v261, %v10221
  %v10254 = vsel %vm10215, %v262, %v10222
  %v10255 = vsel %vm10215, %v263, %v10223
  %v10256 = vsel %vm10215, %v264, %v10224
  %v10257 = vsel %vm10215, %v265, %v10225
  %v10258 = vsel %vm10215, %v266, %v10226
  %v10259 = vsel %vm10215, %v267, %v10227
  %v10260 = vsel %vm10215, %v268, %v10228
  %v10261 = vsel %vm10215, %v269, %v10229
  %v10262 = vsel %vm10215, %v270, %v10230
  %v10263 = vsel %vm10215, %v271, %v10231
  %v10264 = vsel %vm10215, %v272, %v10232
  %v10265 = vsel %vm10215, %v273, %v10233
  %v10266 = vsel %vm10215, %v274, %v10234
  %v10267 = vsel %vm10215, %v275, %v10235
  %v10268 = vsel %vm10215, %v276, %v10236
  %v10269 = vsel %vm10215, %v277, %v10237
  %v10270 = vsel %vm10215, %v278, %v10238
  %v10271 = vsel %vm10215, %v279, %v10239
  %v10272 = vsel %vm10215, %v280, %v10240
  %v10273 = vsel %vm10215, %v281, %v10241
  %v10274 = vsel %vm10215, %v282, %v10242
  %v10275 = vsel %vm10215, %v283, %v10243
  %v10276 = vsel %vm10215, %v284, %v10244
  %v10277 = vsel %vm10215, %v285, %v10245
  %v10278 = vsel %vm10215, %v286, %v10246
  %v10279 = vsel %vm10215, %v287, %v10247
  %v10280 = vsel %vm10215, %v288, %v10248
  %v10281 = vsel %vm10214, %v225, %v10249
  %v10282 = vsel %vm10214, %v226, %v10250
  %v10283 = vsel %vm10214, %v227, %v10251
  %v10284 = vsel %vm10214, %v228, %v10252
  %v10285 = vsel %vm10214, %v229, %v10253
  %v10286 = vsel %vm10214, %v230, %v10254
  %v10287 = vsel %vm10214, %v231, %v10255
  %v10288 = vsel %vm10214, %v232, %v10256
  %v10289 = vsel %vm10214, %v233, %v10257
  %v10290 = vsel %vm10214, %v234, %v10258
  %v10291 = vsel %vm10214, %v235, %v10259
  %v10292 = vsel %vm10214, %v236, %v10260
  %v10293 = vsel %vm10214, %v237, %v10261
  %v10294 = vsel %vm10214, %v238, %v10262
  %v10295 = vsel %vm10214, %v239, %v10263
  %v10296 = vsel %vm10214, %v240, %v10264
  %v10297 = vsel %vm10214, %v241, %v10265
  %v10298 = vsel %vm10214, %v242, %v10266
  %v10299 = vsel %vm10214, %v243, %v10267
  %v10300 = vsel %vm10214, %v244, %v10268
  %v10301 = vsel %vm10214, %v245, %v10269
  %v10302 = vsel %vm10214, %v246, %v10270
  %v10303 = vsel %vm10214, %v247, %v10271
  %v10304 = vsel %vm10214, %v248, %v10272
  %v10305 = vsel %vm10214, %v249, %v10273
  %v10306 = vsel %vm10214, %v250, %v10274
  %v10307 = vsel %vm10214, %v251, %v10275
  %v10308 = vsel %vm10214, %v252, %v10276
  %v10309 = vsel %vm10214, %v253, %v10277
  %v10310 = vsel %vm10214, %v254, %v10278
  %v10311 = vsel %vm10214, %v255, %v10279
  %v10312 = vsel %vm10214, %v256, %v10280
  %v10313 = vsel %vm5285, %v5439, %v10281
  %v10314 = vsel %vm5285, %v5593, %v10282
  %v10315 = vsel %vm5285, %v5747, %v10283
  %v10316 = vsel %vm5285, %v5901, %v10284
  %v10317 = vsel %vm5285, %v6055, %v10285
  %v10318 = vsel %vm5285, %v6209, %v10286
  %v10319 = vsel %vm5285, %v6363, %v10287
  %v10320 = vsel %vm5285, %v6517, %v10288
  %v10321 = vsel %vm5285, %v6671, %v10289
  %v10322 = vsel %vm5285, %v6825, %v10290
  %v10323 = vsel %vm5285, %v6979, %v10291
  %v10324 = vsel %vm5285, %v7133, %v10292
  %v10325 = vsel %vm5285, %v7287, %v10293
  %v10326 = vsel %vm5285, %v7441, %v10294
  %v10327 = vsel %vm5285, %v7595, %v10295
  %v10328 = vsel %vm5285, %v7749, %v10296
  %v10329 = vsel %vm5285, %v7903, %v10297
  %v10330 = vsel %vm5285, %v8057, %v10298
  %v10331 = vsel %vm5285, %v8211, %v10299
  %v10332 = vsel %vm5285, %v8365, %v10300
  %v10333 = vsel %vm5285, %v8519, %v10301
  %v10334 = vsel %vm5285, %v8673, %v10302
  %v10335 = vsel %vm5285, %v8827, %v10303
  %v10336 = vsel %vm5285, %v8981, %v10304
  %v10337 = vsel %vm5285, %v9135, %v10305
  %v10338 = vsel %vm5285, %v9289, %v10306
  %v10339 = vsel %vm5285, %v9443, %v10307
  %v10340 = vsel %vm5285, %v9597, %v10308
  %v10341 = vsel %vm5285, %v9751, %v10309
  %v10342 = vsel %vm5285, %v9905, %v10310
  %v10343 = vsel %vm5285, %v10059, %v10311
  %v10344 = vsel %vm5285, %v10213, %v10312
  %v10345 = vsel %vm324, %v479, %v10313
  %v10346 = vsel %vm324, %v634, %v10314
  %v10347 = vsel %vm324, %v789, %v10315
  %v10348 = vsel %vm324, %v944, %v10316
  %v10349 = vsel %vm324, %v1099, %v10317
  %v10350 = vsel %vm324, %v1254, %v10318
  %v10351 = vsel %vm324, %v1409, %v10319
  %v10352 = vsel %vm324, %v1564, %v10320
  %v10353 = vsel %vm324, %v1719, %v10321
  %v10354 = vsel %vm324, %v1874, %v10322
  %v10355 = vsel %vm324, %v2029, %v10323
  %v10356 = vsel %vm324, %v2184, %v10324
  %v10357 = vsel %vm324, %v2339, %v10325
  %v10358 = vsel %vm324, %v2494, %v10326
  %v10359 = vsel %vm324, %v2649, %v10327
  %v10360 = vsel %vm324, %v2804, %v10328
  %v10361 = vsel %vm324, %v2959, %v10329
  %v10362 = vsel %vm324, %v3114, %v10330
  %v10363 = vsel %vm324, %v3269, %v10331
  %v10364 = vsel %vm324, %v3424, %v10332
  %v10365 = vsel %vm324, %v3579, %v10333
  %v10366 = vsel %vm324, %v3734, %v10334
  %v10367 = vsel %vm324, %v3889, %v10335
  %v10368 = vsel %vm324, %v4044, %v10336
  %v10369 = vsel %vm324, %v4199, %v10337
  %v10370 = vsel %vm324, %v4354, %v10338
  %v10371 = vsel %vm324, %v4509, %v10339
  %v10372 = vsel %vm324, %v4664, %v10340
  %v10373 = vsel %vm324, %v4819, %v10341
  %v10374 = vsel %vm324, %v4974, %v10342
  %v10375 = vsel %vm324, %v5129, %v10343
  %v10376 = vsel %vm324, %v5284, %v10344
  %v10377 = vsel %vm323, %v68, %v10345
  %v10378 = vsel %vm323, %v73, %v10346
  %v10379 = vsel %vm323, %v78, %v10347
  %v10380 = vsel %vm323, %v83, %v10348
  %v10381 = vsel %vm323, %v88, %v10349
  %v10382 = vsel %vm323, %v93, %v10350
  %v10383 = vsel %vm323, %v98, %v10351
  %v10384 = vsel %vm323, %v103, %v10352
  %v10385 = vsel %vm323, %v108, %v10353
  %v10386 = vsel %vm323, %v113, %v10354
  %v10387 = vsel %vm323, %v118, %v10355
  %v10388 = vsel %vm323, %v123, %v10356
  %v10389 = vsel %vm323, %v128, %v10357
  %v10390 = vsel %vm323, %v133, %v10358
  %v10391 = vsel %vm323, %v138, %v10359
  %v10392 = vsel %vm323, %v143, %v10360
  %v10393 = vsel %vm323, %v148, %v10361
  %v10394 = vsel %vm323, %v153, %v10362
  %v10395 = vsel %vm323, %v158, %v10363
  %v10396 = vsel %vm323, %v163, %v10364
  %v10397 = vsel %vm323, %v168, %v10365
  %v10398 = vsel %vm323, %v173, %v10366
  %v10399 = vsel %vm323, %v178, %v10367
  %v10400 = vsel %vm323, %v183, %v10368
  %v10401 = vsel %vm323, %v188, %v10369
  %v10402 = vsel %vm323, %v193, %v10370
  %v10403 = vsel %vm323, %v198, %v10371
  %v10404 = vsel %vm323, %v203, %v10372
  %v10405 = vsel %vm323, %v208, %v10373
  %v10406 = vsel %vm323, %v213, %v10374
  %v10407 = vsel %vm323, %v218, %v10375
  %v10408 = vsel %vm323, %v223, %v10376
  %v10409 = vpack.c.bf16 %v10378, %v10377
  %v10410 = vpack.c.bf16 %v10380, %v10379
  %v10411 = vpack.c.bf16 %v10382, %v10381
  %v10412 = vpack.c.bf16 %v10384, %v10383
  %v10413 = vpack.c.bf16 %v10386, %v10385
  %v10414 = vpack.c.bf16 %v10388, %v10387
  %v10415 = vpack.c.bf16 %v10390, %v10389
  %v10416 = vpack.c.bf16 %v10392, %v10391
  %v10417 = vpack.c.bf16 %v10394, %v10393
  %v10418 = vpack.c.bf16 %v10396, %v10395
  %v10419 = vpack.c.bf16 %v10398, %v10397
  %v10420 = vpack.c.bf16 %v10400, %v10399
  %v10421 = vpack.c.bf16 %v10402, %v10401
  %v10422 = vpack.c.bf16 %v10404, %v10403
  %v10423 = vpack.c.bf16 %v10406, %v10405
  %v10424 = vpack.c.bf16 %v10408, %v10407
  %v10425 = vld [vmem:[%s1] sm:$0xf]
  %v10426 = vld [vmem:[%s2] sm:$0x1]
  %v10428 = vperm.slane %v10426, 0
  %vm10430 = vcmask 64512
  %v10432 = vsel %vm10430, %v10409, 0
  %v10435 = vsel %vm10430, %v10410, 0
  %v10438 = vsel %vm10430, %v10411, 0
  %v10441 = vsel %vm10430, %v10412, 0
  %v10444 = vsel %vm10430, %v10413, 0
  %v10447 = vsel %vm10430, %v10414, 0
  %v10450 = vsel %vm10430, %v10415, 0
  %v10453 = vsel %vm10430, %v10416, 0
  %v10456 = vsel %vm10430, %v10417, 0
  %v10459 = vsel %vm10430, %v10418, 0
  %v10462 = vsel %vm10430, %v10419, 0
  %v10465 = vsel %vm10430, %v10420, 0
  %v10468 = vsel %vm10430, %v10421, 0
  %v10471 = vsel %vm10430, %v10422, 0
  %v10474 = vsel %vm10430, %v10423, 0
  %v10477 = vsel %vm10430, %v10424, 0
  %vm10479 = vcmask 1043456
  %v10481 = vsel %vm10479, %v10425, 0
  %10483 = vmatpush.bf16.msra.mxu0 0
  %10484 = vmatpush.bf16.msra.mxu0 0
  %10485 = vmatpush.bf16.msra.mxu0 0
  %10486 = vmatpush.bf16.msra.mxu0 0
  %10487 = vmatpush.bf16.msra.mxu0 0
  %10488 = vmatpush.bf16.msra.mxu0 0
  %10489 = vmatpush.bf16.msra.mxu0 0
  %10490 = vmatpush.bf16.msra.mxu0 %v10481
  %10491 = vmatmul.bf16.gmra.mxu0 %v10432
  %v10492 = vpop.f32.mrf.mxu0
  %v10493 = vadd.f32 %v10428, %v10492
  %v10494 = vpop.f32.mrf.mxu0
  %v10495 = vadd.f32 %v10428, %v10494
  %10496 = vmatmul.bf16.gmra.mxu0 %v10435
  %v10497 = vpop.f32.mrf.mxu0
  %v10498 = vadd.f32 %v10428, %v10497
  %v10499 = vpop.f32.mrf.mxu0
  %v10500 = vadd.f32 %v10428, %v10499
  %10501 = vmatmul.bf16.gmra.mxu0 %v10438
  %v10502 = vpop.f32.mrf.mxu0
  %v10503 = vadd.f32 %v10428, %v10502
  %v10504 = vpop.f32.mrf.mxu0
  %v10505 = vadd.f32 %v10428, %v10504
  %10506 = vmatmul.bf16.gmra.mxu0 %v10441
  %v10507 = vpop.f32.mrf.mxu0
  %v10508 = vadd.f32 %v10428, %v10507
  %v10509 = vpop.f32.mrf.mxu0
  %v10510 = vadd.f32 %v10428, %v10509
  %10511 = vmatmul.bf16.gmra.mxu0 %v10444
  %v10512 = vpop.f32.mrf.mxu0
  %v10513 = vadd.f32 %v10428, %v10512
  %v10514 = vpop.f32.mrf.mxu0
  %v10515 = vadd.f32 %v10428, %v10514
  %10516 = vmatmul.bf16.gmra.mxu0 %v10447
  %v10517 = vpop.f32.mrf.mxu0
  %v10518 = vadd.f32 %v10428, %v10517
  %v10519 = vpop.f32.mrf.mxu0
  %v10520 = vadd.f32 %v10428, %v10519
  %10521 = vmatmul.bf16.gmra.mxu0 %v10450
  %v10522 = vpop.f32.mrf.mxu0
  %v10523 = vadd.f32 %v10428, %v10522
  %v10524 = vpop.f32.mrf.mxu0
  %v10525 = vadd.f32 %v10428, %v10524
  %10526 = vmatmul.bf16.gmra.mxu0 %v10453
  %v10527 = vpop.f32.mrf.mxu0
  %v10528 = vadd.f32 %v10428, %v10527
  %v10529 = vpop.f32.mrf.mxu0
  %v10530 = vadd.f32 %v10428, %v10529
  %10531 = vmatmul.bf16.gmra.mxu0 %v10456
  %v10532 = vpop.f32.mrf.mxu0
  %v10533 = vadd.f32 %v10428, %v10532
  %v10534 = vpop.f32.mrf.mxu0
  %v10535 = vadd.f32 %v10428, %v10534
  %10536 = vmatmul.bf16.gmra.mxu0 %v10459
  %v10537 = vpop.f32.mrf.mxu0
  %v10538 = vadd.f32 %v10428, %v10537
  %v10539 = vpop.f32.mrf.mxu0
  %v10540 = vadd.f32 %v10428, %v10539
  %10541 = vmatmul.bf16.gmra.mxu0 %v10462
  %v10542 = vpop.f32.mrf.mxu0
  %v10543 = vadd.f32 %v10428, %v10542
  %v10544 = vpop.f32.mrf.mxu0
  %v10545 = vadd.f32 %v10428, %v10544
  %10546 = vmatmul.bf16.gmra.mxu0 %v10465
  %v10547 = vpop.f32.mrf.mxu0
  %v10548 = vadd.f32 %v10428, %v10547
  %v10549 = vpop.f32.mrf.mxu0
  %v10550 = vadd.f32 %v10428, %v10549
  %10551 = vmatmul.bf16.gmra.mxu0 %v10468
  %v10552 = vpop.f32.mrf.mxu0
  %v10553 = vadd.f32 %v10428, %v10552
  %v10554 = vpop.f32.mrf.mxu0
  %v10555 = vadd.f32 %v10428, %v10554
  %10556 = vmatmul.bf16.gmra.mxu0 %v10471
  %v10557 = vpop.f32.mrf.mxu0
  %v10558 = vadd.f32 %v10428, %v10557
  %v10559 = vpop.f32.mrf.mxu0
  %v10560 = vadd.f32 %v10428, %v10559
  %10561 = vmatmul.bf16.gmra.mxu0 %v10474
  %v10562 = vpop.f32.mrf.mxu0
  %v10563 = vadd.f32 %v10428, %v10562
  %v10564 = vpop.f32.mrf.mxu0
  %v10565 = vadd.f32 %v10428, %v10564
  %10566 = vmatmul.bf16.gmra.mxu0 %v10477
  %v10567 = vpop.f32.mrf.mxu0
  %v10568 = vadd.f32 %v10428, %v10567
  %v10569 = vpop.f32.mrf.mxu0
  %v10570 = vadd.f32 %v10428, %v10569
  %10571 = vdwg.mxu0
  %v10572 = vmax.f32 %v10493, 0.0
  %v10573 = vmax.f32 %v10495, 0.0
  %v10574 = vmax.f32 %v10498, 0.0
  %v10575 = vmax.f32 %v10500, 0.0
  %v10576 = vmax.f32 %v10503, 0.0
  %v10577 = vmax.f32 %v10505, 0.0
  %v10578 = vmax.f32 %v10508, 0.0
  %v10579 = vmax.f32 %v10510, 0.0
  %v10580 = vmax.f32 %v10513, 0.0
  %v10581 = vmax.f32 %v10515, 0.0
  %v10582 = vmax.f32 %v10518, 0.0
  %v10583 = vmax.f32 %v10520, 0.0
  %v10584 = vmax.f32 %v10523, 0.0
  %v10585 = vmax.f32 %v10525, 0.0
  %v10586 = vmax.f32 %v10528, 0.0
  %v10587 = vmax.f32 %v10530, 0.0
  %v10588 = vmax.f32 %v10533, 0.0
  %v10589 = vmax.f32 %v10535, 0.0
  %v10590 = vmax.f32 %v10538, 0.0
  %v10591 = vmax.f32 %v10540, 0.0
  %v10592 = vmax.f32 %v10543, 0.0
  %v10593 = vmax.f32 %v10545, 0.0
  %v10594 = vmax.f32 %v10548, 0.0
  %v10595 = vmax.f32 %v10550, 0.0
  %v10596 = vmax.f32 %v10553, 0.0
  %v10597 = vmax.f32 %v10555, 0.0
  %v10598 = vmax.f32 %v10558, 0.0
  %v10599 = vmax.f32 %v10560, 0.0
  %v10600 = vmax.f32 %v10563, 0.0
  %v10601 = vmax.f32 %v10565, 0.0
  %v10602 = vmax.f32 %v10568, 0.0
  %v10603 = vmax.f32 %v10570, 0.0
  %v10604 = vpack.c.bf16 %v10573, %v10572
  %v10605 = vpack.c.bf16 %v10575, %v10574
  %v10606 = vpack.c.bf16 %v10577, %v10576
  %v10607 = vpack.c.bf16 %v10579, %v10578
  %v10608 = vpack.c.bf16 %v10581, %v10580
  %v10609 = vpack.c.bf16 %v10583, %v10582
  %v10610 = vpack.c.bf16 %v10585, %v10584
  %v10611 = vpack.c.bf16 %v10587, %v10586
  %v10612 = vpack.c.bf16 %v10589, %v10588
  %v10613 = vpack.c.bf16 %v10591, %v10590
  %v10614 = vpack.c.bf16 %v10593, %v10592
  %v10615 = vpack.c.bf16 %v10595, %v10594
  %v10616 = vpack.c.bf16 %v10597, %v10596
  %v10617 = vpack.c.bf16 %v10599, %v10598
  %v10618 = vpack.c.bf16 %v10601, %v10600
  %v10619 = vpack.c.bf16 %v10603, %v10602
  %v10620 = vld [vmem:[%s3] sm:$0xff]
  %v10621 = vld [vmem:[%s3 + $0x8] sm:$0xff]
  %v10622 = vld [vmem:[%s3 + $0x10] sm:$0xff]
  %v10623 = vld [vmem:[%s3 + $0x18] sm:$0xff]
  %v10624 = vld [vmem:[%s3 + $0x20] sm:$0xff]
  %v10625 = vld [vmem:[%s3 + $0x28] sm:$0xff]
  %v10626 = vld [vmem:[%s3 + $0x30] sm:$0xff]
  %v10627 = vld [vmem:[%s3 + $0x38] sm:$0xff]
  %v10628 = vld [vmem:[%s3 + $0x40] sm:$0xff]
  %v10629 = vld [vmem:[%s3 + $0x48] sm:$0xff]
  %v10630 = vld [vmem:[%s3 + $0x50] sm:$0xff]
  %v10631 = vld [vmem:[%s3 + $0x58] sm:$0xff]
  %v10632 = vld [vmem:[%s3 + $0x60] sm:$0xff]
  %v10633 = vld [vmem:[%s3 + $0x68] sm:$0xff]
  %v10634 = vld [vmem:[%s3 + $0x70] sm:$0xff]
  %v10635 = vld [vmem:[%s3 + $0x78] sm:$0xff]
  %v10636 = vld [vmem:[%s4] sm:$0x3]
  %v10638 = vperm.slane %v10636, 0
  %v10639 = vperm.slane %v10636, 1
  %v10658 = vunpack.c.l.b16 %v10620
  %v10659 = vunpack.c.h.b16 %v10620
  %v10660 = vunpack.c.l.b16 %v10621
  %v10661 = vunpack.c.h.b16 %v10621
  %v10662 = vunpack.c.l.b16 %v10622
  %v10663 = vunpack.c.h.b16 %v10622
  %v10664 = vunpack.c.l.b16 %v10623
  %v10665 = vunpack.c.h.b16 %v10623
  %v10666 = vunpack.c.l.b16 %v10624
  %v10667 = vunpack.c.h.b16 %v10624
  %v10668 = vunpack.c.l.b16 %v10625
  %v10669 = vunpack.c.h.b16 %v10625
  %v10670 = vunpack.c.l.b16 %v10626
  %v10671 = vunpack.c.h.b16 %v10626
  %v10672 = vunpack.c.l.b16 %v10627
  %v10673 = vunpack.c.h.b16 %v10627
  %v10674 = vunpack.c.l.b16 %v10628
  %v10675 = vunpack.c.h.b16 %v10628
  %v10676 = vunpack.c.l.b16 %v10629
  %v10677 = vunpack.c.h.b16 %v10629
  %v10678 = vunpack.c.l.b16 %v10630
  %v10679 = vunpack.c.h.b16 %v10630
  %v10680 = vunpack.c.l.b16 %v10631
  %v10681 = vunpack.c.h.b16 %v10631
  %v10682 = vunpack.c.l.b16 %v10632
  %v10683 = vunpack.c.h.b16 %v10632
  %v10684 = vunpack.c.l.b16 %v10633
  %v10685 = vunpack.c.h.b16 %v10633
  %v10686 = vunpack.c.l.b16 %v10634
  %v10687 = vunpack.c.h.b16 %v10634
  %v10688 = vunpack.c.l.b16 %v10635
  %v10689 = vunpack.c.h.b16 %v10635
  %v10690 = vpack.c.b16 %v10660, %v10658
  %v10691 = vpack.c.b16 %v10661, %v10659
  %v10692 = vpack.c.b16 %v10664, %v10662
  %v10693 = vpack.c.b16 %v10665, %v10663
  %v10694 = vpack.c.b16 %v10668, %v10666
  %v10695 = vpack.c.b16 %v10669, %v10667
  %v10696 = vpack.c.b16 %v10672, %v10670
  %v10697 = vpack.c.b16 %v10673, %v10671
  %v10698 = vpack.c.b16 %v10676, %v10674
  %v10699 = vpack.c.b16 %v10677, %v10675
  %v10700 = vpack.c.b16 %v10680, %v10678
  %v10701 = vpack.c.b16 %v10681, %v10679
  %v10702 = vpack.c.b16 %v10684, %v10682
  %v10703 = vpack.c.b16 %v10685, %v10683
  %v10704 = vpack.c.b16 %v10688, %v10686
  %v10705 = vpack.c.b16 %v10689, %v10687
  %10722 = vmatpush.bf16.msra.mxu0 %v10704
  %10723 = vmatpush.bf16.msra.mxu0 %v10702
  %10724 = vmatpush.bf16.msra.mxu0 %v10700
  %10725 = vmatpush.bf16.msra.mxu0 %v10698
  %10726 = vmatpush.bf16.msra.mxu0 %v10696
  %10727 = vmatpush.bf16.msra.mxu0 %v10694
  %10728 = vmatpush.bf16.msra.mxu0 %v10692
  %10729 = vmatpush.bf16.msra.mxu0 %v10690
  %10730 = vmatmul.bf16.gmra.mxu0 %v10604
  %v10731 = vpop.f32.mrf.mxu0
  %v10732 = vadd.f32 %v10638, %v10731
  %v10733 = vpop.f32.mrf.mxu0
  %v10734 = vadd.f32 %v10638, %v10733
  %10735 = vmatmul.bf16.gmra.mxu0 %v10605
  %v10736 = vpop.f32.mrf.mxu0
  %v10737 = vadd.f32 %v10638, %v10736
  %v10738 = vpop.f32.mrf.mxu0
  %v10739 = vadd.f32 %v10638, %v10738
  %10740 = vmatmul.bf16.gmra.mxu0 %v10606
  %v10741 = vpop.f32.mrf.mxu0
  %v10742 = vadd.f32 %v10638, %v10741
  %v10743 = vpop.f32.mrf.mxu0
  %v10744 = vadd.f32 %v10638, %v10743
  %10745 = vmatmul.bf16.gmra.mxu0 %v10607
  %v10746 = vpop.f32.mrf.mxu0
  %v10747 = vadd.f32 %v10638, %v10746
  %v10748 = vpop.f32.mrf.mxu0
  %v10749 = vadd.f32 %v10638, %v10748
  %10750 = vmatmul.bf16.gmra.mxu0 %v10608
  %v10751 = vpop.f32.mrf.mxu0
  %v10752 = vadd.f32 %v10638, %v10751
  %v10753 = vpop.f32.mrf.mxu0
  %v10754 = vadd.f32 %v10638, %v10753
  %10755 = vmatmul.bf16.gmra.mxu0 %v10609
  %v10756 = vpop.f32.mrf.mxu0
  %v10757 = vadd.f32 %v10638, %v10756
  %v10758 = vpop.f32.mrf.mxu0
  %v10759 = vadd.f32 %v10638, %v10758
  %10760 = vmatmul.bf16.gmra.mxu0 %v10610
  %v10761 = vpop.f32.mrf.mxu0
  %v10762 = vadd.f32 %v10638, %v10761
  %v10763 = vpop.f32.mrf.mxu0
  %v10764 = vadd.f32 %v10638, %v10763
  %10765 = vmatmul.bf16.gmra.mxu0 %v10611
  %v10766 = vpop.f32.mrf.mxu0
  %v10767 = vadd.f32 %v10638, %v10766
  %v10768 = vpop.f32.mrf.mxu0
  %v10769 = vadd.f32 %v10638, %v10768
  %10770 = vmatmul.bf16.gmra.mxu0 %v10612
  %v10771 = vpop.f32.mrf.mxu0
  %v10772 = vadd.f32 %v10638, %v10771
  %v10773 = vpop.f32.mrf.mxu0
  %v10774 = vadd.f32 %v10638, %v10773
  %10775 = vmatmul.bf16.gmra.mxu0 %v10613
  %v10776 = vpop.f32.mrf.mxu0
  %v10777 = vadd.f32 %v10638, %v10776
  %v10778 = vpop.f32.mrf.mxu0
  %v10779 = vadd.f32 %v10638, %v10778
  %10780 = vmatmul.bf16.gmra.mxu0 %v10614
  %v10781 = vpop.f32.mrf.mxu0
  %v10782 = vadd.f32 %v10638, %v10781
  %v10783 = vpop.f32.mrf.mxu0
  %v10784 = vadd.f32 %v10638, %v10783
  %10785 = vmatmul.bf16.gmra.mxu0 %v10615
  %v10786 = vpop.f32.mrf.mxu0
  %v10787 = vadd.f32 %v10638, %v10786
  %v10788 = vpop.f32.mrf.mxu0
  %v10789 = vadd.f32 %v10638, %v10788
  %10790 = vmatmul.bf16.gmra.mxu0 %v10616
  %v10791 = vpop.f32.mrf.mxu0
  %v10792 = vadd.f32 %v10638, %v10791
  %v10793 = vpop.f32.mrf.mxu0
  %v10794 = vadd.f32 %v10638, %v10793
  %10795 = vmatmul.bf16.gmra.mxu0 %v10617
  %v10796 = vpop.f32.mrf.mxu0
  %v10797 = vadd.f32 %v10638, %v10796
  %v10798 = vpop.f32.mrf.mxu0
  %v10799 = vadd.f32 %v10638, %v10798
  %10800 = vmatmul.bf16.gmra.mxu0 %v10618
  %v10801 = vpop.f32.mrf.mxu0
  %v10802 = vadd.f32 %v10638, %v10801
  %v10803 = vpop.f32.mrf.mxu0
  %v10804 = vadd.f32 %v10638, %v10803
  %10805 = vmatmul.bf16.gmra.mxu0 %v10619
  %v10806 = vpop.f32.mrf.mxu0
  %v10807 = vadd.f32 %v10638, %v10806
  %v10808 = vpop.f32.mrf.mxu0
  %v10809 = vadd.f32 %v10638, %v10808
  %10810 = vdwg.mxu0
  %10811 = vmatpush.bf16.msra.mxu0 %v10705
  %10812 = vmatpush.bf16.msra.mxu0 %v10703
  %10813 = vmatpush.bf16.msra.mxu0 %v10701
  %10814 = vmatpush.bf16.msra.mxu0 %v10699
  %10815 = vmatpush.bf16.msra.mxu0 %v10697
  %10816 = vmatpush.bf16.msra.mxu0 %v10695
  %10817 = vmatpush.bf16.msra.mxu0 %v10693
  %10818 = vmatpush.bf16.msra.mxu0 %v10691
  %10819 = vmatmul.bf16.gmra.mxu0 %v10604
  %v10820 = vpop.f32.mrf.mxu0
  %v10821 = vadd.f32 %v10639, %v10820
  %v10822 = vpop.f32.mrf.mxu0
  %v10823 = vadd.f32 %v10639, %v10822
  %10824 = vmatmul.bf16.gmra.mxu0 %v10605
  %v10825 = vpop.f32.mrf.mxu0
  %v10826 = vadd.f32 %v10639, %v10825
  %v10827 = vpop.f32.mrf.mxu0
  %v10828 = vadd.f32 %v10639, %v10827
  %10829 = vmatmul.bf16.gmra.mxu0 %v10606
  %v10830 = vpop.f32.mrf.mxu0
  %v10831 = vadd.f32 %v10639, %v10830
  %v10832 = vpop.f32.mrf.mxu0
  %v10833 = vadd.f32 %v10639, %v10832
  %10834 = vmatmul.bf16.gmra.mxu0 %v10607
  %v10835 = vpop.f32.mrf.mxu0
  %v10836 = vadd.f32 %v10639, %v10835
  %v10837 = vpop.f32.mrf.mxu0
  %v10838 = vadd.f32 %v10639, %v10837
  %10839 = vmatmul.bf16.gmra.mxu0 %v10608
  %v10840 = vpop.f32.mrf.mxu0
  %v10841 = vadd.f32 %v10639, %v10840
  %v10842 = vpop.f32.mrf.mxu0
  %v10843 = vadd.f32 %v10639, %v10842
  %10844 = vmatmul.bf16.gmra.mxu0 %v10609
  %v10845 = vpop.f32.mrf.mxu0
  %v10846 = vadd.f32 %v10639, %v10845
  %v10847 = vpop.f32.mrf.mxu0
  %v10848 = vadd.f32 %v10639, %v10847
  %10849 = vmatmul.bf16.gmra.mxu0 %v10610
  %v10850 = vpop.f32.mrf.mxu0
  %v10851 = vadd.f32 %v10639, %v10850
  %v10852 = vpop.f32.mrf.mxu0
  %v10853 = vadd.f32 %v10639, %v10852
  %10854 = vmatmul.bf16.gmra.mxu0 %v10611
  %v10855 = vpop.f32.mrf.mxu0
  %v10856 = vadd.f32 %v10639, %v10855
  %v10857 = vpop.f32.mrf.mxu0
  %v10858 = vadd.f32 %v10639, %v10857
  %10859 = vmatmul.bf16.gmra.mxu0 %v10612
  %v10860 = vpop.f32.mrf.mxu0
  %v10861 = vadd.f32 %v10639, %v10860
  %v10862 = vpop.f32.mrf.mxu0
  %v10863 = vadd.f32 %v10639, %v10862
  %10864 = vmatmul.bf16.gmra.mxu0 %v10613
  %v10865 = vpop.f32.mrf.mxu0
  %v10866 = vadd.f32 %v10639, %v10865
  %v10867 = vpop.f32.mrf.mxu0
  %v10868 = vadd.f32 %v10639, %v10867
  %10869 = vmatmul.bf16.gmra.mxu0 %v10614
  %v10870 = vpop.f32.mrf.mxu0
  %v10871 = vadd.f32 %v10639, %v10870
  %v10872 = vpop.f32.mrf.mxu0
  %v10873 = vadd.f32 %v10639, %v10872
  %10874 = vmatmul.bf16.gmra.mxu0 %v10615
  %v10875 = vpop.f32.mrf.mxu0
  %v10876 = vadd.f32 %v10639, %v10875
  %v10877 = vpop.f32.mrf.mxu0
  %v10878 = vadd.f32 %v10639, %v10877
  %10879 = vmatmul.bf16.gmra.mxu0 %v10616
  %v10880 = vpop.f32.mrf.mxu0
  %v10881 = vadd.f32 %v10639, %v10880
  %v10882 = vpop.f32.mrf.mxu0
  %v10883 = vadd.f32 %v10639, %v10882
  %10884 = vmatmul.bf16.gmra.mxu0 %v10617
  %v10885 = vpop.f32.mrf.mxu0
  %v10886 = vadd.f32 %v10639, %v10885
  %v10887 = vpop.f32.mrf.mxu0
  %v10888 = vadd.f32 %v10639, %v10887
  %10889 = vmatmul.bf16.gmra.mxu0 %v10618
  %v10890 = vpop.f32.mrf.mxu0
  %v10891 = vadd.f32 %v10639, %v10890
  %v10892 = vpop.f32.mrf.mxu0
  %v10893 = vadd.f32 %v10639, %v10892
  %10894 = vmatmul.bf16.gmra.mxu0 %v10619
  %v10895 = vpop.f32.mrf.mxu0
  %v10896 = vadd.f32 %v10639, %v10895
  %v10897 = vpop.f32.mrf.mxu0
  %v10898 = vadd.f32 %v10639, %v10897
  %10899 = vdwg.mxu0
  %v10900 = vmax.f32 %v10732, 0.0
  %v10901 = vmax.f32 %v10821, 0.0
  %v10902 = vmax.f32 %v10734, 0.0
  %v10903 = vmax.f32 %v10823, 0.0
  %v10904 = vmax.f32 %v10737, 0.0
  %v10905 = vmax.f32 %v10826, 0.0
  %v10906 = vmax.f32 %v10739, 0.0
  %v10907 = vmax.f32 %v10828, 0.0
  %v10908 = vmax.f32 %v10742, 0.0
  %v10909 = vmax.f32 %v10831, 0.0
  %v10910 = vmax.f32 %v10744, 0.0
  %v10911 = vmax.f32 %v10833, 0.0
  %v10912 = vmax.f32 %v10747, 0.0
  %v10913 = vmax.f32 %v10836, 0.0
  %v10914 = vmax.f32 %v10749, 0.0
  %v10915 = vmax.f32 %v10838, 0.0
  %v10916 = vmax.f32 %v10752, 0.0
  %v10917 = vmax.f32 %v10841, 0.0
  %v10918 = vmax.f32 %v10754, 0.0
  %v10919 = vmax.f32 %v10843, 0.0
  %v10920 = vmax.f32 %v10757, 0.0
  %v10921 = vmax.f32 %v10846, 0.0
  %v10922 = vmax.f32 %v10759, 0.0
  %v10923 = vmax.f32 %v10848, 0.0
  %v10924 = vmax.f32 %v10762, 0.0
  %v10925 = vmax.f32 %v10851, 0.0
  %v10926 = vmax.f32 %v10764, 0.0
  %v10927 = vmax.f32 %v10853, 0.0
  %v10928 = vmax.f32 %v10767, 0.0
  %v10929 = vmax.f32 %v10856, 0.0
  %v10930 = vmax.f32 %v10769, 0.0
  %v10931 = vmax.f32 %v10858, 0.0
  %v10932 = vmax.f32 %v10772, 0.0
  %v10933 = vmax.f32 %v10861, 0.0
  %v10934 = vmax.f32 %v10774, 0.0
  %v10935 = vmax.f32 %v10863, 0.0
  %v10936 = vmax.f32 %v10777, 0.0
  %v10937 = vmax.f32 %v10866, 0.0
  %v10938 = vmax.f32 %v10779, 0.0
  %v10939 = vmax.f32 %v10868, 0.0
  %v10940 = vmax.f32 %v10782, 0.0
  %v10941 = vmax.f32 %v10871, 0.0
  %v10942 = vmax.f32 %v10784, 0.0
  %v10943 = vmax.f32 %v10873, 0.0
  %v10944 = vmax.f32 %v10787, 0.0
  %v10945 = vmax.f32 %v10876, 0.0
  %v10946 = vmax.f32 %v10789, 0.0
  %v10947 = vmax.f32 %v10878, 0.0
  %v10948 = vmax.f32 %v10792, 0.0
  %v10949 = vmax.f32 %v10881, 0.0
  %v10950 = vmax.f32 %v10794, 0.0
  %v10951 = vmax.f32 %v10883, 0.0
  %v10952 = vmax.f32 %v10797, 0.0
  %v10953 = vmax.f32 %v10886, 0.0
  %v10954 = vmax.f32 %v10799, 0.0
  %v10955 = vmax.f32 %v10888, 0.0
  %v10956 = vmax.f32 %v10802, 0.0
  %v10957 = vmax.f32 %v10891, 0.0
  %v10958 = vmax.f32 %v10804, 0.0
  %v10959 = vmax.f32 %v10893, 0.0
  %v10960 = vmax.f32 %v10807, 0.0
  %v10961 = vmax.f32 %v10896, 0.0
  %v10962 = vmax.f32 %v10809, 0.0
  %v10963 = vmax.f32 %v10898, 0.0
  %v10964 = vpack.c.bf16 %v10902, %v10900
  %v10965 = vpack.c.bf16 %v10903, %v10901
  %v10966 = vpack.c.bf16 %v10906, %v10904
  %v10967 = vpack.c.bf16 %v10907, %v10905
  %v10968 = vpack.c.bf16 %v10910, %v10908
  %v10969 = vpack.c.bf16 %v10911, %v10909
  %v10970 = vpack.c.bf16 %v10914, %v10912
  %v10971 = vpack.c.bf16 %v10915, %v10913
  %v10972 = vpack.c.bf16 %v10918, %v10916
  %v10973 = vpack.c.bf16 %v10919, %v10917
  %v10974 = vpack.c.bf16 %v10922, %v10920
  %v10975 = vpack.c.bf16 %v10923, %v10921
  %v10976 = vpack.c.bf16 %v10926, %v10924
  %v10977 = vpack.c.bf16 %v10927, %v10925
  %v10978 = vpack.c.bf16 %v10930, %v10928
  %v10979 = vpack.c.bf16 %v10931, %v10929
  %v10980 = vpack.c.bf16 %v10934, %v10932
  %v10981 = vpack.c.bf16 %v10935, %v10933
  %v10982 = vpack.c.bf16 %v10938, %v10936
  %v10983 = vpack.c.bf16 %v10939, %v10937
  %v10984 = vpack.c.bf16 %v10942, %v10940
  %v10985 = vpack.c.bf16 %v10943, %v10941
  %v10986 = vpack.c.bf16 %v10946, %v10944
  %v10987 = vpack.c.bf16 %v10947, %v10945
  %v10988 = vpack.c.bf16 %v10950, %v10948
  %v10989 = vpack.c.bf16 %v10951, %v10949
  %v10990 = vpack.c.bf16 %v10954, %v10952
  %v10991 = vpack.c.bf16 %v10955, %v10953
  %v10992 = vpack.c.bf16 %v10958, %v10956
  %v10993 = vpack.c.bf16 %v10959, %v10957
  %v10994 = vpack.c.bf16 %v10962, %v10960
  %v10995 = vpack.c.bf16 %v10963, %v10961
  %v10996 = vld [vmem:[%s5] sm:$0xf]
  %v10997 = vld [vmem:[%s5 + $0x4] sm:$0xf]
  %v10998 = vld [vmem:[%s5 + $0x8] sm:$0xf]
  %v10999 = vld [vmem:[%s5 + $0xc] sm:$0xf]
  %v11000 = vld [vmem:[%s5 + $0x10] sm:$0xf]
  %v11001 = vld [vmem:[%s5 + $0x14] sm:$0xf]
  %v11002 = vld [vmem:[%s5 + $0x18] sm:$0xf]
  %v11003 = vld [vmem:[%s5 + $0x1c] sm:$0xf]
  %v11004 = vld [vmem:[%s5 + $0x20] sm:$0xf]
  %v11005 = vld [vmem:[%s5 + $0x24] sm:$0xf]
  %v11006 = vld [vmem:[%s5 + $0x28] sm:$0xf]
  %v11007 = vld [vmem:[%s5 + $0x2c] sm:$0xf]
  %v11008 = vld [vmem:[%s5 + $0x30] sm:$0xf]
  %v11009 = vld [vmem:[%s5 + $0x34] sm:$0xf]
  %v11010 = vld [vmem:[%s5 + $0x38] sm:$0xf]
  %v11011 = vld [vmem:[%s5 + $0x3c] sm:$0xf]
  %v11012 = vld [vmem:[%s5 + $0x40] sm:$0xf]
  %v11013 = vld [vmem:[%s5 + $0x44] sm:$0xf]
  %v11014 = vld [vmem:[%s5 + $0x48] sm:$0xf]
  %v11015 = vld [vmem:[%s5 + $0x4c] sm:$0xf]
  %v11016 = vld [vmem:[%s5 + $0x50] sm:$0xf]
  %v11017 = vld [vmem:[%s5 + $0x54] sm:$0xf]
  %v11018 = vld [vmem:[%s5 + $0x58] sm:$0xf]
  %v11019 = vld [vmem:[%s5 + $0x5c] sm:$0xf]
  %v11020 = vld [vmem:[%s5 + $0x60] sm:$0xf]
  %v11021 = vld [vmem:[%s5 + $0x64] sm:$0xf]
  %v11022 = vld [vmem:[%s5 + $0x68] sm:$0xf]
  %v11023 = vld [vmem:[%s5 + $0x6c] sm:$0xf]
  %v11024 = vld [vmem:[%s5 + $0x70] sm:$0xf]
  %v11025 = vld [vmem:[%s5 + $0x74] sm:$0xf]
  %v11026 = vld [vmem:[%s5 + $0x78] sm:$0xf]
  %v11027 = vld [vmem:[%s5 + $0x7c] sm:$0xf]
  %v11028 = vld [vmem:[%s6] sm:$0x1]
  %v11030 = vperm.slane %v11028, 0
  %v11064 = vunpack.c.l.b16 %v10996
  %v11065 = vunpack.c.l.b16 %v10997
  %v11066 = vunpack.c.l.b16 %v10998
  %v11067 = vunpack.c.l.b16 %v10999
  %v11068 = vunpack.c.l.b16 %v11000
  %v11069 = vunpack.c.l.b16 %v11001
  %v11070 = vunpack.c.l.b16 %v11002
  %v11071 = vunpack.c.l.b16 %v11003
  %v11072 = vunpack.c.l.b16 %v11004
  %v11073 = vunpack.c.l.b16 %v11005
  %v11074 = vunpack.c.l.b16 %v11006
  %v11075 = vunpack.c.l.b16 %v11007
  %v11076 = vunpack.c.l.b16 %v11008
  %v11077 = vunpack.c.l.b16 %v11009
  %v11078 = vunpack.c.l.b16 %v11010
  %v11079 = vunpack.c.l.b16 %v11011
  %v11080 = vunpack.c.l.b16 %v11012
  %v11081 = vunpack.c.l.b16 %v11013
  %v11082 = vunpack.c.l.b16 %v11014
  %v11083 = vunpack.c.l.b16 %v11015
  %v11084 = vunpack.c.l.b16 %v11016
  %v11085 = vunpack.c.l.b16 %v11017
  %v11086 = vunpack.c.l.b16 %v11018
  %v11087 = vunpack.c.l.b16 %v11019
  %v11088 = vunpack.c.l.b16 %v11020
  %v11089 = vunpack.c.l.b16 %v11021
  %v11090 = vunpack.c.l.b16 %v11022
  %v11091 = vunpack.c.l.b16 %v11023
  %v11092 = vunpack.c.l.b16 %v11024
  %v11093 = vunpack.c.l.b16 %v11025
  %v11094 = vunpack.c.l.b16 %v11026
  %v11095 = vunpack.c.l.b16 %v11027
  %v11096 = vpack.c.b16 %v11065, %v11064
  %v11097 = vpack.c.b16 %v11067, %v11066
  %v11098 = vpack.c.b16 %v11069, %v11068
  %v11099 = vpack.c.b16 %v11071, %v11070
  %v11100 = vpack.c.b16 %v11073, %v11072
  %v11101 = vpack.c.b16 %v11075, %v11074
  %v11102 = vpack.c.b16 %v11077, %v11076
  %v11103 = vpack.c.b16 %v11079, %v11078
  %v11104 = vpack.c.b16 %v11081, %v11080
  %v11105 = vpack.c.b16 %v11083, %v11082
  %v11106 = vpack.c.b16 %v11085, %v11084
  %v11107 = vpack.c.b16 %v11087, %v11086
  %v11108 = vpack.c.b16 %v11089, %v11088
  %v11109 = vpack.c.b16 %v11091, %v11090
  %v11110 = vpack.c.b16 %v11093, %v11092
  %v11111 = vpack.c.b16 %v11095, %v11094
  %11128 = vmatpush.bf16.msra.mxu0 %v11103
  %11129 = vmatpush.bf16.msra.mxu0 %v11102
  %11130 = vmatpush.bf16.msra.mxu0 %v11101
  %11131 = vmatpush.bf16.msra.mxu0 %v11100
  %11132 = vmatpush.bf16.msra.mxu0 %v11099
  %11133 = vmatpush.bf16.msra.mxu0 %v11098
  %11134 = vmatpush.bf16.msra.mxu0 %v11097
  %11135 = vmatpush.bf16.msra.mxu0 %v11096
  %11136 = vmatmul.bf16.gmra.mxu0 %v10964
  %v11137 = vpop.f32.mrf.mxu0
  %v11138 = vadd.f32 %v11030, %v11137
  %v11139 = vpop.f32.mrf.mxu0
  %v11140 = vadd.f32 %v11030, %v11139
  %11141 = vmatmul.bf16.gmra.mxu0 %v10966
  %v11142 = vpop.f32.mrf.mxu0
  %v11143 = vadd.f32 %v11030, %v11142
  %v11144 = vpop.f32.mrf.mxu0
  %v11145 = vadd.f32 %v11030, %v11144
  %11146 = vmatmul.bf16.gmra.mxu0 %v10968
  %v11147 = vpop.f32.mrf.mxu0
  %v11148 = vadd.f32 %v11030, %v11147
  %v11149 = vpop.f32.mrf.mxu0
  %v11150 = vadd.f32 %v11030, %v11149
  %11151 = vmatmul.bf16.gmra.mxu0 %v10970
  %v11152 = vpop.f32.mrf.mxu0
  %v11153 = vadd.f32 %v11030, %v11152
  %v11154 = vpop.f32.mrf.mxu0
  %v11155 = vadd.f32 %v11030, %v11154
  %11156 = vmatmul.bf16.gmra.mxu0 %v10972
  %v11157 = vpop.f32.mrf.mxu0
  %v11158 = vadd.f32 %v11030, %v11157
  %v11159 = vpop.f32.mrf.mxu0
  %v11160 = vadd.f32 %v11030, %v11159
  %11161 = vmatmul.bf16.gmra.mxu0 %v10974
  %v11162 = vpop.f32.mrf.mxu0
  %v11163 = vadd.f32 %v11030, %v11162
  %v11164 = vpop.f32.mrf.mxu0
  %v11165 = vadd.f32 %v11030, %v11164
  %11166 = vmatmul.bf16.gmra.mxu0 %v10976
  %v11167 = vpop.f32.mrf.mxu0
  %v11168 = vadd.f32 %v11030, %v11167
  %v11169 = vpop.f32.mrf.mxu0
  %v11170 = vadd.f32 %v11030, %v11169
  %11171 = vmatmul.bf16.gmra.mxu0 %v10978
  %v11172 = vpop.f32.mrf.mxu0
  %v11173 = vadd.f32 %v11030, %v11172
  %v11174 = vpop.f32.mrf.mxu0
  %v11175 = vadd.f32 %v11030, %v11174
  %11176 = vmatmul.bf16.gmra.mxu0 %v10980
  %v11177 = vpop.f32.mrf.mxu0
  %v11178 = vadd.f32 %v11030, %v11177
  %v11179 = vpop.f32.mrf.mxu0
  %v11180 = vadd.f32 %v11030, %v11179
  %11181 = vmatmul.bf16.gmra.mxu0 %v10982
  %v11182 = vpop.f32.mrf.mxu0
  %v11183 = vadd.f32 %v11030, %v11182
  %v11184 = vpop.f32.mrf.mxu0
  %v11185 = vadd.f32 %v11030, %v11184
  %11186 = vmatmul.bf16.gmra.mxu0 %v10984
  %v11187 = vpop.f32.mrf.mxu0
  %v11188 = vadd.f32 %v11030, %v11187
  %v11189 = vpop.f32.mrf.mxu0
  %v11190 = vadd.f32 %v11030, %v11189
  %11191 = vmatmul.bf16.gmra.mxu0 %v10986
  %v11192 = vpop.f32.mrf.mxu0
  %v11193 = vadd.f32 %v11030, %v11192
  %v11194 = vpop.f32.mrf.mxu0
  %v11195 = vadd.f32 %v11030, %v11194
  %11196 = vmatmul.bf16.gmra.mxu0 %v10988
  %v11197 = vpop.f32.mrf.mxu0
  %v11198 = vadd.f32 %v11030, %v11197
  %v11199 = vpop.f32.mrf.mxu0
  %v11200 = vadd.f32 %v11030, %v11199
  %11201 = vmatmul.bf16.gmra.mxu0 %v10990
  %v11202 = vpop.f32.mrf.mxu0
  %v11203 = vadd.f32 %v11030, %v11202
  %v11204 = vpop.f32.mrf.mxu0
  %v11205 = vadd.f32 %v11030, %v11204
  %11206 = vmatmul.bf16.gmra.mxu0 %v10992
  %v11207 = vpop.f32.mrf.mxu0
  %v11208 = vadd.f32 %v11030, %v11207
  %v11209 = vpop.f32.mrf.mxu0
  %v11210 = vadd.f32 %v11030, %v11209
  %11211 = vmatmul.bf16.gmra.mxu0 %v10994
  %v11212 = vpop.f32.mrf.mxu0
  %v11213 = vadd.f32 %v11030, %v11212
  %v11214 = vpop.f32.mrf.mxu0
  %v11215 = vadd.f32 %v11030, %v11214
  %11216 = vdwg.mxu0
  %11217 = vmatpush.bf16.msra.mxu0 %v11111
  %11218 = vmatpush.bf16.msra.mxu0 %v11110
  %11219 = vmatpush.bf16.msra.mxu0 %v11109
  %11220 = vmatpush.bf16.msra.mxu0 %v11108
  %11221 = vmatpush.bf16.msra.mxu0 %v11107
  %11222 = vmatpush.bf16.msra.mxu0 %v11106
  %11223 = vmatpush.bf16.msra.mxu0 %v11105
  %11224 = vmatpush.bf16.msra.mxu0 %v11104
  %11225 = vmatmul.bf16.gmra.mxu0 %v10965
  %v11226 = vpop.f32.mrf.mxu0
  %v11227 = vadd.f32 %v11138, %v11226
  %v11228 = vpop.f32.mrf.mxu0
  %v11229 = vadd.f32 %v11140, %v11228
  %11230 = vmatmul.bf16.gmra.mxu0 %v10967
  %v11231 = vpop.f32.mrf.mxu0
  %v11232 = vadd.f32 %v11143, %v11231
  %v11233 = vpop.f32.mrf.mxu0
  %v11234 = vadd.f32 %v11145, %v11233
  %11235 = vmatmul.bf16.gmra.mxu0 %v10969
  %v11236 = vpop.f32.mrf.mxu0
  %v11237 = vadd.f32 %v11148, %v11236
  %v11238 = vpop.f32.mrf.mxu0
  %v11239 = vadd.f32 %v11150, %v11238
  %11240 = vmatmul.bf16.gmra.mxu0 %v10971
  %v11241 = vpop.f32.mrf.mxu0
  %v11242 = vadd.f32 %v11153, %v11241
  %v11243 = vpop.f32.mrf.mxu0
  %v11244 = vadd.f32 %v11155, %v11243
  %11245 = vmatmul.bf16.gmra.mxu0 %v10973
  %v11246 = vpop.f32.mrf.mxu0
  %v11247 = vadd.f32 %v11158, %v11246
  %v11248 = vpop.f32.mrf.mxu0
  %v11249 = vadd.f32 %v11160, %v11248
  %11250 = vmatmul.bf16.gmra.mxu0 %v10975
  %v11251 = vpop.f32.mrf.mxu0
  %v11252 = vadd.f32 %v11163, %v11251
  %v11253 = vpop.f32.mrf.mxu0
  %v11254 = vadd.f32 %v11165, %v11253
  %11255 = vmatmul.bf16.gmra.mxu0 %v10977
  %v11256 = vpop.f32.mrf.mxu0
  %v11257 = vadd.f32 %v11168, %v11256
  %v11258 = vpop.f32.mrf.mxu0
  %v11259 = vadd.f32 %v11170, %v11258
  %11260 = vmatmul.bf16.gmra.mxu0 %v10979
  %v11261 = vpop.f32.mrf.mxu0
  %v11262 = vadd.f32 %v11173, %v11261
  %v11263 = vpop.f32.mrf.mxu0
  %v11264 = vadd.f32 %v11175, %v11263
  %11265 = vmatmul.bf16.gmra.mxu0 %v10981
  %v11266 = vpop.f32.mrf.mxu0
  %v11267 = vadd.f32 %v11178, %v11266
  %v11268 = vpop.f32.mrf.mxu0
  %v11269 = vadd.f32 %v11180, %v11268
  %11270 = vmatmul.bf16.gmra.mxu0 %v10983
  %v11271 = vpop.f32.mrf.mxu0
  %v11272 = vadd.f32 %v11183, %v11271
  %v11273 = vpop.f32.mrf.mxu0
  %v11274 = vadd.f32 %v11185, %v11273
  %11275 = vmatmul.bf16.gmra.mxu0 %v10985
  %v11276 = vpop.f32.mrf.mxu0
  %v11277 = vadd.f32 %v11188, %v11276
  %v11278 = vpop.f32.mrf.mxu0
  %v11279 = vadd.f32 %v11190, %v11278
  %11280 = vmatmul.bf16.gmra.mxu0 %v10987
  %v11281 = vpop.f32.mrf.mxu0
  %v11282 = vadd.f32 %v11193, %v11281
  %v11283 = vpop.f32.mrf.mxu0
  %v11284 = vadd.f32 %v11195, %v11283
  %11285 = vmatmul.bf16.gmra.mxu0 %v10989
  %v11286 = vpop.f32.mrf.mxu0
  %v11287 = vadd.f32 %v11198, %v11286
  %v11288 = vpop.f32.mrf.mxu0
  %v11289 = vadd.f32 %v11200, %v11288
  %11290 = vmatmul.bf16.gmra.mxu0 %v10991
  %v11291 = vpop.f32.mrf.mxu0
  %v11292 = vadd.f32 %v11203, %v11291
  %v11293 = vpop.f32.mrf.mxu0
  %v11294 = vadd.f32 %v11205, %v11293
  %11295 = vmatmul.bf16.gmra.mxu0 %v10993
  %v11296 = vpop.f32.mrf.mxu0
  %v11297 = vadd.f32 %v11208, %v11296
  %v11298 = vpop.f32.mrf.mxu0
  %v11299 = vadd.f32 %v11210, %v11298
  %11300 = vmatmul.bf16.gmra.mxu0 %v10995
  %v11301 = vpop.f32.mrf.mxu0
  %v11302 = vadd.f32 %v11213, %v11301
  %v11303 = vpop.f32.mrf.mxu0
  %v11304 = vadd.f32 %v11215, %v11303
  %11305 = vdwg.mxu0
  %v11306 = vmax.f32 %v11227, 0.0
  %v11307 = vmax.f32 %v11229, 0.0
  %v11308 = vmax.f32 %v11232, 0.0
  %v11309 = vmax.f32 %v11234, 0.0
  %v11310 = vmax.f32 %v11237, 0.0
  %v11311 = vmax.f32 %v11239, 0.0
  %v11312 = vmax.f32 %v11242, 0.0
  %v11313 = vmax.f32 %v11244, 0.0
  %v11314 = vmax.f32 %v11247, 0.0
  %v11315 = vmax.f32 %v11249, 0.0
  %v11316 = vmax.f32 %v11252, 0.0
  %v11317 = vmax.f32 %v11254, 0.0
  %v11318 = vmax.f32 %v11257, 0.0
  %v11319 = vmax.f32 %v11259, 0.0
  %v11320 = vmax.f32 %v11262, 0.0
  %v11321 = vmax.f32 %v11264, 0.0
  %v11322 = vmax.f32 %v11267, 0.0
  %v11323 = vmax.f32 %v11269, 0.0
  %v11324 = vmax.f32 %v11272, 0.0
  %v11325 = vmax.f32 %v11274, 0.0
  %v11326 = vmax.f32 %v11277, 0.0
  %v11327 = vmax.f32 %v11279, 0.0
  %v11328 = vmax.f32 %v11282, 0.0
  %v11329 = vmax.f32 %v11284, 0.0
  %v11330 = vmax.f32 %v11287, 0.0
  %v11331 = vmax.f32 %v11289, 0.0
  %v11332 = vmax.f32 %v11292, 0.0
  %v11333 = vmax.f32 %v11294, 0.0
  %v11334 = vmax.f32 %v11297, 0.0
  %v11335 = vmax.f32 %v11299, 0.0
  %v11336 = vmax.f32 %v11302, 0.0
  %v11337 = vmax.f32 %v11304, 0.0
  %v11338 = vpack.c.bf16 %v11307, %v11306
  %v11339 = vpack.c.bf16 %v11309, %v11308
  %v11340 = vpack.c.bf16 %v11311, %v11310
  %v11341 = vpack.c.bf16 %v11313, %v11312
  %v11342 = vpack.c.bf16 %v11315, %v11314
  %v11343 = vpack.c.bf16 %v11317, %v11316
  %v11344 = vpack.c.bf16 %v11319, %v11318
  %v11345 = vpack.c.bf16 %v11321, %v11320
  %v11346 = vpack.c.bf16 %v11323, %v11322
  %v11347 = vpack.c.bf16 %v11325, %v11324
  %v11348 = vpack.c.bf16 %v11327, %v11326
  %v11349 = vpack.c.bf16 %v11329, %v11328
  %v11350 = vpack.c.bf16 %v11331, %v11330
  %v11351 = vpack.c.bf16 %v11333, %v11332
  %v11352 = vpack.c.bf16 %v11335, %v11334
  %v11353 = vpack.c.bf16 %v11337, %v11336
  %v11354 = vld [vmem:[%s7] sm:$0xf]
  %v11355 = vld [vmem:[%s7 + $0x4] sm:$0xf]
  %v11356 = vld [vmem:[%s7 + $0x8] sm:$0xf]
  %v11357 = vld [vmem:[%s7 + $0xc] sm:$0xf]
  %v11358 = vld [vmem:[%s7 + $0x10] sm:$0xf]
  %v11359 = vld [vmem:[%s7 + $0x14] sm:$0xf]
  %v11360 = vld [vmem:[%s7 + $0x18] sm:$0xf]
  %v11361 = vld [vmem:[%s7 + $0x1c] sm:$0xf]
  %v11362 = vld [vmem:[%s7 + $0x20] sm:$0xf]
  %v11363 = vld [vmem:[%s7 + $0x24] sm:$0xf]
  %v11364 = vld [vmem:[%s7 + $0x28] sm:$0xf]
  %v11365 = vld [vmem:[%s7 + $0x2c] sm:$0xf]
  %v11366 = vld [vmem:[%s7 + $0x30] sm:$0xf]
  %v11367 = vld [vmem:[%s7 + $0x34] sm:$0xf]
  %v11368 = vld [vmem:[%s7 + $0x38] sm:$0xf]
  %v11369 = vld [vmem:[%s7 + $0x3c] sm:$0xf]
  %v11370 = vld [vmem:[%s8] sm:$0x1]
  %v11372 = vperm.slane %v11370, 0
  %v11390 = vunpack.c.l.b16 %v11354
  %v11391 = vunpack.c.l.b16 %v11355
  %v11392 = vunpack.c.l.b16 %v11356
  %v11393 = vunpack.c.l.b16 %v11357
  %v11394 = vunpack.c.l.b16 %v11358
  %v11395 = vunpack.c.l.b16 %v11359
  %v11396 = vunpack.c.l.b16 %v11360
  %v11397 = vunpack.c.l.b16 %v11361
  %v11398 = vunpack.c.l.b16 %v11362
  %v11399 = vunpack.c.l.b16 %v11363
  %v11400 = vunpack.c.l.b16 %v11364
  %v11401 = vunpack.c.l.b16 %v11365
  %v11402 = vunpack.c.l.b16 %v11366
  %v11403 = vunpack.c.l.b16 %v11367
  %v11404 = vunpack.c.l.b16 %v11368
  %v11405 = vunpack.c.l.b16 %v11369
  %v11406 = vpack.c.b16 %v11391, %v11390
  %v11407 = vpack.c.b16 %v11393, %v11392
  %v11408 = vpack.c.b16 %v11395, %v11394
  %v11409 = vpack.c.b16 %v11397, %v11396
  %v11410 = vpack.c.b16 %v11399, %v11398
  %v11411 = vpack.c.b16 %v11401, %v11400
  %v11412 = vpack.c.b16 %v11403, %v11402
  %v11413 = vpack.c.b16 %v11405, %v11404
  %11422 = vmatpush.bf16.msra.mxu0 %v11413
  %11423 = vmatpush.bf16.msra.mxu0 %v11412
  %11424 = vmatpush.bf16.msra.mxu0 %v11411
  %11425 = vmatpush.bf16.msra.mxu0 %v11410
  %11426 = vmatpush.bf16.msra.mxu0 %v11409
  %11427 = vmatpush.bf16.msra.mxu0 %v11408
  %11428 = vmatpush.bf16.msra.mxu0 %v11407
  %11429 = vmatpush.bf16.msra.mxu0 %v11406
  %11430 = vmatmul.bf16.gmra.mxu0 %v11338
  %v11431 = vpop.f32.mrf.mxu0
  %v11432 = vadd.f32 %v11372, %v11431
  %v11433 = vpop.f32.mrf.mxu0
  %v11434 = vadd.f32 %v11372, %v11433
  %11435 = vmatmul.bf16.gmra.mxu0 %v11339
  %v11436 = vpop.f32.mrf.mxu0
  %v11437 = vadd.f32 %v11372, %v11436
  %v11438 = vpop.f32.mrf.mxu0
  %v11439 = vadd.f32 %v11372, %v11438
  %11440 = vmatmul.bf16.gmra.mxu0 %v11340
  %v11441 = vpop.f32.mrf.mxu0
  %v11442 = vadd.f32 %v11372, %v11441
  %v11443 = vpop.f32.mrf.mxu0
  %v11444 = vadd.f32 %v11372, %v11443
  %11445 = vmatmul.bf16.gmra.mxu0 %v11341
  %v11446 = vpop.f32.mrf.mxu0
  %v11447 = vadd.f32 %v11372, %v11446
  %v11448 = vpop.f32.mrf.mxu0
  %v11449 = vadd.f32 %v11372, %v11448
  %11450 = vmatmul.bf16.gmra.mxu0 %v11342
  %v11451 = vpop.f32.mrf.mxu0
  %v11452 = vadd.f32 %v11372, %v11451
  %v11453 = vpop.f32.mrf.mxu0
  %v11454 = vadd.f32 %v11372, %v11453
  %11455 = vmatmul.bf16.gmra.mxu0 %v11343
  %v11456 = vpop.f32.mrf.mxu0
  %v11457 = vadd.f32 %v11372, %v11456
  %v11458 = vpop.f32.mrf.mxu0
  %v11459 = vadd.f32 %v11372, %v11458
  %11460 = vmatmul.bf16.gmra.mxu0 %v11344
  %v11461 = vpop.f32.mrf.mxu0
  %v11462 = vadd.f32 %v11372, %v11461
  %v11463 = vpop.f32.mrf.mxu0
  %v11464 = vadd.f32 %v11372, %v11463
  %11465 = vmatmul.bf16.gmra.mxu0 %v11345
  %v11466 = vpop.f32.mrf.mxu0
  %v11467 = vadd.f32 %v11372, %v11466
  %v11468 = vpop.f32.mrf.mxu0
  %v11469 = vadd.f32 %v11372, %v11468
  %11470 = vmatmul.bf16.gmra.mxu0 %v11346
  %v11471 = vpop.f32.mrf.mxu0
  %v11472 = vadd.f32 %v11372, %v11471
  %v11473 = vpop.f32.mrf.mxu0
  %v11474 = vadd.f32 %v11372, %v11473
  %11475 = vmatmul.bf16.gmra.mxu0 %v11347
  %v11476 = vpop.f32.mrf.mxu0
  %v11477 = vadd.f32 %v11372, %v11476
  %v11478 = vpop.f32.mrf.mxu0
  %v11479 = vadd.f32 %v11372, %v11478
  %11480 = vmatmul.bf16.gmra.mxu0 %v11348
  %v11481 = vpop.f32.mrf.mxu0
  %v11482 = vadd.f32 %v11372, %v11481
  %v11483 = vpop.f32.mrf.mxu0
  %v11484 = vadd.f32 %v11372, %v11483
  %11485 = vmatmul.bf16.gmra.mxu0 %v11349
  %v11486 = vpop.f32.mrf.mxu0
  %v11487 = vadd.f32 %v11372, %v11486
  %v11488 = vpop.f32.mrf.mxu0
  %v11489 = vadd.f32 %v11372, %v11488
  %11490 = vmatmul.bf16.gmra.mxu0 %v11350
  %v11491 = vpop.f32.mrf.mxu0
  %v11492 = vadd.f32 %v11372, %v11491
  %v11493 = vpop.f32.mrf.mxu0
  %v11494 = vadd.f32 %v11372, %v11493
  %11495 = vmatmul.bf16.gmra.mxu0 %v11351
  %v11496 = vpop.f32.mrf.mxu0
  %v11497 = vadd.f32 %v11372, %v11496
  %v11498 = vpop.f32.mrf.mxu0
  %v11499 = vadd.f32 %v11372, %v11498
  %11500 = vmatmul.bf16.gmra.mxu0 %v11352
  %v11501 = vpop.f32.mrf.mxu0
  %v11502 = vadd.f32 %v11372, %v11501
  %v11503 = vpop.f32.mrf.mxu0
  %v11504 = vadd.f32 %v11372, %v11503
  %11505 = vmatmul.bf16.gmra.mxu0 %v11353
  %v11506 = vpop.f32.mrf.mxu0
  %v11507 = vadd.f32 %v11372, %v11506
  %v11508 = vpop.f32.mrf.mxu0
  %v11509 = vadd.f32 %v11372, %v11508
  %11510 = vdwg.mxu0
  %vm11511 = vcmask 15360
  %11512 = vst.msk [vmem:[%s9] sm:$0xff] %vm11511, %v11432
  %11513 = vst.msk [vmem:[%s9 + $0x8] sm:$0xff] %vm11511, %v11434
  %11514 = vst.msk [vmem:[%s9 + $0x10] sm:$0xff] %vm11511, %v11437
  %11515 = vst.msk [vmem:[%s9 + $0x18] sm:$0xff] %vm11511, %v11439
  %11516 = vst.msk [vmem:[%s9 + $0x20] sm:$0xff] %vm11511, %v11442
  %11517 = vst.msk [vmem:[%s9 + $0x28] sm:$0xff] %vm11511, %v11444
  %11518 = vst.msk [vmem:[%s9 + $0x30] sm:$0xff] %vm11511, %v11447
  %11519 = vst.msk [vmem:[%s9 + $0x38] sm:$0xff] %vm11511, %v11449
  %11520 = vst.msk [vmem:[%s9 + $0x40] sm:$0xff] %vm11511, %v11452
  %11521 = vst.msk [vmem:[%s9 + $0x48] sm:$0xff] %vm11511, %v11454
  %11522 = vst.msk [vmem:[%s9 + $0x50] sm:$0xff] %vm11511, %v11457
  %11523 = vst.msk [vmem:[%s9 + $0x58] sm:$0xff] %vm11511, %v11459
  %11524 = vst.msk [vmem:[%s9 + $0x60] sm:$0xff] %vm11511, %v11462
  %11525 = vst.msk [vmem:[%s9 + $0x68] sm:$0xff] %vm11511, %v11464
  %11526 = vst.msk [vmem:[%s9 + $0x70] sm:$0xff] %vm11511, %v11467
  %11527 = vst.msk [vmem:[%s9 + $0x78] sm:$0xff] %vm11511, %v11469
  %11528 = vst.msk [vmem:[%s9 + $0x80] sm:$0xff] %vm11511, %v11472
  %11529 = vst.msk [vmem:[%s9 + $0x88] sm:$0xff] %vm11511, %v11474
  %11530 = vst.msk [vmem:[%s9 + $0x90] sm:$0xff] %vm11511, %v11477
  %11531 = vst.msk [vmem:[%s9 + $0x98] sm:$0xff] %vm11511, %v11479
  %11532 = vst.msk [vmem:[%s9 + $0xa0] sm:$0xff] %vm11511, %v11482
  %11533 = vst.msk [vmem:[%s9 + $0xa8] sm:$0xff] %vm11511, %v11484
  %11534 = vst.msk [vmem:[%s9 + $0xb0] sm:$0xff] %vm11511, %v11487
  %11535 = vst.msk [vmem:[%s9 + $0xb8] sm:$0xff] %vm11511, %v11489
  %11536 = vst.msk [vmem:[%s9 + $0xc0] sm:$0xff] %vm11511, %v11492
  %11537 = vst.msk [vmem:[%s9 + $0xc8] sm:$0xff] %vm11511, %v11494
  %11538 = vst.msk [vmem:[%s9 + $0xd0] sm:$0xff] %vm11511, %v11497
  %11539 = vst.msk [vmem:[%s9 + $0xd8] sm:$0xff] %vm11511, %v11499
  %11540 = vst.msk [vmem:[%s9 + $0xe0] sm:$0xff] %vm11511, %v11502
  %11541 = vst.msk [vmem:[%s9 + $0xe8] sm:$0xff] %vm11511, %v11504
  %11542 = vst.msk [vmem:[%s9 + $0xf0] sm:$0xff] %vm11511, %v11507
  %11543 = vst.msk [vmem:[%s9 + $0xf8] sm:$0xff] %vm11511, %v11509
  // Predicated region
  $region38: #{extrapolation_net.1} parent=0 // pred_check
    _
  $region39: #{extrapolation_net.1} parent=0 // pred_check_branch
    %11545 = sbr.rel (0) target = $region41
  $region40: #{extrapolation_net.1} parent=0 // pred_region
    _
  $region41: #{extrapolation_net.1} parent=0 // pred_fallthru
    _
  // Predicated region
  $region42: #{extrapolation_net.1} parent=0 // pred_check
    _
  $region43: #{extrapolation_net.1} parent=0 // pred_check_branch
    %11547 = sbr.rel (0) target = $region45
  $region44: #{extrapolation_net.1} parent=0 // pred_region
    _
  $region45: #{extrapolation_net.1} parent=0 // pred_fallthru
    _

</llo_original>
